<compile_context>
chip_gen: v5e
topology: v5e:2x2
jax: 0.10.0
libtpu: 0.0.40
codegen_flags: <defaults>
</compile_context>

<pallas_src>
import functools

import jax
import jax.numpy as jnp
from jax import lax
from jax.experimental import pallas as pl
from jax.experimental.pallas import tpu as pltpu

BN_EPS = 1e-5


def _store_zero_padded(buf_ref, interior, pad):
    """Write `interior` (H, W, C) into buf_ref ((H+2p, W+2p, C)) with a zero halo.

    Only the thin halo strips are (re)zeroed, every grid step, so the kernel
    stays correct when the grid axis is megacore-partitioned ("parallel").
    The interior is fully overwritten each step.
    """
    Hp, Wp, C = buf_ref.shape
    H, W, _ = interior.shape
    zrow = jnp.zeros((pad, Wp, C), jnp.float32)
    zcol = jnp.zeros((Hp, pad, C), jnp.float32)
    buf_ref[0:pad, :, :] = zrow
    buf_ref[Hp - pad:Hp, :, :] = zrow
    buf_ref[:, 0:pad, :] = zcol
    buf_ref[:, Wp - pad:Wp, :] = zcol
    buf_ref[pad:pad + H, pad:pad + W, :] = interior


def _fca_kernel(H, W, C,
                xpad_ref, xd_ref, sel_ref, mask_ref,
                w1_ref, w2_ref, w3a_ref, w3b_ref,
                a1_ref, c1_ref, a2a_ref, c2a_ref, a2b_ref, c2b_ref, c3_ref,
                out_ref,
                b1buf_ref, gabuf_ref, gbbuf_ref):
    HW = H * W

    def im2col(window):
        # window(kh, kw) -> (H, W, C).  Returns the (H*W, 9*C) patch matrix;
        # column order matches the (kh, kw, cin) flattening of the weights.
        cols = []
        for kh in range(3):
            for kw in range(3):
                cols.append(window(kh, kw).reshape(HW, C))
        return jnp.concatenate(cols, axis=-1)

    # ---- conv1: single im2col matmul (K = 9C) over the pre-padded input ----
    p1 = im2col(lambda kh, kw: xpad_ref[0, kh:kh + H, kw:kw + W, :])
    y1 = jnp.dot(p1, w1_ref[...], preferred_element_type=jnp.float32)   # (HW, C)

    # ---- bn1 + relu1 (feeds conv2) -> pad-2 scratch --------------------------
    b1 = jnp.maximum(y1 * a1_ref[...] + c1_ref[...], 0.0)
    _store_zero_padded(b1buf_ref, b1.reshape(H, W, C), pad=2)

    # ---- bn2 + relu2, conv1 half of the cat -> pad-1 scratch -----------------
    ga = jnp.maximum(y1 * a2a_ref[...] + c2a_ref[...], 0.0)
    _store_zero_padded(gabuf_ref, ga.reshape(H, W, C), pad=1)

    # ---- conv2: dilation-2 taps, single im2col matmul (K = 9C) ---------------
    p2 = im2col(
        lambda kh, kw: b1buf_ref[2 * kh:2 * kh + H, 2 * kw:2 * kw + W, :])
    y2 = jnp.dot(p2, w2_ref[...], preferred_element_type=jnp.float32)   # (HW, C)

    # ---- bn2 + relu2, conv2 half of the cat -> pad-1 scratch -----------------
    gb = jnp.maximum(y2 * a2b_ref[...] + c2b_ref[...], 0.0)
    _store_zero_padded(gbbuf_ref, gb.reshape(H, W, C), pad=1)

    # ---- conv3 (2C -> 1): two K=9C pushes (bn3 scale folded into weights) ----
    pa = im2col(lambda kh, kw: gabuf_ref[kh:kh + H, kw:kw + W, :])
    za = jnp.dot(pa, w3a_ref[...], preferred_element_type=jnp.float32)  # (HW, 1)
    pb = im2col(lambda kh, kw: gbbuf_ref[kh:kh + H, kw:kw + W, :])
    zb = jnp.dot(pb, w3b_ref[...], preferred_element_type=jnp.float32)  # (HW, 1)
    z = za + zb

    # ---- lane-dense gate expansion: e[h, w*C + c] = z[h*W + w, 0] ------------
    # 0/1 select + matmul relayout keeps the output store fully lane-dense.
    e = jnp.dot(sel_ref[...], z * mask_ref[...],
                preferred_element_type=jnp.float32)                      # (H, W*C)
    gate = jax.nn.sigmoid(e + c3_ref[0])                                 # bn3 shift

    # ---- resblock * scale, stored as a dense (H, W*C) slab -------------------
    out_ref[0] = xd_ref[0] * gate


def new_network_fca(x_nchw, params):
    """Forward pass of New_Network_FCA.  x_nchw: (N, C, H, W) float32."""
    N, C, H, W = x_nchw.shape
    HW, WC = H * W, W * C
    K9 = 9 * C

    # NCHW -> NHWC (required by the channels-last kernel); the 1-pixel conv1
    # halo pad rides on this same boundary pass.
    x = jnp.transpose(x_nchw, (0, 2, 3, 1)).astype(jnp.float32)
    xpad = jnp.pad(x, ((0, 0), (1, 1), (1, 1), (0, 0)))
    xd = x.reshape(N, H, WC)                # lane-dense view of the same data

    # conv weights: OIHW -> (kh, kw, cin, cout) -> im2col layout (9*cin, cout)
    w1 = jnp.transpose(params["w1"], (2, 3, 1, 0)).astype(jnp.float32).reshape(K9, C)
    w2 = jnp.transpose(params["w2"], (2, 3, 1, 0)).astype(jnp.float32).reshape(K9, C)
    w3 = jnp.transpose(params["w3"], (2, 3, 1, 0)).astype(jnp.float32)   # (3,3,2C,1)

    # fold inference-mode BatchNorm into per-channel scale/shift
    a1 = params["g1"] / jnp.sqrt(params["v1"] + BN_EPS)
    c1 = params["b1"] - params["m1"] * a1
    a2 = params["g2"] / jnp.sqrt(params["v2"] + BN_EPS)
    c2 = params["b2"] - params["m2"] * a2
    a3 = params["g3"] / jnp.sqrt(params["v3"] + BN_EPS)
    c3 = (params["b3"] - params["m3"] * a3).astype(jnp.float32)          # (1,)

    # bn3 scale folds into conv3 weights; split into conv1 / conv2 halves
    w3a = (w3[:, :, :C, :] * a3[0]).reshape(K9, 1)
    w3b = (w3[:, :, C:, :] * a3[0]).reshape(K9, 1)

    a1 = a1.reshape(1, C).astype(jnp.float32)
    c1 = c1.reshape(1, C).astype(jnp.float32)
    a2a = a2[:C].reshape(1, C).astype(jnp.float32)
    c2a = c2[:C].reshape(1, C).astype(jnp.float32)
    a2b = a2[C:].reshape(1, C).astype(jnp.float32)
    c2b = c2[C:].reshape(1, C).astype(jnp.float32)

    # constants for the lane-dense gate expansion (matmul-based relayout):
    #   sel[h, m]  = 1  iff  m // W == h        -> (H, H*W)
    #   mask[m, j] = 1  iff  m %  W == j // C   -> (H*W, W*C)
    m_idx = jnp.arange(HW)
    sel = (m_idx[None, :] // W == jnp.arange(H)[:, None]).astype(jnp.float32)
    mask = (m_idx[:, None] % W == (jnp.arange(WC)[None, :] // C)).astype(jnp.float32)

    kernel = functools.partial(_fca_kernel, H, W, C)

    def _full(shape):
        nd = len(shape)
        return pl.BlockSpec(shape, lambda n, _nd=nd: (0,) * _nd)

    out = pl.pallas_call(
        kernel,
        out_shape=jax.ShapeDtypeStruct((N, H, WC), jnp.float32),
        grid_spec=pltpu.PrefetchScalarGridSpec(
            num_scalar_prefetch=0,
            grid=(N,),
            in_specs=[
                pl.BlockSpec((1, H + 2, W + 2, C), lambda n: (n, 0, 0, 0)),  # xpad
                pl.BlockSpec((1, H, WC), lambda n: (n, 0, 0)),               # x dense
                _full((H, HW)),                                              # sel
                _full((HW, WC)),                                             # mask
                _full((K9, C)),                                              # w1
                _full((K9, C)),                                              # w2
                _full((K9, 1)),                                              # w3a
                _full((K9, 1)),                                              # w3b
                _full((1, C)), _full((1, C)),                                # a1, c1
                _full((1, C)), _full((1, C)),                                # a2a, c2a
                _full((1, C)), _full((1, C)),                                # a2b, c2b
                pl.BlockSpec(memory_space=pltpu.MemorySpace.SMEM),           # c3
            ],
            out_specs=pl.BlockSpec((1, H, WC), lambda n: (n, 0, 0)),
            scratch_shapes=[
                pltpu.VMEM((H + 4, W + 4, C), jnp.float32),   # conv2 pad-2 input
                pltpu.VMEM((H + 2, W + 2, C), jnp.float32),   # conv3 input, half a
                pltpu.VMEM((H + 2, W + 2, C), jnp.float32),   # conv3 input, half b
            ],
        ),
        compiler_params=pltpu.CompilerParams(
            dimension_semantics=("parallel",)),
    )(xpad, xd, sel, mask, w1, w2, w3a, w3b,
      a1, c1, a2a, c2a, a2b, c2b, c3)

    return jnp.transpose(out.reshape(N, H, W, C), (0, 3, 1, 2))   # back to NCHW


# ----------------------------- pure-JAX reference -----------------------------
def _reference(x, p):
    def bn(t, g, b, m, v):
        sh = (1, -1, 1, 1)
        return (t - m.reshape(sh)) / jnp.sqrt(v.reshape(sh) + BN_EPS) * \
            g.reshape(sh) + b.reshape(sh)

    dn = ("NCHW", "OIHW", "NCHW")
    conv1 = lax.conv_general_dilated(x, p["w1"], (1, 1), [(1, 1), (1, 1)],
                                     dimension_numbers=dn)
    t = jax.nn.relu(bn(conv1, p["g1"], p["b1"], p["m1"], p["v1"]))
    conv2 = lax.conv_general_dilated(t, p["w2"], (1, 1), [(2, 2), (2, 2)],
                                     rhs_dilation=(2, 2), dimension_numbers=dn)
    f = jnp.concatenate([conv1, conv2], axis=1)
    g = jax.nn.relu(bn(f, p["g2"], p["b2"], p["m2"], p["v2"]))
    z = lax.conv_general_dilated(g, p["w3"], (1, 1), [(1, 1), (1, 1)],
                                 dimension_numbers=dn)
    z = bn(z, p["g3"], p["b3"], p["m3"], p["v3"])
    return x * jax.nn.sigmoid(z)


if __name__ == "__main__":
    N, C, H, W = 2, 8, 16, 16          # inplanes = 8
    key = jax.random.PRNGKey(0)
    ks = jax.random.split(key, 16)

    def bn_params(k0, k1, k2, k3, ch):
        return (1.0 + 0.1 * jax.random.normal(k0, (ch,), jnp.float32),     # gamma
                0.05 * jax.random.normal(k1, (ch,), jnp.float32),          # beta
                0.1 * jax.random.normal(k2, (ch,), jnp.float32),           # running_mean
                0.5 + jnp.abs(jax.random.normal(k3, (ch,), jnp.float32)))  # running_var

    g1, b1, m1, v1 = bn_params(ks[3], ks[4], ks[5], ks[6], C)
    g2, b2, m2, v2 = bn_params(ks[7], ks[8], ks[9], ks[10], 2 * C)
    g3, b3, m3, v3 = bn_params(ks[11], ks[12], ks[13], ks[14], 1)

    params = dict(
        w1=0.1 * jax.random.normal(ks[0], (C, C, 3, 3), jnp.float32),
        w2=0.1 * jax.random.normal(ks[1], (C, C, 3, 3), jnp.float32),
        w3=0.1 * jax.random.normal(ks[2], (1, 2 * C, 3, 3), jnp.float32),
        g1=g1, b1=b1, m1=m1, v1=v1,
        g2=g2, b2=b2, m2=m2, v2=v2,
        g3=g3, b3=b3, m3=m3, v3=v3,
    )

    x = jax.random.normal(ks[15], (N, C, H, W), jnp.float32)

    out = new_network_fca(x, params)
    out = jax.block_until_ready(out)

    ref = _reference(x, params)
    assert out.shape == (N, C, H, W)
    assert jnp.allclose(out, ref, atol=1e-3, rtol=1e-3), \
        f"max err {jnp.max(jnp.abs(out - ref))}"

    print("KERNEL_OK")
</pallas_src>

<mosaic_0001>
module attributes {stable_mosaic.version = 11 : i64} {
  func.func @_fca_kernel(%arg0: i32, %arg1: memref<1x18x18x8xf32, #tpu.memory_space<vmem>>, %arg2: memref<1x16x128xf32, #tpu.memory_space<vmem>>, %arg3: memref<16x256xf32, #tpu.memory_space<vmem>>, %arg4: memref<256x128xf32, #tpu.memory_space<vmem>>, %arg5: memref<72x8xf32, #tpu.memory_space<vmem>>, %arg6: memref<72x8xf32, #tpu.memory_space<vmem>>, %arg7: memref<72x1xf32, #tpu.memory_space<vmem>>, %arg8: memref<72x1xf32, #tpu.memory_space<vmem>>, %arg9: memref<1x8xf32, #tpu.memory_space<vmem>>, %arg10: memref<1x8xf32, #tpu.memory_space<vmem>>, %arg11: memref<1x8xf32, #tpu.memory_space<vmem>>, %arg12: memref<1x8xf32, #tpu.memory_space<vmem>>, %arg13: memref<1x8xf32, #tpu.memory_space<vmem>>, %arg14: memref<1x8xf32, #tpu.memory_space<vmem>>, %arg15: memref<1xf32, #tpu.memory_space<smem>>, %arg16: memref<1x16x128xf32, #tpu.memory_space<vmem>>, %arg17: memref<20x20x8xf32, #tpu.memory_space<vmem>>, %arg18: memref<18x18x8xf32, #tpu.memory_space<vmem>>, %arg19: memref<18x18x8xf32, #tpu.memory_space<vmem>>) attributes {dimension_semantics = [#tpu.dimension_semantics<parallel>], iteration_bounds = array<i64: 2>, scalar_prefetch = 0 : i64, scratch_operands = 3 : i64, tpu.core_type = #tpu.core_type<tc>, window_params = [{transform_indices = @transform_0, window_bounds = array<i64: 1, 18, 18, 8>}, {transform_indices = @transform_1, window_bounds = array<i64: 1, 16, 128>}, {pipeline_mode = #tpu.pipeline_mode<synchronous>, transform_indices = @transform_2, window_bounds = array<i64: 16, 256>}, {pipeline_mode = #tpu.pipeline_mode<synchronous>, transform_indices = @transform_3, window_bounds = array<i64: 256, 128>}, {pipeline_mode = #tpu.pipeline_mode<synchronous>, transform_indices = @transform_4, window_bounds = array<i64: 72, 8>}, {pipeline_mode = #tpu.pipeline_mode<synchronous>, transform_indices = @transform_5, window_bounds = array<i64: 72, 8>}, {pipeline_mode = #tpu.pipeline_mode<synchronous>, transform_indices = @transform_6, window_bounds = array<i64: 72, 1>}, {pipeline_mode = #tpu.pipeline_mode<synchronous>, transform_indices = @transform_7, window_bounds = array<i64: 72, 1>}, {pipeline_mode = #tpu.pipeline_mode<synchronous>, transform_indices = @transform_8, window_bounds = array<i64: 1, 8>}, {pipeline_mode = #tpu.pipeline_mode<synchronous>, transform_indices = @transform_9, window_bounds = array<i64: 1, 8>}, {pipeline_mode = #tpu.pipeline_mode<synchronous>, transform_indices = @transform_10, window_bounds = array<i64: 1, 8>}, {pipeline_mode = #tpu.pipeline_mode<synchronous>, transform_indices = @transform_11, window_bounds = array<i64: 1, 8>}, {pipeline_mode = #tpu.pipeline_mode<synchronous>, transform_indices = @transform_12, window_bounds = array<i64: 1, 8>}, {pipeline_mode = #tpu.pipeline_mode<synchronous>, transform_indices = @transform_13, window_bounds = array<i64: 1, 8>}, {transform_indices = @transform_14, window_bounds = array<i64: 1>}, {transform_indices = @transform_15, window_bounds = array<i64: 1, 16, 128>}]} {
    %c0 = arith.constant 0 : index
    %c0_0 = arith.constant 0 : index
    %c0_1 = arith.constant 0 : index
    %c0_2 = arith.constant 0 : index
    %0 = vector.load %arg1[%c0, %c0_0, %c0_1, %c0_2] : memref<1x18x18x8xf32, #tpu.memory_space<vmem>>, vector<1x16x16x8xf32>
    %1 = vector.shape_cast %0 : vector<1x16x16x8xf32> to vector<16x16x8xf32>
    %2 = vector.shape_cast %1 : vector<16x16x8xf32> to vector<256x8xf32>
    %c0_3 = arith.constant 0 : index
    %c0_4 = arith.constant 0 : index
    %c1 = arith.constant 1 : index
    %c0_5 = arith.constant 0 : index
    %3 = vector.load %arg1[%c0_3, %c0_4, %c1, %c0_5] : memref<1x18x18x8xf32, #tpu.memory_space<vmem>>, vector<1x16x16x8xf32>
    %4 = vector.shape_cast %3 : vector<1x16x16x8xf32> to vector<16x16x8xf32>
    %5 = vector.shape_cast %4 : vector<16x16x8xf32> to vector<256x8xf32>
    %c0_6 = arith.constant 0 : index
    %c0_7 = arith.constant 0 : index
    %c2 = arith.constant 2 : index
    %c0_8 = arith.constant 0 : index
    %6 = vector.load %arg1[%c0_6, %c0_7, %c2, %c0_8] : memref<1x18x18x8xf32, #tpu.memory_space<vmem>>, vector<1x16x16x8xf32>
    %7 = vector.shape_cast %6 : vector<1x16x16x8xf32> to vector<16x16x8xf32>
    %8 = vector.shape_cast %7 : vector<16x16x8xf32> to vector<256x8xf32>
    %c0_9 = arith.constant 0 : index
    %c1_10 = arith.constant 1 : index
    %c0_11 = arith.constant 0 : index
    %c0_12 = arith.constant 0 : index
    %9 = vector.load %arg1[%c0_9, %c1_10, %c0_11, %c0_12] : memref<1x18x18x8xf32, #tpu.memory_space<vmem>>, vector<1x16x16x8xf32>
    %10 = vector.shape_cast %9 : vector<1x16x16x8xf32> to vector<16x16x8xf32>
    %11 = vector.shape_cast %10 : vector<16x16x8xf32> to vector<256x8xf32>
    %c0_13 = arith.constant 0 : index
    %c1_14 = arith.constant 1 : index
    %c1_15 = arith.constant 1 : index
    %c0_16 = arith.constant 0 : index
    %12 = vector.load %arg1[%c0_13, %c1_14, %c1_15, %c0_16] : memref<1x18x18x8xf32, #tpu.memory_space<vmem>>, vector<1x16x16x8xf32>
    %13 = vector.shape_cast %12 : vector<1x16x16x8xf32> to vector<16x16x8xf32>
    %14 = vector.shape_cast %13 : vector<16x16x8xf32> to vector<256x8xf32>
    %c0_17 = arith.constant 0 : index
    %c1_18 = arith.constant 1 : index
    %c2_19 = arith.constant 2 : index
    %c0_20 = arith.constant 0 : index
    %15 = vector.load %arg1[%c0_17, %c1_18, %c2_19, %c0_20] : memref<1x18x18x8xf32, #tpu.memory_space<vmem>>, vector<1x16x16x8xf32>
    %16 = vector.shape_cast %15 : vector<1x16x16x8xf32> to vector<16x16x8xf32>
    %17 = vector.shape_cast %16 : vector<16x16x8xf32> to vector<256x8xf32>
    %c0_21 = arith.constant 0 : index
    %c2_22 = arith.constant 2 : index
    %c0_23 = arith.constant 0 : index
    %c0_24 = arith.constant 0 : index
    %18 = vector.load %arg1[%c0_21, %c2_22, %c0_23, %c0_24] : memref<1x18x18x8xf32, #tpu.memory_space<vmem>>, vector<1x16x16x8xf32>
    %19 = vector.shape_cast %18 : vector<1x16x16x8xf32> to vector<16x16x8xf32>
    %20 = vector.shape_cast %19 : vector<16x16x8xf32> to vector<256x8xf32>
    %c0_25 = arith.constant 0 : index
    %c2_26 = arith.constant 2 : index
    %c1_27 = arith.constant 1 : index
    %c0_28 = arith.constant 0 : index
    %21 = vector.load %arg1[%c0_25, %c2_26, %c1_27, %c0_28] : memref<1x18x18x8xf32, #tpu.memory_space<vmem>>, vector<1x16x16x8xf32>
    %22 = vector.shape_cast %21 : vector<1x16x16x8xf32> to vector<16x16x8xf32>
    %23 = vector.shape_cast %22 : vector<16x16x8xf32> to vector<256x8xf32>
    %c0_29 = arith.constant 0 : index
    %c2_30 = arith.constant 2 : index
    %c2_31 = arith.constant 2 : index
    %c0_32 = arith.constant 0 : index
    %24 = vector.load %arg1[%c0_29, %c2_30, %c2_31, %c0_32] : memref<1x18x18x8xf32, #tpu.memory_space<vmem>>, vector<1x16x16x8xf32>
    %25 = vector.shape_cast %24 : vector<1x16x16x8xf32> to vector<16x16x8xf32>
    %26 = vector.shape_cast %25 : vector<16x16x8xf32> to vector<256x8xf32>
    %27 = tpu.concatenate %2, %5, %8, %11, %14, %17, %20, %23, %26 in 1 : vector<256x8xf32>, vector<256x8xf32>, vector<256x8xf32>, vector<256x8xf32>, vector<256x8xf32>, vector<256x8xf32>, vector<256x8xf32>, vector<256x8xf32>, vector<256x8xf32> -> vector<256x72xf32>
    %c0_33 = arith.constant 0 : index
    %c0_34 = arith.constant 0 : index
    %28 = vector.load %arg5[%c0_33, %c0_34] : memref<72x8xf32, #tpu.memory_space<vmem>>, vector<72x8xf32>
    %cst = arith.constant dense<0.000000e+00> : vector<256x8xf32>
    %29 = tpu.matmul %27, %28, %cst {dimension_numbers = #tpu.dot_dimension_numbers<[1], [0], [0], [1], [0, 0, 1, 1], [], []>} : vector<256x72xf32>, vector<72x8xf32>, vector<256x8xf32> -> vector<256x8xf32>
    %c0_35 = arith.constant 0 : index
    %c0_36 = arith.constant 0 : index
    %30 = vector.load %arg9[%c0_35, %c0_36] : memref<1x8xf32, #tpu.memory_space<vmem>>, vector<1x8xf32>
    %31 = vector.broadcast %30 : vector<1x8xf32> to vector<256x8xf32>
    %32 = arith.mulf %29, %31 : vector<256x8xf32>
    %c0_37 = arith.constant 0 : index
    %c0_38 = arith.constant 0 : index
    %33 = vector.load %arg10[%c0_37, %c0_38] : memref<1x8xf32, #tpu.memory_space<vmem>>, vector<1x8xf32>
    %34 = vector.broadcast %33 : vector<1x8xf32> to vector<256x8xf32>
    %35 = arith.addf %32, %34 : vector<256x8xf32>
    %cst_39 = arith.constant 0.000000e+00 : f32
    %36 = vector.broadcast %cst_39 : f32 to vector<256x8xf32>
    %37 = arith.maximumf %35, %36 : vector<256x8xf32>
    %38 = vector.shape_cast %37 : vector<256x8xf32> to vector<16x16x8xf32>
    %cst_40 = arith.constant 0.000000e+00 : f32
    %39 = vector.broadcast %cst_40 : f32 to vector<2x20x8xf32>
    %cst_41 = arith.constant 0.000000e+00 : f32
    %40 = vector.broadcast %cst_41 : f32 to vector<20x2x8xf32>
    %c0_42 = arith.constant 0 : index
    %c0_43 = arith.constant 0 : index
    %c0_44 = arith.constant 0 : index
    %41 = vector.load %arg17[%c0_42, %c0_43, %c0_44] : memref<20x20x8xf32, #tpu.memory_space<vmem>>, vector<2x20x8xf32>
    tpu.vector_store %arg17[%c0_42, %c0_43, %c0_44], %39 {strides = array<i32>} : memref<20x20x8xf32, #tpu.memory_space<vmem>>, vector<2x20x8xf32>,
    %c18 = arith.constant 18 : index
    %c0_45 = arith.constant 0 : index
    %c0_46 = arith.constant 0 : index
    %42 = vector.load %arg17[%c18, %c0_45, %c0_46] : memref<20x20x8xf32, #tpu.memory_space<vmem>>, vector<2x20x8xf32>
    tpu.vector_store %arg17[%c18, %c0_45, %c0_46], %39 {strides = array<i32>} : memref<20x20x8xf32, #tpu.memory_space<vmem>>, vector<2x20x8xf32>,
    %c0_47 = arith.constant 0 : index
    %c0_48 = arith.constant 0 : index
    %c0_49 = arith.constant 0 : index
    %43 = vector.load %arg17[%c0_47, %c0_48, %c0_49] : memref<20x20x8xf32, #tpu.memory_space<vmem>>, vector<20x2x8xf32>
    tpu.vector_store %arg17[%c0_47, %c0_48, %c0_49], %40 {strides = array<i32>} : memref<20x20x8xf32, #tpu.memory_space<vmem>>, vector<20x2x8xf32>,
    %c0_50 = arith.constant 0 : index
    %c18_51 = arith.constant 18 : index
    %c0_52 = arith.constant 0 : index
    %44 = vector.load %arg17[%c0_50, %c18_51, %c0_52] : memref<20x20x8xf32, #tpu.memory_space<vmem>>, vector<20x2x8xf32>
    tpu.vector_store %arg17[%c0_50, %c18_51, %c0_52], %40 {strides = array<i32>} : memref<20x20x8xf32, #tpu.memory_space<vmem>>, vector<20x2x8xf32>,
    %c2_53 = arith.constant 2 : index
    %c2_54 = arith.constant 2 : index
    %c0_55 = arith.constant 0 : index
    %45 = vector.load %arg17[%c2_53, %c2_54, %c0_55] : memref<20x20x8xf32, #tpu.memory_space<vmem>>, vector<16x16x8xf32>
    tpu.vector_store %arg17[%c2_53, %c2_54, %c0_55], %38 {strides = array<i32>} : memref<20x20x8xf32, #tpu.memory_space<vmem>>, vector<16x16x8xf32>,
    %c0_56 = arith.constant 0 : index
    %c0_57 = arith.constant 0 : index
    %46 = vector.load %arg11[%c0_56, %c0_57] : memref<1x8xf32, #tpu.memory_space<vmem>>, vector<1x8xf32>
    %47 = vector.broadcast %46 : vector<1x8xf32> to vector<256x8xf32>
    %48 = arith.mulf %29, %47 : vector<256x8xf32>
    %c0_58 = arith.constant 0 : index
    %c0_59 = arith.constant 0 : index
    %49 = vector.load %arg12[%c0_58, %c0_59] : memref<1x8xf32, #tpu.memory_space<vmem>>, vector<1x8xf32>
    %50 = vector.broadcast %49 : vector<1x8xf32> to vector<256x8xf32>
    %51 = arith.addf %48, %50 : vector<256x8xf32>
    %cst_60 = arith.constant 0.000000e+00 : f32
    %52 = vector.broadcast %cst_60 : f32 to vector<256x8xf32>
    %53 = arith.maximumf %51, %52 : vector<256x8xf32>
    %54 = vector.shape_cast %53 : vector<256x8xf32> to vector<16x16x8xf32>
    %cst_61 = arith.constant 0.000000e+00 : f32
    %55 = vector.broadcast %cst_61 : f32 to vector<1x18x8xf32>
    %cst_62 = arith.constant 0.000000e+00 : f32
    %56 = vector.broadcast %cst_62 : f32 to vector<18x1x8xf32>
    %c0_63 = arith.constant 0 : index
    %c0_64 = arith.constant 0 : index
    %c0_65 = arith.constant 0 : index
    %57 = vector.load %arg18[%c0_63, %c0_64, %c0_65] : memref<18x18x8xf32, #tpu.memory_space<vmem>>, vector<1x18x8xf32>
    tpu.vector_store %arg18[%c0_63, %c0_64, %c0_65], %55 {strides = array<i32>} : memref<18x18x8xf32, #tpu.memory_space<vmem>>, vector<1x18x8xf32>,
    %c17 = arith.constant 17 : index
    %c0_66 = arith.constant 0 : index
    %c0_67 = arith.constant 0 : index
    %58 = vector.load %arg18[%c17, %c0_66, %c0_67] : memref<18x18x8xf32, #tpu.memory_space<vmem>>, vector<1x18x8xf32>
    tpu.vector_store %arg18[%c17, %c0_66, %c0_67], %55 {strides = array<i32>} : memref<18x18x8xf32, #tpu.memory_space<vmem>>, vector<1x18x8xf32>,
    %c0_68 = arith.constant 0 : index
    %c0_69 = arith.constant 0 : index
    %c0_70 = arith.constant 0 : index
    %59 = vector.load %arg18[%c0_68, %c0_69, %c0_70] : memref<18x18x8xf32, #tpu.memory_space<vmem>>, vector<18x1x8xf32>
    tpu.vector_store %arg18[%c0_68, %c0_69, %c0_70], %56 {strides = array<i32>} : memref<18x18x8xf32, #tpu.memory_space<vmem>>, vector<18x1x8xf32>,
    %c0_71 = arith.constant 0 : index
    %c17_72 = arith.constant 17 : index
    %c0_73 = arith.constant 0 : index
    %60 = vector.load %arg18[%c0_71, %c17_72, %c0_73] : memref<18x18x8xf32, #tpu.memory_space<vmem>>, vector<18x1x8xf32>
    tpu.vector_store %arg18[%c0_71, %c17_72, %c0_73], %56 {strides = array<i32>} : memref<18x18x8xf32, #tpu.memory_space<vmem>>, vector<18x1x8xf32>,
    %c1_74 = arith.constant 1 : index
    %c1_75 = arith.constant 1 : index
    %c0_76 = arith.constant 0 : index
    %61 = vector.load %arg18[%c1_74, %c1_75, %c0_76] : memref<18x18x8xf32, #tpu.memory_space<vmem>>, vector<16x16x8xf32>
    tpu.vector_store %arg18[%c1_74, %c1_75, %c0_76], %54 {strides = array<i32>} : memref<18x18x8xf32, #tpu.memory_space<vmem>>, vector<16x16x8xf32>,
    %c0_77 = arith.constant 0 : index
    %c0_78 = arith.constant 0 : index
    %c0_79 = arith.constant 0 : index
    %62 = vector.load %arg17[%c0_77, %c0_78, %c0_79] : memref<20x20x8xf32, #tpu.memory_space<vmem>>, vector<16x16x8xf32>
    %63 = vector.shape_cast %62 : vector<16x16x8xf32> to vector<256x8xf32>
    %c0_80 = arith.constant 0 : index
    %c2_81 = arith.constant 2 : index
    %c0_82 = arith.constant 0 : index
    %64 = vector.load %arg17[%c0_80, %c2_81, %c0_82] : memref<20x20x8xf32, #tpu.memory_space<vmem>>, vector<16x16x8xf32>
    %65 = vector.shape_cast %64 : vector<16x16x8xf32> to vector<256x8xf32>
    %c0_83 = arith.constant 0 : index
    %c4 = arith.constant 4 : index
    %c0_84 = arith.constant 0 : index
    %66 = vector.load %arg17[%c0_83, %c4, %c0_84] : memref<20x20x8xf32, #tpu.memory_space<vmem>>, vector<16x16x8xf32>
    %67 = vector.shape_cast %66 : vector<16x16x8xf32> to vector<256x8xf32>
    %c2_85 = arith.constant 2 : index
    %c0_86 = arith.constant 0 : index
    %c0_87 = arith.constant 0 : index
    %68 = vector.load %arg17[%c2_85, %c0_86, %c0_87] : memref<20x20x8xf32, #tpu.memory_space<vmem>>, vector<16x16x8xf32>
    %69 = vector.shape_cast %68 : vector<16x16x8xf32> to vector<256x8xf32>
    %c2_88 = arith.constant 2 : index
    %c2_89 = arith.constant 2 : index
    %c0_90 = arith.constant 0 : index
    %70 = vector.load %arg17[%c2_88, %c2_89, %c0_90] : memref<20x20x8xf32, #tpu.memory_space<vmem>>, vector<16x16x8xf32>
    %71 = vector.shape_cast %70 : vector<16x16x8xf32> to vector<256x8xf32>
    %c2_91 = arith.constant 2 : index
    %c4_92 = arith.constant 4 : index
    %c0_93 = arith.constant 0 : index
    %72 = vector.load %arg17[%c2_91, %c4_92, %c0_93] : memref<20x20x8xf32, #tpu.memory_space<vmem>>, vector<16x16x8xf32>
    %73 = vector.shape_cast %72 : vector<16x16x8xf32> to vector<256x8xf32>
    %c4_94 = arith.constant 4 : index
    %c0_95 = arith.constant 0 : index
    %c0_96 = arith.constant 0 : index
    %74 = vector.load %arg17[%c4_94, %c0_95, %c0_96] : memref<20x20x8xf32, #tpu.memory_space<vmem>>, vector<16x16x8xf32>
    %75 = vector.shape_cast %74 : vector<16x16x8xf32> to vector<256x8xf32>
    %c4_97 = arith.constant 4 : index
    %c2_98 = arith.constant 2 : index
    %c0_99 = arith.constant 0 : index
    %76 = vector.load %arg17[%c4_97, %c2_98, %c0_99] : memref<20x20x8xf32, #tpu.memory_space<vmem>>, vector<16x16x8xf32>
    %77 = vector.shape_cast %76 : vector<16x16x8xf32> to vector<256x8xf32>
    %c4_100 = arith.constant 4 : index
    %c4_101 = arith.constant 4 : index
    %c0_102 = arith.constant 0 : index
    %78 = vector.load %arg17[%c4_100, %c4_101, %c0_102] : memref<20x20x8xf32, #tpu.memory_space<vmem>>, vector<16x16x8xf32>
    %79 = vector.shape_cast %78 : vector<16x16x8xf32> to vector<256x8xf32>
    %80 = tpu.concatenate %63, %65, %67, %69, %71, %73, %75, %77, %79 in 1 : vector<256x8xf32>, vector<256x8xf32>, vector<256x8xf32>, vector<256x8xf32>, vector<256x8xf32>, vector<256x8xf32>, vector<256x8xf32>, vector<256x8xf32>, vector<256x8xf32> -> vector<256x72xf32>
    %c0_103 = arith.constant 0 : index
    %c0_104 = arith.constant 0 : index
    %81 = vector.load %arg6[%c0_103, %c0_104] : memref<72x8xf32, #tpu.memory_space<vmem>>, vector<72x8xf32>
    %cst_105 = arith.constant dense<0.000000e+00> : vector<256x8xf32>
    %82 = tpu.matmul %80, %81, %cst_105 {dimension_numbers = #tpu.dot_dimension_numbers<[1], [0], [0], [1], [0, 0, 1, 1], [], []>} : vector<256x72xf32>, vector<72x8xf32>, vector<256x8xf32> -> vector<256x8xf32>
    %c0_106 = arith.constant 0 : index
    %c0_107 = arith.constant 0 : index
    %83 = vector.load %arg13[%c0_106, %c0_107] : memref<1x8xf32, #tpu.memory_space<vmem>>, vector<1x8xf32>
    %84 = vector.broadcast %83 : vector<1x8xf32> to vector<256x8xf32>
    %85 = arith.mulf %82, %84 : vector<256x8xf32>
    %c0_108 = arith.constant 0 : index
    %c0_109 = arith.constant 0 : index
    %86 = vector.load %arg14[%c0_108, %c0_109] : memref<1x8xf32, #tpu.memory_space<vmem>>, vector<1x8xf32>
    %87 = vector.broadcast %86 : vector<1x8xf32> to vector<256x8xf32>
    %88 = arith.addf %85, %87 : vector<256x8xf32>
    %cst_110 = arith.constant 0.000000e+00 : f32
    %89 = vector.broadcast %cst_110 : f32 to vector<256x8xf32>
    %90 = arith.maximumf %88, %89 : vector<256x8xf32>
    %91 = vector.shape_cast %90 : vector<256x8xf32> to vector<16x16x8xf32>
    %cst_111 = arith.constant 0.000000e+00 : f32
    %92 = vector.broadcast %cst_111 : f32 to vector<1x18x8xf32>
    %cst_112 = arith.constant 0.000000e+00 : f32
    %93 = vector.broadcast %cst_112 : f32 to vector<18x1x8xf32>
    %c0_113 = arith.constant 0 : index
    %c0_114 = arith.constant 0 : index
    %c0_115 = arith.constant 0 : index
    %94 = vector.load %arg19[%c0_113, %c0_114, %c0_115] : memref<18x18x8xf32, #tpu.memory_space<vmem>>, vector<1x18x8xf32>
    tpu.vector_store %arg19[%c0_113, %c0_114, %c0_115], %92 {strides = array<i32>} : memref<18x18x8xf32, #tpu.memory_space<vmem>>, vector<1x18x8xf32>,
    %c17_116 = arith.constant 17 : index
    %c0_117 = arith.constant 0 : index
    %c0_118 = arith.constant 0 : index
    %95 = vector.load %arg19[%c17_116, %c0_117, %c0_118] : memref<18x18x8xf32, #tpu.memory_space<vmem>>, vector<1x18x8xf32>
    tpu.vector_store %arg19[%c17_116, %c0_117, %c0_118], %92 {strides = array<i32>} : memref<18x18x8xf32, #tpu.memory_space<vmem>>, vector<1x18x8xf32>,
    %c0_119 = arith.constant 0 : index
    %c0_120 = arith.constant 0 : index
    %c0_121 = arith.constant 0 : index
    %96 = vector.load %arg19[%c0_119, %c0_120, %c0_121] : memref<18x18x8xf32, #tpu.memory_space<vmem>>, vector<18x1x8xf32>
    tpu.vector_store %arg19[%c0_119, %c0_120, %c0_121], %93 {strides = array<i32>} : memref<18x18x8xf32, #tpu.memory_space<vmem>>, vector<18x1x8xf32>,
    %c0_122 = arith.constant 0 : index
    %c17_123 = arith.constant 17 : index
    %c0_124 = arith.constant 0 : index
    %97 = vector.load %arg19[%c0_122, %c17_123, %c0_124] : memref<18x18x8xf32, #tpu.memory_space<vmem>>, vector<18x1x8xf32>
    tpu.vector_store %arg19[%c0_122, %c17_123, %c0_124], %93 {strides = array<i32>} : memref<18x18x8xf32, #tpu.memory_space<vmem>>, vector<18x1x8xf32>,
    %c1_125 = arith.constant 1 : index
    %c1_126 = arith.constant 1 : index
    %c0_127 = arith.constant 0 : index
    %98 = vector.load %arg19[%c1_125, %c1_126, %c0_127] : memref<18x18x8xf32, #tpu.memory_space<vmem>>, vector<16x16x8xf32>
    tpu.vector_store %arg19[%c1_125, %c1_126, %c0_127], %91 {strides = array<i32>} : memref<18x18x8xf32, #tpu.memory_space<vmem>>, vector<16x16x8xf32>,
    %c0_128 = arith.constant 0 : index
    %c0_129 = arith.constant 0 : index
    %c0_130 = arith.constant 0 : index
    %99 = vector.load %arg18[%c0_128, %c0_129, %c0_130] : memref<18x18x8xf32, #tpu.memory_space<vmem>>, vector<16x16x8xf32>
    %100 = vector.shape_cast %99 : vector<16x16x8xf32> to vector<256x8xf32>
    %c0_131 = arith.constant 0 : index
    %c1_132 = arith.constant 1 : index
    %c0_133 = arith.constant 0 : index
    %101 = vector.load %arg18[%c0_131, %c1_132, %c0_133] : memref<18x18x8xf32, #tpu.memory_space<vmem>>, vector<16x16x8xf32>
    %102 = vector.shape_cast %101 : vector<16x16x8xf32> to vector<256x8xf32>
    %c0_134 = arith.constant 0 : index
    %c2_135 = arith.constant 2 : index
    %c0_136 = arith.constant 0 : index
    %103 = vector.load %arg18[%c0_134, %c2_135, %c0_136] : memref<18x18x8xf32, #tpu.memory_space<vmem>>, vector<16x16x8xf32>
    %104 = vector.shape_cast %103 : vector<16x16x8xf32> to vector<256x8xf32>
    %c1_137 = arith.constant 1 : index
    %c0_138 = arith.constant 0 : index
    %c0_139 = arith.constant 0 : index
    %105 = vector.load %arg18[%c1_137, %c0_138, %c0_139] : memref<18x18x8xf32, #tpu.memory_space<vmem>>, vector<16x16x8xf32>
    %106 = vector.shape_cast %105 : vector<16x16x8xf32> to vector<256x8xf32>
    %c1_140 = arith.constant 1 : index
    %c1_141 = arith.constant 1 : index
    %c0_142 = arith.constant 0 : index
    %107 = vector.load %arg18[%c1_140, %c1_141, %c0_142] : memref<18x18x8xf32, #tpu.memory_space<vmem>>, vector<16x16x8xf32>
    %108 = vector.shape_cast %107 : vector<16x16x8xf32> to vector<256x8xf32>
    %c1_143 = arith.constant 1 : index
    %c2_144 = arith.constant 2 : index
    %c0_145 = arith.constant 0 : index
    %109 = vector.load %arg18[%c1_143, %c2_144, %c0_145] : memref<18x18x8xf32, #tpu.memory_space<vmem>>, vector<16x16x8xf32>
    %110 = vector.shape_cast %109 : vector<16x16x8xf32> to vector<256x8xf32>
    %c2_146 = arith.constant 2 : index
    %c0_147 = arith.constant 0 : index
    %c0_148 = arith.constant 0 : index
    %111 = vector.load %arg18[%c2_146, %c0_147, %c0_148] : memref<18x18x8xf32, #tpu.memory_space<vmem>>, vector<16x16x8xf32>
    %112 = vector.shape_cast %111 : vector<16x16x8xf32> to vector<256x8xf32>
    %c2_149 = arith.constant 2 : index
    %c1_150 = arith.constant 1 : index
    %c0_151 = arith.constant 0 : index
    %113 = vector.load %arg18[%c2_149, %c1_150, %c0_151] : memref<18x18x8xf32, #tpu.memory_space<vmem>>, vector<16x16x8xf32>
    %114 = vector.shape_cast %113 : vector<16x16x8xf32> to vector<256x8xf32>
    %c2_152 = arith.constant 2 : index
    %c2_153 = arith.constant 2 : index
    %c0_154 = arith.constant 0 : index
    %115 = vector.load %arg18[%c2_152, %c2_153, %c0_154] : memref<18x18x8xf32, #tpu.memory_space<vmem>>, vector<16x16x8xf32>
    %116 = vector.shape_cast %115 : vector<16x16x8xf32> to vector<256x8xf32>
    %117 = tpu.concatenate %100, %102, %104, %106, %108, %110, %112, %114, %116 in 1 : vector<256x8xf32>, vector<256x8xf32>, vector<256x8xf32>, vector<256x8xf32>, vector<256x8xf32>, vector<256x8xf32>, vector<256x8xf32>, vector<256x8xf32>, vector<256x8xf32> -> vector<256x72xf32>
    %c0_155 = arith.constant 0 : index
    %c0_156 = arith.constant 0 : index
    %118 = vector.load %arg7[%c0_155, %c0_156] : memref<72x1xf32, #tpu.memory_space<vmem>>, vector<72x1xf32>
    %cst_157 = arith.constant dense<0.000000e+00> : vector<256x1xf32>
    %119 = tpu.matmul %117, %118, %cst_157 {dimension_numbers = #tpu.dot_dimension_numbers<[1], [0], [0], [1], [0, 0, 1, 1], [], []>} : vector<256x72xf32>, vector<72x1xf32>, vector<256x1xf32> -> vector<256x1xf32>
    %c0_158 = arith.constant 0 : index
    %c0_159 = arith.constant 0 : index
    %c0_160 = arith.constant 0 : index
    %120 = vector.load %arg19[%c0_158, %c0_159, %c0_160] : memref<18x18x8xf32, #tpu.memory_space<vmem>>, vector<16x16x8xf32>
    %121 = vector.shape_cast %120 : vector<16x16x8xf32> to vector<256x8xf32>
    %c0_161 = arith.constant 0 : index
    %c1_162 = arith.constant 1 : index
    %c0_163 = arith.constant 0 : index
    %122 = vector.load %arg19[%c0_161, %c1_162, %c0_163] : memref<18x18x8xf32, #tpu.memory_space<vmem>>, vector<16x16x8xf32>
    %123 = vector.shape_cast %122 : vector<16x16x8xf32> to vector<256x8xf32>
    %c0_164 = arith.constant 0 : index
    %c2_165 = arith.constant 2 : index
    %c0_166 = arith.constant 0 : index
    %124 = vector.load %arg19[%c0_164, %c2_165, %c0_166] : memref<18x18x8xf32, #tpu.memory_space<vmem>>, vector<16x16x8xf32>
    %125 = vector.shape_cast %124 : vector<16x16x8xf32> to vector<256x8xf32>
    %c1_167 = arith.constant 1 : index
    %c0_168 = arith.constant 0 : index
    %c0_169 = arith.constant 0 : index
    %126 = vector.load %arg19[%c1_167, %c0_168, %c0_169] : memref<18x18x8xf32, #tpu.memory_space<vmem>>, vector<16x16x8xf32>
    %127 = vector.shape_cast %126 : vector<16x16x8xf32> to vector<256x8xf32>
    %c1_170 = arith.constant 1 : index
    %c1_171 = arith.constant 1 : index
    %c0_172 = arith.constant 0 : index
    %128 = vector.load %arg19[%c1_170, %c1_171, %c0_172] : memref<18x18x8xf32, #tpu.memory_space<vmem>>, vector<16x16x8xf32>
    %129 = vector.shape_cast %128 : vector<16x16x8xf32> to vector<256x8xf32>
    %c1_173 = arith.constant 1 : index
    %c2_174 = arith.constant 2 : index
    %c0_175 = arith.constant 0 : index
    %130 = vector.load %arg19[%c1_173, %c2_174, %c0_175] : memref<18x18x8xf32, #tpu.memory_space<vmem>>, vector<16x16x8xf32>
    %131 = vector.shape_cast %130 : vector<16x16x8xf32> to vector<256x8xf32>
    %c2_176 = arith.constant 2 : index
    %c0_177 = arith.constant 0 : index
    %c0_178 = arith.constant 0 : index
    %132 = vector.load %arg19[%c2_176, %c0_177, %c0_178] : memref<18x18x8xf32, #tpu.memory_space<vmem>>, vector<16x16x8xf32>
    %133 = vector.shape_cast %132 : vector<16x16x8xf32> to vector<256x8xf32>
    %c2_179 = arith.constant 2 : index
    %c1_180 = arith.constant 1 : index
    %c0_181 = arith.constant 0 : index
    %134 = vector.load %arg19[%c2_179, %c1_180, %c0_181] : memref<18x18x8xf32, #tpu.memory_space<vmem>>, vector<16x16x8xf32>
    %135 = vector.shape_cast %134 : vector<16x16x8xf32> to vector<256x8xf32>
    %c2_182 = arith.constant 2 : index
    %c2_183 = arith.constant 2 : index
    %c0_184 = arith.constant 0 : index
    %136 = vector.load %arg19[%c2_182, %c2_183, %c0_184] : memref<18x18x8xf32, #tpu.memory_space<vmem>>, vector<16x16x8xf32>
    %137 = vector.shape_cast %136 : vector<16x16x8xf32> to vector<256x8xf32>
    %138 = tpu.concatenate %121, %123, %125, %127, %129, %131, %133, %135, %137 in 1 : vector<256x8xf32>, vector<256x8xf32>, vector<256x8xf32>, vector<256x8xf32>, vector<256x8xf32>, vector<256x8xf32>, vector<256x8xf32>, vector<256x8xf32>, vector<256x8xf32> -> vector<256x72xf32>
    %c0_185 = arith.constant 0 : index
    %c0_186 = arith.constant 0 : index
    %139 = vector.load %arg8[%c0_185, %c0_186] : memref<72x1xf32, #tpu.memory_space<vmem>>, vector<72x1xf32>
    %cst_187 = arith.constant dense<0.000000e+00> : vector<256x1xf32>
    %140 = tpu.matmul %138, %139, %cst_187 {dimension_numbers = #tpu.dot_dimension_numbers<[1], [0], [0], [1], [0, 0, 1, 1], [], []>} : vector<256x72xf32>, vector<72x1xf32>, vector<256x1xf32> -> vector<256x1xf32>
    %141 = arith.addf %119, %140 : vector<256x1xf32>
    %c0_188 = arith.constant 0 : index
    %c0_189 = arith.constant 0 : index
    %142 = vector.load %arg3[%c0_188, %c0_189] : memref<16x256xf32, #tpu.memory_space<vmem>>, vector<16x256xf32>
    %c0_190 = arith.constant 0 : index
    %c0_191 = arith.constant 0 : index
    %143 = vector.load %arg4[%c0_190, %c0_191] : memref<256x128xf32, #tpu.memory_space<vmem>>, vector<256x128xf32>
    %144 = vector.broadcast %141 : vector<256x1xf32> to vector<256x128xf32>
    %145 = arith.mulf %144, %143 : vector<256x128xf32>
    %cst_192 = arith.constant dense<0.000000e+00> : vector<16x128xf32>
    %146 = tpu.matmul %142, %145, %cst_192 {dimension_numbers = #tpu.dot_dimension_numbers<[1], [0], [0], [1], [0, 0, 1, 1], [], []>} : vector<16x256xf32>, vector<256x128xf32>, vector<16x128xf32> -> vector<16x128xf32>
    %c0_193 = arith.constant 0 : index
    %147 = memref.load %arg15[%c0_193] : memref<1xf32, #tpu.memory_space<smem>>
    %148 = vector.broadcast %147 : f32 to vector<16x128xf32>
    %149 = arith.addf %146, %148 : vector<16x128xf32>
    %150 = arith.negf %149 : vector<16x128xf32>
    %151 = math.exp %150 : vector<16x128xf32>
    %cst_194 = arith.constant 1.000000e+00 : f32
    %152 = vector.broadcast %cst_194 : f32 to vector<16x128xf32>
    %153 = arith.addf %152, %151 : vector<16x128xf32>
    %154 = arith.divf %152, %153 : vector<16x128xf32>
    %c0_195 = arith.constant 0 : index
    %c0_196 = arith.constant 0 : index
    %c0_197 = arith.constant 0 : index
    %155 = vector.load %arg2[%c0_195, %c0_196, %c0_197] : memref<1x16x128xf32, #tpu.memory_space<vmem>>, vector<1x16x128xf32>
    %156 = vector.shape_cast %155 : vector<1x16x128xf32> to vector<16x128xf32>
    %157 = arith.mulf %156, %154 : vector<16x128xf32>
    %c0_198 = arith.constant 0 : index
    %c0_199 = arith.constant 0 : index
    %c0_200 = arith.constant 0 : index
    %158 = vector.load %arg16[%c0_198, %c0_199, %c0_200] : memref<1x16x128xf32, #tpu.memory_space<vmem>>, vector<1x16x128xf32>
    %159 = vector.shape_cast %158 : vector<1x16x128xf32> to vector<16x128xf32>
    %160 = vector.shape_cast %157 : vector<16x128xf32> to vector<1x16x128xf32>
    tpu.vector_store %arg16[%c0_198, %c0_199, %c0_200], %160 {strides = array<i32>} : memref<1x16x128xf32, #tpu.memory_space<vmem>>, vector<1x16x128xf32>,
    return
  }
  func.func @transform_0(%arg0: i32) -> (i32, i32, i32, i32) {
    %c0_i32 = arith.constant 0 : i32
    %c0_i32_0 = arith.constant 0 : i32
    %c0_i32_1 = arith.constant 0 : i32
    %c0_i32_2 = arith.constant 0 : i32
    return %arg0, %c0_i32, %c0_i32_0, %c0_i32_1 : i32, i32, i32, i32
  }
  func.func @transform_1(%arg0: i32) -> (i32, i32, i32) {
    %c0_i32 = arith.constant 0 : i32
    %c0_i32_0 = arith.constant 0 : i32
    %c0_i32_1 = arith.constant 0 : i32
    return %arg0, %c0_i32, %c0_i32_0 : i32, i32, i32
  }
  func.func @transform_2(%arg0: i32) -> (i32, i32) {
    %c0_i32 = arith.constant 0 : i32
    %c0_i32_0 = arith.constant 0 : i32
    %c0_i32_1 = arith.constant 0 : i32
    return %c0_i32, %c0_i32_0 : i32, i32
  }
  func.func @transform_3(%arg0: i32) -> (i32, i32) {
    %c0_i32 = arith.constant 0 : i32
    %c0_i32_0 = arith.constant 0 : i32
    %c0_i32_1 = arith.constant 0 : i32
    return %c0_i32, %c0_i32_0 : i32, i32
  }
  func.func @transform_4(%arg0: i32) -> (i32, i32) {
    %c0_i32 = arith.constant 0 : i32
    %c0_i32_0 = arith.constant 0 : i32
    %c0_i32_1 = arith.constant 0 : i32
    return %c0_i32, %c0_i32_0 : i32, i32
  }
  func.func @transform_5(%arg0: i32) -> (i32, i32) {
    %c0_i32 = arith.constant 0 : i32
    %c0_i32_0 = arith.constant 0 : i32
    %c0_i32_1 = arith.constant 0 : i32
    return %c0_i32, %c0_i32_0 : i32, i32
  }
  func.func @transform_6(%arg0: i32) -> (i32, i32) {
    %c0_i32 = arith.constant 0 : i32
    %c0_i32_0 = arith.constant 0 : i32
    %c0_i32_1 = arith.constant 0 : i32
    return %c0_i32, %c0_i32_0 : i32, i32
  }
  func.func @transform_7(%arg0: i32) -> (i32, i32) {
    %c0_i32 = arith.constant 0 : i32
    %c0_i32_0 = arith.constant 0 : i32
    %c0_i32_1 = arith.constant 0 : i32
    return %c0_i32, %c0_i32_0 : i32, i32
  }
  func.func @transform_8(%arg0: i32) -> (i32, i32) {
    %c0_i32 = arith.constant 0 : i32
    %c0_i32_0 = arith.constant 0 : i32
    %c0_i32_1 = arith.constant 0 : i32
    return %c0_i32, %c0_i32_0 : i32, i32
  }
  func.func @transform_9(%arg0: i32) -> (i32, i32) {
    %c0_i32 = arith.constant 0 : i32
    %c0_i32_0 = arith.constant 0 : i32
    %c0_i32_1 = arith.constant 0 : i32
    return %c0_i32, %c0_i32_0 : i32, i32
  }
  func.func @transform_10(%arg0: i32) -> (i32, i32) {
    %c0_i32 = arith.constant 0 : i32
    %c0_i32_0 = arith.constant 0 : i32
    %c0_i32_1 = arith.constant 0 : i32
    return %c0_i32, %c0_i32_0 : i32, i32
  }
  func.func @transform_11(%arg0: i32) -> (i32, i32) {
    %c0_i32 = arith.constant 0 : i32
    %c0_i32_0 = arith.constant 0 : i32
    %c0_i32_1 = arith.constant 0 : i32
    return %c0_i32, %c0_i32_0 : i32, i32
  }
  func.func @transform_12(%arg0: i32) -> (i32, i32) {
    %c0_i32 = arith.constant 0 : i32
    %c0_i32_0 = arith.constant 0 : i32
    %c0_i32_1 = arith.constant 0 : i32
    return %c0_i32, %c0_i32_0 : i32, i32
  }
  func.func @transform_13(%arg0: i32) -> (i32, i32) {
    %c0_i32 = arith.constant 0 : i32
    %c0_i32_0 = arith.constant 0 : i32
    %c0_i32_1 = arith.constant 0 : i32
    return %c0_i32, %c0_i32_0 : i32, i32
  }
  func.func @transform_14(%arg0: i32) -> i32 {
    %c0_i32 = arith.constant 0 : i32
    %c0_i32_0 = arith.constant 0 : i32
    return %c0_i32 : i32
  }
  func.func @transform_15(%arg0: i32) -> (i32, i32, i32) {
    %c0_i32 = arith.constant 0 : i32
    %c0_i32_0 = arith.constant 0 : i32
    %c0_i32_1 = arith.constant 0 : i32
    return %arg0, %c0_i32, %c0_i32_0 : i32, i32, i32
  }
}

</mosaic_0001>

<llo_original>
// kernel: tpu_custom_call.1
$region0: #{tpu_custom_call.1}
  #allocation0 [shape = 'u32[]', space=smem, size = 0x4, offset = 0x4, fixed_abs, tag = 'smem constant byte address 0x4 - core index']
  #allocation1 [shape = 'u32[72,128]{1,0:T(1,128)}', space=vmem, size = 0x9000, scoped, tag = 'internal scratch']
  #allocation2 [shape = 'f32[20,20,8]{2,1,0:T(8,128)}', space=vmem, size = 0x3c000, scoped, tag = 'scratch operand']
  #allocation3 [shape = 'f32[18,18,8]{2,1,0:T(8,128)}', space=vmem, size = 0x36000, scoped, tag = 'scratch operand']
  #allocation4 [shape = 'f32[18,18,8]{2,1,0:T(8,128)}', space=vmem, size = 0x36000, scoped, tag = 'scratch operand']
  #allocation5 [shape = 'f32[1]{0:T(128)S(6)}', space=smem, size = 0x200, scoped, tag = 'scoped memory for tpu_custom_call.1']
  %s0 = inlined_call_operand.vmem [shape: f32[2,18,18,8], index: 0, kind: input, shape index: {}]
  %s1 = inlined_call_operand.vmem [shape: f32[2,16,128], index: 1, kind: input, shape index: {}]
  %s2 = inlined_call_operand.vmem [shape: f32[16,256], index: 2, kind: input, shape index: {}]
  %s3 = inlined_call_operand.vmem [shape: f32[256,128], index: 3, kind: input, shape index: {}]
  %s4 = inlined_call_operand.vmem [shape: f32[72,8], index: 4, kind: input, shape index: {}]
  %s5 = inlined_call_operand.vmem [shape: f32[72,8], index: 5, kind: input, shape index: {}]
  %s6 = inlined_call_operand.vmem [shape: f32[72,1], index: 6, kind: input, shape index: {}]
  %s7 = inlined_call_operand.vmem [shape: f32[72,1], index: 7, kind: input, shape index: {}]
  %s8 = inlined_call_operand.vmem [shape: f32[1,8], index: 8, kind: input, shape index: {}]
  %s9 = inlined_call_operand.vmem [shape: f32[1,8], index: 9, kind: input, shape index: {}]
  %s10 = inlined_call_operand.vmem [shape: f32[1,8], index: 10, kind: input, shape index: {}]
  %s11 = inlined_call_operand.vmem [shape: f32[1,8], index: 11, kind: input, shape index: {}]
  %s12 = inlined_call_operand.vmem [shape: f32[1,8], index: 12, kind: input, shape index: {}]
  %s13 = inlined_call_operand.vmem [shape: f32[1,8], index: 13, kind: input, shape index: {}]
  %s14 = inlined_call_operand.<no memory space> [shape: f32[1], index: 14, kind: input, shape index: {}]
  %s15 = inlined_call_operand.hbm [shape: f32[2,16,128], index: 15, kind: output, shape index: {}]
  %s16 = sld [smem:[#allocation0]]
  $region93: #{tpu_custom_call.1} parent=0
    _
  %s18 = ssub.s32 1, %s16
  %s19 = scalar_select 0, %s18, %s16
  %20 = sst [smem:[#allocation5]] %s14
  $region1: #{tpu_custom_call.1} parent=0
    #allocation6 [shape = 'u8[16384]{0}', space=vmem, size = 0x4000, scoped, tag = 'output window, operand 0']
    #allocation7 [shape = 's32[2]{0}', space=sflag, size = 0x8, scoped, tag = 'scoped memory for tpu_custom_call.1']
    %21 = vsyncpa [#allocation7], 0
    %s22 = scalar_lea.sflag [#allocation7], 1
    %23 = vsyncpa %s22, 0
    loop: start=0, step=1, limit=4
    $region2: #{tpu_custom_call.1} parent=1 // loop_pre_header
      _
    $region3: #{tpu_custom_call.1} parent=1 // loop_header
      %s25 = sphi 0, %s29
      %p26 = scmp.ge.s32.totalorder %s25, 4
      %s35 = sphi 0, %s37
      %s38 = sphi 0, %s35
      %s39 = sphi 0, %s38
      %s55 = sphi 0, %s39
      %s61 = sphi 0, %s63
      %s64 = sphi 0, %s61
      %s65 = sphi 0, %s64
      %s81 = sphi 0, %s65
      %s85 = sphi 0, %s85
      %s87 = sphi 0, %s85
      %s88 = sphi 0, %s87
      %s102 = sphi 0, %s88
      %s106 = sphi 0, %s106
      %s108 = sphi 0, %s106
      %s109 = sphi 0, %s108
      %s123 = sphi 0, %s109
      %s127 = sphi 0, %s127
      %s129 = sphi 0, %s127
      %s130 = sphi 0, %s129
      %s144 = sphi 0, %s130
      %s148 = sphi 0, %s148
      %s150 = sphi 0, %s148
      %s151 = sphi 0, %s150
      %s165 = sphi 0, %s151
      %s169 = sphi 0, %s169
      %s171 = sphi 0, %s169
      %s172 = sphi 0, %s171
      %s186 = sphi 0, %s172
      %s190 = sphi 0, %s190
      %s192 = sphi 0, %s190
      %s193 = sphi 0, %s192
      %s207 = sphi 0, %s193
      %s211 = sphi 0, %s211
      %s213 = sphi 0, %s211
      %s214 = sphi 0, %s213
      %s228 = sphi 0, %s214
      %s232 = sphi 0, %s232
      %s234 = sphi 0, %s232
      %s235 = sphi 0, %s234
      %s249 = sphi 0, %s235
      %s253 = sphi 0, %s253
      %s255 = sphi 0, %s253
      %s256 = sphi 0, %s255
      %s270 = sphi 0, %s256
      %s274 = sphi 0, %s274
      %s276 = sphi 0, %s274
      %s277 = sphi 0, %s276
      %s291 = sphi 0, %s277
      %s295 = sphi 0, %s295
      %s297 = sphi 0, %s295
      %s298 = sphi 0, %s297
      %s312 = sphi 0, %s298
      %s316 = sphi 0, %s316
      %s318 = sphi 0, %s316
      %s319 = sphi 0, %s318
      %s333 = sphi 0, %s319
      %s337 = sphi 0, %s337
      %s339 = sphi 0, %s337
      %s340 = sphi 0, %s339
      %s354 = sphi 0, %s340
      %s360 = sphi 0, %s362
      %s363 = sphi 0, %s360
      %s364 = sphi 0, %s363
      %s380 = sphi 0, %s364
    $region4: #{tpu_custom_call.1} parent=1 // loop_header_branch
      %28 = sbr.rel (%p26) target = $region8
    $region5: #{tpu_custom_call.1} parent=1 // loop_body
      %s30 = ssub.s32 %s25, 1
      %s31 = ssub.s32 %s25, 2
      %s32 = sadd.s32 %s25, 1
      %s33 = ssub.s32 %s25, %s32
      %p34 = scmp.eq.s32.totalorder %s33, 0
      %s36 = sadd.s32 %s35, 1
      %s37 = scalar_select %p34, %s35, %s36
      %p40 = pneg %p34
      %p41 = scmp.eq.s32.totalorder %s25, 1
      %p42 = por %p40, %p41
      %p43 = scmp.ne.s32.totalorder %s35, %s38
      %p44 = scmp.eq.s32.totalorder %s25, 0
      %p45 = por %p43, %p44
      %p46 = scmp.ne.s32.totalorder %s35, %s38
      %p47 = scmp.eq.s32.totalorder %s30, 1
      %p48 = por %p46, %p47
      %p49 = scmp.ne.s32.totalorder %s38, %s39
      %p50 = scmp.eq.s32.totalorder %s30, 0
      %p51 = por %p49, %p50
      %p52 = scmp.ne.s32.totalorder %s38, %s39
      %p53 = scmp.eq.s32.totalorder %s31, 1
      %p54 = por %p52, %p53
      %p56 = scmp.ne.s32.totalorder %s39, %s55
      %p57 = scmp.eq.s32.totalorder %s31, 0
      %p58 = por %p56, %p57
      %s59 = ssub.s32 %s25, %s32
      %p60 = scmp.eq.s32.totalorder %s59, 0
      %s62 = sadd.s32 %s61, 1
      %s63 = scalar_select %p60, %s61, %s62
      %p66 = pneg %p60
      %p67 = scmp.eq.s32.totalorder %s25, 1
      %p68 = por %p66, %p67
      %p69 = scmp.ne.s32.totalorder %s61, %s64
      %p70 = scmp.eq.s32.totalorder %s25, 0
      %p71 = por %p69, %p70
      %p72 = scmp.ne.s32.totalorder %s61, %s64
      %p73 = scmp.eq.s32.totalorder %s30, 1
      %p74 = por %p72, %p73
      %p75 = scmp.ne.s32.totalorder %s64, %s65
      %p76 = scmp.eq.s32.totalorder %s30, 0
      %p77 = por %p75, %p76
      %p78 = scmp.ne.s32.totalorder %s64, %s65
      %p79 = scmp.eq.s32.totalorder %s31, 1
      %p80 = por %p78, %p79
      %p82 = scmp.ne.s32.totalorder %s65, %s81
      %p83 = scmp.eq.s32.totalorder %s31, 0
      %p84 = por %p82, %p83
      %s86 = sadd.s32 %s85, 1
      %p89 = scmp.eq.s32.totalorder %s25, 1
      %p90 = scmp.ne.s32.totalorder %s85, %s87
      %p91 = scmp.eq.s32.totalorder %s25, 0
      %p92 = por %p90, %p91
      %p93 = scmp.ne.s32.totalorder %s85, %s87
      %p94 = scmp.eq.s32.totalorder %s30, 1
      %p95 = por %p93, %p94
      %p96 = scmp.ne.s32.totalorder %s87, %s88
      %p97 = scmp.eq.s32.totalorder %s30, 0
      %p98 = por %p96, %p97
      %p99 = scmp.ne.s32.totalorder %s87, %s88
      %p100 = scmp.eq.s32.totalorder %s31, 1
      %p101 = por %p99, %p100
      %p103 = scmp.ne.s32.totalorder %s88, %s102
      %p104 = scmp.eq.s32.totalorder %s31, 0
      %p105 = por %p103, %p104
      %s107 = sadd.s32 %s106, 1
      %p110 = scmp.eq.s32.totalorder %s25, 1
      %p111 = scmp.ne.s32.totalorder %s106, %s108
      %p112 = scmp.eq.s32.totalorder %s25, 0
      %p113 = por %p111, %p112
      %p114 = scmp.ne.s32.totalorder %s106, %s108
      %p115 = scmp.eq.s32.totalorder %s30, 1
      %p116 = por %p114, %p115
      %p117 = scmp.ne.s32.totalorder %s108, %s109
      %p118 = scmp.eq.s32.totalorder %s30, 0
      %p119 = por %p117, %p118
      %p120 = scmp.ne.s32.totalorder %s108, %s109
      %p121 = scmp.eq.s32.totalorder %s31, 1
      %p122 = por %p120, %p121
      %p124 = scmp.ne.s32.totalorder %s109, %s123
      %p125 = scmp.eq.s32.totalorder %s31, 0
      %p126 = por %p124, %p125
      %s128 = sadd.s32 %s127, 1
      %p131 = scmp.eq.s32.totalorder %s25, 1
      %p132 = scmp.ne.s32.totalorder %s127, %s129
      %p133 = scmp.eq.s32.totalorder %s25, 0
      %p134 = por %p132, %p133
      %p135 = scmp.ne.s32.totalorder %s127, %s129
      %p136 = scmp.eq.s32.totalorder %s30, 1
      %p137 = por %p135, %p136
      %p138 = scmp.ne.s32.totalorder %s129, %s130
      %p139 = scmp.eq.s32.totalorder %s30, 0
      %p140 = por %p138, %p139
      %p141 = scmp.ne.s32.totalorder %s129, %s130
      %p142 = scmp.eq.s32.totalorder %s31, 1
      %p143 = por %p141, %p142
      %p145 = scmp.ne.s32.totalorder %s130, %s144
      %p146 = scmp.eq.s32.totalorder %s31, 0
      %p147 = por %p145, %p146
      %s149 = sadd.s32 %s148, 1
      %p152 = scmp.eq.s32.totalorder %s25, 1
      %p153 = scmp.ne.s32.totalorder %s148, %s150
      %p154 = scmp.eq.s32.totalorder %s25, 0
      %p155 = por %p153, %p154
      %p156 = scmp.ne.s32.totalorder %s148, %s150
      %p157 = scmp.eq.s32.totalorder %s30, 1
      %p158 = por %p156, %p157
      %p159 = scmp.ne.s32.totalorder %s150, %s151
      %p160 = scmp.eq.s32.totalorder %s30, 0
      %p161 = por %p159, %p160
      %p162 = scmp.ne.s32.totalorder %s150, %s151
      %p163 = scmp.eq.s32.totalorder %s31, 1
      %p164 = por %p162, %p163
      %p166 = scmp.ne.s32.totalorder %s151, %s165
      %p167 = scmp.eq.s32.totalorder %s31, 0
      %p168 = por %p166, %p167
      %s170 = sadd.s32 %s169, 1
      %p173 = scmp.eq.s32.totalorder %s25, 1
      %p174 = scmp.ne.s32.totalorder %s169, %s171
      %p175 = scmp.eq.s32.totalorder %s25, 0
      %p176 = por %p174, %p175
      %p177 = scmp.ne.s32.totalorder %s169, %s171
      %p178 = scmp.eq.s32.totalorder %s30, 1
      %p179 = por %p177, %p178
      %p180 = scmp.ne.s32.totalorder %s171, %s172
      %p181 = scmp.eq.s32.totalorder %s30, 0
      %p182 = por %p180, %p181
      %p183 = scmp.ne.s32.totalorder %s171, %s172
      %p184 = scmp.eq.s32.totalorder %s31, 1
      %p185 = por %p183, %p184
      %p187 = scmp.ne.s32.totalorder %s172, %s186
      %p188 = scmp.eq.s32.totalorder %s31, 0
      %p189 = por %p187, %p188
      %s191 = sadd.s32 %s190, 1
      %p194 = scmp.eq.s32.totalorder %s25, 1
      %p195 = scmp.ne.s32.totalorder %s190, %s192
      %p196 = scmp.eq.s32.totalorder %s25, 0
      %p197 = por %p195, %p196
      %p198 = scmp.ne.s32.totalorder %s190, %s192
      %p199 = scmp.eq.s32.totalorder %s30, 1
      %p200 = por %p198, %p199
      %p201 = scmp.ne.s32.totalorder %s192, %s193
      %p202 = scmp.eq.s32.totalorder %s30, 0
      %p203 = por %p201, %p202
      %p204 = scmp.ne.s32.totalorder %s192, %s193
      %p205 = scmp.eq.s32.totalorder %s31, 1
      %p206 = por %p204, %p205
      %p208 = scmp.ne.s32.totalorder %s193, %s207
      %p209 = scmp.eq.s32.totalorder %s31, 0
      %p210 = por %p208, %p209
      %s212 = sadd.s32 %s211, 1
      %p215 = scmp.eq.s32.totalorder %s25, 1
      %p216 = scmp.ne.s32.totalorder %s211, %s213
      %p217 = scmp.eq.s32.totalorder %s25, 0
      %p218 = por %p216, %p217
      %p219 = scmp.ne.s32.totalorder %s211, %s213
      %p220 = scmp.eq.s32.totalorder %s30, 1
      %p221 = por %p219, %p220
      %p222 = scmp.ne.s32.totalorder %s213, %s214
      %p223 = scmp.eq.s32.totalorder %s30, 0
      %p224 = por %p222, %p223
      %p225 = scmp.ne.s32.totalorder %s213, %s214
      %p226 = scmp.eq.s32.totalorder %s31, 1
      %p227 = por %p225, %p226
      %p229 = scmp.ne.s32.totalorder %s214, %s228
      %p230 = scmp.eq.s32.totalorder %s31, 0
      %p231 = por %p229, %p230
      %s233 = sadd.s32 %s232, 1
      %p236 = scmp.eq.s32.totalorder %s25, 1
      %p237 = scmp.ne.s32.totalorder %s232, %s234
      %p238 = scmp.eq.s32.totalorder %s25, 0
      %p239 = por %p237, %p238
      %p240 = scmp.ne.s32.totalorder %s232, %s234
      %p241 = scmp.eq.s32.totalorder %s30, 1
      %p242 = por %p240, %p241
      %p243 = scmp.ne.s32.totalorder %s234, %s235
      %p244 = scmp.eq.s32.totalorder %s30, 0
      %p245 = por %p243, %p244
      %p246 = scmp.ne.s32.totalorder %s234, %s235
      %p247 = scmp.eq.s32.totalorder %s31, 1
      %p248 = por %p246, %p247
      %p250 = scmp.ne.s32.totalorder %s235, %s249
      %p251 = scmp.eq.s32.totalorder %s31, 0
      %p252 = por %p250, %p251
      %s254 = sadd.s32 %s253, 1
      %p257 = scmp.eq.s32.totalorder %s25, 1
      %p258 = scmp.ne.s32.totalorder %s253, %s255
      %p259 = scmp.eq.s32.totalorder %s25, 0
      %p260 = por %p258, %p259
      %p261 = scmp.ne.s32.totalorder %s253, %s255
      %p262 = scmp.eq.s32.totalorder %s30, 1
      %p263 = por %p261, %p262
      %p264 = scmp.ne.s32.totalorder %s255, %s256
      %p265 = scmp.eq.s32.totalorder %s30, 0
      %p266 = por %p264, %p265
      %p267 = scmp.ne.s32.totalorder %s255, %s256
      %p268 = scmp.eq.s32.totalorder %s31, 1
      %p269 = por %p267, %p268
      %p271 = scmp.ne.s32.totalorder %s256, %s270
      %p272 = scmp.eq.s32.totalorder %s31, 0
      %p273 = por %p271, %p272
      %s275 = sadd.s32 %s274, 1
      %p278 = scmp.eq.s32.totalorder %s25, 1
      %p279 = scmp.ne.s32.totalorder %s274, %s276
      %p280 = scmp.eq.s32.totalorder %s25, 0
      %p281 = por %p279, %p280
      %p282 = scmp.ne.s32.totalorder %s274, %s276
      %p283 = scmp.eq.s32.totalorder %s30, 1
      %p284 = por %p282, %p283
      %p285 = scmp.ne.s32.totalorder %s276, %s277
      %p286 = scmp.eq.s32.totalorder %s30, 0
      %p287 = por %p285, %p286
      %p288 = scmp.ne.s32.totalorder %s276, %s277
      %p289 = scmp.eq.s32.totalorder %s31, 1
      %p290 = por %p288, %p289
      %p292 = scmp.ne.s32.totalorder %s277, %s291
      %p293 = scmp.eq.s32.totalorder %s31, 0
      %p294 = por %p292, %p293
      %s296 = sadd.s32 %s295, 1
      %p299 = scmp.eq.s32.totalorder %s25, 1
      %p300 = scmp.ne.s32.totalorder %s295, %s297
      %p301 = scmp.eq.s32.totalorder %s25, 0
      %p302 = por %p300, %p301
      %p303 = scmp.ne.s32.totalorder %s295, %s297
      %p304 = scmp.eq.s32.totalorder %s30, 1
      %p305 = por %p303, %p304
      %p306 = scmp.ne.s32.totalorder %s297, %s298
      %p307 = scmp.eq.s32.totalorder %s30, 0
      %p308 = por %p306, %p307
      %p309 = scmp.ne.s32.totalorder %s297, %s298
      %p310 = scmp.eq.s32.totalorder %s31, 1
      %p311 = por %p309, %p310
      %p313 = scmp.ne.s32.totalorder %s298, %s312
      %p314 = scmp.eq.s32.totalorder %s31, 0
      %p315 = por %p313, %p314
      %s317 = sadd.s32 %s316, 1
      %p320 = scmp.eq.s32.totalorder %s25, 1
      %p321 = scmp.ne.s32.totalorder %s316, %s318
      %p322 = scmp.eq.s32.totalorder %s25, 0
      %p323 = por %p321, %p322
      %p324 = scmp.ne.s32.totalorder %s316, %s318
      %p325 = scmp.eq.s32.totalorder %s30, 1
      %p326 = por %p324, %p325
      %p327 = scmp.ne.s32.totalorder %s318, %s319
      %p328 = scmp.eq.s32.totalorder %s30, 0
      %p329 = por %p327, %p328
      %p330 = scmp.ne.s32.totalorder %s318, %s319
      %p331 = scmp.eq.s32.totalorder %s31, 1
      %p332 = por %p330, %p331
      %p334 = scmp.ne.s32.totalorder %s319, %s333
      %p335 = scmp.eq.s32.totalorder %s31, 0
      %p336 = por %p334, %p335
      %s338 = sadd.s32 %s337, 1
      %p341 = scmp.eq.s32.totalorder %s25, 1
      %p342 = scmp.ne.s32.totalorder %s337, %s339
      %p343 = scmp.eq.s32.totalorder %s25, 0
      %p344 = por %p342, %p343
      %p345 = scmp.ne.s32.totalorder %s337, %s339
      %p346 = scmp.eq.s32.totalorder %s30, 1
      %p347 = por %p345, %p346
      %p348 = scmp.ne.s32.totalorder %s339, %s340
      %p349 = scmp.eq.s32.totalorder %s30, 0
      %p350 = por %p348, %p349
      %p351 = scmp.ne.s32.totalorder %s339, %s340
      %p352 = scmp.eq.s32.totalorder %s31, 1
      %p353 = por %p351, %p352
      %p355 = scmp.ne.s32.totalorder %s340, %s354
      %p356 = scmp.eq.s32.totalorder %s31, 0
      %p357 = por %p355, %p356
      %s358 = ssub.s32 %s25, %s32
      %p359 = scmp.eq.s32.totalorder %s358, 0
      %s361 = sadd.s32 %s360, 1
      %s362 = scalar_select %p359, %s360, %s361
      %p365 = pneg %p359
      %p366 = scmp.eq.s32.totalorder %s25, 1
      %p367 = por %p365, %p366
      %p368 = scmp.ne.s32.totalorder %s360, %s363
      %p369 = scmp.eq.s32.totalorder %s25, 0
      %p370 = por %p368, %p369
      %p371 = scmp.ne.s32.totalorder %s360, %s363
      %p372 = scmp.eq.s32.totalorder %s30, 1
      %p373 = por %p371, %p372
      %p374 = scmp.ne.s32.totalorder %s363, %s364
      %p375 = scmp.eq.s32.totalorder %s30, 0
      %p376 = por %p374, %p375
      %p377 = scmp.ne.s32.totalorder %s363, %s364
      %p378 = scmp.eq.s32.totalorder %s31, 1
      %p379 = por %p377, %p378
      %p381 = scmp.ne.s32.totalorder %s364, %s380
      %p382 = scmp.eq.s32.totalorder %s31, 0
      %p383 = por %p381, %p382
      %p384 = scmp.le.s32.totalorder 1, %s25
      %p385 = scmp.lt.s32.totalorder %s25, 3
      %p386 = pnand %p384, %p385
      %p387 = pneg %p386
      // Predicated region
      $region9: #{tpu_custom_call.1} parent=5 // pred_check
        _
      $region10: #{tpu_custom_call.1} parent=5 // pred_check_branch
        %389 = sbr.rel (%p386) target = $region12
      $region11: #{tpu_custom_call.1} parent=5 // pred_region
        %s390 = ssub.s32 %s25, 1
        // Predicated region
        $region13: #{tpu_custom_call.1} parent=11 // pred_check
          %p391 = pneg %p98
        $region14: #{tpu_custom_call.1} parent=11 // pred_check_branch
          %393 = sbr.rel (%p391) target = $region16
        $region15: #{tpu_custom_call.1} parent=11 // pred_region
          _
        $region16: #{tpu_custom_call.1} parent=11 // pred_fallthru
          _
        // Predicated region
        $region17: #{tpu_custom_call.1} parent=11 // pred_check
          %p394 = pneg %p119
        $region18: #{tpu_custom_call.1} parent=11 // pred_check_branch
          %396 = sbr.rel (%p394) target = $region20
        $region19: #{tpu_custom_call.1} parent=11 // pred_region
          _
        $region20: #{tpu_custom_call.1} parent=11 // pred_fallthru
          _
        // Predicated region
        $region21: #{tpu_custom_call.1} parent=11 // pred_check
          %p397 = pneg %p140
        $region22: #{tpu_custom_call.1} parent=11 // pred_check_branch
          %399 = sbr.rel (%p397) target = $region24
        $region23: #{tpu_custom_call.1} parent=11 // pred_region
          _
        $region24: #{tpu_custom_call.1} parent=11 // pred_fallthru
          _
        // Predicated region
        $region25: #{tpu_custom_call.1} parent=11 // pred_check
          %p400 = pneg %p161
        $region26: #{tpu_custom_call.1} parent=11 // pred_check_branch
          %402 = sbr.rel (%p400) target = $region28
        $region27: #{tpu_custom_call.1} parent=11 // pred_region
          _
        $region28: #{tpu_custom_call.1} parent=11 // pred_fallthru
          _
        // Predicated region
        $region29: #{tpu_custom_call.1} parent=11 // pred_check
          %p403 = pneg %p182
        $region30: #{tpu_custom_call.1} parent=11 // pred_check_branch
          %405 = sbr.rel (%p403) target = $region32
        $region31: #{tpu_custom_call.1} parent=11 // pred_region
          _
        $region32: #{tpu_custom_call.1} parent=11 // pred_fallthru
          _
        // Predicated region
        $region33: #{tpu_custom_call.1} parent=11 // pred_check
          %p406 = pneg %p203
        $region34: #{tpu_custom_call.1} parent=11 // pred_check_branch
          %408 = sbr.rel (%p406) target = $region36
        $region35: #{tpu_custom_call.1} parent=11 // pred_region
          _
        $region36: #{tpu_custom_call.1} parent=11 // pred_fallthru
          _
        // Predicated region
        $region37: #{tpu_custom_call.1} parent=11 // pred_check
          %p409 = pneg %p224
        $region38: #{tpu_custom_call.1} parent=11 // pred_check_branch
          %411 = sbr.rel (%p409) target = $region40
        $region39: #{tpu_custom_call.1} parent=11 // pred_region
          _
        $region40: #{tpu_custom_call.1} parent=11 // pred_fallthru
          _
        // Predicated region
        $region41: #{tpu_custom_call.1} parent=11 // pred_check
          %p412 = pneg %p245
        $region42: #{tpu_custom_call.1} parent=11 // pred_check_branch
          %414 = sbr.rel (%p412) target = $region44
        $region43: #{tpu_custom_call.1} parent=11 // pred_region
          _
        $region44: #{tpu_custom_call.1} parent=11 // pred_fallthru
          _
        // Predicated region
        $region45: #{tpu_custom_call.1} parent=11 // pred_check
          %p415 = pneg %p266
        $region46: #{tpu_custom_call.1} parent=11 // pred_check_branch
          %417 = sbr.rel (%p415) target = $region48
        $region47: #{tpu_custom_call.1} parent=11 // pred_region
          _
        $region48: #{tpu_custom_call.1} parent=11 // pred_fallthru
          _
        // Predicated region
        $region49: #{tpu_custom_call.1} parent=11 // pred_check
          %p418 = pneg %p287
        $region50: #{tpu_custom_call.1} parent=11 // pred_check_branch
          %420 = sbr.rel (%p418) target = $region52
        $region51: #{tpu_custom_call.1} parent=11 // pred_region
          _
        $region52: #{tpu_custom_call.1} parent=11 // pred_fallthru
          _
        // Predicated region
        $region53: #{tpu_custom_call.1} parent=11 // pred_check
          %p421 = pneg %p308
        $region54: #{tpu_custom_call.1} parent=11 // pred_check_branch
          %423 = sbr.rel (%p421) target = $region56
        $region55: #{tpu_custom_call.1} parent=11 // pred_region
          _
        $region56: #{tpu_custom_call.1} parent=11 // pred_fallthru
          _
        // Predicated region
        $region57: #{tpu_custom_call.1} parent=11 // pred_check
          %p424 = pneg %p329
        $region58: #{tpu_custom_call.1} parent=11 // pred_check_branch
          %426 = sbr.rel (%p424) target = $region60
        $region59: #{tpu_custom_call.1} parent=11 // pred_region
          _
        $region60: #{tpu_custom_call.1} parent=11 // pred_fallthru
          _
        // Predicated region
        $region61: #{tpu_custom_call.1} parent=11 // pred_check
          %p427 = pneg %p350
        $region62: #{tpu_custom_call.1} parent=11 // pred_check_branch
          %429 = sbr.rel (%p427) target = $region64
        $region63: #{tpu_custom_call.1} parent=11 // pred_region
          _
        $region64: #{tpu_custom_call.1} parent=11 // pred_fallthru
          _
      $region12: #{tpu_custom_call.1} parent=5 // pred_fallthru
        _
      %p430 = scmp.lt.s32.totalorder %s25, 2
      // Predicated region
      $region65: #{tpu_custom_call.1} parent=5 // pred_check
        %p431 = pneg %p430
      $region66: #{tpu_custom_call.1} parent=5 // pred_check_branch
        %433 = sbr.rel (%p431) target = $region68
      $region67: #{tpu_custom_call.1} parent=5 // pred_region
        // Predicated region
        $region69: #{tpu_custom_call.1} parent=67 // pred_check
          %p434 = pneg %p45
        $region70: #{tpu_custom_call.1} parent=67 // pred_check_branch
          %436 = sbr.rel (%p434) target = $region72
        $region71: #{tpu_custom_call.1} parent=67 // pred_region
          %p437 = scmp.lt.s32.totalorder %s25, 1
          %s438 = scalar_select %p437, %s25, 1
          %s439 = smul.addr %s438, 54
          %s440 = smul.addr %s439, 8
          %s441 = scalar_lea.vmem %s0, %s440
        $region72: #{tpu_custom_call.1} parent=67 // pred_fallthru
          _
        // Predicated region
        $region73: #{tpu_custom_call.1} parent=67 // pred_check
          %p442 = pneg %p71
        $region74: #{tpu_custom_call.1} parent=67 // pred_check_branch
          %444 = sbr.rel (%p442) target = $region76
        $region75: #{tpu_custom_call.1} parent=67 // pred_region
          %p445 = scmp.lt.s32.totalorder %s25, 1
          %s446 = scalar_select %p445, %s25, 1
          %s447 = smul.addr %s446, 2
          %s448 = smul.addr %s447, 8
          %s449 = scalar_lea.vmem %s1, %s448
        $region76: #{tpu_custom_call.1} parent=67 // pred_fallthru
          _
      $region68: #{tpu_custom_call.1} parent=5 // pred_fallthru
        _
      %p450 = scmp.le.s32.totalorder 1, %s25
      %p451 = scmp.lt.s32.totalorder %s25, 3
      %p452 = pnand %p450, %p451
      %p453 = pneg %p452
      // Predicated region
      $region77: #{tpu_custom_call.1} parent=5 // pred_check
        _
      $region78: #{tpu_custom_call.1} parent=5 // pred_check_branch
        %455 = sbr.rel (%p452) target = $region80
      $region79: #{tpu_custom_call.1} parent=5 // pred_region
        %s456 = ssub.s32 %s25, 1
        %p457 = scmp.lt.s32.totalorder %s30, 1
        %s458 = scalar_select %p457, %s30, 1
        %s459 = smul.addr %s458, 54
        %s460 = smul.addr %s459, 8
        %s461 = scalar_lea.vmem %s0, %s460
        %p462 = pneg %p51
        %p463 = pneg %p48
        %p464 = scmp.lt.s32.totalorder %s30, 1
        %s465 = scalar_select %p464, %s30, 1
        %s466 = smul.addr %s465, 2
        %s467 = smul.addr %s466, 8
        %s468 = scalar_lea.vmem %s1, %s467
        %p469 = pneg %p77
        %p470 = pneg %p74
        %p471 = pneg %p98
        %p472 = pneg %p95
        %p473 = pneg %p119
        %p474 = pneg %p116
        %p475 = pneg %p140
        %p476 = pneg %p137
        %p477 = pneg %p161
        %p478 = pneg %p158
        %p479 = pneg %p182
        %p480 = pneg %p179
        %p481 = pneg %p203
        %p482 = pneg %p200
        %p483 = pneg %p224
        %p484 = pneg %p221
        %p485 = pneg %p245
        %p486 = pneg %p242
        %p487 = pneg %p266
        %p488 = pneg %p263
        %p489 = pneg %p287
        %p490 = pneg %p284
        %p491 = pneg %p308
        %p492 = pneg %p305
        %p493 = pneg %p329
        %p494 = pneg %p326
        %p495 = pneg %p350
        %p496 = pneg %p347
        %p497 = pneg %p376
        %p498 = pneg %p373
        %s499 = sand.u32 %s363, 1
        %s500 = scalar_lea.sflag [#allocation7], %s499
        %s501 = sand.u32 %s363, 1
        %s502 = smul.addr %s501, 16
        %s503 = scalar_lea.vmem [#allocation6], %s502
        %p504 = scmp.lt.s32.totalorder %s30, 1
        %s505 = scalar_select %p504, %s30, 1
        %s506 = smul.addr %s505, 54
        %s507 = smul.addr %s506, 8
        %s508 = scalar_lea.vmem %s0, %s507
        %p509 = scmp.lt.s32.totalorder %s30, 1
        %s510 = scalar_select %p509, %s30, 1
        %s511 = smul.addr %s510, 2
        %s512 = smul.addr %s511, 8
        %s513 = scalar_lea.vmem %s1, %s512
        %v514 = vld [vmem:[%s508] sm:$0xff]
        %v515 = vld [vmem:[%s508 + $0x8] sm:$0xff]
        %v516 = vld [vmem:[%s508 + $0x18] sm:$0xff]
        %v517 = vld [vmem:[%s508 + $0x20] sm:$0xff]
        %v518 = vld [vmem:[%s508 + $0x30] sm:$0xff]
        %v519 = vld [vmem:[%s508 + $0x38] sm:$0xff]
        %v520 = vld [vmem:[%s508 + $0x48] sm:$0xff]
        %v521 = vld [vmem:[%s508 + $0x50] sm:$0xff]
        %v522 = vld [vmem:[%s508 + $0x60] sm:$0xff]
        %v523 = vld [vmem:[%s508 + $0x68] sm:$0xff]
        %v524 = vld [vmem:[%s508 + $0x78] sm:$0xff]
        %v525 = vld [vmem:[%s508 + $0x80] sm:$0xff]
        %v526 = vld [vmem:[%s508 + $0x90] sm:$0xff]
        %v527 = vld [vmem:[%s508 + $0x98] sm:$0xff]
        %v528 = vld [vmem:[%s508 + $0xa8] sm:$0xff]
        %v529 = vld [vmem:[%s508 + $0xb0] sm:$0xff]
        %v530 = vld [vmem:[%s508 + $0xc0] sm:$0xff]
        %v531 = vld [vmem:[%s508 + $0xc8] sm:$0xff]
        %v532 = vld [vmem:[%s508 + $0xd8] sm:$0xff]
        %v533 = vld [vmem:[%s508 + $0xe0] sm:$0xff]
        %v534 = vld [vmem:[%s508 + $0xf0] sm:$0xff]
        %v535 = vld [vmem:[%s508 + $0xf8] sm:$0xff]
        %v536 = vld [vmem:[%s508 + $0x108] sm:$0xff]
        %v537 = vld [vmem:[%s508 + $0x110] sm:$0xff]
        %v538 = vld [vmem:[%s508 + $0x120] sm:$0xff]
        %v539 = vld [vmem:[%s508 + $0x128] sm:$0xff]
        %v540 = vld [vmem:[%s508 + $0x138] sm:$0xff]
        %v541 = vld [vmem:[%s508 + $0x140] sm:$0xff]
        %v542 = vld [vmem:[%s508 + $0x150] sm:$0xff]
        %v543 = vld [vmem:[%s508 + $0x158] sm:$0xff]
        %v544 = vld [vmem:[%s508 + $0x168] sm:$0xff]
        %v545 = vld [vmem:[%s508 + $0x170] sm:$0xff]
        %v546 = vld [vmem:[%s508 + $0x1] sm:$0xff]
        %v547 = vld [vmem:[%s508 + $0x9] sm:$0xff]
        %v548 = vld [vmem:[%s508 + $0x19] sm:$0xff]
        %v549 = vld [vmem:[%s508 + $0x21] sm:$0xff]
        %v550 = vld [vmem:[%s508 + $0x31] sm:$0xff]
        %v551 = vld [vmem:[%s508 + $0x39] sm:$0xff]
        %v552 = vld [vmem:[%s508 + $0x49] sm:$0xff]
        %v553 = vld [vmem:[%s508 + $0x51] sm:$0xff]
        %v554 = vld [vmem:[%s508 + $0x61] sm:$0xff]
        %v555 = vld [vmem:[%s508 + $0x69] sm:$0xff]
        %v556 = vld [vmem:[%s508 + $0x79] sm:$0xff]
        %v557 = vld [vmem:[%s508 + $0x81] sm:$0xff]
        %v558 = vld [vmem:[%s508 + $0x91] sm:$0xff]
        %v559 = vld [vmem:[%s508 + $0x99] sm:$0xff]
        %v560 = vld [vmem:[%s508 + $0xa9] sm:$0xff]
        %v561 = vld [vmem:[%s508 + $0xb1] sm:$0xff]
        %v562 = vld [vmem:[%s508 + $0xc1] sm:$0xff]
        %v563 = vld [vmem:[%s508 + $0xc9] sm:$0xff]
        %v564 = vld [vmem:[%s508 + $0xd9] sm:$0xff]
        %v565 = vld [vmem:[%s508 + $0xe1] sm:$0xff]
        %v566 = vld [vmem:[%s508 + $0xf1] sm:$0xff]
        %v567 = vld [vmem:[%s508 + $0xf9] sm:$0xff]
        %v568 = vld [vmem:[%s508 + $0x109] sm:$0xff]
        %v569 = vld [vmem:[%s508 + $0x111] sm:$0xff]
        %v570 = vld [vmem:[%s508 + $0x121] sm:$0xff]
        %v571 = vld [vmem:[%s508 + $0x129] sm:$0xff]
        %v572 = vld [vmem:[%s508 + $0x139] sm:$0xff]
        %v573 = vld [vmem:[%s508 + $0x141] sm:$0xff]
        %v574 = vld [vmem:[%s508 + $0x151] sm:$0xff]
        %v575 = vld [vmem:[%s508 + $0x159] sm:$0xff]
        %v576 = vld [vmem:[%s508 + $0x169] sm:$0xff]
        %v577 = vld [vmem:[%s508 + $0x171] sm:$0xff]
        %v578 = vld [vmem:[%s508 + $0x2] sm:$0xff]
        %v579 = vld [vmem:[%s508 + $0xa] sm:$0xff]
        %v580 = vld [vmem:[%s508 + $0x1a] sm:$0xff]
        %v581 = vld [vmem:[%s508 + $0x22] sm:$0xff]
        %v582 = vld [vmem:[%s508 + $0x32] sm:$0xff]
        %v583 = vld [vmem:[%s508 + $0x3a] sm:$0xff]
        %v584 = vld [vmem:[%s508 + $0x4a] sm:$0xff]
        %v585 = vld [vmem:[%s508 + $0x52] sm:$0xff]
        %v586 = vld [vmem:[%s508 + $0x62] sm:$0xff]
        %v587 = vld [vmem:[%s508 + $0x6a] sm:$0xff]
        %v588 = vld [vmem:[%s508 + $0x7a] sm:$0xff]
        %v589 = vld [vmem:[%s508 + $0x82] sm:$0xff]
        %v590 = vld [vmem:[%s508 + $0x92] sm:$0xff]
        %v591 = vld [vmem:[%s508 + $0x9a] sm:$0xff]
        %v592 = vld [vmem:[%s508 + $0xaa] sm:$0xff]
        %v593 = vld [vmem:[%s508 + $0xb2] sm:$0xff]
        %v594 = vld [vmem:[%s508 + $0xc2] sm:$0xff]
        %v595 = vld [vmem:[%s508 + $0xca] sm:$0xff]
        %v596 = vld [vmem:[%s508 + $0xda] sm:$0xff]
        %v597 = vld [vmem:[%s508 + $0xe2] sm:$0xff]
        %v598 = vld [vmem:[%s508 + $0xf2] sm:$0xff]
        %v599 = vld [vmem:[%s508 + $0xfa] sm:$0xff]
        %v600 = vld [vmem:[%s508 + $0x10a] sm:$0xff]
        %v601 = vld [vmem:[%s508 + $0x112] sm:$0xff]
        %v602 = vld [vmem:[%s508 + $0x122] sm:$0xff]
        %v603 = vld [vmem:[%s508 + $0x12a] sm:$0xff]
        %v604 = vld [vmem:[%s508 + $0x13a] sm:$0xff]
        %v605 = vld [vmem:[%s508 + $0x142] sm:$0xff]
        %v606 = vld [vmem:[%s508 + $0x152] sm:$0xff]
        %v607 = vld [vmem:[%s508 + $0x15a] sm:$0xff]
        %v608 = vld [vmem:[%s508 + $0x16a] sm:$0xff]
        %v609 = vld [vmem:[%s508 + $0x172] sm:$0xff]
        %s610 = scalar_lea.vmem %s508, 24
        %v611 = vld [vmem:[%s610] sm:$0xff]
        %v612 = vld [vmem:[%s610 + $0x8] sm:$0xff]
        %v613 = vld [vmem:[%s610 + $0x18] sm:$0xff]
        %v614 = vld [vmem:[%s610 + $0x20] sm:$0xff]
        %v615 = vld [vmem:[%s610 + $0x30] sm:$0xff]
        %v616 = vld [vmem:[%s610 + $0x38] sm:$0xff]
        %v617 = vld [vmem:[%s610 + $0x48] sm:$0xff]
        %v618 = vld [vmem:[%s610 + $0x50] sm:$0xff]
        %v619 = vld [vmem:[%s610 + $0x60] sm:$0xff]
        %v620 = vld [vmem:[%s610 + $0x68] sm:$0xff]
        %v621 = vld [vmem:[%s610 + $0x78] sm:$0xff]
        %v622 = vld [vmem:[%s610 + $0x80] sm:$0xff]
        %v623 = vld [vmem:[%s610 + $0x90] sm:$0xff]
        %v624 = vld [vmem:[%s610 + $0x98] sm:$0xff]
        %v625 = vld [vmem:[%s610 + $0xa8] sm:$0xff]
        %v626 = vld [vmem:[%s610 + $0xb0] sm:$0xff]
        %v627 = vld [vmem:[%s610 + $0xc0] sm:$0xff]
        %v628 = vld [vmem:[%s610 + $0xc8] sm:$0xff]
        %v629 = vld [vmem:[%s610 + $0xd8] sm:$0xff]
        %v630 = vld [vmem:[%s610 + $0xe0] sm:$0xff]
        %v631 = vld [vmem:[%s610 + $0xf0] sm:$0xff]
        %v632 = vld [vmem:[%s610 + $0xf8] sm:$0xff]
        %v633 = vld [vmem:[%s610 + $0x108] sm:$0xff]
        %v634 = vld [vmem:[%s610 + $0x110] sm:$0xff]
        %v635 = vld [vmem:[%s610 + $0x120] sm:$0xff]
        %v636 = vld [vmem:[%s610 + $0x128] sm:$0xff]
        %v637 = vld [vmem:[%s610 + $0x138] sm:$0xff]
        %v638 = vld [vmem:[%s610 + $0x140] sm:$0xff]
        %v639 = vld [vmem:[%s610 + $0x150] sm:$0xff]
        %v640 = vld [vmem:[%s610 + $0x158] sm:$0xff]
        %v641 = vld [vmem:[%s610 + $0x168] sm:$0xff]
        %v642 = vld [vmem:[%s610 + $0x170] sm:$0xff]
        %v643 = vld [vmem:[%s610 + $0x1] sm:$0xff]
        %v644 = vld [vmem:[%s610 + $0x9] sm:$0xff]
        %v645 = vld [vmem:[%s610 + $0x19] sm:$0xff]
        %v646 = vld [vmem:[%s610 + $0x21] sm:$0xff]
        %v647 = vld [vmem:[%s610 + $0x31] sm:$0xff]
        %v648 = vld [vmem:[%s610 + $0x39] sm:$0xff]
        %v649 = vld [vmem:[%s610 + $0x49] sm:$0xff]
        %v650 = vld [vmem:[%s610 + $0x51] sm:$0xff]
        %v651 = vld [vmem:[%s610 + $0x61] sm:$0xff]
        %v652 = vld [vmem:[%s610 + $0x69] sm:$0xff]
        %v653 = vld [vmem:[%s610 + $0x79] sm:$0xff]
        %v654 = vld [vmem:[%s610 + $0x81] sm:$0xff]
        %v655 = vld [vmem:[%s610 + $0x91] sm:$0xff]
        %v656 = vld [vmem:[%s610 + $0x99] sm:$0xff]
        %v657 = vld [vmem:[%s610 + $0xa9] sm:$0xff]
        %v658 = vld [vmem:[%s610 + $0xb1] sm:$0xff]
        %v659 = vld [vmem:[%s610 + $0xc1] sm:$0xff]
        %v660 = vld [vmem:[%s610 + $0xc9] sm:$0xff]
        %v661 = vld [vmem:[%s610 + $0xd9] sm:$0xff]
        %v662 = vld [vmem:[%s610 + $0xe1] sm:$0xff]
        %v663 = vld [vmem:[%s610 + $0xf1] sm:$0xff]
        %v664 = vld [vmem:[%s610 + $0xf9] sm:$0xff]
        %v665 = vld [vmem:[%s610 + $0x109] sm:$0xff]
        %v666 = vld [vmem:[%s610 + $0x111] sm:$0xff]
        %v667 = vld [vmem:[%s610 + $0x121] sm:$0xff]
        %v668 = vld [vmem:[%s610 + $0x129] sm:$0xff]
        %v669 = vld [vmem:[%s610 + $0x139] sm:$0xff]
        %v670 = vld [vmem:[%s610 + $0x141] sm:$0xff]
        %v671 = vld [vmem:[%s610 + $0x151] sm:$0xff]
        %v672 = vld [vmem:[%s610 + $0x159] sm:$0xff]
        %v673 = vld [vmem:[%s610 + $0x169] sm:$0xff]
        %v674 = vld [vmem:[%s610 + $0x171] sm:$0xff]
        %v675 = vld [vmem:[%s610 + $0x2] sm:$0xff]
        %v676 = vld [vmem:[%s610 + $0xa] sm:$0xff]
        %v677 = vld [vmem:[%s610 + $0x1a] sm:$0xff]
        %v678 = vld [vmem:[%s610 + $0x22] sm:$0xff]
        %v679 = vld [vmem:[%s610 + $0x32] sm:$0xff]
        %v680 = vld [vmem:[%s610 + $0x3a] sm:$0xff]
        %v681 = vld [vmem:[%s610 + $0x4a] sm:$0xff]
        %v682 = vld [vmem:[%s610 + $0x52] sm:$0xff]
        %v683 = vld [vmem:[%s610 + $0x62] sm:$0xff]
        %v684 = vld [vmem:[%s610 + $0x6a] sm:$0xff]
        %v685 = vld [vmem:[%s610 + $0x7a] sm:$0xff]
        %v686 = vld [vmem:[%s610 + $0x82] sm:$0xff]
        %v687 = vld [vmem:[%s610 + $0x92] sm:$0xff]
        %v688 = vld [vmem:[%s610 + $0x9a] sm:$0xff]
        %v689 = vld [vmem:[%s610 + $0xaa] sm:$0xff]
        %v690 = vld [vmem:[%s610 + $0xb2] sm:$0xff]
        %v691 = vld [vmem:[%s610 + $0xc2] sm:$0xff]
        %v692 = vld [vmem:[%s610 + $0xca] sm:$0xff]
        %v693 = vld [vmem:[%s610 + $0xda] sm:$0xff]
        %v694 = vld [vmem:[%s610 + $0xe2] sm:$0xff]
        %v695 = vld [vmem:[%s610 + $0xf2] sm:$0xff]
        %v696 = vld [vmem:[%s610 + $0xfa] sm:$0xff]
        %v697 = vld [vmem:[%s610 + $0x10a] sm:$0xff]
        %v698 = vld [vmem:[%s610 + $0x112] sm:$0xff]
        %v699 = vld [vmem:[%s610 + $0x122] sm:$0xff]
        %v700 = vld [vmem:[%s610 + $0x12a] sm:$0xff]
        %v701 = vld [vmem:[%s610 + $0x13a] sm:$0xff]
        %v702 = vld [vmem:[%s610 + $0x142] sm:$0xff]
        %v703 = vld [vmem:[%s610 + $0x152] sm:$0xff]
        %v704 = vld [vmem:[%s610 + $0x15a] sm:$0xff]
        %v705 = vld [vmem:[%s610 + $0x16a] sm:$0xff]
        %v706 = vld [vmem:[%s610 + $0x172] sm:$0xff]
        %s707 = scalar_lea.vmem %s508, 48
        %v708 = vld [vmem:[%s707] sm:$0xff]
        %v709 = vld [vmem:[%s707 + $0x8] sm:$0xff]
        %v710 = vld [vmem:[%s707 + $0x18] sm:$0xff]
        %v711 = vld [vmem:[%s707 + $0x20] sm:$0xff]
        %v712 = vld [vmem:[%s707 + $0x30] sm:$0xff]
        %v713 = vld [vmem:[%s707 + $0x38] sm:$0xff]
        %v714 = vld [vmem:[%s707 + $0x48] sm:$0xff]
        %v715 = vld [vmem:[%s707 + $0x50] sm:$0xff]
        %v716 = vld [vmem:[%s707 + $0x60] sm:$0xff]
        %v717 = vld [vmem:[%s707 + $0x68] sm:$0xff]
        %v718 = vld [vmem:[%s707 + $0x78] sm:$0xff]
        %v719 = vld [vmem:[%s707 + $0x80] sm:$0xff]
        %v720 = vld [vmem:[%s707 + $0x90] sm:$0xff]
        %v721 = vld [vmem:[%s707 + $0x98] sm:$0xff]
        %v722 = vld [vmem:[%s707 + $0xa8] sm:$0xff]
        %v723 = vld [vmem:[%s707 + $0xb0] sm:$0xff]
        %v724 = vld [vmem:[%s707 + $0xc0] sm:$0xff]
        %v725 = vld [vmem:[%s707 + $0xc8] sm:$0xff]
        %v726 = vld [vmem:[%s707 + $0xd8] sm:$0xff]
        %v727 = vld [vmem:[%s707 + $0xe0] sm:$0xff]
        %v728 = vld [vmem:[%s707 + $0xf0] sm:$0xff]
        %v729 = vld [vmem:[%s707 + $0xf8] sm:$0xff]
        %v730 = vld [vmem:[%s707 + $0x108] sm:$0xff]
        %v731 = vld [vmem:[%s707 + $0x110] sm:$0xff]
        %v732 = vld [vmem:[%s707 + $0x120] sm:$0xff]
        %v733 = vld [vmem:[%s707 + $0x128] sm:$0xff]
        %v734 = vld [vmem:[%s707 + $0x138] sm:$0xff]
        %v735 = vld [vmem:[%s707 + $0x140] sm:$0xff]
        %v736 = vld [vmem:[%s707 + $0x150] sm:$0xff]
        %v737 = vld [vmem:[%s707 + $0x158] sm:$0xff]
        %v738 = vld [vmem:[%s707 + $0x168] sm:$0xff]
        %v739 = vld [vmem:[%s707 + $0x170] sm:$0xff]
        %v740 = vld [vmem:[%s707 + $0x1] sm:$0xff]
        %v741 = vld [vmem:[%s707 + $0x9] sm:$0xff]
        %v742 = vld [vmem:[%s707 + $0x19] sm:$0xff]
        %v743 = vld [vmem:[%s707 + $0x21] sm:$0xff]
        %v744 = vld [vmem:[%s707 + $0x31] sm:$0xff]
        %v745 = vld [vmem:[%s707 + $0x39] sm:$0xff]
        %v746 = vld [vmem:[%s707 + $0x49] sm:$0xff]
        %v747 = vld [vmem:[%s707 + $0x51] sm:$0xff]
        %v748 = vld [vmem:[%s707 + $0x61] sm:$0xff]
        %v749 = vld [vmem:[%s707 + $0x69] sm:$0xff]
        %v750 = vld [vmem:[%s707 + $0x79] sm:$0xff]
        %v751 = vld [vmem:[%s707 + $0x81] sm:$0xff]
        %v752 = vld [vmem:[%s707 + $0x91] sm:$0xff]
        %v753 = vld [vmem:[%s707 + $0x99] sm:$0xff]
        %v754 = vld [vmem:[%s707 + $0xa9] sm:$0xff]
        %v755 = vld [vmem:[%s707 + $0xb1] sm:$0xff]
        %v756 = vld [vmem:[%s707 + $0xc1] sm:$0xff]
        %v757 = vld [vmem:[%s707 + $0xc9] sm:$0xff]
        %v758 = vld [vmem:[%s707 + $0xd9] sm:$0xff]
        %v759 = vld [vmem:[%s707 + $0xe1] sm:$0xff]
        %v760 = vld [vmem:[%s707 + $0xf1] sm:$0xff]
        %v761 = vld [vmem:[%s707 + $0xf9] sm:$0xff]
        %v762 = vld [vmem:[%s707 + $0x109] sm:$0xff]
        %v763 = vld [vmem:[%s707 + $0x111] sm:$0xff]
        %v764 = vld [vmem:[%s707 + $0x121] sm:$0xff]
        %v765 = vld [vmem:[%s707 + $0x129] sm:$0xff]
        %v766 = vld [vmem:[%s707 + $0x139] sm:$0xff]
        %v767 = vld [vmem:[%s707 + $0x141] sm:$0xff]
        %v768 = vld [vmem:[%s707 + $0x151] sm:$0xff]
        %v769 = vld [vmem:[%s707 + $0x159] sm:$0xff]
        %v770 = vld [vmem:[%s707 + $0x169] sm:$0xff]
        %v771 = vld [vmem:[%s707 + $0x171] sm:$0xff]
        %v772 = vld [vmem:[%s707 + $0x2] sm:$0xff]
        %v773 = vld [vmem:[%s707 + $0xa] sm:$0xff]
        %v774 = vld [vmem:[%s707 + $0x1a] sm:$0xff]
        %v775 = vld [vmem:[%s707 + $0x22] sm:$0xff]
        %v776 = vld [vmem:[%s707 + $0x32] sm:$0xff]
        %v777 = vld [vmem:[%s707 + $0x3a] sm:$0xff]
        %v778 = vld [vmem:[%s707 + $0x4a] sm:$0xff]
        %v779 = vld [vmem:[%s707 + $0x52] sm:$0xff]
        %v780 = vld [vmem:[%s707 + $0x62] sm:$0xff]
        %v781 = vld [vmem:[%s707 + $0x6a] sm:$0xff]
        %v782 = vld [vmem:[%s707 + $0x7a] sm:$0xff]
        %v783 = vld [vmem:[%s707 + $0x82] sm:$0xff]
        %v784 = vld [vmem:[%s707 + $0x92] sm:$0xff]
        %v785 = vld [vmem:[%s707 + $0x9a] sm:$0xff]
        %v786 = vld [vmem:[%s707 + $0xaa] sm:$0xff]
        %v787 = vld [vmem:[%s707 + $0xb2] sm:$0xff]
        %v788 = vld [vmem:[%s707 + $0xc2] sm:$0xff]
        %v789 = vld [vmem:[%s707 + $0xca] sm:$0xff]
        %v790 = vld [vmem:[%s707 + $0xda] sm:$0xff]
        %v791 = vld [vmem:[%s707 + $0xe2] sm:$0xff]
        %v792 = vld [vmem:[%s707 + $0xf2] sm:$0xff]
        %v793 = vld [vmem:[%s707 + $0xfa] sm:$0xff]
        %v794 = vld [vmem:[%s707 + $0x10a] sm:$0xff]
        %v795 = vld [vmem:[%s707 + $0x112] sm:$0xff]
        %v796 = vld [vmem:[%s707 + $0x122] sm:$0xff]
        %v797 = vld [vmem:[%s707 + $0x12a] sm:$0xff]
        %v798 = vld [vmem:[%s707 + $0x13a] sm:$0xff]
        %v799 = vld [vmem:[%s707 + $0x142] sm:$0xff]
        %v800 = vld [vmem:[%s707 + $0x152] sm:$0xff]
        %v801 = vld [vmem:[%s707 + $0x15a] sm:$0xff]
        %v802 = vld [vmem:[%s707 + $0x16a] sm:$0xff]
        %v803 = vld [vmem:[%s707 + $0x172] sm:$0xff]
        %836 = vrot.lane.b32.xlu0 %v546, 8
        %v837 = vpop.permute.xlu0 %836
        %838 = vrot.lane.b32.xlu0 %v547, 8
        %v839 = vpop.permute.xlu0 %838
        %840 = vrot.lane.b32.xlu0 %v548, 8
        %v841 = vpop.permute.xlu0 %840
        %842 = vrot.lane.b32.xlu0 %v549, 8
        %v843 = vpop.permute.xlu0 %842
        %844 = vrot.lane.b32.xlu0 %v550, 8
        %v845 = vpop.permute.xlu0 %844
        %846 = vrot.lane.b32.xlu0 %v551, 8
        %v847 = vpop.permute.xlu0 %846
        %848 = vrot.lane.b32.xlu0 %v552, 8
        %v849 = vpop.permute.xlu0 %848
        %850 = vrot.lane.b32.xlu0 %v553, 8
        %v851 = vpop.permute.xlu0 %850
        %852 = vrot.lane.b32.xlu0 %v554, 8
        %v853 = vpop.permute.xlu0 %852
        %854 = vrot.lane.b32.xlu0 %v555, 8
        %v855 = vpop.permute.xlu0 %854
        %856 = vrot.lane.b32.xlu0 %v556, 8
        %v857 = vpop.permute.xlu0 %856
        %858 = vrot.lane.b32.xlu0 %v557, 8
        %v859 = vpop.permute.xlu0 %858
        %860 = vrot.lane.b32.xlu0 %v558, 8
        %v861 = vpop.permute.xlu0 %860
        %862 = vrot.lane.b32.xlu0 %v559, 8
        %v863 = vpop.permute.xlu0 %862
        %864 = vrot.lane.b32.xlu0 %v560, 8
        %v865 = vpop.permute.xlu0 %864
        %866 = vrot.lane.b32.xlu0 %v561, 8
        %v867 = vpop.permute.xlu0 %866
        %868 = vrot.lane.b32.xlu0 %v562, 8
        %v869 = vpop.permute.xlu0 %868
        %870 = vrot.lane.b32.xlu0 %v563, 8
        %v871 = vpop.permute.xlu0 %870
        %872 = vrot.lane.b32.xlu0 %v564, 8
        %v873 = vpop.permute.xlu0 %872
        %874 = vrot.lane.b32.xlu0 %v565, 8
        %v875 = vpop.permute.xlu0 %874
        %876 = vrot.lane.b32.xlu0 %v566, 8
        %v877 = vpop.permute.xlu0 %876
        %878 = vrot.lane.b32.xlu0 %v567, 8
        %v879 = vpop.permute.xlu0 %878
        %880 = vrot.lane.b32.xlu0 %v568, 8
        %v881 = vpop.permute.xlu0 %880
        %882 = vrot.lane.b32.xlu0 %v569, 8
        %v883 = vpop.permute.xlu0 %882
        %884 = vrot.lane.b32.xlu0 %v570, 8
        %v885 = vpop.permute.xlu0 %884
        %886 = vrot.lane.b32.xlu0 %v571, 8
        %v887 = vpop.permute.xlu0 %886
        %888 = vrot.lane.b32.xlu0 %v572, 8
        %v889 = vpop.permute.xlu0 %888
        %890 = vrot.lane.b32.xlu0 %v573, 8
        %v891 = vpop.permute.xlu0 %890
        %892 = vrot.lane.b32.xlu0 %v574, 8
        %v893 = vpop.permute.xlu0 %892
        %894 = vrot.lane.b32.xlu0 %v575, 8
        %v895 = vpop.permute.xlu0 %894
        %896 = vrot.lane.b32.xlu0 %v576, 8
        %v897 = vpop.permute.xlu0 %896
        %898 = vrot.lane.b32.xlu0 %v577, 8
        %v899 = vpop.permute.xlu0 %898
        %964 = vrot.lane.b32.xlu0 %v578, 16
        %v965 = vpop.permute.xlu0 %964
        %966 = vrot.lane.b32.xlu0 %v579, 16
        %v967 = vpop.permute.xlu0 %966
        %968 = vrot.lane.b32.xlu0 %v580, 16
        %v969 = vpop.permute.xlu0 %968
        %970 = vrot.lane.b32.xlu0 %v581, 16
        %v971 = vpop.permute.xlu0 %970
        %972 = vrot.lane.b32.xlu0 %v582, 16
        %v973 = vpop.permute.xlu0 %972
        %974 = vrot.lane.b32.xlu0 %v583, 16
        %v975 = vpop.permute.xlu0 %974
        %976 = vrot.lane.b32.xlu0 %v584, 16
        %v977 = vpop.permute.xlu0 %976
        %978 = vrot.lane.b32.xlu0 %v585, 16
        %v979 = vpop.permute.xlu0 %978
        %980 = vrot.lane.b32.xlu0 %v586, 16
        %v981 = vpop.permute.xlu0 %980
        %982 = vrot.lane.b32.xlu0 %v587, 16
        %v983 = vpop.permute.xlu0 %982
        %984 = vrot.lane.b32.xlu0 %v588, 16
        %v985 = vpop.permute.xlu0 %984
        %986 = vrot.lane.b32.xlu0 %v589, 16
        %v987 = vpop.permute.xlu0 %986
        %988 = vrot.lane.b32.xlu0 %v590, 16
        %v989 = vpop.permute.xlu0 %988
        %990 = vrot.lane.b32.xlu0 %v591, 16
        %v991 = vpop.permute.xlu0 %990
        %992 = vrot.lane.b32.xlu0 %v592, 16
        %v993 = vpop.permute.xlu0 %992
        %994 = vrot.lane.b32.xlu0 %v593, 16
        %v995 = vpop.permute.xlu0 %994
        %996 = vrot.lane.b32.xlu0 %v594, 16
        %v997 = vpop.permute.xlu0 %996
        %998 = vrot.lane.b32.xlu0 %v595, 16
        %v999 = vpop.permute.xlu0 %998
        %1000 = vrot.lane.b32.xlu0 %v596, 16
        %v1001 = vpop.permute.xlu0 %1000
        %1002 = vrot.lane.b32.xlu0 %v597, 16
        %v1003 = vpop.permute.xlu0 %1002
        %1004 = vrot.lane.b32.xlu0 %v598, 16
        %v1005 = vpop.permute.xlu0 %1004
        %1006 = vrot.lane.b32.xlu0 %v599, 16
        %v1007 = vpop.permute.xlu0 %1006
        %1008 = vrot.lane.b32.xlu0 %v600, 16
        %v1009 = vpop.permute.xlu0 %1008
        %1010 = vrot.lane.b32.xlu0 %v601, 16
        %v1011 = vpop.permute.xlu0 %1010
        %1012 = vrot.lane.b32.xlu0 %v602, 16
        %v1013 = vpop.permute.xlu0 %1012
        %1014 = vrot.lane.b32.xlu0 %v603, 16
        %v1015 = vpop.permute.xlu0 %1014
        %1016 = vrot.lane.b32.xlu0 %v604, 16
        %v1017 = vpop.permute.xlu0 %1016
        %1018 = vrot.lane.b32.xlu0 %v605, 16
        %v1019 = vpop.permute.xlu0 %1018
        %1020 = vrot.lane.b32.xlu0 %v606, 16
        %v1021 = vpop.permute.xlu0 %1020
        %1022 = vrot.lane.b32.xlu0 %v607, 16
        %v1023 = vpop.permute.xlu0 %1022
        %1024 = vrot.lane.b32.xlu0 %v608, 16
        %v1025 = vpop.permute.xlu0 %1024
        %1026 = vrot.lane.b32.xlu0 %v609, 16
        %v1027 = vpop.permute.xlu0 %1026
        %1092 = vrot.lane.b32.xlu0 %v611, 24
        %v1093 = vpop.permute.xlu0 %1092
        %1094 = vrot.lane.b32.xlu0 %v612, 24
        %v1095 = vpop.permute.xlu0 %1094
        %1096 = vrot.lane.b32.xlu0 %v613, 24
        %v1097 = vpop.permute.xlu0 %1096
        %1098 = vrot.lane.b32.xlu0 %v614, 24
        %v1099 = vpop.permute.xlu0 %1098
        %1100 = vrot.lane.b32.xlu0 %v615, 24
        %v1101 = vpop.permute.xlu0 %1100
        %1102 = vrot.lane.b32.xlu0 %v616, 24
        %v1103 = vpop.permute.xlu0 %1102
        %1104 = vrot.lane.b32.xlu0 %v617, 24
        %v1105 = vpop.permute.xlu0 %1104
        %1106 = vrot.lane.b32.xlu0 %v618, 24
        %v1107 = vpop.permute.xlu0 %1106
        %1108 = vrot.lane.b32.xlu0 %v619, 24
        %v1109 = vpop.permute.xlu0 %1108
        %1110 = vrot.lane.b32.xlu0 %v620, 24
        %v1111 = vpop.permute.xlu0 %1110
        %1112 = vrot.lane.b32.xlu0 %v621, 24
        %v1113 = vpop.permute.xlu0 %1112
        %1114 = vrot.lane.b32.xlu0 %v622, 24
        %v1115 = vpop.permute.xlu0 %1114
        %1116 = vrot.lane.b32.xlu0 %v623, 24
        %v1117 = vpop.permute.xlu0 %1116
        %1118 = vrot.lane.b32.xlu0 %v624, 24
        %v1119 = vpop.permute.xlu0 %1118
        %1120 = vrot.lane.b32.xlu0 %v625, 24
        %v1121 = vpop.permute.xlu0 %1120
        %1122 = vrot.lane.b32.xlu0 %v626, 24
        %v1123 = vpop.permute.xlu0 %1122
        %1124 = vrot.lane.b32.xlu0 %v627, 24
        %v1125 = vpop.permute.xlu0 %1124
        %1126 = vrot.lane.b32.xlu0 %v628, 24
        %v1127 = vpop.permute.xlu0 %1126
        %1128 = vrot.lane.b32.xlu0 %v629, 24
        %v1129 = vpop.permute.xlu0 %1128
        %1130 = vrot.lane.b32.xlu0 %v630, 24
        %v1131 = vpop.permute.xlu0 %1130
        %1132 = vrot.lane.b32.xlu0 %v631, 24
        %v1133 = vpop.permute.xlu0 %1132
        %1134 = vrot.lane.b32.xlu0 %v632, 24
        %v1135 = vpop.permute.xlu0 %1134
        %1136 = vrot.lane.b32.xlu0 %v633, 24
        %v1137 = vpop.permute.xlu0 %1136
        %1138 = vrot.lane.b32.xlu0 %v634, 24
        %v1139 = vpop.permute.xlu0 %1138
        %1140 = vrot.lane.b32.xlu0 %v635, 24
        %v1141 = vpop.permute.xlu0 %1140
        %1142 = vrot.lane.b32.xlu0 %v636, 24
        %v1143 = vpop.permute.xlu0 %1142
        %1144 = vrot.lane.b32.xlu0 %v637, 24
        %v1145 = vpop.permute.xlu0 %1144
        %1146 = vrot.lane.b32.xlu0 %v638, 24
        %v1147 = vpop.permute.xlu0 %1146
        %1148 = vrot.lane.b32.xlu0 %v639, 24
        %v1149 = vpop.permute.xlu0 %1148
        %1150 = vrot.lane.b32.xlu0 %v640, 24
        %v1151 = vpop.permute.xlu0 %1150
        %1152 = vrot.lane.b32.xlu0 %v641, 24
        %v1153 = vpop.permute.xlu0 %1152
        %1154 = vrot.lane.b32.xlu0 %v642, 24
        %v1155 = vpop.permute.xlu0 %1154
        %1220 = vrot.lane.b32.xlu0 %v643, 32
        %v1221 = vpop.permute.xlu0 %1220
        %1222 = vrot.lane.b32.xlu0 %v644, 32
        %v1223 = vpop.permute.xlu0 %1222
        %1224 = vrot.lane.b32.xlu0 %v645, 32
        %v1225 = vpop.permute.xlu0 %1224
        %1226 = vrot.lane.b32.xlu0 %v646, 32
        %v1227 = vpop.permute.xlu0 %1226
        %1228 = vrot.lane.b32.xlu0 %v647, 32
        %v1229 = vpop.permute.xlu0 %1228
        %1230 = vrot.lane.b32.xlu0 %v648, 32
        %v1231 = vpop.permute.xlu0 %1230
        %1232 = vrot.lane.b32.xlu0 %v649, 32
        %v1233 = vpop.permute.xlu0 %1232
        %1234 = vrot.lane.b32.xlu0 %v650, 32
        %v1235 = vpop.permute.xlu0 %1234
        %1236 = vrot.lane.b32.xlu0 %v651, 32
        %v1237 = vpop.permute.xlu0 %1236
        %1238 = vrot.lane.b32.xlu0 %v652, 32
        %v1239 = vpop.permute.xlu0 %1238
        %1240 = vrot.lane.b32.xlu0 %v653, 32
        %v1241 = vpop.permute.xlu0 %1240
        %1242 = vrot.lane.b32.xlu0 %v654, 32
        %v1243 = vpop.permute.xlu0 %1242
        %1244 = vrot.lane.b32.xlu0 %v655, 32
        %v1245 = vpop.permute.xlu0 %1244
        %1246 = vrot.lane.b32.xlu0 %v656, 32
        %v1247 = vpop.permute.xlu0 %1246
        %1248 = vrot.lane.b32.xlu0 %v657, 32
        %v1249 = vpop.permute.xlu0 %1248
        %1250 = vrot.lane.b32.xlu0 %v658, 32
        %v1251 = vpop.permute.xlu0 %1250
        %1252 = vrot.lane.b32.xlu0 %v659, 32
        %v1253 = vpop.permute.xlu0 %1252
        %1254 = vrot.lane.b32.xlu0 %v660, 32
        %v1255 = vpop.permute.xlu0 %1254
        %1256 = vrot.lane.b32.xlu0 %v661, 32
        %v1257 = vpop.permute.xlu0 %1256
        %1258 = vrot.lane.b32.xlu0 %v662, 32
        %v1259 = vpop.permute.xlu0 %1258
        %1260 = vrot.lane.b32.xlu0 %v663, 32
        %v1261 = vpop.permute.xlu0 %1260
        %1262 = vrot.lane.b32.xlu0 %v664, 32
        %v1263 = vpop.permute.xlu0 %1262
        %1264 = vrot.lane.b32.xlu0 %v665, 32
        %v1265 = vpop.permute.xlu0 %1264
        %1266 = vrot.lane.b32.xlu0 %v666, 32
        %v1267 = vpop.permute.xlu0 %1266
        %1268 = vrot.lane.b32.xlu0 %v667, 32
        %v1269 = vpop.permute.xlu0 %1268
        %1270 = vrot.lane.b32.xlu0 %v668, 32
        %v1271 = vpop.permute.xlu0 %1270
        %1272 = vrot.lane.b32.xlu0 %v669, 32
        %v1273 = vpop.permute.xlu0 %1272
        %1274 = vrot.lane.b32.xlu0 %v670, 32
        %v1275 = vpop.permute.xlu0 %1274
        %1276 = vrot.lane.b32.xlu0 %v671, 32
        %v1277 = vpop.permute.xlu0 %1276
        %1278 = vrot.lane.b32.xlu0 %v672, 32
        %v1279 = vpop.permute.xlu0 %1278
        %1280 = vrot.lane.b32.xlu0 %v673, 32
        %v1281 = vpop.permute.xlu0 %1280
        %1282 = vrot.lane.b32.xlu0 %v674, 32
        %v1283 = vpop.permute.xlu0 %1282
        %1348 = vrot.lane.b32.xlu0 %v675, 40
        %v1349 = vpop.permute.xlu0 %1348
        %1350 = vrot.lane.b32.xlu0 %v676, 40
        %v1351 = vpop.permute.xlu0 %1350
        %1352 = vrot.lane.b32.xlu0 %v677, 40
        %v1353 = vpop.permute.xlu0 %1352
        %1354 = vrot.lane.b32.xlu0 %v678, 40
        %v1355 = vpop.permute.xlu0 %1354
        %1356 = vrot.lane.b32.xlu0 %v679, 40
        %v1357 = vpop.permute.xlu0 %1356
        %1358 = vrot.lane.b32.xlu0 %v680, 40
        %v1359 = vpop.permute.xlu0 %1358
        %1360 = vrot.lane.b32.xlu0 %v681, 40
        %v1361 = vpop.permute.xlu0 %1360
        %1362 = vrot.lane.b32.xlu0 %v682, 40
        %v1363 = vpop.permute.xlu0 %1362
        %1364 = vrot.lane.b32.xlu0 %v683, 40
        %v1365 = vpop.permute.xlu0 %1364
        %1366 = vrot.lane.b32.xlu0 %v684, 40
        %v1367 = vpop.permute.xlu0 %1366
        %1368 = vrot.lane.b32.xlu0 %v685, 40
        %v1369 = vpop.permute.xlu0 %1368
        %1370 = vrot.lane.b32.xlu0 %v686, 40
        %v1371 = vpop.permute.xlu0 %1370
        %1372 = vrot.lane.b32.xlu0 %v687, 40
        %v1373 = vpop.permute.xlu0 %1372
        %1374 = vrot.lane.b32.xlu0 %v688, 40
        %v1375 = vpop.permute.xlu0 %1374
        %1376 = vrot.lane.b32.xlu0 %v689, 40
        %v1377 = vpop.permute.xlu0 %1376
        %1378 = vrot.lane.b32.xlu0 %v690, 40
        %v1379 = vpop.permute.xlu0 %1378
        %1380 = vrot.lane.b32.xlu0 %v691, 40
        %v1381 = vpop.permute.xlu0 %1380
        %1382 = vrot.lane.b32.xlu0 %v692, 40
        %v1383 = vpop.permute.xlu0 %1382
        %1384 = vrot.lane.b32.xlu0 %v693, 40
        %v1385 = vpop.permute.xlu0 %1384
        %1386 = vrot.lane.b32.xlu0 %v694, 40
        %v1387 = vpop.permute.xlu0 %1386
        %1388 = vrot.lane.b32.xlu0 %v695, 40
        %v1389 = vpop.permute.xlu0 %1388
        %1390 = vrot.lane.b32.xlu0 %v696, 40
        %v1391 = vpop.permute.xlu0 %1390
        %1392 = vrot.lane.b32.xlu0 %v697, 40
        %v1393 = vpop.permute.xlu0 %1392
        %1394 = vrot.lane.b32.xlu0 %v698, 40
        %v1395 = vpop.permute.xlu0 %1394
        %1396 = vrot.lane.b32.xlu0 %v699, 40
        %v1397 = vpop.permute.xlu0 %1396
        %1398 = vrot.lane.b32.xlu0 %v700, 40
        %v1399 = vpop.permute.xlu0 %1398
        %1400 = vrot.lane.b32.xlu0 %v701, 40
        %v1401 = vpop.permute.xlu0 %1400
        %1402 = vrot.lane.b32.xlu0 %v702, 40
        %v1403 = vpop.permute.xlu0 %1402
        %1404 = vrot.lane.b32.xlu0 %v703, 40
        %v1405 = vpop.permute.xlu0 %1404
        %1406 = vrot.lane.b32.xlu0 %v704, 40
        %v1407 = vpop.permute.xlu0 %1406
        %1408 = vrot.lane.b32.xlu0 %v705, 40
        %v1409 = vpop.permute.xlu0 %1408
        %1410 = vrot.lane.b32.xlu0 %v706, 40
        %v1411 = vpop.permute.xlu0 %1410
        %1476 = vrot.lane.b32.xlu0 %v708, 48
        %v1477 = vpop.permute.xlu0 %1476
        %1478 = vrot.lane.b32.xlu0 %v709, 48
        %v1479 = vpop.permute.xlu0 %1478
        %1480 = vrot.lane.b32.xlu0 %v710, 48
        %v1481 = vpop.permute.xlu0 %1480
        %1482 = vrot.lane.b32.xlu0 %v711, 48
        %v1483 = vpop.permute.xlu0 %1482
        %1484 = vrot.lane.b32.xlu0 %v712, 48
        %v1485 = vpop.permute.xlu0 %1484
        %1486 = vrot.lane.b32.xlu0 %v713, 48
        %v1487 = vpop.permute.xlu0 %1486
        %1488 = vrot.lane.b32.xlu0 %v714, 48
        %v1489 = vpop.permute.xlu0 %1488
        %1490 = vrot.lane.b32.xlu0 %v715, 48
        %v1491 = vpop.permute.xlu0 %1490
        %1492 = vrot.lane.b32.xlu0 %v716, 48
        %v1493 = vpop.permute.xlu0 %1492
        %1494 = vrot.lane.b32.xlu0 %v717, 48
        %v1495 = vpop.permute.xlu0 %1494
        %1496 = vrot.lane.b32.xlu0 %v718, 48
        %v1497 = vpop.permute.xlu0 %1496
        %1498 = vrot.lane.b32.xlu0 %v719, 48
        %v1499 = vpop.permute.xlu0 %1498
        %1500 = vrot.lane.b32.xlu0 %v720, 48
        %v1501 = vpop.permute.xlu0 %1500
        %1502 = vrot.lane.b32.xlu0 %v721, 48
        %v1503 = vpop.permute.xlu0 %1502
        %1504 = vrot.lane.b32.xlu0 %v722, 48
        %v1505 = vpop.permute.xlu0 %1504
        %1506 = vrot.lane.b32.xlu0 %v723, 48
        %v1507 = vpop.permute.xlu0 %1506
        %1508 = vrot.lane.b32.xlu0 %v724, 48
        %v1509 = vpop.permute.xlu0 %1508
        %1510 = vrot.lane.b32.xlu0 %v725, 48
        %v1511 = vpop.permute.xlu0 %1510
        %1512 = vrot.lane.b32.xlu0 %v726, 48
        %v1513 = vpop.permute.xlu0 %1512
        %1514 = vrot.lane.b32.xlu0 %v727, 48
        %v1515 = vpop.permute.xlu0 %1514
        %1516 = vrot.lane.b32.xlu0 %v728, 48
        %v1517 = vpop.permute.xlu0 %1516
        %1518 = vrot.lane.b32.xlu0 %v729, 48
        %v1519 = vpop.permute.xlu0 %1518
        %1520 = vrot.lane.b32.xlu0 %v730, 48
        %v1521 = vpop.permute.xlu0 %1520
        %1522 = vrot.lane.b32.xlu0 %v731, 48
        %v1523 = vpop.permute.xlu0 %1522
        %1524 = vrot.lane.b32.xlu0 %v732, 48
        %v1525 = vpop.permute.xlu0 %1524
        %1526 = vrot.lane.b32.xlu0 %v733, 48
        %v1527 = vpop.permute.xlu0 %1526
        %1528 = vrot.lane.b32.xlu0 %v734, 48
        %v1529 = vpop.permute.xlu0 %1528
        %1530 = vrot.lane.b32.xlu0 %v735, 48
        %v1531 = vpop.permute.xlu0 %1530
        %1532 = vrot.lane.b32.xlu0 %v736, 48
        %v1533 = vpop.permute.xlu0 %1532
        %1534 = vrot.lane.b32.xlu0 %v737, 48
        %v1535 = vpop.permute.xlu0 %1534
        %1536 = vrot.lane.b32.xlu0 %v738, 48
        %v1537 = vpop.permute.xlu0 %1536
        %1538 = vrot.lane.b32.xlu0 %v739, 48
        %v1539 = vpop.permute.xlu0 %1538
        %1604 = vrot.lane.b32.xlu0 %v740, 56
        %v1605 = vpop.permute.xlu0 %1604
        %1606 = vrot.lane.b32.xlu0 %v741, 56
        %v1607 = vpop.permute.xlu0 %1606
        %1608 = vrot.lane.b32.xlu0 %v742, 56
        %v1609 = vpop.permute.xlu0 %1608
        %1610 = vrot.lane.b32.xlu0 %v743, 56
        %v1611 = vpop.permute.xlu0 %1610
        %1612 = vrot.lane.b32.xlu0 %v744, 56
        %v1613 = vpop.permute.xlu0 %1612
        %1614 = vrot.lane.b32.xlu0 %v745, 56
        %v1615 = vpop.permute.xlu0 %1614
        %1616 = vrot.lane.b32.xlu0 %v746, 56
        %v1617 = vpop.permute.xlu0 %1616
        %1618 = vrot.lane.b32.xlu0 %v747, 56
        %v1619 = vpop.permute.xlu0 %1618
        %1620 = vrot.lane.b32.xlu0 %v748, 56
        %v1621 = vpop.permute.xlu0 %1620
        %1622 = vrot.lane.b32.xlu0 %v749, 56
        %v1623 = vpop.permute.xlu0 %1622
        %1624 = vrot.lane.b32.xlu0 %v750, 56
        %v1625 = vpop.permute.xlu0 %1624
        %1626 = vrot.lane.b32.xlu0 %v751, 56
        %v1627 = vpop.permute.xlu0 %1626
        %1628 = vrot.lane.b32.xlu0 %v752, 56
        %v1629 = vpop.permute.xlu0 %1628
        %1630 = vrot.lane.b32.xlu0 %v753, 56
        %v1631 = vpop.permute.xlu0 %1630
        %1632 = vrot.lane.b32.xlu0 %v754, 56
        %v1633 = vpop.permute.xlu0 %1632
        %1634 = vrot.lane.b32.xlu0 %v755, 56
        %v1635 = vpop.permute.xlu0 %1634
        %1636 = vrot.lane.b32.xlu0 %v756, 56
        %v1637 = vpop.permute.xlu0 %1636
        %1638 = vrot.lane.b32.xlu0 %v757, 56
        %v1639 = vpop.permute.xlu0 %1638
        %1640 = vrot.lane.b32.xlu0 %v758, 56
        %v1641 = vpop.permute.xlu0 %1640
        %1642 = vrot.lane.b32.xlu0 %v759, 56
        %v1643 = vpop.permute.xlu0 %1642
        %1644 = vrot.lane.b32.xlu0 %v760, 56
        %v1645 = vpop.permute.xlu0 %1644
        %1646 = vrot.lane.b32.xlu0 %v761, 56
        %v1647 = vpop.permute.xlu0 %1646
        %1648 = vrot.lane.b32.xlu0 %v762, 56
        %v1649 = vpop.permute.xlu0 %1648
        %1650 = vrot.lane.b32.xlu0 %v763, 56
        %v1651 = vpop.permute.xlu0 %1650
        %1652 = vrot.lane.b32.xlu0 %v764, 56
        %v1653 = vpop.permute.xlu0 %1652
        %1654 = vrot.lane.b32.xlu0 %v765, 56
        %v1655 = vpop.permute.xlu0 %1654
        %1656 = vrot.lane.b32.xlu0 %v766, 56
        %v1657 = vpop.permute.xlu0 %1656
        %1658 = vrot.lane.b32.xlu0 %v767, 56
        %v1659 = vpop.permute.xlu0 %1658
        %1660 = vrot.lane.b32.xlu0 %v768, 56
        %v1661 = vpop.permute.xlu0 %1660
        %1662 = vrot.lane.b32.xlu0 %v769, 56
        %v1663 = vpop.permute.xlu0 %1662
        %1664 = vrot.lane.b32.xlu0 %v770, 56
        %v1665 = vpop.permute.xlu0 %1664
        %1666 = vrot.lane.b32.xlu0 %v771, 56
        %v1667 = vpop.permute.xlu0 %1666
        %1732 = vrot.lane.b32.xlu0 %v772, 64
        %v1733 = vpop.permute.xlu0 %1732
        %1734 = vrot.lane.b32.xlu0 %v773, 64
        %v1735 = vpop.permute.xlu0 %1734
        %1736 = vrot.lane.b32.xlu0 %v774, 64
        %v1737 = vpop.permute.xlu0 %1736
        %1738 = vrot.lane.b32.xlu0 %v775, 64
        %v1739 = vpop.permute.xlu0 %1738
        %1740 = vrot.lane.b32.xlu0 %v776, 64
        %v1741 = vpop.permute.xlu0 %1740
        %1742 = vrot.lane.b32.xlu0 %v777, 64
        %v1743 = vpop.permute.xlu0 %1742
        %1744 = vrot.lane.b32.xlu0 %v778, 64
        %v1745 = vpop.permute.xlu0 %1744
        %1746 = vrot.lane.b32.xlu0 %v779, 64
        %v1747 = vpop.permute.xlu0 %1746
        %1748 = vrot.lane.b32.xlu0 %v780, 64
        %v1749 = vpop.permute.xlu0 %1748
        %1750 = vrot.lane.b32.xlu0 %v781, 64
        %v1751 = vpop.permute.xlu0 %1750
        %1752 = vrot.lane.b32.xlu0 %v782, 64
        %v1753 = vpop.permute.xlu0 %1752
        %1754 = vrot.lane.b32.xlu0 %v783, 64
        %v1755 = vpop.permute.xlu0 %1754
        %1756 = vrot.lane.b32.xlu0 %v784, 64
        %v1757 = vpop.permute.xlu0 %1756
        %1758 = vrot.lane.b32.xlu0 %v785, 64
        %v1759 = vpop.permute.xlu0 %1758
        %1760 = vrot.lane.b32.xlu0 %v786, 64
        %v1761 = vpop.permute.xlu0 %1760
        %1762 = vrot.lane.b32.xlu0 %v787, 64
        %v1763 = vpop.permute.xlu0 %1762
        %1764 = vrot.lane.b32.xlu0 %v788, 64
        %v1765 = vpop.permute.xlu0 %1764
        %1766 = vrot.lane.b32.xlu0 %v789, 64
        %v1767 = vpop.permute.xlu0 %1766
        %1768 = vrot.lane.b32.xlu0 %v790, 64
        %v1769 = vpop.permute.xlu0 %1768
        %1770 = vrot.lane.b32.xlu0 %v791, 64
        %v1771 = vpop.permute.xlu0 %1770
        %1772 = vrot.lane.b32.xlu0 %v792, 64
        %v1773 = vpop.permute.xlu0 %1772
        %1774 = vrot.lane.b32.xlu0 %v793, 64
        %v1775 = vpop.permute.xlu0 %1774
        %1776 = vrot.lane.b32.xlu0 %v794, 64
        %v1777 = vpop.permute.xlu0 %1776
        %1778 = vrot.lane.b32.xlu0 %v795, 64
        %v1779 = vpop.permute.xlu0 %1778
        %1780 = vrot.lane.b32.xlu0 %v796, 64
        %v1781 = vpop.permute.xlu0 %1780
        %1782 = vrot.lane.b32.xlu0 %v797, 64
        %v1783 = vpop.permute.xlu0 %1782
        %1784 = vrot.lane.b32.xlu0 %v798, 64
        %v1785 = vpop.permute.xlu0 %1784
        %1786 = vrot.lane.b32.xlu0 %v799, 64
        %v1787 = vpop.permute.xlu0 %1786
        %1788 = vrot.lane.b32.xlu0 %v800, 64
        %v1789 = vpop.permute.xlu0 %1788
        %1790 = vrot.lane.b32.xlu0 %v801, 64
        %v1791 = vpop.permute.xlu0 %1790
        %1792 = vrot.lane.b32.xlu0 %v802, 64
        %v1793 = vpop.permute.xlu0 %1792
        %1794 = vrot.lane.b32.xlu0 %v803, 64
        %v1795 = vpop.permute.xlu0 %1794
        %vm1828 = vcmask 64512
        %v1829 = vsel %vm1828, %v514, %v837
        %v1830 = vsel %vm1828, %v515, %v839
        %v1831 = vsel %vm1828, %v516, %v841
        %v1832 = vsel %vm1828, %v517, %v843
        %v1833 = vsel %vm1828, %v518, %v845
        %v1834 = vsel %vm1828, %v519, %v847
        %v1835 = vsel %vm1828, %v520, %v849
        %v1836 = vsel %vm1828, %v521, %v851
        %v1837 = vsel %vm1828, %v522, %v853
        %v1838 = vsel %vm1828, %v523, %v855
        %v1839 = vsel %vm1828, %v524, %v857
        %v1840 = vsel %vm1828, %v525, %v859
        %v1841 = vsel %vm1828, %v526, %v861
        %v1842 = vsel %vm1828, %v527, %v863
        %v1843 = vsel %vm1828, %v528, %v865
        %v1844 = vsel %vm1828, %v529, %v867
        %v1845 = vsel %vm1828, %v530, %v869
        %v1846 = vsel %vm1828, %v531, %v871
        %v1847 = vsel %vm1828, %v532, %v873
        %v1848 = vsel %vm1828, %v533, %v875
        %v1849 = vsel %vm1828, %v534, %v877
        %v1850 = vsel %vm1828, %v535, %v879
        %v1851 = vsel %vm1828, %v536, %v881
        %v1852 = vsel %vm1828, %v537, %v883
        %v1853 = vsel %vm1828, %v538, %v885
        %v1854 = vsel %vm1828, %v539, %v887
        %v1855 = vsel %vm1828, %v540, %v889
        %v1856 = vsel %vm1828, %v541, %v891
        %v1857 = vsel %vm1828, %v542, %v893
        %v1858 = vsel %vm1828, %v543, %v895
        %v1859 = vsel %vm1828, %v544, %v897
        %v1860 = vsel %vm1828, %v545, %v899
        %vm1861 = vcmask 130048
        %v1862 = vsel %vm1861, %v1829, %v965
        %v1863 = vsel %vm1861, %v1830, %v967
        %v1864 = vsel %vm1861, %v1831, %v969
        %v1865 = vsel %vm1861, %v1832, %v971
        %v1866 = vsel %vm1861, %v1833, %v973
        %v1867 = vsel %vm1861, %v1834, %v975
        %v1868 = vsel %vm1861, %v1835, %v977
        %v1869 = vsel %vm1861, %v1836, %v979
        %v1870 = vsel %vm1861, %v1837, %v981
        %v1871 = vsel %vm1861, %v1838, %v983
        %v1872 = vsel %vm1861, %v1839, %v985
        %v1873 = vsel %vm1861, %v1840, %v987
        %v1874 = vsel %vm1861, %v1841, %v989
        %v1875 = vsel %vm1861, %v1842, %v991
        %v1876 = vsel %vm1861, %v1843, %v993
        %v1877 = vsel %vm1861, %v1844, %v995
        %v1878 = vsel %vm1861, %v1845, %v997
        %v1879 = vsel %vm1861, %v1846, %v999
        %v1880 = vsel %vm1861, %v1847, %v1001
        %v1881 = vsel %vm1861, %v1848, %v1003
        %v1882 = vsel %vm1861, %v1849, %v1005
        %v1883 = vsel %vm1861, %v1850, %v1007
        %v1884 = vsel %vm1861, %v1851, %v1009
        %v1885 = vsel %vm1861, %v1852, %v1011
        %v1886 = vsel %vm1861, %v1853, %v1013
        %v1887 = vsel %vm1861, %v1854, %v1015
        %v1888 = vsel %vm1861, %v1855, %v1017
        %v1889 = vsel %vm1861, %v1856, %v1019
        %v1890 = vsel %vm1861, %v1857, %v1021
        %v1891 = vsel %vm1861, %v1858, %v1023
        %v1892 = vsel %vm1861, %v1859, %v1025
        %v1893 = vsel %vm1861, %v1860, %v1027
        %vm1894 = vcmask 195584
        %v1895 = vsel %vm1894, %v1862, %v1093
        %v1896 = vsel %vm1894, %v1863, %v1095
        %v1897 = vsel %vm1894, %v1864, %v1097
        %v1898 = vsel %vm1894, %v1865, %v1099
        %v1899 = vsel %vm1894, %v1866, %v1101
        %v1900 = vsel %vm1894, %v1867, %v1103
        %v1901 = vsel %vm1894, %v1868, %v1105
        %v1902 = vsel %vm1894, %v1869, %v1107
        %v1903 = vsel %vm1894, %v1870, %v1109
        %v1904 = vsel %vm1894, %v1871, %v1111
        %v1905 = vsel %vm1894, %v1872, %v1113
        %v1906 = vsel %vm1894, %v1873, %v1115
        %v1907 = vsel %vm1894, %v1874, %v1117
        %v1908 = vsel %vm1894, %v1875, %v1119
        %v1909 = vsel %vm1894, %v1876, %v1121
        %v1910 = vsel %vm1894, %v1877, %v1123
        %v1911 = vsel %vm1894, %v1878, %v1125
        %v1912 = vsel %vm1894, %v1879, %v1127
        %v1913 = vsel %vm1894, %v1880, %v1129
        %v1914 = vsel %vm1894, %v1881, %v1131
        %v1915 = vsel %vm1894, %v1882, %v1133
        %v1916 = vsel %vm1894, %v1883, %v1135
        %v1917 = vsel %vm1894, %v1884, %v1137
        %v1918 = vsel %vm1894, %v1885, %v1139
        %v1919 = vsel %vm1894, %v1886, %v1141
        %v1920 = vsel %vm1894, %v1887, %v1143
        %v1921 = vsel %vm1894, %v1888, %v1145
        %v1922 = vsel %vm1894, %v1889, %v1147
        %v1923 = vsel %vm1894, %v1890, %v1149
        %v1924 = vsel %vm1894, %v1891, %v1151
        %v1925 = vsel %vm1894, %v1892, %v1153
        %v1926 = vsel %vm1894, %v1893, %v1155
        %vm1927 = vcmask 261120
        %v1928 = vsel %vm1927, %v1895, %v1221
        %v1929 = vsel %vm1927, %v1896, %v1223
        %v1930 = vsel %vm1927, %v1897, %v1225
        %v1931 = vsel %vm1927, %v1898, %v1227
        %v1932 = vsel %vm1927, %v1899, %v1229
        %v1933 = vsel %vm1927, %v1900, %v1231
        %v1934 = vsel %vm1927, %v1901, %v1233
        %v1935 = vsel %vm1927, %v1902, %v1235
        %v1936 = vsel %vm1927, %v1903, %v1237
        %v1937 = vsel %vm1927, %v1904, %v1239
        %v1938 = vsel %vm1927, %v1905, %v1241
        %v1939 = vsel %vm1927, %v1906, %v1243
        %v1940 = vsel %vm1927, %v1907, %v1245
        %v1941 = vsel %vm1927, %v1908, %v1247
        %v1942 = vsel %vm1927, %v1909, %v1249
        %v1943 = vsel %vm1927, %v1910, %v1251
        %v1944 = vsel %vm1927, %v1911, %v1253
        %v1945 = vsel %vm1927, %v1912, %v1255
        %v1946 = vsel %vm1927, %v1913, %v1257
        %v1947 = vsel %vm1927, %v1914, %v1259
        %v1948 = vsel %vm1927, %v1915, %v1261
        %v1949 = vsel %vm1927, %v1916, %v1263
        %v1950 = vsel %vm1927, %v1917, %v1265
        %v1951 = vsel %vm1927, %v1918, %v1267
        %v1952 = vsel %vm1927, %v1919, %v1269
        %v1953 = vsel %vm1927, %v1920, %v1271
        %v1954 = vsel %vm1927, %v1921, %v1273
        %v1955 = vsel %vm1927, %v1922, %v1275
        %v1956 = vsel %vm1927, %v1923, %v1277
        %v1957 = vsel %vm1927, %v1924, %v1279
        %v1958 = vsel %vm1927, %v1925, %v1281
        %v1959 = vsel %vm1927, %v1926, %v1283
        %vm1960 = vcmask 326656
        %v1961 = vsel %vm1960, %v1928, %v1349
        %v1962 = vsel %vm1960, %v1929, %v1351
        %v1963 = vsel %vm1960, %v1930, %v1353
        %v1964 = vsel %vm1960, %v1931, %v1355
        %v1965 = vsel %vm1960, %v1932, %v1357
        %v1966 = vsel %vm1960, %v1933, %v1359
        %v1967 = vsel %vm1960, %v1934, %v1361
        %v1968 = vsel %vm1960, %v1935, %v1363
        %v1969 = vsel %vm1960, %v1936, %v1365
        %v1970 = vsel %vm1960, %v1937, %v1367
        %v1971 = vsel %vm1960, %v1938, %v1369
        %v1972 = vsel %vm1960, %v1939, %v1371
        %v1973 = vsel %vm1960, %v1940, %v1373
        %v1974 = vsel %vm1960, %v1941, %v1375
        %v1975 = vsel %vm1960, %v1942, %v1377
        %v1976 = vsel %vm1960, %v1943, %v1379
        %v1977 = vsel %vm1960, %v1944, %v1381
        %v1978 = vsel %vm1960, %v1945, %v1383
        %v1979 = vsel %vm1960, %v1946, %v1385
        %v1980 = vsel %vm1960, %v1947, %v1387
        %v1981 = vsel %vm1960, %v1948, %v1389
        %v1982 = vsel %vm1960, %v1949, %v1391
        %v1983 = vsel %vm1960, %v1950, %v1393
        %v1984 = vsel %vm1960, %v1951, %v1395
        %v1985 = vsel %vm1960, %v1952, %v1397
        %v1986 = vsel %vm1960, %v1953, %v1399
        %v1987 = vsel %vm1960, %v1954, %v1401
        %v1988 = vsel %vm1960, %v1955, %v1403
        %v1989 = vsel %vm1960, %v1956, %v1405
        %v1990 = vsel %vm1960, %v1957, %v1407
        %v1991 = vsel %vm1960, %v1958, %v1409
        %v1992 = vsel %vm1960, %v1959, %v1411
        %vm1993 = vcmask 392192
        %v1994 = vsel %vm1993, %v1961, %v1477
        %v1995 = vsel %vm1993, %v1962, %v1479
        %v1996 = vsel %vm1993, %v1963, %v1481
        %v1997 = vsel %vm1993, %v1964, %v1483
        %v1998 = vsel %vm1993, %v1965, %v1485
        %v1999 = vsel %vm1993, %v1966, %v1487
        %v2000 = vsel %vm1993, %v1967, %v1489
        %v2001 = vsel %vm1993, %v1968, %v1491
        %v2002 = vsel %vm1993, %v1969, %v1493
        %v2003 = vsel %vm1993, %v1970, %v1495
        %v2004 = vsel %vm1993, %v1971, %v1497
        %v2005 = vsel %vm1993, %v1972, %v1499
        %v2006 = vsel %vm1993, %v1973, %v1501
        %v2007 = vsel %vm1993, %v1974, %v1503
        %v2008 = vsel %vm1993, %v1975, %v1505
        %v2009 = vsel %vm1993, %v1976, %v1507
        %v2010 = vsel %vm1993, %v1977, %v1509
        %v2011 = vsel %vm1993, %v1978, %v1511
        %v2012 = vsel %vm1993, %v1979, %v1513
        %v2013 = vsel %vm1993, %v1980, %v1515
        %v2014 = vsel %vm1993, %v1981, %v1517
        %v2015 = vsel %vm1993, %v1982, %v1519
        %v2016 = vsel %vm1993, %v1983, %v1521
        %v2017 = vsel %vm1993, %v1984, %v1523
        %v2018 = vsel %vm1993, %v1985, %v1525
        %v2019 = vsel %vm1993, %v1986, %v1527
        %v2020 = vsel %vm1993, %v1987, %v1529
        %v2021 = vsel %vm1993, %v1988, %v1531
        %v2022 = vsel %vm1993, %v1989, %v1533
        %v2023 = vsel %vm1993, %v1990, %v1535
        %v2024 = vsel %vm1993, %v1991, %v1537
        %v2025 = vsel %vm1993, %v1992, %v1539
        %vm2026 = vcmask 457728
        %v2027 = vsel %vm2026, %v1994, %v1605
        %v2028 = vsel %vm2026, %v1995, %v1607
        %v2029 = vsel %vm2026, %v1996, %v1609
        %v2030 = vsel %vm2026, %v1997, %v1611
        %v2031 = vsel %vm2026, %v1998, %v1613
        %v2032 = vsel %vm2026, %v1999, %v1615
        %v2033 = vsel %vm2026, %v2000, %v1617
        %v2034 = vsel %vm2026, %v2001, %v1619
        %v2035 = vsel %vm2026, %v2002, %v1621
        %v2036 = vsel %vm2026, %v2003, %v1623
        %v2037 = vsel %vm2026, %v2004, %v1625
        %v2038 = vsel %vm2026, %v2005, %v1627
        %v2039 = vsel %vm2026, %v2006, %v1629
        %v2040 = vsel %vm2026, %v2007, %v1631
        %v2041 = vsel %vm2026, %v2008, %v1633
        %v2042 = vsel %vm2026, %v2009, %v1635
        %v2043 = vsel %vm2026, %v2010, %v1637
        %v2044 = vsel %vm2026, %v2011, %v1639
        %v2045 = vsel %vm2026, %v2012, %v1641
        %v2046 = vsel %vm2026, %v2013, %v1643
        %v2047 = vsel %vm2026, %v2014, %v1645
        %v2048 = vsel %vm2026, %v2015, %v1647
        %v2049 = vsel %vm2026, %v2016, %v1649
        %v2050 = vsel %vm2026, %v2017, %v1651
        %v2051 = vsel %vm2026, %v2018, %v1653
        %v2052 = vsel %vm2026, %v2019, %v1655
        %v2053 = vsel %vm2026, %v2020, %v1657
        %v2054 = vsel %vm2026, %v2021, %v1659
        %v2055 = vsel %vm2026, %v2022, %v1661
        %v2056 = vsel %vm2026, %v2023, %v1663
        %v2057 = vsel %vm2026, %v2024, %v1665
        %v2058 = vsel %vm2026, %v2025, %v1667
        %vm2059 = vcmask 523264
        %v2060 = vsel %vm2059, %v2027, %v1733
        %v2061 = vsel %vm2059, %v2028, %v1735
        %v2062 = vsel %vm2059, %v2029, %v1737
        %v2063 = vsel %vm2059, %v2030, %v1739
        %v2064 = vsel %vm2059, %v2031, %v1741
        %v2065 = vsel %vm2059, %v2032, %v1743
        %v2066 = vsel %vm2059, %v2033, %v1745
        %v2067 = vsel %vm2059, %v2034, %v1747
        %v2068 = vsel %vm2059, %v2035, %v1749
        %v2069 = vsel %vm2059, %v2036, %v1751
        %v2070 = vsel %vm2059, %v2037, %v1753
        %v2071 = vsel %vm2059, %v2038, %v1755
        %v2072 = vsel %vm2059, %v2039, %v1757
        %v2073 = vsel %vm2059, %v2040, %v1759
        %v2074 = vsel %vm2059, %v2041, %v1761
        %v2075 = vsel %vm2059, %v2042, %v1763
        %v2076 = vsel %vm2059, %v2043, %v1765
        %v2077 = vsel %vm2059, %v2044, %v1767
        %v2078 = vsel %vm2059, %v2045, %v1769
        %v2079 = vsel %vm2059, %v2046, %v1771
        %v2080 = vsel %vm2059, %v2047, %v1773
        %v2081 = vsel %vm2059, %v2048, %v1775
        %v2082 = vsel %vm2059, %v2049, %v1777
        %v2083 = vsel %vm2059, %v2050, %v1779
        %v2084 = vsel %vm2059, %v2051, %v1781
        %v2085 = vsel %vm2059, %v2052, %v1783
        %v2086 = vsel %vm2059, %v2053, %v1785
        %v2087 = vsel %vm2059, %v2054, %v1787
        %v2088 = vsel %vm2059, %v2055, %v1789
        %v2089 = vsel %vm2059, %v2056, %v1791
        %v2090 = vsel %vm2059, %v2057, %v1793
        %v2091 = vsel %vm2059, %v2058, %v1795
        %v2092 = vld [vmem:[%s4] sm:$0xff]
        %v2093 = vld [vmem:[%s4 + $0x8] sm:$0xff]
        %v2094 = vld [vmem:[%s4 + $0x10] sm:$0xff]
        %v2095 = vld [vmem:[%s4 + $0x18] sm:$0xff]
        %v2096 = vld [vmem:[%s4 + $0x20] sm:$0xff]
        %v2097 = vld [vmem:[%s4 + $0x28] sm:$0xff]
        %v2098 = vld [vmem:[%s4 + $0x30] sm:$0xff]
        %v2099 = vld [vmem:[%s4 + $0x38] sm:$0xff]
        %v2100 = vld [vmem:[%s4 + $0x40] sm:$0xff]
        %vm2101 = vcmask 588800
        %v2103 = vsel %vm2101, %v2060, 0
        %v2106 = vsel %vm2101, %v2061, 0
        %v2109 = vsel %vm2101, %v2062, 0
        %v2112 = vsel %vm2101, %v2063, 0
        %v2115 = vsel %vm2101, %v2064, 0
        %v2118 = vsel %vm2101, %v2065, 0
        %v2121 = vsel %vm2101, %v2066, 0
        %v2124 = vsel %vm2101, %v2067, 0
        %v2127 = vsel %vm2101, %v2068, 0
        %v2130 = vsel %vm2101, %v2069, 0
        %v2133 = vsel %vm2101, %v2070, 0
        %v2136 = vsel %vm2101, %v2071, 0
        %v2139 = vsel %vm2101, %v2072, 0
        %v2142 = vsel %vm2101, %v2073, 0
        %v2145 = vsel %vm2101, %v2074, 0
        %v2148 = vsel %vm2101, %v2075, 0
        %v2151 = vsel %vm2101, %v2076, 0
        %v2154 = vsel %vm2101, %v2077, 0
        %v2157 = vsel %vm2101, %v2078, 0
        %v2160 = vsel %vm2101, %v2079, 0
        %v2163 = vsel %vm2101, %v2080, 0
        %v2166 = vsel %vm2101, %v2081, 0
        %v2169 = vsel %vm2101, %v2082, 0
        %v2172 = vsel %vm2101, %v2083, 0
        %v2175 = vsel %vm2101, %v2084, 0
        %v2178 = vsel %vm2101, %v2085, 0
        %v2181 = vsel %vm2101, %v2086, 0
        %v2184 = vsel %vm2101, %v2087, 0
        %v2187 = vsel %vm2101, %v2088, 0
        %v2190 = vsel %vm2101, %v2089, 0
        %v2193 = vsel %vm2101, %v2090, 0
        %v2196 = vsel %vm2101, %v2091, 0
        %2198 = vmatpush.msra.mxu0 0.0
        %2199 = vmatpush.msra.mxu0 0.0
        %2200 = vmatpush.msra.mxu0 0.0
        %2201 = vmatpush.msra.mxu0 0.0
        %2202 = vmatpush.msra.mxu0 0.0
        %2203 = vmatpush.msra.mxu0 0.0
        %2204 = vmatpush.msra.mxu0 0.0
        %2205 = vmatpush.msra.mxu0 %v2100
        %2206 = vmatpush.msra.mxu0 %v2099
        %2207 = vmatpush.msra.mxu0 %v2098
        %2208 = vmatpush.msra.mxu0 %v2097
        %2209 = vmatpush.msra.mxu0 %v2096
        %2210 = vmatpush.msra.mxu0 %v2095
        %2211 = vmatpush.msra.mxu0 %v2094
        %2212 = vmatpush.msra.mxu0 %v2093
        %2213 = vmatpush.msra.mxu0 %v2092
        %2214 = vmatmul.f32.gmra.mxu0 %v2103
        %v2215 = vpop.f32.mrf.mxu0
        %v2216 = vadd.f32 0.0, %v2215
        %2217 = vmatmul.f32.gmra.mxu0 %v2106
        %v2218 = vpop.f32.mrf.mxu0
        %v2219 = vadd.f32 0.0, %v2218
        %2220 = vmatmul.f32.gmra.mxu0 %v2109
        %v2221 = vpop.f32.mrf.mxu0
        %v2222 = vadd.f32 0.0, %v2221
        %2223 = vmatmul.f32.gmra.mxu0 %v2112
        %v2224 = vpop.f32.mrf.mxu0
        %v2225 = vadd.f32 0.0, %v2224
        %2226 = vmatmul.f32.gmra.mxu0 %v2115
        %v2227 = vpop.f32.mrf.mxu0
        %v2228 = vadd.f32 0.0, %v2227
        %2229 = vmatmul.f32.gmra.mxu0 %v2118
        %v2230 = vpop.f32.mrf.mxu0
        %v2231 = vadd.f32 0.0, %v2230
        %2232 = vmatmul.f32.gmra.mxu0 %v2121
        %v2233 = vpop.f32.mrf.mxu0
        %v2234 = vadd.f32 0.0, %v2233
        %2235 = vmatmul.f32.gmra.mxu0 %v2124
        %v2236 = vpop.f32.mrf.mxu0
        %v2237 = vadd.f32 0.0, %v2236
        %2238 = vmatmul.f32.gmra.mxu0 %v2127
        %v2239 = vpop.f32.mrf.mxu0
        %v2240 = vadd.f32 0.0, %v2239
        %2241 = vmatmul.f32.gmra.mxu0 %v2130
        %v2242 = vpop.f32.mrf.mxu0
        %v2243 = vadd.f32 0.0, %v2242
        %2244 = vmatmul.f32.gmra.mxu0 %v2133
        %v2245 = vpop.f32.mrf.mxu0
        %v2246 = vadd.f32 0.0, %v2245
        %2247 = vmatmul.f32.gmra.mxu0 %v2136
        %v2248 = vpop.f32.mrf.mxu0
        %v2249 = vadd.f32 0.0, %v2248
        %2250 = vmatmul.f32.gmra.mxu0 %v2139
        %v2251 = vpop.f32.mrf.mxu0
        %v2252 = vadd.f32 0.0, %v2251
        %2253 = vmatmul.f32.gmra.mxu0 %v2142
        %v2254 = vpop.f32.mrf.mxu0
        %v2255 = vadd.f32 0.0, %v2254
        %2256 = vmatmul.f32.gmra.mxu0 %v2145
        %v2257 = vpop.f32.mrf.mxu0
        %v2258 = vadd.f32 0.0, %v2257
        %2259 = vmatmul.f32.gmra.mxu0 %v2148
        %v2260 = vpop.f32.mrf.mxu0
        %v2261 = vadd.f32 0.0, %v2260
        %2262 = vmatmul.f32.gmra.mxu0 %v2151
        %v2263 = vpop.f32.mrf.mxu0
        %v2264 = vadd.f32 0.0, %v2263
        %2265 = vmatmul.f32.gmra.mxu0 %v2154
        %v2266 = vpop.f32.mrf.mxu0
        %v2267 = vadd.f32 0.0, %v2266
        %2268 = vmatmul.f32.gmra.mxu0 %v2157
        %v2269 = vpop.f32.mrf.mxu0
        %v2270 = vadd.f32 0.0, %v2269
        %2271 = vmatmul.f32.gmra.mxu0 %v2160
        %v2272 = vpop.f32.mrf.mxu0
        %v2273 = vadd.f32 0.0, %v2272
        %2274 = vmatmul.f32.gmra.mxu0 %v2163
        %v2275 = vpop.f32.mrf.mxu0
        %v2276 = vadd.f32 0.0, %v2275
        %2277 = vmatmul.f32.gmra.mxu0 %v2166
        %v2278 = vpop.f32.mrf.mxu0
        %v2279 = vadd.f32 0.0, %v2278
        %2280 = vmatmul.f32.gmra.mxu0 %v2169
        %v2281 = vpop.f32.mrf.mxu0
        %v2282 = vadd.f32 0.0, %v2281
        %2283 = vmatmul.f32.gmra.mxu0 %v2172
        %v2284 = vpop.f32.mrf.mxu0
        %v2285 = vadd.f32 0.0, %v2284
        %2286 = vmatmul.f32.gmra.mxu0 %v2175
        %v2287 = vpop.f32.mrf.mxu0
        %v2288 = vadd.f32 0.0, %v2287
        %2289 = vmatmul.f32.gmra.mxu0 %v2178
        %v2290 = vpop.f32.mrf.mxu0
        %v2291 = vadd.f32 0.0, %v2290
        %2292 = vmatmul.f32.gmra.mxu0 %v2181
        %v2293 = vpop.f32.mrf.mxu0
        %v2294 = vadd.f32 0.0, %v2293
        %2295 = vmatmul.f32.gmra.mxu0 %v2184
        %v2296 = vpop.f32.mrf.mxu0
        %v2297 = vadd.f32 0.0, %v2296
        %2298 = vmatmul.f32.gmra.mxu0 %v2187
        %v2299 = vpop.f32.mrf.mxu0
        %v2300 = vadd.f32 0.0, %v2299
        %2301 = vmatmul.f32.gmra.mxu0 %v2190
        %v2302 = vpop.f32.mrf.mxu0
        %v2303 = vadd.f32 0.0, %v2302
        %2304 = vmatmul.f32.gmra.mxu0 %v2193
        %v2305 = vpop.f32.mrf.mxu0
        %v2306 = vadd.f32 0.0, %v2305
        %2307 = vmatmul.f32.gmra.mxu0 %v2196
        %v2308 = vpop.f32.mrf.mxu0
        %v2309 = vadd.f32 0.0, %v2308
        %2310 = vdwg.mxu0
        %v2311 = vld [vmem:[%s8] sm:$0x1]
        %v2313 = vperm.slane %v2311, 0
        %v2315 = vmul.f32 %v2216, %v2313
        %v2316 = vmul.f32 %v2219, %v2313
        %v2317 = vmul.f32 %v2222, %v2313
        %v2318 = vmul.f32 %v2225, %v2313
        %v2319 = vmul.f32 %v2228, %v2313
        %v2320 = vmul.f32 %v2231, %v2313
        %v2321 = vmul.f32 %v2234, %v2313
        %v2322 = vmul.f32 %v2237, %v2313
        %v2323 = vmul.f32 %v2240, %v2313
        %v2324 = vmul.f32 %v2243, %v2313
        %v2325 = vmul.f32 %v2246, %v2313
        %v2326 = vmul.f32 %v2249, %v2313
        %v2327 = vmul.f32 %v2252, %v2313
        %v2328 = vmul.f32 %v2255, %v2313
        %v2329 = vmul.f32 %v2258, %v2313
        %v2330 = vmul.f32 %v2261, %v2313
        %v2331 = vmul.f32 %v2264, %v2313
        %v2332 = vmul.f32 %v2267, %v2313
        %v2333 = vmul.f32 %v2270, %v2313
        %v2334 = vmul.f32 %v2273, %v2313
        %v2335 = vmul.f32 %v2276, %v2313
        %v2336 = vmul.f32 %v2279, %v2313
        %v2337 = vmul.f32 %v2282, %v2313
        %v2338 = vmul.f32 %v2285, %v2313
        %v2339 = vmul.f32 %v2288, %v2313
        %v2340 = vmul.f32 %v2291, %v2313
        %v2341 = vmul.f32 %v2294, %v2313
        %v2342 = vmul.f32 %v2297, %v2313
        %v2343 = vmul.f32 %v2300, %v2313
        %v2344 = vmul.f32 %v2303, %v2313
        %v2345 = vmul.f32 %v2306, %v2313
        %v2346 = vmul.f32 %v2309, %v2313
        %v2347 = vld [vmem:[%s9] sm:$0x1]
        %v2349 = vperm.slane %v2347, 0
        %v2351 = vadd.f32 %v2315, %v2349
        %v2352 = vadd.f32 %v2316, %v2349
        %v2353 = vadd.f32 %v2317, %v2349
        %v2354 = vadd.f32 %v2318, %v2349
        %v2355 = vadd.f32 %v2319, %v2349
        %v2356 = vadd.f32 %v2320, %v2349
        %v2357 = vadd.f32 %v2321, %v2349
        %v2358 = vadd.f32 %v2322, %v2349
        %v2359 = vadd.f32 %v2323, %v2349
        %v2360 = vadd.f32 %v2324, %v2349
        %v2361 = vadd.f32 %v2325, %v2349
        %v2362 = vadd.f32 %v2326, %v2349
        %v2363 = vadd.f32 %v2327, %v2349
        %v2364 = vadd.f32 %v2328, %v2349
        %v2365 = vadd.f32 %v2329, %v2349
        %v2366 = vadd.f32 %v2330, %v2349
        %v2367 = vadd.f32 %v2331, %v2349
        %v2368 = vadd.f32 %v2332, %v2349
        %v2369 = vadd.f32 %v2333, %v2349
        %v2370 = vadd.f32 %v2334, %v2349
        %v2371 = vadd.f32 %v2335, %v2349
        %v2372 = vadd.f32 %v2336, %v2349
        %v2373 = vadd.f32 %v2337, %v2349
        %v2374 = vadd.f32 %v2338, %v2349
        %v2375 = vadd.f32 %v2339, %v2349
        %v2376 = vadd.f32 %v2340, %v2349
        %v2377 = vadd.f32 %v2341, %v2349
        %v2378 = vadd.f32 %v2342, %v2349
        %v2379 = vadd.f32 %v2343, %v2349
        %v2380 = vadd.f32 %v2344, %v2349
        %v2381 = vadd.f32 %v2345, %v2349
        %v2382 = vadd.f32 %v2346, %v2349
        %v2383 = vmax.f32 %v2351, 0.0
        %v2384 = vmax.f32 %v2352, 0.0
        %v2385 = vmax.f32 %v2353, 0.0
        %v2386 = vmax.f32 %v2354, 0.0
        %v2387 = vmax.f32 %v2355, 0.0
        %v2388 = vmax.f32 %v2356, 0.0
        %v2389 = vmax.f32 %v2357, 0.0
        %v2390 = vmax.f32 %v2358, 0.0
        %v2391 = vmax.f32 %v2359, 0.0
        %v2392 = vmax.f32 %v2360, 0.0
        %v2393 = vmax.f32 %v2361, 0.0
        %v2394 = vmax.f32 %v2362, 0.0
        %v2395 = vmax.f32 %v2363, 0.0
        %v2396 = vmax.f32 %v2364, 0.0
        %v2397 = vmax.f32 %v2365, 0.0
        %v2398 = vmax.f32 %v2366, 0.0
        %v2399 = vmax.f32 %v2367, 0.0
        %v2400 = vmax.f32 %v2368, 0.0
        %v2401 = vmax.f32 %v2369, 0.0
        %v2402 = vmax.f32 %v2370, 0.0
        %v2403 = vmax.f32 %v2371, 0.0
        %v2404 = vmax.f32 %v2372, 0.0
        %v2405 = vmax.f32 %v2373, 0.0
        %v2406 = vmax.f32 %v2374, 0.0
        %v2407 = vmax.f32 %v2375, 0.0
        %v2408 = vmax.f32 %v2376, 0.0
        %v2409 = vmax.f32 %v2377, 0.0
        %v2410 = vmax.f32 %v2378, 0.0
        %v2411 = vmax.f32 %v2379, 0.0
        %v2412 = vmax.f32 %v2380, 0.0
        %v2413 = vmax.f32 %v2381, 0.0
        %v2414 = vmax.f32 %v2382, 0.0
        %2415 = vst.msk [vmem:[#allocation2] sm:$0xff] %vm1828, 0.0
        %2416 = vst.msk [vmem:[#allocation2 + $0x8] sm:$0xff] %vm1828, 0.0
        %vm2417 = vcmask 60416
        %2418 = vst.msk [vmem:[#allocation2 + $0x10] sm:$0xf] %vm2417, 0.0
        %2419 = vst.msk [vmem:[#allocation2 + $0x18] sm:$0xff] %vm1828, 0.0
        %2420 = vst.msk [vmem:[#allocation2 + $0x20] sm:$0xff] %vm1828, 0.0
        %2421 = vst.msk [vmem:[#allocation2 + $0x28] sm:$0xf] %vm2417, 0.0
        %s2422 = scalar_lea.vmem [#allocation2], 432
        %2423 = vst.msk [vmem:[%s2422] sm:$0xff] %vm1828, 0.0
        %2424 = vst.msk [vmem:[%s2422 + $0x8] sm:$0xff] %vm1828, 0.0
        %2425 = vst.msk [vmem:[%s2422 + $0x10] sm:$0xf] %vm2417, 0.0
        %2426 = vst.msk [vmem:[%s2422 + $0x18] sm:$0xff] %vm1828, 0.0
        %2427 = vst.msk [vmem:[%s2422 + $0x20] sm:$0xff] %vm1828, 0.0
        %2428 = vst.msk [vmem:[%s2422 + $0x28] sm:$0xf] %vm2417, 0.0
        %vm2429 = vcmask 58368
        %2430 = vst.msk [vmem:[#allocation2] sm:$0x3] %vm2429, 0.0
        %2431 = vst.msk [vmem:[#allocation2 + $0x18] sm:$0x3] %vm2429, 0.0
        %2432 = vst.msk [vmem:[#allocation2 + $0x30] sm:$0x3] %vm2429, 0.0
        %2433 = vst.msk [vmem:[#allocation2 + $0x48] sm:$0x3] %vm2429, 0.0
        %2434 = vst.msk [vmem:[#allocation2 + $0x60] sm:$0x3] %vm2429, 0.0
        %2435 = vst.msk [vmem:[#allocation2 + $0x78] sm:$0x3] %vm2429, 0.0
        %2436 = vst.msk [vmem:[#allocation2 + $0x90] sm:$0x3] %vm2429, 0.0
        %2437 = vst.msk [vmem:[#allocation2 + $0xa8] sm:$0x3] %vm2429, 0.0
        %2438 = vst.msk [vmem:[#allocation2 + $0xc0] sm:$0x3] %vm2429, 0.0
        %2439 = vst.msk [vmem:[#allocation2 + $0xd8] sm:$0x3] %vm2429, 0.0
        %2440 = vst.msk [vmem:[#allocation2 + $0xf0] sm:$0x3] %vm2429, 0.0
        %2441 = vst.msk [vmem:[#allocation2 + $0x108] sm:$0x3] %vm2429, 0.0
        %2442 = vst.msk [vmem:[#allocation2 + $0x120] sm:$0x3] %vm2429, 0.0
        %2443 = vst.msk [vmem:[#allocation2 + $0x138] sm:$0x3] %vm2429, 0.0
        %2444 = vst.msk [vmem:[#allocation2 + $0x150] sm:$0x3] %vm2429, 0.0
        %2445 = vst.msk [vmem:[#allocation2 + $0x168] sm:$0x3] %vm2429, 0.0
        %2446 = vst.msk [vmem:[#allocation2 + $0x180] sm:$0x3] %vm2429, 0.0
        %2447 = vst.msk [vmem:[#allocation2 + $0x198] sm:$0x3] %vm2429, 0.0
        %2448 = vst.msk [vmem:[#allocation2 + $0x1b0] sm:$0x3] %vm2429, 0.0
        %2449 = vst.msk [vmem:[#allocation2 + $0x1c8] sm:$0x3] %vm2429, 0.0
        %2450 = vst.msk [vmem:[#allocation2 + $0x12] sm:$0x3] %vm2429, 0.0
        %2451 = vst.msk [vmem:[#allocation2 + $0x2a] sm:$0x3] %vm2429, 0.0
        %2452 = vst.msk [vmem:[#allocation2 + $0x42] sm:$0x3] %vm2429, 0.0
        %2453 = vst.msk [vmem:[#allocation2 + $0x5a] sm:$0x3] %vm2429, 0.0
        %2454 = vst.msk [vmem:[#allocation2 + $0x72] sm:$0x3] %vm2429, 0.0
        %2455 = vst.msk [vmem:[#allocation2 + $0x8a] sm:$0x3] %vm2429, 0.0
        %2456 = vst.msk [vmem:[#allocation2 + $0xa2] sm:$0x3] %vm2429, 0.0
        %2457 = vst.msk [vmem:[#allocation2 + $0xba] sm:$0x3] %vm2429, 0.0
        %2458 = vst.msk [vmem:[#allocation2 + $0xd2] sm:$0x3] %vm2429, 0.0
        %2459 = vst.msk [vmem:[#allocation2 + $0xea] sm:$0x3] %vm2429, 0.0
        %2460 = vst.msk [vmem:[#allocation2 + $0x102] sm:$0x3] %vm2429, 0.0
        %2461 = vst.msk [vmem:[#allocation2 + $0x11a] sm:$0x3] %vm2429, 0.0
        %2462 = vst.msk [vmem:[#allocation2 + $0x132] sm:$0x3] %vm2429, 0.0
        %2463 = vst.msk [vmem:[#allocation2 + $0x14a] sm:$0x3] %vm2429, 0.0
        %2464 = vst.msk [vmem:[#allocation2 + $0x162] sm:$0x3] %vm2429, 0.0
        %2465 = vst.msk [vmem:[#allocation2 + $0x17a] sm:$0x3] %vm2429, 0.0
        %2466 = vst.msk [vmem:[#allocation2 + $0x192] sm:$0x3] %vm2429, 0.0
        %2467 = vst.msk [vmem:[#allocation2 + $0x1aa] sm:$0x3] %vm2429, 0.0
        %2468 = vst.msk [vmem:[#allocation2 + $0x1c2] sm:$0x3] %vm2429, 0.0
        %2469 = vst.msk [vmem:[#allocation2 + $0x1da] sm:$0x3] %vm2429, 0.0
        %s2470 = scalar_lea.vmem [#allocation2], 48
        %2471 = vst.msk [vmem:[%s2470 + $0x2] sm:$0xff] %vm1828, %v2383
        %2472 = vst.msk [vmem:[%s2470 + $0xa] sm:$0xff] %vm1828, %v2384
        %2473 = vst.msk [vmem:[%s2470 + $0x1a] sm:$0xff] %vm1828, %v2385
        %2474 = vst.msk [vmem:[%s2470 + $0x22] sm:$0xff] %vm1828, %v2386
        %2475 = vst.msk [vmem:[%s2470 + $0x32] sm:$0xff] %vm1828, %v2387
        %2476 = vst.msk [vmem:[%s2470 + $0x3a] sm:$0xff] %vm1828, %v2388
        %2477 = vst.msk [vmem:[%s2470 + $0x4a] sm:$0xff] %vm1828, %v2389
        %2478 = vst.msk [vmem:[%s2470 + $0x52] sm:$0xff] %vm1828, %v2390
        %2479 = vst.msk [vmem:[%s2470 + $0x62] sm:$0xff] %vm1828, %v2391
        %2480 = vst.msk [vmem:[%s2470 + $0x6a] sm:$0xff] %vm1828, %v2392
        %2481 = vst.msk [vmem:[%s2470 + $0x7a] sm:$0xff] %vm1828, %v2393
        %2482 = vst.msk [vmem:[%s2470 + $0x82] sm:$0xff] %vm1828, %v2394
        %2483 = vst.msk [vmem:[%s2470 + $0x92] sm:$0xff] %vm1828, %v2395
        %2484 = vst.msk [vmem:[%s2470 + $0x9a] sm:$0xff] %vm1828, %v2396
        %2485 = vst.msk [vmem:[%s2470 + $0xaa] sm:$0xff] %vm1828, %v2397
        %2486 = vst.msk [vmem:[%s2470 + $0xb2] sm:$0xff] %vm1828, %v2398
        %2487 = vst.msk [vmem:[%s2470 + $0xc2] sm:$0xff] %vm1828, %v2399
        %2488 = vst.msk [vmem:[%s2470 + $0xca] sm:$0xff] %vm1828, %v2400
        %2489 = vst.msk [vmem:[%s2470 + $0xda] sm:$0xff] %vm1828, %v2401
        %2490 = vst.msk [vmem:[%s2470 + $0xe2] sm:$0xff] %vm1828, %v2402
        %2491 = vst.msk [vmem:[%s2470 + $0xf2] sm:$0xff] %vm1828, %v2403
        %2492 = vst.msk [vmem:[%s2470 + $0xfa] sm:$0xff] %vm1828, %v2404
        %2493 = vst.msk [vmem:[%s2470 + $0x10a] sm:$0xff] %vm1828, %v2405
        %2494 = vst.msk [vmem:[%s2470 + $0x112] sm:$0xff] %vm1828, %v2406
        %2495 = vst.msk [vmem:[%s2470 + $0x122] sm:$0xff] %vm1828, %v2407
        %2496 = vst.msk [vmem:[%s2470 + $0x12a] sm:$0xff] %vm1828, %v2408
        %2497 = vst.msk [vmem:[%s2470 + $0x13a] sm:$0xff] %vm1828, %v2409
        %2498 = vst.msk [vmem:[%s2470 + $0x142] sm:$0xff] %vm1828, %v2410
        %2499 = vst.msk [vmem:[%s2470 + $0x152] sm:$0xff] %vm1828, %v2411
        %2500 = vst.msk [vmem:[%s2470 + $0x15a] sm:$0xff] %vm1828, %v2412
        %2501 = vst.msk [vmem:[%s2470 + $0x16a] sm:$0xff] %vm1828, %v2413
        %2502 = vst.msk [vmem:[%s2470 + $0x172] sm:$0xff] %vm1828, %v2414
        %v2503 = vld [vmem:[%s10] sm:$0x1]
        %v2505 = vperm.slane %v2503, 0
        %v2507 = vmul.f32 %v2216, %v2505
        %v2508 = vmul.f32 %v2219, %v2505
        %v2509 = vmul.f32 %v2222, %v2505
        %v2510 = vmul.f32 %v2225, %v2505
        %v2511 = vmul.f32 %v2228, %v2505
        %v2512 = vmul.f32 %v2231, %v2505
        %v2513 = vmul.f32 %v2234, %v2505
        %v2514 = vmul.f32 %v2237, %v2505
        %v2515 = vmul.f32 %v2240, %v2505
        %v2516 = vmul.f32 %v2243, %v2505
        %v2517 = vmul.f32 %v2246, %v2505
        %v2518 = vmul.f32 %v2249, %v2505
        %v2519 = vmul.f32 %v2252, %v2505
        %v2520 = vmul.f32 %v2255, %v2505
        %v2521 = vmul.f32 %v2258, %v2505
        %v2522 = vmul.f32 %v2261, %v2505
        %v2523 = vmul.f32 %v2264, %v2505
        %v2524 = vmul.f32 %v2267, %v2505
        %v2525 = vmul.f32 %v2270, %v2505
        %v2526 = vmul.f32 %v2273, %v2505
        %v2527 = vmul.f32 %v2276, %v2505
        %v2528 = vmul.f32 %v2279, %v2505
        %v2529 = vmul.f32 %v2282, %v2505
        %v2530 = vmul.f32 %v2285, %v2505
        %v2531 = vmul.f32 %v2288, %v2505
        %v2532 = vmul.f32 %v2291, %v2505
        %v2533 = vmul.f32 %v2294, %v2505
        %v2534 = vmul.f32 %v2297, %v2505
        %v2535 = vmul.f32 %v2300, %v2505
        %v2536 = vmul.f32 %v2303, %v2505
        %v2537 = vmul.f32 %v2306, %v2505
        %v2538 = vmul.f32 %v2309, %v2505
        %v2539 = vld [vmem:[%s11] sm:$0x1]
        %v2541 = vperm.slane %v2539, 0
        %v2543 = vadd.f32 %v2507, %v2541
        %v2544 = vadd.f32 %v2508, %v2541
        %v2545 = vadd.f32 %v2509, %v2541
        %v2546 = vadd.f32 %v2510, %v2541
        %v2547 = vadd.f32 %v2511, %v2541
        %v2548 = vadd.f32 %v2512, %v2541
        %v2549 = vadd.f32 %v2513, %v2541
        %v2550 = vadd.f32 %v2514, %v2541
        %v2551 = vadd.f32 %v2515, %v2541
        %v2552 = vadd.f32 %v2516, %v2541
        %v2553 = vadd.f32 %v2517, %v2541
        %v2554 = vadd.f32 %v2518, %v2541
        %v2555 = vadd.f32 %v2519, %v2541
        %v2556 = vadd.f32 %v2520, %v2541
        %v2557 = vadd.f32 %v2521, %v2541
        %v2558 = vadd.f32 %v2522, %v2541
        %v2559 = vadd.f32 %v2523, %v2541
        %v2560 = vadd.f32 %v2524, %v2541
        %v2561 = vadd.f32 %v2525, %v2541
        %v2562 = vadd.f32 %v2526, %v2541
        %v2563 = vadd.f32 %v2527, %v2541
        %v2564 = vadd.f32 %v2528, %v2541
        %v2565 = vadd.f32 %v2529, %v2541
        %v2566 = vadd.f32 %v2530, %v2541
        %v2567 = vadd.f32 %v2531, %v2541
        %v2568 = vadd.f32 %v2532, %v2541
        %v2569 = vadd.f32 %v2533, %v2541
        %v2570 = vadd.f32 %v2534, %v2541
        %v2571 = vadd.f32 %v2535, %v2541
        %v2572 = vadd.f32 %v2536, %v2541
        %v2573 = vadd.f32 %v2537, %v2541
        %v2574 = vadd.f32 %v2538, %v2541
        %v2575 = vmax.f32 %v2543, 0.0
        %v2576 = vmax.f32 %v2544, 0.0
        %v2577 = vmax.f32 %v2545, 0.0
        %v2578 = vmax.f32 %v2546, 0.0
        %v2579 = vmax.f32 %v2547, 0.0
        %v2580 = vmax.f32 %v2548, 0.0
        %v2581 = vmax.f32 %v2549, 0.0
        %v2582 = vmax.f32 %v2550, 0.0
        %v2583 = vmax.f32 %v2551, 0.0
        %v2584 = vmax.f32 %v2552, 0.0
        %v2585 = vmax.f32 %v2553, 0.0
        %v2586 = vmax.f32 %v2554, 0.0
        %v2587 = vmax.f32 %v2555, 0.0
        %v2588 = vmax.f32 %v2556, 0.0
        %v2589 = vmax.f32 %v2557, 0.0
        %v2590 = vmax.f32 %v2558, 0.0
        %v2591 = vmax.f32 %v2559, 0.0
        %v2592 = vmax.f32 %v2560, 0.0
        %v2593 = vmax.f32 %v2561, 0.0
        %v2594 = vmax.f32 %v2562, 0.0
        %v2595 = vmax.f32 %v2563, 0.0
        %v2596 = vmax.f32 %v2564, 0.0
        %v2597 = vmax.f32 %v2565, 0.0
        %v2598 = vmax.f32 %v2566, 0.0
        %v2599 = vmax.f32 %v2567, 0.0
        %v2600 = vmax.f32 %v2568, 0.0
        %v2601 = vmax.f32 %v2569, 0.0
        %v2602 = vmax.f32 %v2570, 0.0
        %v2603 = vmax.f32 %v2571, 0.0
        %v2604 = vmax.f32 %v2572, 0.0
        %v2605 = vmax.f32 %v2573, 0.0
        %v2606 = vmax.f32 %v2574, 0.0
        %2607 = vst.msk [vmem:[#allocation3] sm:$0xff] %vm1828, 0.0
        %2608 = vst.msk [vmem:[#allocation3 + $0x8] sm:$0xff] %vm1828, 0.0
        %2609 = vst.msk [vmem:[#allocation3 + $0x10] sm:$0x3] %vm2429, 0.0
        %s2610 = scalar_lea.vmem [#allocation3], 408
        %2611 = vst.msk [vmem:[%s2610] sm:$0xff] %vm1828, 0.0
        %2612 = vst.msk [vmem:[%s2610 + $0x8] sm:$0xff] %vm1828, 0.0
        %2613 = vst.msk [vmem:[%s2610 + $0x10] sm:$0x3] %vm2429, 0.0
        %vm2614 = vcmask 57344
        %2615 = vst.msk [vmem:[#allocation3] sm:$0x1] %vm2614, 0.0
        %2616 = vst.msk [vmem:[#allocation3 + $0x18] sm:$0x1] %vm2614, 0.0
        %2617 = vst.msk [vmem:[#allocation3 + $0x30] sm:$0x1] %vm2614, 0.0
        %2618 = vst.msk [vmem:[#allocation3 + $0x48] sm:$0x1] %vm2614, 0.0
        %2619 = vst.msk [vmem:[#allocation3 + $0x60] sm:$0x1] %vm2614, 0.0
        %2620 = vst.msk [vmem:[#allocation3 + $0x78] sm:$0x1] %vm2614, 0.0
        %2621 = vst.msk [vmem:[#allocation3 + $0x90] sm:$0x1] %vm2614, 0.0
        %2622 = vst.msk [vmem:[#allocation3 + $0xa8] sm:$0x1] %vm2614, 0.0
        %2623 = vst.msk [vmem:[#allocation3 + $0xc0] sm:$0x1] %vm2614, 0.0
        %2624 = vst.msk [vmem:[#allocation3 + $0xd8] sm:$0x1] %vm2614, 0.0
        %2625 = vst.msk [vmem:[#allocation3 + $0xf0] sm:$0x1] %vm2614, 0.0
        %2626 = vst.msk [vmem:[#allocation3 + $0x108] sm:$0x1] %vm2614, 0.0
        %2627 = vst.msk [vmem:[#allocation3 + $0x120] sm:$0x1] %vm2614, 0.0
        %2628 = vst.msk [vmem:[#allocation3 + $0x138] sm:$0x1] %vm2614, 0.0
        %2629 = vst.msk [vmem:[#allocation3 + $0x150] sm:$0x1] %vm2614, 0.0
        %2630 = vst.msk [vmem:[#allocation3 + $0x168] sm:$0x1] %vm2614, 0.0
        %2631 = vst.msk [vmem:[#allocation3 + $0x180] sm:$0x1] %vm2614, 0.0
        %2632 = vst.msk [vmem:[#allocation3 + $0x198] sm:$0x1] %vm2614, 0.0
        %2633 = vst.msk [vmem:[#allocation3 + $0x11] sm:$0x1] %vm2614, 0.0
        %2634 = vst.msk [vmem:[#allocation3 + $0x29] sm:$0x1] %vm2614, 0.0
        %2635 = vst.msk [vmem:[#allocation3 + $0x41] sm:$0x1] %vm2614, 0.0
        %2636 = vst.msk [vmem:[#allocation3 + $0x59] sm:$0x1] %vm2614, 0.0
        %2637 = vst.msk [vmem:[#allocation3 + $0x71] sm:$0x1] %vm2614, 0.0
        %2638 = vst.msk [vmem:[#allocation3 + $0x89] sm:$0x1] %vm2614, 0.0
        %2639 = vst.msk [vmem:[#allocation3 + $0xa1] sm:$0x1] %vm2614, 0.0
        %2640 = vst.msk [vmem:[#allocation3 + $0xb9] sm:$0x1] %vm2614, 0.0
        %2641 = vst.msk [vmem:[#allocation3 + $0xd1] sm:$0x1] %vm2614, 0.0
        %2642 = vst.msk [vmem:[#allocation3 + $0xe9] sm:$0x1] %vm2614, 0.0
        %2643 = vst.msk [vmem:[#allocation3 + $0x101] sm:$0x1] %vm2614, 0.0
        %2644 = vst.msk [vmem:[#allocation3 + $0x119] sm:$0x1] %vm2614, 0.0
        %2645 = vst.msk [vmem:[#allocation3 + $0x131] sm:$0x1] %vm2614, 0.0
        %2646 = vst.msk [vmem:[#allocation3 + $0x149] sm:$0x1] %vm2614, 0.0
        %2647 = vst.msk [vmem:[#allocation3 + $0x161] sm:$0x1] %vm2614, 0.0
        %2648 = vst.msk [vmem:[#allocation3 + $0x179] sm:$0x1] %vm2614, 0.0
        %2649 = vst.msk [vmem:[#allocation3 + $0x191] sm:$0x1] %vm2614, 0.0
        %2650 = vst.msk [vmem:[#allocation3 + $0x1a9] sm:$0x1] %vm2614, 0.0
        %s2651 = scalar_lea.vmem [#allocation3], 24
        %2652 = vst.msk [vmem:[%s2651 + $0x1] sm:$0xff] %vm1828, %v2575
        %2653 = vst.msk [vmem:[%s2651 + $0x9] sm:$0xff] %vm1828, %v2576
        %2654 = vst.msk [vmem:[%s2651 + $0x19] sm:$0xff] %vm1828, %v2577
        %2655 = vst.msk [vmem:[%s2651 + $0x21] sm:$0xff] %vm1828, %v2578
        %2656 = vst.msk [vmem:[%s2651 + $0x31] sm:$0xff] %vm1828, %v2579
        %2657 = vst.msk [vmem:[%s2651 + $0x39] sm:$0xff] %vm1828, %v2580
        %2658 = vst.msk [vmem:[%s2651 + $0x49] sm:$0xff] %vm1828, %v2581
        %2659 = vst.msk [vmem:[%s2651 + $0x51] sm:$0xff] %vm1828, %v2582
        %2660 = vst.msk [vmem:[%s2651 + $0x61] sm:$0xff] %vm1828, %v2583
        %2661 = vst.msk [vmem:[%s2651 + $0x69] sm:$0xff] %vm1828, %v2584
        %2662 = vst.msk [vmem:[%s2651 + $0x79] sm:$0xff] %vm1828, %v2585
        %2663 = vst.msk [vmem:[%s2651 + $0x81] sm:$0xff] %vm1828, %v2586
        %2664 = vst.msk [vmem:[%s2651 + $0x91] sm:$0xff] %vm1828, %v2587
        %2665 = vst.msk [vmem:[%s2651 + $0x99] sm:$0xff] %vm1828, %v2588
        %2666 = vst.msk [vmem:[%s2651 + $0xa9] sm:$0xff] %vm1828, %v2589
        %2667 = vst.msk [vmem:[%s2651 + $0xb1] sm:$0xff] %vm1828, %v2590
        %2668 = vst.msk [vmem:[%s2651 + $0xc1] sm:$0xff] %vm1828, %v2591
        %2669 = vst.msk [vmem:[%s2651 + $0xc9] sm:$0xff] %vm1828, %v2592
        %2670 = vst.msk [vmem:[%s2651 + $0xd9] sm:$0xff] %vm1828, %v2593
        %2671 = vst.msk [vmem:[%s2651 + $0xe1] sm:$0xff] %vm1828, %v2594
        %2672 = vst.msk [vmem:[%s2651 + $0xf1] sm:$0xff] %vm1828, %v2595
        %2673 = vst.msk [vmem:[%s2651 + $0xf9] sm:$0xff] %vm1828, %v2596
        %2674 = vst.msk [vmem:[%s2651 + $0x109] sm:$0xff] %vm1828, %v2597
        %2675 = vst.msk [vmem:[%s2651 + $0x111] sm:$0xff] %vm1828, %v2598
        %2676 = vst.msk [vmem:[%s2651 + $0x121] sm:$0xff] %vm1828, %v2599
        %2677 = vst.msk [vmem:[%s2651 + $0x129] sm:$0xff] %vm1828, %v2600
        %2678 = vst.msk [vmem:[%s2651 + $0x139] sm:$0xff] %vm1828, %v2601
        %2679 = vst.msk [vmem:[%s2651 + $0x141] sm:$0xff] %vm1828, %v2602
        %2680 = vst.msk [vmem:[%s2651 + $0x151] sm:$0xff] %vm1828, %v2603
        %2681 = vst.msk [vmem:[%s2651 + $0x159] sm:$0xff] %vm1828, %v2604
        %2682 = vst.msk [vmem:[%s2651 + $0x169] sm:$0xff] %vm1828, %v2605
        %2683 = vst.msk [vmem:[%s2651 + $0x171] sm:$0xff] %vm1828, %v2606
        %v2684 = vld [vmem:[#allocation2] sm:$0xff]
        %v2685 = vld [vmem:[#allocation2 + $0x8] sm:$0xff]
        %v2686 = vld [vmem:[#allocation2 + $0x18] sm:$0xff]
        %v2687 = vld [vmem:[#allocation2 + $0x20] sm:$0xff]
        %v2688 = vld [vmem:[#allocation2 + $0x30] sm:$0xff]
        %v2689 = vld [vmem:[#allocation2 + $0x38] sm:$0xff]
        %v2690 = vld [vmem:[#allocation2 + $0x48] sm:$0xff]
        %v2691 = vld [vmem:[#allocation2 + $0x50] sm:$0xff]
        %v2692 = vld [vmem:[#allocation2 + $0x60] sm:$0xff]
        %v2693 = vld [vmem:[#allocation2 + $0x68] sm:$0xff]
        %v2694 = vld [vmem:[#allocation2 + $0x78] sm:$0xff]
        %v2695 = vld [vmem:[#allocation2 + $0x80] sm:$0xff]
        %v2696 = vld [vmem:[#allocation2 + $0x90] sm:$0xff]
        %v2697 = vld [vmem:[#allocation2 + $0x98] sm:$0xff]
        %v2698 = vld [vmem:[#allocation2 + $0xa8] sm:$0xff]
        %v2699 = vld [vmem:[#allocation2 + $0xb0] sm:$0xff]
        %v2700 = vld [vmem:[#allocation2 + $0xc0] sm:$0xff]
        %v2701 = vld [vmem:[#allocation2 + $0xc8] sm:$0xff]
        %v2702 = vld [vmem:[#allocation2 + $0xd8] sm:$0xff]
        %v2703 = vld [vmem:[#allocation2 + $0xe0] sm:$0xff]
        %v2704 = vld [vmem:[#allocation2 + $0xf0] sm:$0xff]
        %v2705 = vld [vmem:[#allocation2 + $0xf8] sm:$0xff]
        %v2706 = vld [vmem:[#allocation2 + $0x108] sm:$0xff]
        %v2707 = vld [vmem:[#allocation2 + $0x110] sm:$0xff]
        %v2708 = vld [vmem:[#allocation2 + $0x120] sm:$0xff]
        %v2709 = vld [vmem:[#allocation2 + $0x128] sm:$0xff]
        %v2710 = vld [vmem:[#allocation2 + $0x138] sm:$0xff]
        %v2711 = vld [vmem:[#allocation2 + $0x140] sm:$0xff]
        %v2712 = vld [vmem:[#allocation2 + $0x150] sm:$0xff]
        %v2713 = vld [vmem:[#allocation2 + $0x158] sm:$0xff]
        %v2714 = vld [vmem:[#allocation2 + $0x168] sm:$0xff]
        %v2715 = vld [vmem:[#allocation2 + $0x170] sm:$0xff]
        %v2716 = vld [vmem:[#allocation2 + $0x2] sm:$0xff]
        %v2717 = vld [vmem:[#allocation2 + $0xa] sm:$0xff]
        %v2718 = vld [vmem:[#allocation2 + $0x1a] sm:$0xff]
        %v2719 = vld [vmem:[#allocation2 + $0x22] sm:$0xff]
        %v2720 = vld [vmem:[#allocation2 + $0x32] sm:$0xff]
        %v2721 = vld [vmem:[#allocation2 + $0x3a] sm:$0xff]
        %v2722 = vld [vmem:[#allocation2 + $0x4a] sm:$0xff]
        %v2723 = vld [vmem:[#allocation2 + $0x52] sm:$0xff]
        %v2724 = vld [vmem:[#allocation2 + $0x62] sm:$0xff]
        %v2725 = vld [vmem:[#allocation2 + $0x6a] sm:$0xff]
        %v2726 = vld [vmem:[#allocation2 + $0x7a] sm:$0xff]
        %v2727 = vld [vmem:[#allocation2 + $0x82] sm:$0xff]
        %v2728 = vld [vmem:[#allocation2 + $0x92] sm:$0xff]
        %v2729 = vld [vmem:[#allocation2 + $0x9a] sm:$0xff]
        %v2730 = vld [vmem:[#allocation2 + $0xaa] sm:$0xff]
        %v2731 = vld [vmem:[#allocation2 + $0xb2] sm:$0xff]
        %v2732 = vld [vmem:[#allocation2 + $0xc2] sm:$0xff]
        %v2733 = vld [vmem:[#allocation2 + $0xca] sm:$0xff]
        %v2734 = vld [vmem:[#allocation2 + $0xda] sm:$0xff]
        %v2735 = vld [vmem:[#allocation2 + $0xe2] sm:$0xff]
        %v2736 = vld [vmem:[#allocation2 + $0xf2] sm:$0xff]
        %v2737 = vld [vmem:[#allocation2 + $0xfa] sm:$0xff]
        %v2738 = vld [vmem:[#allocation2 + $0x10a] sm:$0xff]
        %v2739 = vld [vmem:[#allocation2 + $0x112] sm:$0xff]
        %v2740 = vld [vmem:[#allocation2 + $0x122] sm:$0xff]
        %v2741 = vld [vmem:[#allocation2 + $0x12a] sm:$0xff]
        %v2742 = vld [vmem:[#allocation2 + $0x13a] sm:$0xff]
        %v2743 = vld [vmem:[#allocation2 + $0x142] sm:$0xff]
        %v2744 = vld [vmem:[#allocation2 + $0x152] sm:$0xff]
        %v2745 = vld [vmem:[#allocation2 + $0x15a] sm:$0xff]
        %v2746 = vld [vmem:[#allocation2 + $0x16a] sm:$0xff]
        %v2747 = vld [vmem:[#allocation2 + $0x172] sm:$0xff]
        %v2748 = vld [vmem:[#allocation2 + $0x4] sm:$0xff]
        %v2749 = vld [vmem:[#allocation2 + $0xc] sm:$0xff]
        %v2750 = vld [vmem:[#allocation2 + $0x1c] sm:$0xff]
        %v2751 = vld [vmem:[#allocation2 + $0x24] sm:$0xff]
        %v2752 = vld [vmem:[#allocation2 + $0x34] sm:$0xff]
        %v2753 = vld [vmem:[#allocation2 + $0x3c] sm:$0xff]
        %v2754 = vld [vmem:[#allocation2 + $0x4c] sm:$0xff]
        %v2755 = vld [vmem:[#allocation2 + $0x54] sm:$0xff]
        %v2756 = vld [vmem:[#allocation2 + $0x64] sm:$0xff]
        %v2757 = vld [vmem:[#allocation2 + $0x6c] sm:$0xff]
        %v2758 = vld [vmem:[#allocation2 + $0x7c] sm:$0xff]
        %v2759 = vld [vmem:[#allocation2 + $0x84] sm:$0xff]
        %v2760 = vld [vmem:[#allocation2 + $0x94] sm:$0xff]
        %v2761 = vld [vmem:[#allocation2 + $0x9c] sm:$0xff]
        %v2762 = vld [vmem:[#allocation2 + $0xac] sm:$0xff]
        %v2763 = vld [vmem:[#allocation2 + $0xb4] sm:$0xff]
        %v2764 = vld [vmem:[#allocation2 + $0xc4] sm:$0xff]
        %v2765 = vld [vmem:[#allocation2 + $0xcc] sm:$0xff]
        %v2766 = vld [vmem:[#allocation2 + $0xdc] sm:$0xff]
        %v2767 = vld [vmem:[#allocation2 + $0xe4] sm:$0xff]
        %v2768 = vld [vmem:[#allocation2 + $0xf4] sm:$0xff]
        %v2769 = vld [vmem:[#allocation2 + $0xfc] sm:$0xff]
        %v2770 = vld [vmem:[#allocation2 + $0x10c] sm:$0xff]
        %v2771 = vld [vmem:[#allocation2 + $0x114] sm:$0xff]
        %v2772 = vld [vmem:[#allocation2 + $0x124] sm:$0xff]
        %v2773 = vld [vmem:[#allocation2 + $0x12c] sm:$0xff]
        %v2774 = vld [vmem:[#allocation2 + $0x13c] sm:$0xff]
        %v2775 = vld [vmem:[#allocation2 + $0x144] sm:$0xff]
        %v2776 = vld [vmem:[#allocation2 + $0x154] sm:$0xff]
        %v2777 = vld [vmem:[#allocation2 + $0x15c] sm:$0xff]
        %v2778 = vld [vmem:[#allocation2 + $0x16c] sm:$0xff]
        %v2779 = vld [vmem:[#allocation2 + $0x174] sm:$0xff]
        %v2780 = vld [vmem:[%s2470] sm:$0xff]
        %v2781 = vld [vmem:[%s2470 + $0x8] sm:$0xff]
        %v2782 = vld [vmem:[%s2470 + $0x18] sm:$0xff]
        %v2783 = vld [vmem:[%s2470 + $0x20] sm:$0xff]
        %v2784 = vld [vmem:[%s2470 + $0x30] sm:$0xff]
        %v2785 = vld [vmem:[%s2470 + $0x38] sm:$0xff]
        %v2786 = vld [vmem:[%s2470 + $0x48] sm:$0xff]
        %v2787 = vld [vmem:[%s2470 + $0x50] sm:$0xff]
        %v2788 = vld [vmem:[%s2470 + $0x60] sm:$0xff]
        %v2789 = vld [vmem:[%s2470 + $0x68] sm:$0xff]
        %v2790 = vld [vmem:[%s2470 + $0x78] sm:$0xff]
        %v2791 = vld [vmem:[%s2470 + $0x80] sm:$0xff]
        %v2792 = vld [vmem:[%s2470 + $0x90] sm:$0xff]
        %v2793 = vld [vmem:[%s2470 + $0x98] sm:$0xff]
        %v2794 = vld [vmem:[%s2470 + $0xa8] sm:$0xff]
        %v2795 = vld [vmem:[%s2470 + $0xb0] sm:$0xff]
        %v2796 = vld [vmem:[%s2470 + $0xc0] sm:$0xff]
        %v2797 = vld [vmem:[%s2470 + $0xc8] sm:$0xff]
        %v2798 = vld [vmem:[%s2470 + $0xd8] sm:$0xff]
        %v2799 = vld [vmem:[%s2470 + $0xe0] sm:$0xff]
        %v2800 = vld [vmem:[%s2470 + $0xf0] sm:$0xff]
        %v2801 = vld [vmem:[%s2470 + $0xf8] sm:$0xff]
        %v2802 = vld [vmem:[%s2470 + $0x108] sm:$0xff]
        %v2803 = vld [vmem:[%s2470 + $0x110] sm:$0xff]
        %v2804 = vld [vmem:[%s2470 + $0x120] sm:$0xff]
        %v2805 = vld [vmem:[%s2470 + $0x128] sm:$0xff]
        %v2806 = vld [vmem:[%s2470 + $0x138] sm:$0xff]
        %v2807 = vld [vmem:[%s2470 + $0x140] sm:$0xff]
        %v2808 = vld [vmem:[%s2470 + $0x150] sm:$0xff]
        %v2809 = vld [vmem:[%s2470 + $0x158] sm:$0xff]
        %v2810 = vld [vmem:[%s2470 + $0x168] sm:$0xff]
        %v2811 = vld [vmem:[%s2470 + $0x170] sm:$0xff]
        %v2812 = vld [vmem:[%s2470 + $0x2] sm:$0xff]
        %v2813 = vld [vmem:[%s2470 + $0xa] sm:$0xff]
        %v2814 = vld [vmem:[%s2470 + $0x1a] sm:$0xff]
        %v2815 = vld [vmem:[%s2470 + $0x22] sm:$0xff]
        %v2816 = vld [vmem:[%s2470 + $0x32] sm:$0xff]
        %v2817 = vld [vmem:[%s2470 + $0x3a] sm:$0xff]
        %v2818 = vld [vmem:[%s2470 + $0x4a] sm:$0xff]
        %v2819 = vld [vmem:[%s2470 + $0x52] sm:$0xff]
        %v2820 = vld [vmem:[%s2470 + $0x62] sm:$0xff]
        %v2821 = vld [vmem:[%s2470 + $0x6a] sm:$0xff]
        %v2822 = vld [vmem:[%s2470 + $0x7a] sm:$0xff]
        %v2823 = vld [vmem:[%s2470 + $0x82] sm:$0xff]
        %v2824 = vld [vmem:[%s2470 + $0x92] sm:$0xff]
        %v2825 = vld [vmem:[%s2470 + $0x9a] sm:$0xff]
        %v2826 = vld [vmem:[%s2470 + $0xaa] sm:$0xff]
        %v2827 = vld [vmem:[%s2470 + $0xb2] sm:$0xff]
        %v2828 = vld [vmem:[%s2470 + $0xc2] sm:$0xff]
        %v2829 = vld [vmem:[%s2470 + $0xca] sm:$0xff]
        %v2830 = vld [vmem:[%s2470 + $0xda] sm:$0xff]
        %v2831 = vld [vmem:[%s2470 + $0xe2] sm:$0xff]
        %v2832 = vld [vmem:[%s2470 + $0xf2] sm:$0xff]
        %v2833 = vld [vmem:[%s2470 + $0xfa] sm:$0xff]
        %v2834 = vld [vmem:[%s2470 + $0x10a] sm:$0xff]
        %v2835 = vld [vmem:[%s2470 + $0x112] sm:$0xff]
        %v2836 = vld [vmem:[%s2470 + $0x122] sm:$0xff]
        %v2837 = vld [vmem:[%s2470 + $0x12a] sm:$0xff]
        %v2838 = vld [vmem:[%s2470 + $0x13a] sm:$0xff]
        %v2839 = vld [vmem:[%s2470 + $0x142] sm:$0xff]
        %v2840 = vld [vmem:[%s2470 + $0x152] sm:$0xff]
        %v2841 = vld [vmem:[%s2470 + $0x15a] sm:$0xff]
        %v2842 = vld [vmem:[%s2470 + $0x16a] sm:$0xff]
        %v2843 = vld [vmem:[%s2470 + $0x172] sm:$0xff]
        %v2844 = vld [vmem:[%s2470 + $0x4] sm:$0xff]
        %v2845 = vld [vmem:[%s2470 + $0xc] sm:$0xff]
        %v2846 = vld [vmem:[%s2470 + $0x1c] sm:$0xff]
        %v2847 = vld [vmem:[%s2470 + $0x24] sm:$0xff]
        %v2848 = vld [vmem:[%s2470 + $0x34] sm:$0xff]
        %v2849 = vld [vmem:[%s2470 + $0x3c] sm:$0xff]
        %v2850 = vld [vmem:[%s2470 + $0x4c] sm:$0xff]
        %v2851 = vld [vmem:[%s2470 + $0x54] sm:$0xff]
        %v2852 = vld [vmem:[%s2470 + $0x64] sm:$0xff]
        %v2853 = vld [vmem:[%s2470 + $0x6c] sm:$0xff]
        %v2854 = vld [vmem:[%s2470 + $0x7c] sm:$0xff]
        %v2855 = vld [vmem:[%s2470 + $0x84] sm:$0xff]
        %v2856 = vld [vmem:[%s2470 + $0x94] sm:$0xff]
        %v2857 = vld [vmem:[%s2470 + $0x9c] sm:$0xff]
        %v2858 = vld [vmem:[%s2470 + $0xac] sm:$0xff]
        %v2859 = vld [vmem:[%s2470 + $0xb4] sm:$0xff]
        %v2860 = vld [vmem:[%s2470 + $0xc4] sm:$0xff]
        %v2861 = vld [vmem:[%s2470 + $0xcc] sm:$0xff]
        %v2862 = vld [vmem:[%s2470 + $0xdc] sm:$0xff]
        %v2863 = vld [vmem:[%s2470 + $0xe4] sm:$0xff]
        %v2864 = vld [vmem:[%s2470 + $0xf4] sm:$0xff]
        %v2865 = vld [vmem:[%s2470 + $0xfc] sm:$0xff]
        %v2866 = vld [vmem:[%s2470 + $0x10c] sm:$0xff]
        %v2867 = vld [vmem:[%s2470 + $0x114] sm:$0xff]
        %v2868 = vld [vmem:[%s2470 + $0x124] sm:$0xff]
        %v2869 = vld [vmem:[%s2470 + $0x12c] sm:$0xff]
        %v2870 = vld [vmem:[%s2470 + $0x13c] sm:$0xff]
        %v2871 = vld [vmem:[%s2470 + $0x144] sm:$0xff]
        %v2872 = vld [vmem:[%s2470 + $0x154] sm:$0xff]
        %v2873 = vld [vmem:[%s2470 + $0x15c] sm:$0xff]
        %v2874 = vld [vmem:[%s2470 + $0x16c] sm:$0xff]
        %v2875 = vld [vmem:[%s2470 + $0x174] sm:$0xff]
        %s2876 = scalar_lea.vmem [#allocation2], 96
        %v2877 = vld [vmem:[%s2876] sm:$0xff]
        %v2878 = vld [vmem:[%s2876 + $0x8] sm:$0xff]
        %v2879 = vld [vmem:[%s2876 + $0x18] sm:$0xff]
        %v2880 = vld [vmem:[%s2876 + $0x20] sm:$0xff]
        %v2881 = vld [vmem:[%s2876 + $0x30] sm:$0xff]
        %v2882 = vld [vmem:[%s2876 + $0x38] sm:$0xff]
        %v2883 = vld [vmem:[%s2876 + $0x48] sm:$0xff]
        %v2884 = vld [vmem:[%s2876 + $0x50] sm:$0xff]
        %v2885 = vld [vmem:[%s2876 + $0x60] sm:$0xff]
        %v2886 = vld [vmem:[%s2876 + $0x68] sm:$0xff]
        %v2887 = vld [vmem:[%s2876 + $0x78] sm:$0xff]
        %v2888 = vld [vmem:[%s2876 + $0x80] sm:$0xff]
        %v2889 = vld [vmem:[%s2876 + $0x90] sm:$0xff]
        %v2890 = vld [vmem:[%s2876 + $0x98] sm:$0xff]
        %v2891 = vld [vmem:[%s2876 + $0xa8] sm:$0xff]
        %v2892 = vld [vmem:[%s2876 + $0xb0] sm:$0xff]
        %v2893 = vld [vmem:[%s2876 + $0xc0] sm:$0xff]
        %v2894 = vld [vmem:[%s2876 + $0xc8] sm:$0xff]
        %v2895 = vld [vmem:[%s2876 + $0xd8] sm:$0xff]
        %v2896 = vld [vmem:[%s2876 + $0xe0] sm:$0xff]
        %v2897 = vld [vmem:[%s2876 + $0xf0] sm:$0xff]
        %v2898 = vld [vmem:[%s2876 + $0xf8] sm:$0xff]
        %v2899 = vld [vmem:[%s2876 + $0x108] sm:$0xff]
        %v2900 = vld [vmem:[%s2876 + $0x110] sm:$0xff]
        %v2901 = vld [vmem:[%s2876 + $0x120] sm:$0xff]
        %v2902 = vld [vmem:[%s2876 + $0x128] sm:$0xff]
        %v2903 = vld [vmem:[%s2876 + $0x138] sm:$0xff]
        %v2904 = vld [vmem:[%s2876 + $0x140] sm:$0xff]
        %v2905 = vld [vmem:[%s2876 + $0x150] sm:$0xff]
        %v2906 = vld [vmem:[%s2876 + $0x158] sm:$0xff]
        %v2907 = vld [vmem:[%s2876 + $0x168] sm:$0xff]
        %v2908 = vld [vmem:[%s2876 + $0x170] sm:$0xff]
        %v2909 = vld [vmem:[%s2876 + $0x2] sm:$0xff]
        %v2910 = vld [vmem:[%s2876 + $0xa] sm:$0xff]
        %v2911 = vld [vmem:[%s2876 + $0x1a] sm:$0xff]
        %v2912 = vld [vmem:[%s2876 + $0x22] sm:$0xff]
        %v2913 = vld [vmem:[%s2876 + $0x32] sm:$0xff]
        %v2914 = vld [vmem:[%s2876 + $0x3a] sm:$0xff]
        %v2915 = vld [vmem:[%s2876 + $0x4a] sm:$0xff]
        %v2916 = vld [vmem:[%s2876 + $0x52] sm:$0xff]
        %v2917 = vld [vmem:[%s2876 + $0x62] sm:$0xff]
        %v2918 = vld [vmem:[%s2876 + $0x6a] sm:$0xff]
        %v2919 = vld [vmem:[%s2876 + $0x7a] sm:$0xff]
        %v2920 = vld [vmem:[%s2876 + $0x82] sm:$0xff]
        %v2921 = vld [vmem:[%s2876 + $0x92] sm:$0xff]
        %v2922 = vld [vmem:[%s2876 + $0x9a] sm:$0xff]
        %v2923 = vld [vmem:[%s2876 + $0xaa] sm:$0xff]
        %v2924 = vld [vmem:[%s2876 + $0xb2] sm:$0xff]
        %v2925 = vld [vmem:[%s2876 + $0xc2] sm:$0xff]
        %v2926 = vld [vmem:[%s2876 + $0xca] sm:$0xff]
        %v2927 = vld [vmem:[%s2876 + $0xda] sm:$0xff]
        %v2928 = vld [vmem:[%s2876 + $0xe2] sm:$0xff]
        %v2929 = vld [vmem:[%s2876 + $0xf2] sm:$0xff]
        %v2930 = vld [vmem:[%s2876 + $0xfa] sm:$0xff]
        %v2931 = vld [vmem:[%s2876 + $0x10a] sm:$0xff]
        %v2932 = vld [vmem:[%s2876 + $0x112] sm:$0xff]
        %v2933 = vld [vmem:[%s2876 + $0x122] sm:$0xff]
        %v2934 = vld [vmem:[%s2876 + $0x12a] sm:$0xff]
        %v2935 = vld [vmem:[%s2876 + $0x13a] sm:$0xff]
        %v2936 = vld [vmem:[%s2876 + $0x142] sm:$0xff]
        %v2937 = vld [vmem:[%s2876 + $0x152] sm:$0xff]
        %v2938 = vld [vmem:[%s2876 + $0x15a] sm:$0xff]
        %v2939 = vld [vmem:[%s2876 + $0x16a] sm:$0xff]
        %v2940 = vld [vmem:[%s2876 + $0x172] sm:$0xff]
        %v2941 = vld [vmem:[%s2876 + $0x4] sm:$0xff]
        %v2942 = vld [vmem:[%s2876 + $0xc] sm:$0xff]
        %v2943 = vld [vmem:[%s2876 + $0x1c] sm:$0xff]
        %v2944 = vld [vmem:[%s2876 + $0x24] sm:$0xff]
        %v2945 = vld [vmem:[%s2876 + $0x34] sm:$0xff]
        %v2946 = vld [vmem:[%s2876 + $0x3c] sm:$0xff]
        %v2947 = vld [vmem:[%s2876 + $0x4c] sm:$0xff]
        %v2948 = vld [vmem:[%s2876 + $0x54] sm:$0xff]
        %v2949 = vld [vmem:[%s2876 + $0x64] sm:$0xff]
        %v2950 = vld [vmem:[%s2876 + $0x6c] sm:$0xff]
        %v2951 = vld [vmem:[%s2876 + $0x7c] sm:$0xff]
        %v2952 = vld [vmem:[%s2876 + $0x84] sm:$0xff]
        %v2953 = vld [vmem:[%s2876 + $0x94] sm:$0xff]
        %v2954 = vld [vmem:[%s2876 + $0x9c] sm:$0xff]
        %v2955 = vld [vmem:[%s2876 + $0xac] sm:$0xff]
        %v2956 = vld [vmem:[%s2876 + $0xb4] sm:$0xff]
        %v2957 = vld [vmem:[%s2876 + $0xc4] sm:$0xff]
        %v2958 = vld [vmem:[%s2876 + $0xcc] sm:$0xff]
        %v2959 = vld [vmem:[%s2876 + $0xdc] sm:$0xff]
        %v2960 = vld [vmem:[%s2876 + $0xe4] sm:$0xff]
        %v2961 = vld [vmem:[%s2876 + $0xf4] sm:$0xff]
        %v2962 = vld [vmem:[%s2876 + $0xfc] sm:$0xff]
        %v2963 = vld [vmem:[%s2876 + $0x10c] sm:$0xff]
        %v2964 = vld [vmem:[%s2876 + $0x114] sm:$0xff]
        %v2965 = vld [vmem:[%s2876 + $0x124] sm:$0xff]
        %v2966 = vld [vmem:[%s2876 + $0x12c] sm:$0xff]
        %v2967 = vld [vmem:[%s2876 + $0x13c] sm:$0xff]
        %v2968 = vld [vmem:[%s2876 + $0x144] sm:$0xff]
        %v2969 = vld [vmem:[%s2876 + $0x154] sm:$0xff]
        %v2970 = vld [vmem:[%s2876 + $0x15c] sm:$0xff]
        %v2971 = vld [vmem:[%s2876 + $0x16c] sm:$0xff]
        %v2972 = vld [vmem:[%s2876 + $0x174] sm:$0xff]
        %3005 = vrot.lane.b32.xlu0 %v2716, 8
        %v3006 = vpop.permute.xlu0 %3005
        %3007 = vrot.lane.b32.xlu0 %v2717, 8
        %v3008 = vpop.permute.xlu0 %3007
        %3009 = vrot.lane.b32.xlu0 %v2718, 8
        %v3010 = vpop.permute.xlu0 %3009
        %3011 = vrot.lane.b32.xlu0 %v2719, 8
        %v3012 = vpop.permute.xlu0 %3011
        %3013 = vrot.lane.b32.xlu0 %v2720, 8
        %v3014 = vpop.permute.xlu0 %3013
        %3015 = vrot.lane.b32.xlu0 %v2721, 8
        %v3016 = vpop.permute.xlu0 %3015
        %3017 = vrot.lane.b32.xlu0 %v2722, 8
        %v3018 = vpop.permute.xlu0 %3017
        %3019 = vrot.lane.b32.xlu0 %v2723, 8
        %v3020 = vpop.permute.xlu0 %3019
        %3021 = vrot.lane.b32.xlu0 %v2724, 8
        %v3022 = vpop.permute.xlu0 %3021
        %3023 = vrot.lane.b32.xlu0 %v2725, 8
        %v3024 = vpop.permute.xlu0 %3023
        %3025 = vrot.lane.b32.xlu0 %v2726, 8
        %v3026 = vpop.permute.xlu0 %3025
        %3027 = vrot.lane.b32.xlu0 %v2727, 8
        %v3028 = vpop.permute.xlu0 %3027
        %3029 = vrot.lane.b32.xlu0 %v2728, 8
        %v3030 = vpop.permute.xlu0 %3029
        %3031 = vrot.lane.b32.xlu0 %v2729, 8
        %v3032 = vpop.permute.xlu0 %3031
        %3033 = vrot.lane.b32.xlu0 %v2730, 8
        %v3034 = vpop.permute.xlu0 %3033
        %3035 = vrot.lane.b32.xlu0 %v2731, 8
        %v3036 = vpop.permute.xlu0 %3035
        %3037 = vrot.lane.b32.xlu0 %v2732, 8
        %v3038 = vpop.permute.xlu0 %3037
        %3039 = vrot.lane.b32.xlu0 %v2733, 8
        %v3040 = vpop.permute.xlu0 %3039
        %3041 = vrot.lane.b32.xlu0 %v2734, 8
        %v3042 = vpop.permute.xlu0 %3041
        %3043 = vrot.lane.b32.xlu0 %v2735, 8
        %v3044 = vpop.permute.xlu0 %3043
        %3045 = vrot.lane.b32.xlu0 %v2736, 8
        %v3046 = vpop.permute.xlu0 %3045
        %3047 = vrot.lane.b32.xlu0 %v2737, 8
        %v3048 = vpop.permute.xlu0 %3047
        %3049 = vrot.lane.b32.xlu0 %v2738, 8
        %v3050 = vpop.permute.xlu0 %3049
        %3051 = vrot.lane.b32.xlu0 %v2739, 8
        %v3052 = vpop.permute.xlu0 %3051
        %3053 = vrot.lane.b32.xlu0 %v2740, 8
        %v3054 = vpop.permute.xlu0 %3053
        %3055 = vrot.lane.b32.xlu0 %v2741, 8
        %v3056 = vpop.permute.xlu0 %3055
        %3057 = vrot.lane.b32.xlu0 %v2742, 8
        %v3058 = vpop.permute.xlu0 %3057
        %3059 = vrot.lane.b32.xlu0 %v2743, 8
        %v3060 = vpop.permute.xlu0 %3059
        %3061 = vrot.lane.b32.xlu0 %v2744, 8
        %v3062 = vpop.permute.xlu0 %3061
        %3063 = vrot.lane.b32.xlu0 %v2745, 8
        %v3064 = vpop.permute.xlu0 %3063
        %3065 = vrot.lane.b32.xlu0 %v2746, 8
        %v3066 = vpop.permute.xlu0 %3065
        %3067 = vrot.lane.b32.xlu0 %v2747, 8
        %v3068 = vpop.permute.xlu0 %3067
        %3133 = vrot.lane.b32.xlu0 %v2748, 16
        %v3134 = vpop.permute.xlu0 %3133
        %3135 = vrot.lane.b32.xlu0 %v2749, 16
        %v3136 = vpop.permute.xlu0 %3135
        %3137 = vrot.lane.b32.xlu0 %v2750, 16
        %v3138 = vpop.permute.xlu0 %3137
        %3139 = vrot.lane.b32.xlu0 %v2751, 16
        %v3140 = vpop.permute.xlu0 %3139
        %3141 = vrot.lane.b32.xlu0 %v2752, 16
        %v3142 = vpop.permute.xlu0 %3141
        %3143 = vrot.lane.b32.xlu0 %v2753, 16
        %v3144 = vpop.permute.xlu0 %3143
        %3145 = vrot.lane.b32.xlu0 %v2754, 16
        %v3146 = vpop.permute.xlu0 %3145
        %3147 = vrot.lane.b32.xlu0 %v2755, 16
        %v3148 = vpop.permute.xlu0 %3147
        %3149 = vrot.lane.b32.xlu0 %v2756, 16
        %v3150 = vpop.permute.xlu0 %3149
        %3151 = vrot.lane.b32.xlu0 %v2757, 16
        %v3152 = vpop.permute.xlu0 %3151
        %3153 = vrot.lane.b32.xlu0 %v2758, 16
        %v3154 = vpop.permute.xlu0 %3153
        %3155 = vrot.lane.b32.xlu0 %v2759, 16
        %v3156 = vpop.permute.xlu0 %3155
        %3157 = vrot.lane.b32.xlu0 %v2760, 16
        %v3158 = vpop.permute.xlu0 %3157
        %3159 = vrot.lane.b32.xlu0 %v2761, 16
        %v3160 = vpop.permute.xlu0 %3159
        %3161 = vrot.lane.b32.xlu0 %v2762, 16
        %v3162 = vpop.permute.xlu0 %3161
        %3163 = vrot.lane.b32.xlu0 %v2763, 16
        %v3164 = vpop.permute.xlu0 %3163
        %3165 = vrot.lane.b32.xlu0 %v2764, 16
        %v3166 = vpop.permute.xlu0 %3165
        %3167 = vrot.lane.b32.xlu0 %v2765, 16
        %v3168 = vpop.permute.xlu0 %3167
        %3169 = vrot.lane.b32.xlu0 %v2766, 16
        %v3170 = vpop.permute.xlu0 %3169
        %3171 = vrot.lane.b32.xlu0 %v2767, 16
        %v3172 = vpop.permute.xlu0 %3171
        %3173 = vrot.lane.b32.xlu0 %v2768, 16
        %v3174 = vpop.permute.xlu0 %3173
        %3175 = vrot.lane.b32.xlu0 %v2769, 16
        %v3176 = vpop.permute.xlu0 %3175
        %3177 = vrot.lane.b32.xlu0 %v2770, 16
        %v3178 = vpop.permute.xlu0 %3177
        %3179 = vrot.lane.b32.xlu0 %v2771, 16
        %v3180 = vpop.permute.xlu0 %3179
        %3181 = vrot.lane.b32.xlu0 %v2772, 16
        %v3182 = vpop.permute.xlu0 %3181
        %3183 = vrot.lane.b32.xlu0 %v2773, 16
        %v3184 = vpop.permute.xlu0 %3183
        %3185 = vrot.lane.b32.xlu0 %v2774, 16
        %v3186 = vpop.permute.xlu0 %3185
        %3187 = vrot.lane.b32.xlu0 %v2775, 16
        %v3188 = vpop.permute.xlu0 %3187
        %3189 = vrot.lane.b32.xlu0 %v2776, 16
        %v3190 = vpop.permute.xlu0 %3189
        %3191 = vrot.lane.b32.xlu0 %v2777, 16
        %v3192 = vpop.permute.xlu0 %3191
        %3193 = vrot.lane.b32.xlu0 %v2778, 16
        %v3194 = vpop.permute.xlu0 %3193
        %3195 = vrot.lane.b32.xlu0 %v2779, 16
        %v3196 = vpop.permute.xlu0 %3195
        %3261 = vrot.lane.b32.xlu0 %v2780, 24
        %v3262 = vpop.permute.xlu0 %3261
        %3263 = vrot.lane.b32.xlu0 %v2781, 24
        %v3264 = vpop.permute.xlu0 %3263
        %3265 = vrot.lane.b32.xlu0 %v2782, 24
        %v3266 = vpop.permute.xlu0 %3265
        %3267 = vrot.lane.b32.xlu0 %v2783, 24
        %v3268 = vpop.permute.xlu0 %3267
        %3269 = vrot.lane.b32.xlu0 %v2784, 24
        %v3270 = vpop.permute.xlu0 %3269
        %3271 = vrot.lane.b32.xlu0 %v2785, 24
        %v3272 = vpop.permute.xlu0 %3271
        %3273 = vrot.lane.b32.xlu0 %v2786, 24
        %v3274 = vpop.permute.xlu0 %3273
        %3275 = vrot.lane.b32.xlu0 %v2787, 24
        %v3276 = vpop.permute.xlu0 %3275
        %3277 = vrot.lane.b32.xlu0 %v2788, 24
        %v3278 = vpop.permute.xlu0 %3277
        %3279 = vrot.lane.b32.xlu0 %v2789, 24
        %v3280 = vpop.permute.xlu0 %3279
        %3281 = vrot.lane.b32.xlu0 %v2790, 24
        %v3282 = vpop.permute.xlu0 %3281
        %3283 = vrot.lane.b32.xlu0 %v2791, 24
        %v3284 = vpop.permute.xlu0 %3283
        %3285 = vrot.lane.b32.xlu0 %v2792, 24
        %v3286 = vpop.permute.xlu0 %3285
        %3287 = vrot.lane.b32.xlu0 %v2793, 24
        %v3288 = vpop.permute.xlu0 %3287
        %3289 = vrot.lane.b32.xlu0 %v2794, 24
        %v3290 = vpop.permute.xlu0 %3289
        %3291 = vrot.lane.b32.xlu0 %v2795, 24
        %v3292 = vpop.permute.xlu0 %3291
        %3293 = vrot.lane.b32.xlu0 %v2796, 24
        %v3294 = vpop.permute.xlu0 %3293
        %3295 = vrot.lane.b32.xlu0 %v2797, 24
        %v3296 = vpop.permute.xlu0 %3295
        %3297 = vrot.lane.b32.xlu0 %v2798, 24
        %v3298 = vpop.permute.xlu0 %3297
        %3299 = vrot.lane.b32.xlu0 %v2799, 24
        %v3300 = vpop.permute.xlu0 %3299
        %3301 = vrot.lane.b32.xlu0 %v2800, 24
        %v3302 = vpop.permute.xlu0 %3301
        %3303 = vrot.lane.b32.xlu0 %v2801, 24
        %v3304 = vpop.permute.xlu0 %3303
        %3305 = vrot.lane.b32.xlu0 %v2802, 24
        %v3306 = vpop.permute.xlu0 %3305
        %3307 = vrot.lane.b32.xlu0 %v2803, 24
        %v3308 = vpop.permute.xlu0 %3307
        %3309 = vrot.lane.b32.xlu0 %v2804, 24
        %v3310 = vpop.permute.xlu0 %3309
        %3311 = vrot.lane.b32.xlu0 %v2805, 24
        %v3312 = vpop.permute.xlu0 %3311
        %3313 = vrot.lane.b32.xlu0 %v2806, 24
        %v3314 = vpop.permute.xlu0 %3313
        %3315 = vrot.lane.b32.xlu0 %v2807, 24
        %v3316 = vpop.permute.xlu0 %3315
        %3317 = vrot.lane.b32.xlu0 %v2808, 24
        %v3318 = vpop.permute.xlu0 %3317
        %3319 = vrot.lane.b32.xlu0 %v2809, 24
        %v3320 = vpop.permute.xlu0 %3319
        %3321 = vrot.lane.b32.xlu0 %v2810, 24
        %v3322 = vpop.permute.xlu0 %3321
        %3323 = vrot.lane.b32.xlu0 %v2811, 24
        %v3324 = vpop.permute.xlu0 %3323
        %3389 = vrot.lane.b32.xlu0 %v2812, 32
        %v3390 = vpop.permute.xlu0 %3389
        %3391 = vrot.lane.b32.xlu0 %v2813, 32
        %v3392 = vpop.permute.xlu0 %3391
        %3393 = vrot.lane.b32.xlu0 %v2814, 32
        %v3394 = vpop.permute.xlu0 %3393
        %3395 = vrot.lane.b32.xlu0 %v2815, 32
        %v3396 = vpop.permute.xlu0 %3395
        %3397 = vrot.lane.b32.xlu0 %v2816, 32
        %v3398 = vpop.permute.xlu0 %3397
        %3399 = vrot.lane.b32.xlu0 %v2817, 32
        %v3400 = vpop.permute.xlu0 %3399
        %3401 = vrot.lane.b32.xlu0 %v2818, 32
        %v3402 = vpop.permute.xlu0 %3401
        %3403 = vrot.lane.b32.xlu0 %v2819, 32
        %v3404 = vpop.permute.xlu0 %3403
        %3405 = vrot.lane.b32.xlu0 %v2820, 32
        %v3406 = vpop.permute.xlu0 %3405
        %3407 = vrot.lane.b32.xlu0 %v2821, 32
        %v3408 = vpop.permute.xlu0 %3407
        %3409 = vrot.lane.b32.xlu0 %v2822, 32
        %v3410 = vpop.permute.xlu0 %3409
        %3411 = vrot.lane.b32.xlu0 %v2823, 32
        %v3412 = vpop.permute.xlu0 %3411
        %3413 = vrot.lane.b32.xlu0 %v2824, 32
        %v3414 = vpop.permute.xlu0 %3413
        %3415 = vrot.lane.b32.xlu0 %v2825, 32
        %v3416 = vpop.permute.xlu0 %3415
        %3417 = vrot.lane.b32.xlu0 %v2826, 32
        %v3418 = vpop.permute.xlu0 %3417
        %3419 = vrot.lane.b32.xlu0 %v2827, 32
        %v3420 = vpop.permute.xlu0 %3419
        %3421 = vrot.lane.b32.xlu0 %v2828, 32
        %v3422 = vpop.permute.xlu0 %3421
        %3423 = vrot.lane.b32.xlu0 %v2829, 32
        %v3424 = vpop.permute.xlu0 %3423
        %3425 = vrot.lane.b32.xlu0 %v2830, 32
        %v3426 = vpop.permute.xlu0 %3425
        %3427 = vrot.lane.b32.xlu0 %v2831, 32
        %v3428 = vpop.permute.xlu0 %3427
        %3429 = vrot.lane.b32.xlu0 %v2832, 32
        %v3430 = vpop.permute.xlu0 %3429
        %3431 = vrot.lane.b32.xlu0 %v2833, 32
        %v3432 = vpop.permute.xlu0 %3431
        %3433 = vrot.lane.b32.xlu0 %v2834, 32
        %v3434 = vpop.permute.xlu0 %3433
        %3435 = vrot.lane.b32.xlu0 %v2835, 32
        %v3436 = vpop.permute.xlu0 %3435
        %3437 = vrot.lane.b32.xlu0 %v2836, 32
        %v3438 = vpop.permute.xlu0 %3437
        %3439 = vrot.lane.b32.xlu0 %v2837, 32
        %v3440 = vpop.permute.xlu0 %3439
        %3441 = vrot.lane.b32.xlu0 %v2838, 32
        %v3442 = vpop.permute.xlu0 %3441
        %3443 = vrot.lane.b32.xlu0 %v2839, 32
        %v3444 = vpop.permute.xlu0 %3443
        %3445 = vrot.lane.b32.xlu0 %v2840, 32
        %v3446 = vpop.permute.xlu0 %3445
        %3447 = vrot.lane.b32.xlu0 %v2841, 32
        %v3448 = vpop.permute.xlu0 %3447
        %3449 = vrot.lane.b32.xlu0 %v2842, 32
        %v3450 = vpop.permute.xlu0 %3449
        %3451 = vrot.lane.b32.xlu0 %v2843, 32
        %v3452 = vpop.permute.xlu0 %3451
        %3517 = vrot.lane.b32.xlu0 %v2844, 40
        %v3518 = vpop.permute.xlu0 %3517
        %3519 = vrot.lane.b32.xlu0 %v2845, 40
        %v3520 = vpop.permute.xlu0 %3519
        %3521 = vrot.lane.b32.xlu0 %v2846, 40
        %v3522 = vpop.permute.xlu0 %3521
        %3523 = vrot.lane.b32.xlu0 %v2847, 40
        %v3524 = vpop.permute.xlu0 %3523
        %3525 = vrot.lane.b32.xlu0 %v2848, 40
        %v3526 = vpop.permute.xlu0 %3525
        %3527 = vrot.lane.b32.xlu0 %v2849, 40
        %v3528 = vpop.permute.xlu0 %3527
        %3529 = vrot.lane.b32.xlu0 %v2850, 40
        %v3530 = vpop.permute.xlu0 %3529
        %3531 = vrot.lane.b32.xlu0 %v2851, 40
        %v3532 = vpop.permute.xlu0 %3531
        %3533 = vrot.lane.b32.xlu0 %v2852, 40
        %v3534 = vpop.permute.xlu0 %3533
        %3535 = vrot.lane.b32.xlu0 %v2853, 40
        %v3536 = vpop.permute.xlu0 %3535
        %3537 = vrot.lane.b32.xlu0 %v2854, 40
        %v3538 = vpop.permute.xlu0 %3537
        %3539 = vrot.lane.b32.xlu0 %v2855, 40
        %v3540 = vpop.permute.xlu0 %3539
        %3541 = vrot.lane.b32.xlu0 %v2856, 40
        %v3542 = vpop.permute.xlu0 %3541
        %3543 = vrot.lane.b32.xlu0 %v2857, 40
        %v3544 = vpop.permute.xlu0 %3543
        %3545 = vrot.lane.b32.xlu0 %v2858, 40
        %v3546 = vpop.permute.xlu0 %3545
        %3547 = vrot.lane.b32.xlu0 %v2859, 40
        %v3548 = vpop.permute.xlu0 %3547
        %3549 = vrot.lane.b32.xlu0 %v2860, 40
        %v3550 = vpop.permute.xlu0 %3549
        %3551 = vrot.lane.b32.xlu0 %v2861, 40
        %v3552 = vpop.permute.xlu0 %3551
        %3553 = vrot.lane.b32.xlu0 %v2862, 40
        %v3554 = vpop.permute.xlu0 %3553
        %3555 = vrot.lane.b32.xlu0 %v2863, 40
        %v3556 = vpop.permute.xlu0 %3555
        %3557 = vrot.lane.b32.xlu0 %v2864, 40
        %v3558 = vpop.permute.xlu0 %3557
        %3559 = vrot.lane.b32.xlu0 %v2865, 40
        %v3560 = vpop.permute.xlu0 %3559
        %3561 = vrot.lane.b32.xlu0 %v2866, 40
        %v3562 = vpop.permute.xlu0 %3561
        %3563 = vrot.lane.b32.xlu0 %v2867, 40
        %v3564 = vpop.permute.xlu0 %3563
        %3565 = vrot.lane.b32.xlu0 %v2868, 40
        %v3566 = vpop.permute.xlu0 %3565
        %3567 = vrot.lane.b32.xlu0 %v2869, 40
        %v3568 = vpop.permute.xlu0 %3567
        %3569 = vrot.lane.b32.xlu0 %v2870, 40
        %v3570 = vpop.permute.xlu0 %3569
        %3571 = vrot.lane.b32.xlu0 %v2871, 40
        %v3572 = vpop.permute.xlu0 %3571
        %3573 = vrot.lane.b32.xlu0 %v2872, 40
        %v3574 = vpop.permute.xlu0 %3573
        %3575 = vrot.lane.b32.xlu0 %v2873, 40
        %v3576 = vpop.permute.xlu0 %3575
        %3577 = vrot.lane.b32.xlu0 %v2874, 40
        %v3578 = vpop.permute.xlu0 %3577
        %3579 = vrot.lane.b32.xlu0 %v2875, 40
        %v3580 = vpop.permute.xlu0 %3579
        %3645 = vrot.lane.b32.xlu0 %v2877, 48
        %v3646 = vpop.permute.xlu0 %3645
        %3647 = vrot.lane.b32.xlu0 %v2878, 48
        %v3648 = vpop.permute.xlu0 %3647
        %3649 = vrot.lane.b32.xlu0 %v2879, 48
        %v3650 = vpop.permute.xlu0 %3649
        %3651 = vrot.lane.b32.xlu0 %v2880, 48
        %v3652 = vpop.permute.xlu0 %3651
        %3653 = vrot.lane.b32.xlu0 %v2881, 48
        %v3654 = vpop.permute.xlu0 %3653
        %3655 = vrot.lane.b32.xlu0 %v2882, 48
        %v3656 = vpop.permute.xlu0 %3655
        %3657 = vrot.lane.b32.xlu0 %v2883, 48
        %v3658 = vpop.permute.xlu0 %3657
        %3659 = vrot.lane.b32.xlu0 %v2884, 48
        %v3660 = vpop.permute.xlu0 %3659
        %3661 = vrot.lane.b32.xlu0 %v2885, 48
        %v3662 = vpop.permute.xlu0 %3661
        %3663 = vrot.lane.b32.xlu0 %v2886, 48
        %v3664 = vpop.permute.xlu0 %3663
        %3665 = vrot.lane.b32.xlu0 %v2887, 48
        %v3666 = vpop.permute.xlu0 %3665
        %3667 = vrot.lane.b32.xlu0 %v2888, 48
        %v3668 = vpop.permute.xlu0 %3667
        %3669 = vrot.lane.b32.xlu0 %v2889, 48
        %v3670 = vpop.permute.xlu0 %3669
        %3671 = vrot.lane.b32.xlu0 %v2890, 48
        %v3672 = vpop.permute.xlu0 %3671
        %3673 = vrot.lane.b32.xlu0 %v2891, 48
        %v3674 = vpop.permute.xlu0 %3673
        %3675 = vrot.lane.b32.xlu0 %v2892, 48
        %v3676 = vpop.permute.xlu0 %3675
        %3677 = vrot.lane.b32.xlu0 %v2893, 48
        %v3678 = vpop.permute.xlu0 %3677
        %3679 = vrot.lane.b32.xlu0 %v2894, 48
        %v3680 = vpop.permute.xlu0 %3679
        %3681 = vrot.lane.b32.xlu0 %v2895, 48
        %v3682 = vpop.permute.xlu0 %3681
        %3683 = vrot.lane.b32.xlu0 %v2896, 48
        %v3684 = vpop.permute.xlu0 %3683
        %3685 = vrot.lane.b32.xlu0 %v2897, 48
        %v3686 = vpop.permute.xlu0 %3685
        %3687 = vrot.lane.b32.xlu0 %v2898, 48
        %v3688 = vpop.permute.xlu0 %3687
        %3689 = vrot.lane.b32.xlu0 %v2899, 48
        %v3690 = vpop.permute.xlu0 %3689
        %3691 = vrot.lane.b32.xlu0 %v2900, 48
        %v3692 = vpop.permute.xlu0 %3691
        %3693 = vrot.lane.b32.xlu0 %v2901, 48
        %v3694 = vpop.permute.xlu0 %3693
        %3695 = vrot.lane.b32.xlu0 %v2902, 48
        %v3696 = vpop.permute.xlu0 %3695
        %3697 = vrot.lane.b32.xlu0 %v2903, 48
        %v3698 = vpop.permute.xlu0 %3697
        %3699 = vrot.lane.b32.xlu0 %v2904, 48
        %v3700 = vpop.permute.xlu0 %3699
        %3701 = vrot.lane.b32.xlu0 %v2905, 48
        %v3702 = vpop.permute.xlu0 %3701
        %3703 = vrot.lane.b32.xlu0 %v2906, 48
        %v3704 = vpop.permute.xlu0 %3703
        %3705 = vrot.lane.b32.xlu0 %v2907, 48
        %v3706 = vpop.permute.xlu0 %3705
        %3707 = vrot.lane.b32.xlu0 %v2908, 48
        %v3708 = vpop.permute.xlu0 %3707
        %3773 = vrot.lane.b32.xlu0 %v2909, 56
        %v3774 = vpop.permute.xlu0 %3773
        %3775 = vrot.lane.b32.xlu0 %v2910, 56
        %v3776 = vpop.permute.xlu0 %3775
        %3777 = vrot.lane.b32.xlu0 %v2911, 56
        %v3778 = vpop.permute.xlu0 %3777
        %3779 = vrot.lane.b32.xlu0 %v2912, 56
        %v3780 = vpop.permute.xlu0 %3779
        %3781 = vrot.lane.b32.xlu0 %v2913, 56
        %v3782 = vpop.permute.xlu0 %3781
        %3783 = vrot.lane.b32.xlu0 %v2914, 56
        %v3784 = vpop.permute.xlu0 %3783
        %3785 = vrot.lane.b32.xlu0 %v2915, 56
        %v3786 = vpop.permute.xlu0 %3785
        %3787 = vrot.lane.b32.xlu0 %v2916, 56
        %v3788 = vpop.permute.xlu0 %3787
        %3789 = vrot.lane.b32.xlu0 %v2917, 56
        %v3790 = vpop.permute.xlu0 %3789
        %3791 = vrot.lane.b32.xlu0 %v2918, 56
        %v3792 = vpop.permute.xlu0 %3791
        %3793 = vrot.lane.b32.xlu0 %v2919, 56
        %v3794 = vpop.permute.xlu0 %3793
        %3795 = vrot.lane.b32.xlu0 %v2920, 56
        %v3796 = vpop.permute.xlu0 %3795
        %3797 = vrot.lane.b32.xlu0 %v2921, 56
        %v3798 = vpop.permute.xlu0 %3797
        %3799 = vrot.lane.b32.xlu0 %v2922, 56
        %v3800 = vpop.permute.xlu0 %3799
        %3801 = vrot.lane.b32.xlu0 %v2923, 56
        %v3802 = vpop.permute.xlu0 %3801
        %3803 = vrot.lane.b32.xlu0 %v2924, 56
        %v3804 = vpop.permute.xlu0 %3803
        %3805 = vrot.lane.b32.xlu0 %v2925, 56
        %v3806 = vpop.permute.xlu0 %3805
        %3807 = vrot.lane.b32.xlu0 %v2926, 56
        %v3808 = vpop.permute.xlu0 %3807
        %3809 = vrot.lane.b32.xlu0 %v2927, 56
        %v3810 = vpop.permute.xlu0 %3809
        %3811 = vrot.lane.b32.xlu0 %v2928, 56
        %v3812 = vpop.permute.xlu0 %3811
        %3813 = vrot.lane.b32.xlu0 %v2929, 56
        %v3814 = vpop.permute.xlu0 %3813
        %3815 = vrot.lane.b32.xlu0 %v2930, 56
        %v3816 = vpop.permute.xlu0 %3815
        %3817 = vrot.lane.b32.xlu0 %v2931, 56
        %v3818 = vpop.permute.xlu0 %3817
        %3819 = vrot.lane.b32.xlu0 %v2932, 56
        %v3820 = vpop.permute.xlu0 %3819
        %3821 = vrot.lane.b32.xlu0 %v2933, 56
        %v3822 = vpop.permute.xlu0 %3821
        %3823 = vrot.lane.b32.xlu0 %v2934, 56
        %v3824 = vpop.permute.xlu0 %3823
        %3825 = vrot.lane.b32.xlu0 %v2935, 56
        %v3826 = vpop.permute.xlu0 %3825
        %3827 = vrot.lane.b32.xlu0 %v2936, 56
        %v3828 = vpop.permute.xlu0 %3827
        %3829 = vrot.lane.b32.xlu0 %v2937, 56
        %v3830 = vpop.permute.xlu0 %3829
        %3831 = vrot.lane.b32.xlu0 %v2938, 56
        %v3832 = vpop.permute.xlu0 %3831
        %3833 = vrot.lane.b32.xlu0 %v2939, 56
        %v3834 = vpop.permute.xlu0 %3833
        %3835 = vrot.lane.b32.xlu0 %v2940, 56
        %v3836 = vpop.permute.xlu0 %3835
        %3901 = vrot.lane.b32.xlu0 %v2941, 64
        %v3902 = vpop.permute.xlu0 %3901
        %3903 = vrot.lane.b32.xlu0 %v2942, 64
        %v3904 = vpop.permute.xlu0 %3903
        %3905 = vrot.lane.b32.xlu0 %v2943, 64
        %v3906 = vpop.permute.xlu0 %3905
        %3907 = vrot.lane.b32.xlu0 %v2944, 64
        %v3908 = vpop.permute.xlu0 %3907
        %3909 = vrot.lane.b32.xlu0 %v2945, 64
        %v3910 = vpop.permute.xlu0 %3909
        %3911 = vrot.lane.b32.xlu0 %v2946, 64
        %v3912 = vpop.permute.xlu0 %3911
        %3913 = vrot.lane.b32.xlu0 %v2947, 64
        %v3914 = vpop.permute.xlu0 %3913
        %3915 = vrot.lane.b32.xlu0 %v2948, 64
        %v3916 = vpop.permute.xlu0 %3915
        %3917 = vrot.lane.b32.xlu0 %v2949, 64
        %v3918 = vpop.permute.xlu0 %3917
        %3919 = vrot.lane.b32.xlu0 %v2950, 64
        %v3920 = vpop.permute.xlu0 %3919
        %3921 = vrot.lane.b32.xlu0 %v2951, 64
        %v3922 = vpop.permute.xlu0 %3921
        %3923 = vrot.lane.b32.xlu0 %v2952, 64
        %v3924 = vpop.permute.xlu0 %3923
        %3925 = vrot.lane.b32.xlu0 %v2953, 64
        %v3926 = vpop.permute.xlu0 %3925
        %3927 = vrot.lane.b32.xlu0 %v2954, 64
        %v3928 = vpop.permute.xlu0 %3927
        %3929 = vrot.lane.b32.xlu0 %v2955, 64
        %v3930 = vpop.permute.xlu0 %3929
        %3931 = vrot.lane.b32.xlu0 %v2956, 64
        %v3932 = vpop.permute.xlu0 %3931
        %3933 = vrot.lane.b32.xlu0 %v2957, 64
        %v3934 = vpop.permute.xlu0 %3933
        %3935 = vrot.lane.b32.xlu0 %v2958, 64
        %v3936 = vpop.permute.xlu0 %3935
        %3937 = vrot.lane.b32.xlu0 %v2959, 64
        %v3938 = vpop.permute.xlu0 %3937
        %3939 = vrot.lane.b32.xlu0 %v2960, 64
        %v3940 = vpop.permute.xlu0 %3939
        %3941 = vrot.lane.b32.xlu0 %v2961, 64
        %v3942 = vpop.permute.xlu0 %3941
        %3943 = vrot.lane.b32.xlu0 %v2962, 64
        %v3944 = vpop.permute.xlu0 %3943
        %3945 = vrot.lane.b32.xlu0 %v2963, 64
        %v3946 = vpop.permute.xlu0 %3945
        %3947 = vrot.lane.b32.xlu0 %v2964, 64
        %v3948 = vpop.permute.xlu0 %3947
        %3949 = vrot.lane.b32.xlu0 %v2965, 64
        %v3950 = vpop.permute.xlu0 %3949
        %3951 = vrot.lane.b32.xlu0 %v2966, 64
        %v3952 = vpop.permute.xlu0 %3951
        %3953 = vrot.lane.b32.xlu0 %v2967, 64
        %v3954 = vpop.permute.xlu0 %3953
        %3955 = vrot.lane.b32.xlu0 %v2968, 64
        %v3956 = vpop.permute.xlu0 %3955
        %3957 = vrot.lane.b32.xlu0 %v2969, 64
        %v3958 = vpop.permute.xlu0 %3957
        %3959 = vrot.lane.b32.xlu0 %v2970, 64
        %v3960 = vpop.permute.xlu0 %3959
        %3961 = vrot.lane.b32.xlu0 %v2971, 64
        %v3962 = vpop.permute.xlu0 %3961
        %3963 = vrot.lane.b32.xlu0 %v2972, 64
        %v3964 = vpop.permute.xlu0 %3963
        %v3997 = vsel %vm1828, %v2684, %v3006
        %v3998 = vsel %vm1828, %v2685, %v3008
        %v3999 = vsel %vm1828, %v2686, %v3010
        %v4000 = vsel %vm1828, %v2687, %v3012
        %v4001 = vsel %vm1828, %v2688, %v3014
        %v4002 = vsel %vm1828, %v2689, %v3016
        %v4003 = vsel %vm1828, %v2690, %v3018
        %v4004 = vsel %vm1828, %v2691, %v3020
        %v4005 = vsel %vm1828, %v2692, %v3022
        %v4006 = vsel %vm1828, %v2693, %v3024
        %v4007 = vsel %vm1828, %v2694, %v3026
        %v4008 = vsel %vm1828, %v2695, %v3028
        %v4009 = vsel %vm1828, %v2696, %v3030
        %v4010 = vsel %vm1828, %v2697, %v3032
        %v4011 = vsel %vm1828, %v2698, %v3034
        %v4012 = vsel %vm1828, %v2699, %v3036
        %v4013 = vsel %vm1828, %v2700, %v3038
        %v4014 = vsel %vm1828, %v2701, %v3040
        %v4015 = vsel %vm1828, %v2702, %v3042
        %v4016 = vsel %vm1828, %v2703, %v3044
        %v4017 = vsel %vm1828, %v2704, %v3046
        %v4018 = vsel %vm1828, %v2705, %v3048
        %v4019 = vsel %vm1828, %v2706, %v3050
        %v4020 = vsel %vm1828, %v2707, %v3052
        %v4021 = vsel %vm1828, %v2708, %v3054
        %v4022 = vsel %vm1828, %v2709, %v3056
        %v4023 = vsel %vm1828, %v2710, %v3058
        %v4024 = vsel %vm1828, %v2711, %v3060
        %v4025 = vsel %vm1828, %v2712, %v3062
        %v4026 = vsel %vm1828, %v2713, %v3064
        %v4027 = vsel %vm1828, %v2714, %v3066
        %v4028 = vsel %vm1828, %v2715, %v3068
        %v4029 = vsel %vm1861, %v3997, %v3134
        %v4030 = vsel %vm1861, %v3998, %v3136
        %v4031 = vsel %vm1861, %v3999, %v3138
        %v4032 = vsel %vm1861, %v4000, %v3140
        %v4033 = vsel %vm1861, %v4001, %v3142
        %v4034 = vsel %vm1861, %v4002, %v3144
        %v4035 = vsel %vm1861, %v4003, %v3146
        %v4036 = vsel %vm1861, %v4004, %v3148
        %v4037 = vsel %vm1861, %v4005, %v3150
        %v4038 = vsel %vm1861, %v4006, %v3152
        %v4039 = vsel %vm1861, %v4007, %v3154
        %v4040 = vsel %vm1861, %v4008, %v3156
        %v4041 = vsel %vm1861, %v4009, %v3158
        %v4042 = vsel %vm1861, %v4010, %v3160
        %v4043 = vsel %vm1861, %v4011, %v3162
        %v4044 = vsel %vm1861, %v4012, %v3164
        %v4045 = vsel %vm1861, %v4013, %v3166
        %v4046 = vsel %vm1861, %v4014, %v3168
        %v4047 = vsel %vm1861, %v4015, %v3170
        %v4048 = vsel %vm1861, %v4016, %v3172
        %v4049 = vsel %vm1861, %v4017, %v3174
        %v4050 = vsel %vm1861, %v4018, %v3176
        %v4051 = vsel %vm1861, %v4019, %v3178
        %v4052 = vsel %vm1861, %v4020, %v3180
        %v4053 = vsel %vm1861, %v4021, %v3182
        %v4054 = vsel %vm1861, %v4022, %v3184
        %v4055 = vsel %vm1861, %v4023, %v3186
        %v4056 = vsel %vm1861, %v4024, %v3188
        %v4057 = vsel %vm1861, %v4025, %v3190
        %v4058 = vsel %vm1861, %v4026, %v3192
        %v4059 = vsel %vm1861, %v4027, %v3194
        %v4060 = vsel %vm1861, %v4028, %v3196
        %v4061 = vsel %vm1894, %v4029, %v3262
        %v4062 = vsel %vm1894, %v4030, %v3264
        %v4063 = vsel %vm1894, %v4031, %v3266
        %v4064 = vsel %vm1894, %v4032, %v3268
        %v4065 = vsel %vm1894, %v4033, %v3270
        %v4066 = vsel %vm1894, %v4034, %v3272
        %v4067 = vsel %vm1894, %v4035, %v3274
        %v4068 = vsel %vm1894, %v4036, %v3276
        %v4069 = vsel %vm1894, %v4037, %v3278
        %v4070 = vsel %vm1894, %v4038, %v3280
        %v4071 = vsel %vm1894, %v4039, %v3282
        %v4072 = vsel %vm1894, %v4040, %v3284
        %v4073 = vsel %vm1894, %v4041, %v3286
        %v4074 = vsel %vm1894, %v4042, %v3288
        %v4075 = vsel %vm1894, %v4043, %v3290
        %v4076 = vsel %vm1894, %v4044, %v3292
        %v4077 = vsel %vm1894, %v4045, %v3294
        %v4078 = vsel %vm1894, %v4046, %v3296
        %v4079 = vsel %vm1894, %v4047, %v3298
        %v4080 = vsel %vm1894, %v4048, %v3300
        %v4081 = vsel %vm1894, %v4049, %v3302
        %v4082 = vsel %vm1894, %v4050, %v3304
        %v4083 = vsel %vm1894, %v4051, %v3306
        %v4084 = vsel %vm1894, %v4052, %v3308
        %v4085 = vsel %vm1894, %v4053, %v3310
        %v4086 = vsel %vm1894, %v4054, %v3312
        %v4087 = vsel %vm1894, %v4055, %v3314
        %v4088 = vsel %vm1894, %v4056, %v3316
        %v4089 = vsel %vm1894, %v4057, %v3318
        %v4090 = vsel %vm1894, %v4058, %v3320
        %v4091 = vsel %vm1894, %v4059, %v3322
        %v4092 = vsel %vm1894, %v4060, %v3324
        %v4093 = vsel %vm1927, %v4061, %v3390
        %v4094 = vsel %vm1927, %v4062, %v3392
        %v4095 = vsel %vm1927, %v4063, %v3394
        %v4096 = vsel %vm1927, %v4064, %v3396
        %v4097 = vsel %vm1927, %v4065, %v3398
        %v4098 = vsel %vm1927, %v4066, %v3400
        %v4099 = vsel %vm1927, %v4067, %v3402
        %v4100 = vsel %vm1927, %v4068, %v3404
        %v4101 = vsel %vm1927, %v4069, %v3406
        %v4102 = vsel %vm1927, %v4070, %v3408
        %v4103 = vsel %vm1927, %v4071, %v3410
        %v4104 = vsel %vm1927, %v4072, %v3412
        %v4105 = vsel %vm1927, %v4073, %v3414
        %v4106 = vsel %vm1927, %v4074, %v3416
        %v4107 = vsel %vm1927, %v4075, %v3418
        %v4108 = vsel %vm1927, %v4076, %v3420
        %v4109 = vsel %vm1927, %v4077, %v3422
        %v4110 = vsel %vm1927, %v4078, %v3424
        %v4111 = vsel %vm1927, %v4079, %v3426
        %v4112 = vsel %vm1927, %v4080, %v3428
        %v4113 = vsel %vm1927, %v4081, %v3430
        %v4114 = vsel %vm1927, %v4082, %v3432
        %v4115 = vsel %vm1927, %v4083, %v3434
        %v4116 = vsel %vm1927, %v4084, %v3436
        %v4117 = vsel %vm1927, %v4085, %v3438
        %v4118 = vsel %vm1927, %v4086, %v3440
        %v4119 = vsel %vm1927, %v4087, %v3442
        %v4120 = vsel %vm1927, %v4088, %v3444
        %v4121 = vsel %vm1927, %v4089, %v3446
        %v4122 = vsel %vm1927, %v4090, %v3448
        %v4123 = vsel %vm1927, %v4091, %v3450
        %v4124 = vsel %vm1927, %v4092, %v3452
        %v4125 = vsel %vm1960, %v4093, %v3518
        %v4126 = vsel %vm1960, %v4094, %v3520
        %v4127 = vsel %vm1960, %v4095, %v3522
        %v4128 = vsel %vm1960, %v4096, %v3524
        %v4129 = vsel %vm1960, %v4097, %v3526
        %v4130 = vsel %vm1960, %v4098, %v3528
        %v4131 = vsel %vm1960, %v4099, %v3530
        %v4132 = vsel %vm1960, %v4100, %v3532
        %v4133 = vsel %vm1960, %v4101, %v3534
        %v4134 = vsel %vm1960, %v4102, %v3536
        %v4135 = vsel %vm1960, %v4103, %v3538
        %v4136 = vsel %vm1960, %v4104, %v3540
        %v4137 = vsel %vm1960, %v4105, %v3542
        %v4138 = vsel %vm1960, %v4106, %v3544
        %v4139 = vsel %vm1960, %v4107, %v3546
        %v4140 = vsel %vm1960, %v4108, %v3548
        %v4141 = vsel %vm1960, %v4109, %v3550
        %v4142 = vsel %vm1960, %v4110, %v3552
        %v4143 = vsel %vm1960, %v4111, %v3554
        %v4144 = vsel %vm1960, %v4112, %v3556
        %v4145 = vsel %vm1960, %v4113, %v3558
        %v4146 = vsel %vm1960, %v4114, %v3560
        %v4147 = vsel %vm1960, %v4115, %v3562
        %v4148 = vsel %vm1960, %v4116, %v3564
        %v4149 = vsel %vm1960, %v4117, %v3566
        %v4150 = vsel %vm1960, %v4118, %v3568
        %v4151 = vsel %vm1960, %v4119, %v3570
        %v4152 = vsel %vm1960, %v4120, %v3572
        %v4153 = vsel %vm1960, %v4121, %v3574
        %v4154 = vsel %vm1960, %v4122, %v3576
        %v4155 = vsel %vm1960, %v4123, %v3578
        %v4156 = vsel %vm1960, %v4124, %v3580
        %v4157 = vsel %vm1993, %v4125, %v3646
        %v4158 = vsel %vm1993, %v4126, %v3648
        %v4159 = vsel %vm1993, %v4127, %v3650
        %v4160 = vsel %vm1993, %v4128, %v3652
        %v4161 = vsel %vm1993, %v4129, %v3654
        %v4162 = vsel %vm1993, %v4130, %v3656
        %v4163 = vsel %vm1993, %v4131, %v3658
        %v4164 = vsel %vm1993, %v4132, %v3660
        %v4165 = vsel %vm1993, %v4133, %v3662
        %v4166 = vsel %vm1993, %v4134, %v3664
        %v4167 = vsel %vm1993, %v4135, %v3666
        %v4168 = vsel %vm1993, %v4136, %v3668
        %v4169 = vsel %vm1993, %v4137, %v3670
        %v4170 = vsel %vm1993, %v4138, %v3672
        %v4171 = vsel %vm1993, %v4139, %v3674
        %v4172 = vsel %vm1993, %v4140, %v3676
        %v4173 = vsel %vm1993, %v4141, %v3678
        %v4174 = vsel %vm1993, %v4142, %v3680
        %v4175 = vsel %vm1993, %v4143, %v3682
        %v4176 = vsel %vm1993, %v4144, %v3684
        %v4177 = vsel %vm1993, %v4145, %v3686
        %v4178 = vsel %vm1993, %v4146, %v3688
        %v4179 = vsel %vm1993, %v4147, %v3690
        %v4180 = vsel %vm1993, %v4148, %v3692
        %v4181 = vsel %vm1993, %v4149, %v3694
        %v4182 = vsel %vm1993, %v4150, %v3696
        %v4183 = vsel %vm1993, %v4151, %v3698
        %v4184 = vsel %vm1993, %v4152, %v3700
        %v4185 = vsel %vm1993, %v4153, %v3702
        %v4186 = vsel %vm1993, %v4154, %v3704
        %v4187 = vsel %vm1993, %v4155, %v3706
        %v4188 = vsel %vm1993, %v4156, %v3708
        %v4189 = vsel %vm2026, %v4157, %v3774
        %v4190 = vsel %vm2026, %v4158, %v3776
        %v4191 = vsel %vm2026, %v4159, %v3778
        %v4192 = vsel %vm2026, %v4160, %v3780
        %v4193 = vsel %vm2026, %v4161, %v3782
        %v4194 = vsel %vm2026, %v4162, %v3784
        %v4195 = vsel %vm2026, %v4163, %v3786
        %v4196 = vsel %vm2026, %v4164, %v3788
        %v4197 = vsel %vm2026, %v4165, %v3790
        %v4198 = vsel %vm2026, %v4166, %v3792
        %v4199 = vsel %vm2026, %v4167, %v3794
        %v4200 = vsel %vm2026, %v4168, %v3796
        %v4201 = vsel %vm2026, %v4169, %v3798
        %v4202 = vsel %vm2026, %v4170, %v3800
        %v4203 = vsel %vm2026, %v4171, %v3802
        %v4204 = vsel %vm2026, %v4172, %v3804
        %v4205 = vsel %vm2026, %v4173, %v3806
        %v4206 = vsel %vm2026, %v4174, %v3808
        %v4207 = vsel %vm2026, %v4175, %v3810
        %v4208 = vsel %vm2026, %v4176, %v3812
        %v4209 = vsel %vm2026, %v4177, %v3814
        %v4210 = vsel %vm2026, %v4178, %v3816
        %v4211 = vsel %vm2026, %v4179, %v3818
        %v4212 = vsel %vm2026, %v4180, %v3820
        %v4213 = vsel %vm2026, %v4181, %v3822
        %v4214 = vsel %vm2026, %v4182, %v3824
        %v4215 = vsel %vm2026, %v4183, %v3826
        %v4216 = vsel %vm2026, %v4184, %v3828
        %v4217 = vsel %vm2026, %v4185, %v3830
        %v4218 = vsel %vm2026, %v4186, %v3832
        %v4219 = vsel %vm2026, %v4187, %v3834
        %v4220 = vsel %vm2026, %v4188, %v3836
        %v4221 = vsel %vm2059, %v4189, %v3902
        %v4222 = vsel %vm2059, %v4190, %v3904
        %v4223 = vsel %vm2059, %v4191, %v3906
        %v4224 = vsel %vm2059, %v4192, %v3908
        %v4225 = vsel %vm2059, %v4193, %v3910
        %v4226 = vsel %vm2059, %v4194, %v3912
        %v4227 = vsel %vm2059, %v4195, %v3914
        %v4228 = vsel %vm2059, %v4196, %v3916
        %v4229 = vsel %vm2059, %v4197, %v3918
        %v4230 = vsel %vm2059, %v4198, %v3920
        %v4231 = vsel %vm2059, %v4199, %v3922
        %v4232 = vsel %vm2059, %v4200, %v3924
        %v4233 = vsel %vm2059, %v4201, %v3926
        %v4234 = vsel %vm2059, %v4202, %v3928
        %v4235 = vsel %vm2059, %v4203, %v3930
        %v4236 = vsel %vm2059, %v4204, %v3932
        %v4237 = vsel %vm2059, %v4205, %v3934
        %v4238 = vsel %vm2059, %v4206, %v3936
        %v4239 = vsel %vm2059, %v4207, %v3938
        %v4240 = vsel %vm2059, %v4208, %v3940
        %v4241 = vsel %vm2059, %v4209, %v3942
        %v4242 = vsel %vm2059, %v4210, %v3944
        %v4243 = vsel %vm2059, %v4211, %v3946
        %v4244 = vsel %vm2059, %v4212, %v3948
        %v4245 = vsel %vm2059, %v4213, %v3950
        %v4246 = vsel %vm2059, %v4214, %v3952
        %v4247 = vsel %vm2059, %v4215, %v3954
        %v4248 = vsel %vm2059, %v4216, %v3956
        %v4249 = vsel %vm2059, %v4217, %v3958
        %v4250 = vsel %vm2059, %v4218, %v3960
        %v4251 = vsel %vm2059, %v4219, %v3962
        %v4252 = vsel %vm2059, %v4220, %v3964
        %v4253 = vld [vmem:[%s5] sm:$0xff]
        %v4254 = vld [vmem:[%s5 + $0x8] sm:$0xff]
        %v4255 = vld [vmem:[%s5 + $0x10] sm:$0xff]
        %v4256 = vld [vmem:[%s5 + $0x18] sm:$0xff]
        %v4257 = vld [vmem:[%s5 + $0x20] sm:$0xff]
        %v4258 = vld [vmem:[%s5 + $0x28] sm:$0xff]
        %v4259 = vld [vmem:[%s5 + $0x30] sm:$0xff]
        %v4260 = vld [vmem:[%s5 + $0x38] sm:$0xff]
        %v4261 = vld [vmem:[%s5 + $0x40] sm:$0xff]
        %v4263 = vsel %vm2101, %v4221, 0
        %v4266 = vsel %vm2101, %v4222, 0
        %v4269 = vsel %vm2101, %v4223, 0
        %v4272 = vsel %vm2101, %v4224, 0
        %v4275 = vsel %vm2101, %v4225, 0
        %v4278 = vsel %vm2101, %v4226, 0
        %v4281 = vsel %vm2101, %v4227, 0
        %v4284 = vsel %vm2101, %v4228, 0
        %v4287 = vsel %vm2101, %v4229, 0
        %v4290 = vsel %vm2101, %v4230, 0
        %v4293 = vsel %vm2101, %v4231, 0
        %v4296 = vsel %vm2101, %v4232, 0
        %v4299 = vsel %vm2101, %v4233, 0
        %v4302 = vsel %vm2101, %v4234, 0
        %v4305 = vsel %vm2101, %v4235, 0
        %v4308 = vsel %vm2101, %v4236, 0
        %v4311 = vsel %vm2101, %v4237, 0
        %v4314 = vsel %vm2101, %v4238, 0
        %v4317 = vsel %vm2101, %v4239, 0
        %v4320 = vsel %vm2101, %v4240, 0
        %v4323 = vsel %vm2101, %v4241, 0
        %v4326 = vsel %vm2101, %v4242, 0
        %v4329 = vsel %vm2101, %v4243, 0
        %v4332 = vsel %vm2101, %v4244, 0
        %v4335 = vsel %vm2101, %v4245, 0
        %v4338 = vsel %vm2101, %v4246, 0
        %v4341 = vsel %vm2101, %v4247, 0
        %v4344 = vsel %vm2101, %v4248, 0
        %v4347 = vsel %vm2101, %v4249, 0
        %v4350 = vsel %vm2101, %v4250, 0
        %v4353 = vsel %vm2101, %v4251, 0
        %v4356 = vsel %vm2101, %v4252, 0
        %4358 = vmatpush.msra.mxu0 0.0
        %4359 = vmatpush.msra.mxu0 0.0
        %4360 = vmatpush.msra.mxu0 0.0
        %4361 = vmatpush.msra.mxu0 0.0
        %4362 = vmatpush.msra.mxu0 0.0
        %4363 = vmatpush.msra.mxu0 0.0
        %4364 = vmatpush.msra.mxu0 0.0
        %4365 = vmatpush.msra.mxu0 %v4261
        %4366 = vmatpush.msra.mxu0 %v4260
        %4367 = vmatpush.msra.mxu0 %v4259
        %4368 = vmatpush.msra.mxu0 %v4258
        %4369 = vmatpush.msra.mxu0 %v4257
        %4370 = vmatpush.msra.mxu0 %v4256
        %4371 = vmatpush.msra.mxu0 %v4255
        %4372 = vmatpush.msra.mxu0 %v4254
        %4373 = vmatpush.msra.mxu0 %v4253
        %4374 = vmatmul.f32.gmra.mxu0 %v4263
        %v4375 = vpop.f32.mrf.mxu0
        %v4376 = vadd.f32 0.0, %v4375
        %4377 = vmatmul.f32.gmra.mxu0 %v4266
        %v4378 = vpop.f32.mrf.mxu0
        %v4379 = vadd.f32 0.0, %v4378
        %4380 = vmatmul.f32.gmra.mxu0 %v4269
        %v4381 = vpop.f32.mrf.mxu0
        %v4382 = vadd.f32 0.0, %v4381
        %4383 = vmatmul.f32.gmra.mxu0 %v4272
        %v4384 = vpop.f32.mrf.mxu0
        %v4385 = vadd.f32 0.0, %v4384
        %4386 = vmatmul.f32.gmra.mxu0 %v4275
        %v4387 = vpop.f32.mrf.mxu0
        %v4388 = vadd.f32 0.0, %v4387
        %4389 = vmatmul.f32.gmra.mxu0 %v4278
        %v4390 = vpop.f32.mrf.mxu0
        %v4391 = vadd.f32 0.0, %v4390
        %4392 = vmatmul.f32.gmra.mxu0 %v4281
        %v4393 = vpop.f32.mrf.mxu0
        %v4394 = vadd.f32 0.0, %v4393
        %4395 = vmatmul.f32.gmra.mxu0 %v4284
        %v4396 = vpop.f32.mrf.mxu0
        %v4397 = vadd.f32 0.0, %v4396
        %4398 = vmatmul.f32.gmra.mxu0 %v4287
        %v4399 = vpop.f32.mrf.mxu0
        %v4400 = vadd.f32 0.0, %v4399
        %4401 = vmatmul.f32.gmra.mxu0 %v4290
        %v4402 = vpop.f32.mrf.mxu0
        %v4403 = vadd.f32 0.0, %v4402
        %4404 = vmatmul.f32.gmra.mxu0 %v4293
        %v4405 = vpop.f32.mrf.mxu0
        %v4406 = vadd.f32 0.0, %v4405
        %4407 = vmatmul.f32.gmra.mxu0 %v4296
        %v4408 = vpop.f32.mrf.mxu0
        %v4409 = vadd.f32 0.0, %v4408
        %4410 = vmatmul.f32.gmra.mxu0 %v4299
        %v4411 = vpop.f32.mrf.mxu0
        %v4412 = vadd.f32 0.0, %v4411
        %4413 = vmatmul.f32.gmra.mxu0 %v4302
        %v4414 = vpop.f32.mrf.mxu0
        %v4415 = vadd.f32 0.0, %v4414
        %4416 = vmatmul.f32.gmra.mxu0 %v4305
        %v4417 = vpop.f32.mrf.mxu0
        %v4418 = vadd.f32 0.0, %v4417
        %4419 = vmatmul.f32.gmra.mxu0 %v4308
        %v4420 = vpop.f32.mrf.mxu0
        %v4421 = vadd.f32 0.0, %v4420
        %4422 = vmatmul.f32.gmra.mxu0 %v4311
        %v4423 = vpop.f32.mrf.mxu0
        %v4424 = vadd.f32 0.0, %v4423
        %4425 = vmatmul.f32.gmra.mxu0 %v4314
        %v4426 = vpop.f32.mrf.mxu0
        %v4427 = vadd.f32 0.0, %v4426
        %4428 = vmatmul.f32.gmra.mxu0 %v4317
        %v4429 = vpop.f32.mrf.mxu0
        %v4430 = vadd.f32 0.0, %v4429
        %4431 = vmatmul.f32.gmra.mxu0 %v4320
        %v4432 = vpop.f32.mrf.mxu0
        %v4433 = vadd.f32 0.0, %v4432
        %4434 = vmatmul.f32.gmra.mxu0 %v4323
        %v4435 = vpop.f32.mrf.mxu0
        %v4436 = vadd.f32 0.0, %v4435
        %4437 = vmatmul.f32.gmra.mxu0 %v4326
        %v4438 = vpop.f32.mrf.mxu0
        %v4439 = vadd.f32 0.0, %v4438
        %4440 = vmatmul.f32.gmra.mxu0 %v4329
        %v4441 = vpop.f32.mrf.mxu0
        %v4442 = vadd.f32 0.0, %v4441
        %4443 = vmatmul.f32.gmra.mxu0 %v4332
        %v4444 = vpop.f32.mrf.mxu0
        %v4445 = vadd.f32 0.0, %v4444
        %4446 = vmatmul.f32.gmra.mxu0 %v4335
        %v4447 = vpop.f32.mrf.mxu0
        %v4448 = vadd.f32 0.0, %v4447
        %4449 = vmatmul.f32.gmra.mxu0 %v4338
        %v4450 = vpop.f32.mrf.mxu0
        %v4451 = vadd.f32 0.0, %v4450
        %4452 = vmatmul.f32.gmra.mxu0 %v4341
        %v4453 = vpop.f32.mrf.mxu0
        %v4454 = vadd.f32 0.0, %v4453
        %4455 = vmatmul.f32.gmra.mxu0 %v4344
        %v4456 = vpop.f32.mrf.mxu0
        %v4457 = vadd.f32 0.0, %v4456
        %4458 = vmatmul.f32.gmra.mxu0 %v4347
        %v4459 = vpop.f32.mrf.mxu0
        %v4460 = vadd.f32 0.0, %v4459
        %4461 = vmatmul.f32.gmra.mxu0 %v4350
        %v4462 = vpop.f32.mrf.mxu0
        %v4463 = vadd.f32 0.0, %v4462
        %4464 = vmatmul.f32.gmra.mxu0 %v4353
        %v4465 = vpop.f32.mrf.mxu0
        %v4466 = vadd.f32 0.0, %v4465
        %4467 = vmatmul.f32.gmra.mxu0 %v4356
        %v4468 = vpop.f32.mrf.mxu0
        %v4469 = vadd.f32 0.0, %v4468
        %4470 = vdwg.mxu0
        %v4471 = vld [vmem:[%s12] sm:$0x1]
        %v4473 = vperm.slane %v4471, 0
        %v4475 = vmul.f32 %v4376, %v4473
        %v4476 = vmul.f32 %v4379, %v4473
        %v4477 = vmul.f32 %v4382, %v4473
        %v4478 = vmul.f32 %v4385, %v4473
        %v4479 = vmul.f32 %v4388, %v4473
        %v4480 = vmul.f32 %v4391, %v4473
        %v4481 = vmul.f32 %v4394, %v4473
        %v4482 = vmul.f32 %v4397, %v4473
        %v4483 = vmul.f32 %v4400, %v4473
        %v4484 = vmul.f32 %v4403, %v4473
        %v4485 = vmul.f32 %v4406, %v4473
        %v4486 = vmul.f32 %v4409, %v4473
        %v4487 = vmul.f32 %v4412, %v4473
        %v4488 = vmul.f32 %v4415, %v4473
        %v4489 = vmul.f32 %v4418, %v4473
        %v4490 = vmul.f32 %v4421, %v4473
        %v4491 = vmul.f32 %v4424, %v4473
        %v4492 = vmul.f32 %v4427, %v4473
        %v4493 = vmul.f32 %v4430, %v4473
        %v4494 = vmul.f32 %v4433, %v4473
        %v4495 = vmul.f32 %v4436, %v4473
        %v4496 = vmul.f32 %v4439, %v4473
        %v4497 = vmul.f32 %v4442, %v4473
        %v4498 = vmul.f32 %v4445, %v4473
        %v4499 = vmul.f32 %v4448, %v4473
        %v4500 = vmul.f32 %v4451, %v4473
        %v4501 = vmul.f32 %v4454, %v4473
        %v4502 = vmul.f32 %v4457, %v4473
        %v4503 = vmul.f32 %v4460, %v4473
        %v4504 = vmul.f32 %v4463, %v4473
        %v4505 = vmul.f32 %v4466, %v4473
        %v4506 = vmul.f32 %v4469, %v4473
        %v4507 = vld [vmem:[%s13] sm:$0x1]
        %v4509 = vperm.slane %v4507, 0
        %v4511 = vadd.f32 %v4475, %v4509
        %v4512 = vadd.f32 %v4476, %v4509
        %v4513 = vadd.f32 %v4477, %v4509
        %v4514 = vadd.f32 %v4478, %v4509
        %v4515 = vadd.f32 %v4479, %v4509
        %v4516 = vadd.f32 %v4480, %v4509
        %v4517 = vadd.f32 %v4481, %v4509
        %v4518 = vadd.f32 %v4482, %v4509
        %v4519 = vadd.f32 %v4483, %v4509
        %v4520 = vadd.f32 %v4484, %v4509
        %v4521 = vadd.f32 %v4485, %v4509
        %v4522 = vadd.f32 %v4486, %v4509
        %v4523 = vadd.f32 %v4487, %v4509
        %v4524 = vadd.f32 %v4488, %v4509
        %v4525 = vadd.f32 %v4489, %v4509
        %v4526 = vadd.f32 %v4490, %v4509
        %v4527 = vadd.f32 %v4491, %v4509
        %v4528 = vadd.f32 %v4492, %v4509
        %v4529 = vadd.f32 %v4493, %v4509
        %v4530 = vadd.f32 %v4494, %v4509
        %v4531 = vadd.f32 %v4495, %v4509
        %v4532 = vadd.f32 %v4496, %v4509
        %v4533 = vadd.f32 %v4497, %v4509
        %v4534 = vadd.f32 %v4498, %v4509
        %v4535 = vadd.f32 %v4499, %v4509
        %v4536 = vadd.f32 %v4500, %v4509
        %v4537 = vadd.f32 %v4501, %v4509
        %v4538 = vadd.f32 %v4502, %v4509
        %v4539 = vadd.f32 %v4503, %v4509
        %v4540 = vadd.f32 %v4504, %v4509
        %v4541 = vadd.f32 %v4505, %v4509
        %v4542 = vadd.f32 %v4506, %v4509
        %v4543 = vmax.f32 %v4511, 0.0
        %v4544 = vmax.f32 %v4512, 0.0
        %v4545 = vmax.f32 %v4513, 0.0
        %v4546 = vmax.f32 %v4514, 0.0
        %v4547 = vmax.f32 %v4515, 0.0
        %v4548 = vmax.f32 %v4516, 0.0
        %v4549 = vmax.f32 %v4517, 0.0
        %v4550 = vmax.f32 %v4518, 0.0
        %v4551 = vmax.f32 %v4519, 0.0
        %v4552 = vmax.f32 %v4520, 0.0
        %v4553 = vmax.f32 %v4521, 0.0
        %v4554 = vmax.f32 %v4522, 0.0
        %v4555 = vmax.f32 %v4523, 0.0
        %v4556 = vmax.f32 %v4524, 0.0
        %v4557 = vmax.f32 %v4525, 0.0
        %v4558 = vmax.f32 %v4526, 0.0
        %v4559 = vmax.f32 %v4527, 0.0
        %v4560 = vmax.f32 %v4528, 0.0
        %v4561 = vmax.f32 %v4529, 0.0
        %v4562 = vmax.f32 %v4530, 0.0
        %v4563 = vmax.f32 %v4531, 0.0
        %v4564 = vmax.f32 %v4532, 0.0
        %v4565 = vmax.f32 %v4533, 0.0
        %v4566 = vmax.f32 %v4534, 0.0
        %v4567 = vmax.f32 %v4535, 0.0
        %v4568 = vmax.f32 %v4536, 0.0
        %v4569 = vmax.f32 %v4537, 0.0
        %v4570 = vmax.f32 %v4538, 0.0
        %v4571 = vmax.f32 %v4539, 0.0
        %v4572 = vmax.f32 %v4540, 0.0
        %v4573 = vmax.f32 %v4541, 0.0
        %v4574 = vmax.f32 %v4542, 0.0
        %4575 = vst.msk [vmem:[#allocation4] sm:$0xff] %vm1828, 0.0
        %4576 = vst.msk [vmem:[#allocation4 + $0x8] sm:$0xff] %vm1828, 0.0
        %4577 = vst.msk [vmem:[#allocation4 + $0x10] sm:$0x3] %vm2429, 0.0
        %s4578 = scalar_lea.vmem [#allocation4], 408
        %4579 = vst.msk [vmem:[%s4578] sm:$0xff] %vm1828, 0.0
        %4580 = vst.msk [vmem:[%s4578 + $0x8] sm:$0xff] %vm1828, 0.0
        %4581 = vst.msk [vmem:[%s4578 + $0x10] sm:$0x3] %vm2429, 0.0
        %4582 = vst.msk [vmem:[#allocation4] sm:$0x1] %vm2614, 0.0
        %4583 = vst.msk [vmem:[#allocation4 + $0x18] sm:$0x1] %vm2614, 0.0
        %4584 = vst.msk [vmem:[#allocation4 + $0x30] sm:$0x1] %vm2614, 0.0
        %4585 = vst.msk [vmem:[#allocation4 + $0x48] sm:$0x1] %vm2614, 0.0
        %4586 = vst.msk [vmem:[#allocation4 + $0x60] sm:$0x1] %vm2614, 0.0
        %4587 = vst.msk [vmem:[#allocation4 + $0x78] sm:$0x1] %vm2614, 0.0
        %4588 = vst.msk [vmem:[#allocation4 + $0x90] sm:$0x1] %vm2614, 0.0
        %4589 = vst.msk [vmem:[#allocation4 + $0xa8] sm:$0x1] %vm2614, 0.0
        %4590 = vst.msk [vmem:[#allocation4 + $0xc0] sm:$0x1] %vm2614, 0.0
        %4591 = vst.msk [vmem:[#allocation4 + $0xd8] sm:$0x1] %vm2614, 0.0
        %4592 = vst.msk [vmem:[#allocation4 + $0xf0] sm:$0x1] %vm2614, 0.0
        %4593 = vst.msk [vmem:[#allocation4 + $0x108] sm:$0x1] %vm2614, 0.0
        %4594 = vst.msk [vmem:[#allocation4 + $0x120] sm:$0x1] %vm2614, 0.0
        %4595 = vst.msk [vmem:[#allocation4 + $0x138] sm:$0x1] %vm2614, 0.0
        %4596 = vst.msk [vmem:[#allocation4 + $0x150] sm:$0x1] %vm2614, 0.0
        %4597 = vst.msk [vmem:[#allocation4 + $0x168] sm:$0x1] %vm2614, 0.0
        %4598 = vst.msk [vmem:[#allocation4 + $0x180] sm:$0x1] %vm2614, 0.0
        %4599 = vst.msk [vmem:[#allocation4 + $0x198] sm:$0x1] %vm2614, 0.0
        %4600 = vst.msk [vmem:[#allocation4 + $0x11] sm:$0x1] %vm2614, 0.0
        %4601 = vst.msk [vmem:[#allocation4 + $0x29] sm:$0x1] %vm2614, 0.0
        %4602 = vst.msk [vmem:[#allocation4 + $0x41] sm:$0x1] %vm2614, 0.0
        %4603 = vst.msk [vmem:[#allocation4 + $0x59] sm:$0x1] %vm2614, 0.0
        %4604 = vst.msk [vmem:[#allocation4 + $0x71] sm:$0x1] %vm2614, 0.0
        %4605 = vst.msk [vmem:[#allocation4 + $0x89] sm:$0x1] %vm2614, 0.0
        %4606 = vst.msk [vmem:[#allocation4 + $0xa1] sm:$0x1] %vm2614, 0.0
        %4607 = vst.msk [vmem:[#allocation4 + $0xb9] sm:$0x1] %vm2614, 0.0
        %4608 = vst.msk [vmem:[#allocation4 + $0xd1] sm:$0x1] %vm2614, 0.0
        %4609 = vst.msk [vmem:[#allocation4 + $0xe9] sm:$0x1] %vm2614, 0.0
        %4610 = vst.msk [vmem:[#allocation4 + $0x101] sm:$0x1] %vm2614, 0.0
        %4611 = vst.msk [vmem:[#allocation4 + $0x119] sm:$0x1] %vm2614, 0.0
        %4612 = vst.msk [vmem:[#allocation4 + $0x131] sm:$0x1] %vm2614, 0.0
        %4613 = vst.msk [vmem:[#allocation4 + $0x149] sm:$0x1] %vm2614, 0.0
        %4614 = vst.msk [vmem:[#allocation4 + $0x161] sm:$0x1] %vm2614, 0.0
        %4615 = vst.msk [vmem:[#allocation4 + $0x179] sm:$0x1] %vm2614, 0.0
        %4616 = vst.msk [vmem:[#allocation4 + $0x191] sm:$0x1] %vm2614, 0.0
        %4617 = vst.msk [vmem:[#allocation4 + $0x1a9] sm:$0x1] %vm2614, 0.0
        %s4618 = scalar_lea.vmem [#allocation4], 24
        %4619 = vst.msk [vmem:[%s4618 + $0x1] sm:$0xff] %vm1828, %v4543
        %4620 = vst.msk [vmem:[%s4618 + $0x9] sm:$0xff] %vm1828, %v4544
        %4621 = vst.msk [vmem:[%s4618 + $0x19] sm:$0xff] %vm1828, %v4545
        %4622 = vst.msk [vmem:[%s4618 + $0x21] sm:$0xff] %vm1828, %v4546
        %4623 = vst.msk [vmem:[%s4618 + $0x31] sm:$0xff] %vm1828, %v4547
        %4624 = vst.msk [vmem:[%s4618 + $0x39] sm:$0xff] %vm1828, %v4548
        %4625 = vst.msk [vmem:[%s4618 + $0x49] sm:$0xff] %vm1828, %v4549
        %4626 = vst.msk [vmem:[%s4618 + $0x51] sm:$0xff] %vm1828, %v4550
        %4627 = vst.msk [vmem:[%s4618 + $0x61] sm:$0xff] %vm1828, %v4551
        %4628 = vst.msk [vmem:[%s4618 + $0x69] sm:$0xff] %vm1828, %v4552
        %4629 = vst.msk [vmem:[%s4618 + $0x79] sm:$0xff] %vm1828, %v4553
        %4630 = vst.msk [vmem:[%s4618 + $0x81] sm:$0xff] %vm1828, %v4554
        %4631 = vst.msk [vmem:[%s4618 + $0x91] sm:$0xff] %vm1828, %v4555
        %4632 = vst.msk [vmem:[%s4618 + $0x99] sm:$0xff] %vm1828, %v4556
        %4633 = vst.msk [vmem:[%s4618 + $0xa9] sm:$0xff] %vm1828, %v4557
        %4634 = vst.msk [vmem:[%s4618 + $0xb1] sm:$0xff] %vm1828, %v4558
        %4635 = vst.msk [vmem:[%s4618 + $0xc1] sm:$0xff] %vm1828, %v4559
        %4636 = vst.msk [vmem:[%s4618 + $0xc9] sm:$0xff] %vm1828, %v4560
        %4637 = vst.msk [vmem:[%s4618 + $0xd9] sm:$0xff] %vm1828, %v4561
        %4638 = vst.msk [vmem:[%s4618 + $0xe1] sm:$0xff] %vm1828, %v4562
        %4639 = vst.msk [vmem:[%s4618 + $0xf1] sm:$0xff] %vm1828, %v4563
        %4640 = vst.msk [vmem:[%s4618 + $0xf9] sm:$0xff] %vm1828, %v4564
        %4641 = vst.msk [vmem:[%s4618 + $0x109] sm:$0xff] %vm1828, %v4565
        %4642 = vst.msk [vmem:[%s4618 + $0x111] sm:$0xff] %vm1828, %v4566
        %4643 = vst.msk [vmem:[%s4618 + $0x121] sm:$0xff] %vm1828, %v4567
        %4644 = vst.msk [vmem:[%s4618 + $0x129] sm:$0xff] %vm1828, %v4568
        %4645 = vst.msk [vmem:[%s4618 + $0x139] sm:$0xff] %vm1828, %v4569
        %4646 = vst.msk [vmem:[%s4618 + $0x141] sm:$0xff] %vm1828, %v4570
        %4647 = vst.msk [vmem:[%s4618 + $0x151] sm:$0xff] %vm1828, %v4571
        %4648 = vst.msk [vmem:[%s4618 + $0x159] sm:$0xff] %vm1828, %v4572
        %4649 = vst.msk [vmem:[%s4618 + $0x169] sm:$0xff] %vm1828, %v4573
        %4650 = vst.msk [vmem:[%s4618 + $0x171] sm:$0xff] %vm1828, %v4574
        %v4651 = vld [vmem:[#allocation3] sm:$0xff]
        %v4652 = vld [vmem:[#allocation3 + $0x8] sm:$0xff]
        %v4653 = vld [vmem:[#allocation3 + $0x18] sm:$0xff]
        %v4654 = vld [vmem:[#allocation3 + $0x20] sm:$0xff]
        %v4655 = vld [vmem:[#allocation3 + $0x30] sm:$0xff]
        %v4656 = vld [vmem:[#allocation3 + $0x38] sm:$0xff]
        %v4657 = vld [vmem:[#allocation3 + $0x48] sm:$0xff]
        %v4658 = vld [vmem:[#allocation3 + $0x50] sm:$0xff]
        %v4659 = vld [vmem:[#allocation3 + $0x60] sm:$0xff]
        %v4660 = vld [vmem:[#allocation3 + $0x68] sm:$0xff]
        %v4661 = vld [vmem:[#allocation3 + $0x78] sm:$0xff]
        %v4662 = vld [vmem:[#allocation3 + $0x80] sm:$0xff]
        %v4663 = vld [vmem:[#allocation3 + $0x90] sm:$0xff]
        %v4664 = vld [vmem:[#allocation3 + $0x98] sm:$0xff]
        %v4665 = vld [vmem:[#allocation3 + $0xa8] sm:$0xff]
        %v4666 = vld [vmem:[#allocation3 + $0xb0] sm:$0xff]
        %v4667 = vld [vmem:[#allocation3 + $0xc0] sm:$0xff]
        %v4668 = vld [vmem:[#allocation3 + $0xc8] sm:$0xff]
        %v4669 = vld [vmem:[#allocation3 + $0xd8] sm:$0xff]
        %v4670 = vld [vmem:[#allocation3 + $0xe0] sm:$0xff]
        %v4671 = vld [vmem:[#allocation3 + $0xf0] sm:$0xff]
        %v4672 = vld [vmem:[#allocation3 + $0xf8] sm:$0xff]
        %v4673 = vld [vmem:[#allocation3 + $0x108] sm:$0xff]
        %v4674 = vld [vmem:[#allocation3 + $0x110] sm:$0xff]
        %v4675 = vld [vmem:[#allocation3 + $0x120] sm:$0xff]
        %v4676 = vld [vmem:[#allocation3 + $0x128] sm:$0xff]
        %v4677 = vld [vmem:[#allocation3 + $0x138] sm:$0xff]
        %v4678 = vld [vmem:[#allocation3 + $0x140] sm:$0xff]
        %v4679 = vld [vmem:[#allocation3 + $0x150] sm:$0xff]
        %v4680 = vld [vmem:[#allocation3 + $0x158] sm:$0xff]
        %v4681 = vld [vmem:[#allocation3 + $0x168] sm:$0xff]
        %v4682 = vld [vmem:[#allocation3 + $0x170] sm:$0xff]
        %v4683 = vld [vmem:[#allocation3 + $0x1] sm:$0xff]
        %v4684 = vld [vmem:[#allocation3 + $0x9] sm:$0xff]
        %v4685 = vld [vmem:[#allocation3 + $0x19] sm:$0xff]
        %v4686 = vld [vmem:[#allocation3 + $0x21] sm:$0xff]
        %v4687 = vld [vmem:[#allocation3 + $0x31] sm:$0xff]
        %v4688 = vld [vmem:[#allocation3 + $0x39] sm:$0xff]
        %v4689 = vld [vmem:[#allocation3 + $0x49] sm:$0xff]
        %v4690 = vld [vmem:[#allocation3 + $0x51] sm:$0xff]
        %v4691 = vld [vmem:[#allocation3 + $0x61] sm:$0xff]
        %v4692 = vld [vmem:[#allocation3 + $0x69] sm:$0xff]
        %v4693 = vld [vmem:[#allocation3 + $0x79] sm:$0xff]
        %v4694 = vld [vmem:[#allocation3 + $0x81] sm:$0xff]
        %v4695 = vld [vmem:[#allocation3 + $0x91] sm:$0xff]
        %v4696 = vld [vmem:[#allocation3 + $0x99] sm:$0xff]
        %v4697 = vld [vmem:[#allocation3 + $0xa9] sm:$0xff]
        %v4698 = vld [vmem:[#allocation3 + $0xb1] sm:$0xff]
        %v4699 = vld [vmem:[#allocation3 + $0xc1] sm:$0xff]
        %v4700 = vld [vmem:[#allocation3 + $0xc9] sm:$0xff]
        %v4701 = vld [vmem:[#allocation3 + $0xd9] sm:$0xff]
        %v4702 = vld [vmem:[#allocation3 + $0xe1] sm:$0xff]
        %v4703 = vld [vmem:[#allocation3 + $0xf1] sm:$0xff]
        %v4704 = vld [vmem:[#allocation3 + $0xf9] sm:$0xff]
        %v4705 = vld [vmem:[#allocation3 + $0x109] sm:$0xff]
        %v4706 = vld [vmem:[#allocation3 + $0x111] sm:$0xff]
        %v4707 = vld [vmem:[#allocation3 + $0x121] sm:$0xff]
        %v4708 = vld [vmem:[#allocation3 + $0x129] sm:$0xff]
        %v4709 = vld [vmem:[#allocation3 + $0x139] sm:$0xff]
        %v4710 = vld [vmem:[#allocation3 + $0x141] sm:$0xff]
        %v4711 = vld [vmem:[#allocation3 + $0x151] sm:$0xff]
        %v4712 = vld [vmem:[#allocation3 + $0x159] sm:$0xff]
        %v4713 = vld [vmem:[#allocation3 + $0x169] sm:$0xff]
        %v4714 = vld [vmem:[#allocation3 + $0x171] sm:$0xff]
        %v4715 = vld [vmem:[#allocation3 + $0x2] sm:$0xff]
        %v4716 = vld [vmem:[#allocation3 + $0xa] sm:$0xff]
        %v4717 = vld [vmem:[#allocation3 + $0x1a] sm:$0xff]
        %v4718 = vld [vmem:[#allocation3 + $0x22] sm:$0xff]
        %v4719 = vld [vmem:[#allocation3 + $0x32] sm:$0xff]
        %v4720 = vld [vmem:[#allocation3 + $0x3a] sm:$0xff]
        %v4721 = vld [vmem:[#allocation3 + $0x4a] sm:$0xff]
        %v4722 = vld [vmem:[#allocation3 + $0x52] sm:$0xff]
        %v4723 = vld [vmem:[#allocation3 + $0x62] sm:$0xff]
        %v4724 = vld [vmem:[#allocation3 + $0x6a] sm:$0xff]
        %v4725 = vld [vmem:[#allocation3 + $0x7a] sm:$0xff]
        %v4726 = vld [vmem:[#allocation3 + $0x82] sm:$0xff]
        %v4727 = vld [vmem:[#allocation3 + $0x92] sm:$0xff]
        %v4728 = vld [vmem:[#allocation3 + $0x9a] sm:$0xff]
        %v4729 = vld [vmem:[#allocation3 + $0xaa] sm:$0xff]
        %v4730 = vld [vmem:[#allocation3 + $0xb2] sm:$0xff]
        %v4731 = vld [vmem:[#allocation3 + $0xc2] sm:$0xff]
        %v4732 = vld [vmem:[#allocation3 + $0xca] sm:$0xff]
        %v4733 = vld [vmem:[#allocation3 + $0xda] sm:$0xff]
        %v4734 = vld [vmem:[#allocation3 + $0xe2] sm:$0xff]
        %v4735 = vld [vmem:[#allocation3 + $0xf2] sm:$0xff]
        %v4736 = vld [vmem:[#allocation3 + $0xfa] sm:$0xff]
        %v4737 = vld [vmem:[#allocation3 + $0x10a] sm:$0xff]
        %v4738 = vld [vmem:[#allocation3 + $0x112] sm:$0xff]
        %v4739 = vld [vmem:[#allocation3 + $0x122] sm:$0xff]
        %v4740 = vld [vmem:[#allocation3 + $0x12a] sm:$0xff]
        %v4741 = vld [vmem:[#allocation3 + $0x13a] sm:$0xff]
        %v4742 = vld [vmem:[#allocation3 + $0x142] sm:$0xff]
        %v4743 = vld [vmem:[#allocation3 + $0x152] sm:$0xff]
        %v4744 = vld [vmem:[#allocation3 + $0x15a] sm:$0xff]
        %v4745 = vld [vmem:[#allocation3 + $0x16a] sm:$0xff]
        %v4746 = vld [vmem:[#allocation3 + $0x172] sm:$0xff]
        %v4747 = vld [vmem:[%s2651] sm:$0xff]
        %v4748 = vld [vmem:[%s2651 + $0x8] sm:$0xff]
        %v4749 = vld [vmem:[%s2651 + $0x18] sm:$0xff]
        %v4750 = vld [vmem:[%s2651 + $0x20] sm:$0xff]
        %v4751 = vld [vmem:[%s2651 + $0x30] sm:$0xff]
        %v4752 = vld [vmem:[%s2651 + $0x38] sm:$0xff]
        %v4753 = vld [vmem:[%s2651 + $0x48] sm:$0xff]
        %v4754 = vld [vmem:[%s2651 + $0x50] sm:$0xff]
        %v4755 = vld [vmem:[%s2651 + $0x60] sm:$0xff]
        %v4756 = vld [vmem:[%s2651 + $0x68] sm:$0xff]
        %v4757 = vld [vmem:[%s2651 + $0x78] sm:$0xff]
        %v4758 = vld [vmem:[%s2651 + $0x80] sm:$0xff]
        %v4759 = vld [vmem:[%s2651 + $0x90] sm:$0xff]
        %v4760 = vld [vmem:[%s2651 + $0x98] sm:$0xff]
        %v4761 = vld [vmem:[%s2651 + $0xa8] sm:$0xff]
        %v4762 = vld [vmem:[%s2651 + $0xb0] sm:$0xff]
        %v4763 = vld [vmem:[%s2651 + $0xc0] sm:$0xff]
        %v4764 = vld [vmem:[%s2651 + $0xc8] sm:$0xff]
        %v4765 = vld [vmem:[%s2651 + $0xd8] sm:$0xff]
        %v4766 = vld [vmem:[%s2651 + $0xe0] sm:$0xff]
        %v4767 = vld [vmem:[%s2651 + $0xf0] sm:$0xff]
        %v4768 = vld [vmem:[%s2651 + $0xf8] sm:$0xff]
        %v4769 = vld [vmem:[%s2651 + $0x108] sm:$0xff]
        %v4770 = vld [vmem:[%s2651 + $0x110] sm:$0xff]
        %v4771 = vld [vmem:[%s2651 + $0x120] sm:$0xff]
        %v4772 = vld [vmem:[%s2651 + $0x128] sm:$0xff]
        %v4773 = vld [vmem:[%s2651 + $0x138] sm:$0xff]
        %v4774 = vld [vmem:[%s2651 + $0x140] sm:$0xff]
        %v4775 = vld [vmem:[%s2651 + $0x150] sm:$0xff]
        %v4776 = vld [vmem:[%s2651 + $0x158] sm:$0xff]
        %v4777 = vld [vmem:[%s2651 + $0x168] sm:$0xff]
        %v4778 = vld [vmem:[%s2651 + $0x170] sm:$0xff]
        %v4779 = vld [vmem:[%s2651 + $0x1] sm:$0xff]
        %v4780 = vld [vmem:[%s2651 + $0x9] sm:$0xff]
        %v4781 = vld [vmem:[%s2651 + $0x19] sm:$0xff]
        %v4782 = vld [vmem:[%s2651 + $0x21] sm:$0xff]
        %v4783 = vld [vmem:[%s2651 + $0x31] sm:$0xff]
        %v4784 = vld [vmem:[%s2651 + $0x39] sm:$0xff]
        %v4785 = vld [vmem:[%s2651 + $0x49] sm:$0xff]
        %v4786 = vld [vmem:[%s2651 + $0x51] sm:$0xff]
        %v4787 = vld [vmem:[%s2651 + $0x61] sm:$0xff]
        %v4788 = vld [vmem:[%s2651 + $0x69] sm:$0xff]
        %v4789 = vld [vmem:[%s2651 + $0x79] sm:$0xff]
        %v4790 = vld [vmem:[%s2651 + $0x81] sm:$0xff]
        %v4791 = vld [vmem:[%s2651 + $0x91] sm:$0xff]
        %v4792 = vld [vmem:[%s2651 + $0x99] sm:$0xff]
        %v4793 = vld [vmem:[%s2651 + $0xa9] sm:$0xff]
        %v4794 = vld [vmem:[%s2651 + $0xb1] sm:$0xff]
        %v4795 = vld [vmem:[%s2651 + $0xc1] sm:$0xff]
        %v4796 = vld [vmem:[%s2651 + $0xc9] sm:$0xff]
        %v4797 = vld [vmem:[%s2651 + $0xd9] sm:$0xff]
        %v4798 = vld [vmem:[%s2651 + $0xe1] sm:$0xff]
        %v4799 = vld [vmem:[%s2651 + $0xf1] sm:$0xff]
        %v4800 = vld [vmem:[%s2651 + $0xf9] sm:$0xff]
        %v4801 = vld [vmem:[%s2651 + $0x109] sm:$0xff]
        %v4802 = vld [vmem:[%s2651 + $0x111] sm:$0xff]
        %v4803 = vld [vmem:[%s2651 + $0x121] sm:$0xff]
        %v4804 = vld [vmem:[%s2651 + $0x129] sm:$0xff]
        %v4805 = vld [vmem:[%s2651 + $0x139] sm:$0xff]
        %v4806 = vld [vmem:[%s2651 + $0x141] sm:$0xff]
        %v4807 = vld [vmem:[%s2651 + $0x151] sm:$0xff]
        %v4808 = vld [vmem:[%s2651 + $0x159] sm:$0xff]
        %v4809 = vld [vmem:[%s2651 + $0x169] sm:$0xff]
        %v4810 = vld [vmem:[%s2651 + $0x171] sm:$0xff]
        %v4811 = vld [vmem:[%s2651 + $0x2] sm:$0xff]
        %v4812 = vld [vmem:[%s2651 + $0xa] sm:$0xff]
        %v4813 = vld [vmem:[%s2651 + $0x1a] sm:$0xff]
        %v4814 = vld [vmem:[%s2651 + $0x22] sm:$0xff]
        %v4815 = vld [vmem:[%s2651 + $0x32] sm:$0xff]
        %v4816 = vld [vmem:[%s2651 + $0x3a] sm:$0xff]
        %v4817 = vld [vmem:[%s2651 + $0x4a] sm:$0xff]
        %v4818 = vld [vmem:[%s2651 + $0x52] sm:$0xff]
        %v4819 = vld [vmem:[%s2651 + $0x62] sm:$0xff]
        %v4820 = vld [vmem:[%s2651 + $0x6a] sm:$0xff]
        %v4821 = vld [vmem:[%s2651 + $0x7a] sm:$0xff]
        %v4822 = vld [vmem:[%s2651 + $0x82] sm:$0xff]
        %v4823 = vld [vmem:[%s2651 + $0x92] sm:$0xff]
        %v4824 = vld [vmem:[%s2651 + $0x9a] sm:$0xff]
        %v4825 = vld [vmem:[%s2651 + $0xaa] sm:$0xff]
        %v4826 = vld [vmem:[%s2651 + $0xb2] sm:$0xff]
        %v4827 = vld [vmem:[%s2651 + $0xc2] sm:$0xff]
        %v4828 = vld [vmem:[%s2651 + $0xca] sm:$0xff]
        %v4829 = vld [vmem:[%s2651 + $0xda] sm:$0xff]
        %v4830 = vld [vmem:[%s2651 + $0xe2] sm:$0xff]
        %v4831 = vld [vmem:[%s2651 + $0xf2] sm:$0xff]
        %v4832 = vld [vmem:[%s2651 + $0xfa] sm:$0xff]
        %v4833 = vld [vmem:[%s2651 + $0x10a] sm:$0xff]
        %v4834 = vld [vmem:[%s2651 + $0x112] sm:$0xff]
        %v4835 = vld [vmem:[%s2651 + $0x122] sm:$0xff]
        %v4836 = vld [vmem:[%s2651 + $0x12a] sm:$0xff]
        %v4837 = vld [vmem:[%s2651 + $0x13a] sm:$0xff]
        %v4838 = vld [vmem:[%s2651 + $0x142] sm:$0xff]
        %v4839 = vld [vmem:[%s2651 + $0x152] sm:$0xff]
        %v4840 = vld [vmem:[%s2651 + $0x15a] sm:$0xff]
        %v4841 = vld [vmem:[%s2651 + $0x16a] sm:$0xff]
        %v4842 = vld [vmem:[%s2651 + $0x172] sm:$0xff]
        %s4843 = scalar_lea.vmem [#allocation3], 48
        %v4844 = vld [vmem:[%s4843] sm:$0xff]
        %v4845 = vld [vmem:[%s4843 + $0x8] sm:$0xff]
        %v4846 = vld [vmem:[%s4843 + $0x18] sm:$0xff]
        %v4847 = vld [vmem:[%s4843 + $0x20] sm:$0xff]
        %v4848 = vld [vmem:[%s4843 + $0x30] sm:$0xff]
        %v4849 = vld [vmem:[%s4843 + $0x38] sm:$0xff]
        %v4850 = vld [vmem:[%s4843 + $0x48] sm:$0xff]
        %v4851 = vld [vmem:[%s4843 + $0x50] sm:$0xff]
        %v4852 = vld [vmem:[%s4843 + $0x60] sm:$0xff]
        %v4853 = vld [vmem:[%s4843 + $0x68] sm:$0xff]
        %v4854 = vld [vmem:[%s4843 + $0x78] sm:$0xff]
        %v4855 = vld [vmem:[%s4843 + $0x80] sm:$0xff]
        %v4856 = vld [vmem:[%s4843 + $0x90] sm:$0xff]
        %v4857 = vld [vmem:[%s4843 + $0x98] sm:$0xff]
        %v4858 = vld [vmem:[%s4843 + $0xa8] sm:$0xff]
        %v4859 = vld [vmem:[%s4843 + $0xb0] sm:$0xff]
        %v4860 = vld [vmem:[%s4843 + $0xc0] sm:$0xff]
        %v4861 = vld [vmem:[%s4843 + $0xc8] sm:$0xff]
        %v4862 = vld [vmem:[%s4843 + $0xd8] sm:$0xff]
        %v4863 = vld [vmem:[%s4843 + $0xe0] sm:$0xff]
        %v4864 = vld [vmem:[%s4843 + $0xf0] sm:$0xff]
        %v4865 = vld [vmem:[%s4843 + $0xf8] sm:$0xff]
        %v4866 = vld [vmem:[%s4843 + $0x108] sm:$0xff]
        %v4867 = vld [vmem:[%s4843 + $0x110] sm:$0xff]
        %v4868 = vld [vmem:[%s4843 + $0x120] sm:$0xff]
        %v4869 = vld [vmem:[%s4843 + $0x128] sm:$0xff]
        %v4870 = vld [vmem:[%s4843 + $0x138] sm:$0xff]
        %v4871 = vld [vmem:[%s4843 + $0x140] sm:$0xff]
        %v4872 = vld [vmem:[%s4843 + $0x150] sm:$0xff]
        %v4873 = vld [vmem:[%s4843 + $0x158] sm:$0xff]
        %v4874 = vld [vmem:[%s4843 + $0x168] sm:$0xff]
        %v4875 = vld [vmem:[%s4843 + $0x170] sm:$0xff]
        %v4876 = vld [vmem:[%s4843 + $0x1] sm:$0xff]
        %v4877 = vld [vmem:[%s4843 + $0x9] sm:$0xff]
        %v4878 = vld [vmem:[%s4843 + $0x19] sm:$0xff]
        %v4879 = vld [vmem:[%s4843 + $0x21] sm:$0xff]
        %v4880 = vld [vmem:[%s4843 + $0x31] sm:$0xff]
        %v4881 = vld [vmem:[%s4843 + $0x39] sm:$0xff]
        %v4882 = vld [vmem:[%s4843 + $0x49] sm:$0xff]
        %v4883 = vld [vmem:[%s4843 + $0x51] sm:$0xff]
        %v4884 = vld [vmem:[%s4843 + $0x61] sm:$0xff]
        %v4885 = vld [vmem:[%s4843 + $0x69] sm:$0xff]
        %v4886 = vld [vmem:[%s4843 + $0x79] sm:$0xff]
        %v4887 = vld [vmem:[%s4843 + $0x81] sm:$0xff]
        %v4888 = vld [vmem:[%s4843 + $0x91] sm:$0xff]
        %v4889 = vld [vmem:[%s4843 + $0x99] sm:$0xff]
        %v4890 = vld [vmem:[%s4843 + $0xa9] sm:$0xff]
        %v4891 = vld [vmem:[%s4843 + $0xb1] sm:$0xff]
        %v4892 = vld [vmem:[%s4843 + $0xc1] sm:$0xff]
        %v4893 = vld [vmem:[%s4843 + $0xc9] sm:$0xff]
        %v4894 = vld [vmem:[%s4843 + $0xd9] sm:$0xff]
        %v4895 = vld [vmem:[%s4843 + $0xe1] sm:$0xff]
        %v4896 = vld [vmem:[%s4843 + $0xf1] sm:$0xff]
        %v4897 = vld [vmem:[%s4843 + $0xf9] sm:$0xff]
        %v4898 = vld [vmem:[%s4843 + $0x109] sm:$0xff]
        %v4899 = vld [vmem:[%s4843 + $0x111] sm:$0xff]
        %v4900 = vld [vmem:[%s4843 + $0x121] sm:$0xff]
        %v4901 = vld [vmem:[%s4843 + $0x129] sm:$0xff]
        %v4902 = vld [vmem:[%s4843 + $0x139] sm:$0xff]
        %v4903 = vld [vmem:[%s4843 + $0x141] sm:$0xff]
        %v4904 = vld [vmem:[%s4843 + $0x151] sm:$0xff]
        %v4905 = vld [vmem:[%s4843 + $0x159] sm:$0xff]
        %v4906 = vld [vmem:[%s4843 + $0x169] sm:$0xff]
        %v4907 = vld [vmem:[%s4843 + $0x171] sm:$0xff]
        %v4908 = vld [vmem:[%s4843 + $0x2] sm:$0xff]
        %v4909 = vld [vmem:[%s4843 + $0xa] sm:$0xff]
        %v4910 = vld [vmem:[%s4843 + $0x1a] sm:$0xff]
        %v4911 = vld [vmem:[%s4843 + $0x22] sm:$0xff]
        %v4912 = vld [vmem:[%s4843 + $0x32] sm:$0xff]
        %v4913 = vld [vmem:[%s4843 + $0x3a] sm:$0xff]
        %v4914 = vld [vmem:[%s4843 + $0x4a] sm:$0xff]
        %v4915 = vld [vmem:[%s4843 + $0x52] sm:$0xff]
        %v4916 = vld [vmem:[%s4843 + $0x62] sm:$0xff]
        %v4917 = vld [vmem:[%s4843 + $0x6a] sm:$0xff]
        %v4918 = vld [vmem:[%s4843 + $0x7a] sm:$0xff]
        %v4919 = vld [vmem:[%s4843 + $0x82] sm:$0xff]
        %v4920 = vld [vmem:[%s4843 + $0x92] sm:$0xff]
        %v4921 = vld [vmem:[%s4843 + $0x9a] sm:$0xff]
        %v4922 = vld [vmem:[%s4843 + $0xaa] sm:$0xff]
        %v4923 = vld [vmem:[%s4843 + $0xb2] sm:$0xff]
        %v4924 = vld [vmem:[%s4843 + $0xc2] sm:$0xff]
        %v4925 = vld [vmem:[%s4843 + $0xca] sm:$0xff]
        %v4926 = vld [vmem:[%s4843 + $0xda] sm:$0xff]
        %v4927 = vld [vmem:[%s4843 + $0xe2] sm:$0xff]
        %v4928 = vld [vmem:[%s4843 + $0xf2] sm:$0xff]
        %v4929 = vld [vmem:[%s4843 + $0xfa] sm:$0xff]
        %v4930 = vld [vmem:[%s4843 + $0x10a] sm:$0xff]
        %v4931 = vld [vmem:[%s4843 + $0x112] sm:$0xff]
        %v4932 = vld [vmem:[%s4843 + $0x122] sm:$0xff]
        %v4933 = vld [vmem:[%s4843 + $0x12a] sm:$0xff]
        %v4934 = vld [vmem:[%s4843 + $0x13a] sm:$0xff]
        %v4935 = vld [vmem:[%s4843 + $0x142] sm:$0xff]
        %v4936 = vld [vmem:[%s4843 + $0x152] sm:$0xff]
        %v4937 = vld [vmem:[%s4843 + $0x15a] sm:$0xff]
        %v4938 = vld [vmem:[%s4843 + $0x16a] sm:$0xff]
        %v4939 = vld [vmem:[%s4843 + $0x172] sm:$0xff]
        %4972 = vrot.lane.b32.xlu0 %v4683, 8
        %v4973 = vpop.permute.xlu0 %4972
        %4974 = vrot.lane.b32.xlu0 %v4684, 8
        %v4975 = vpop.permute.xlu0 %4974
        %4976 = vrot.lane.b32.xlu0 %v4685, 8
        %v4977 = vpop.permute.xlu0 %4976
        %4978 = vrot.lane.b32.xlu0 %v4686, 8
        %v4979 = vpop.permute.xlu0 %4978
        %4980 = vrot.lane.b32.xlu0 %v4687, 8
        %v4981 = vpop.permute.xlu0 %4980
        %4982 = vrot.lane.b32.xlu0 %v4688, 8
        %v4983 = vpop.permute.xlu0 %4982
        %4984 = vrot.lane.b32.xlu0 %v4689, 8
        %v4985 = vpop.permute.xlu0 %4984
        %4986 = vrot.lane.b32.xlu0 %v4690, 8
        %v4987 = vpop.permute.xlu0 %4986
        %4988 = vrot.lane.b32.xlu0 %v4691, 8
        %v4989 = vpop.permute.xlu0 %4988
        %4990 = vrot.lane.b32.xlu0 %v4692, 8
        %v4991 = vpop.permute.xlu0 %4990
        %4992 = vrot.lane.b32.xlu0 %v4693, 8
        %v4993 = vpop.permute.xlu0 %4992
        %4994 = vrot.lane.b32.xlu0 %v4694, 8
        %v4995 = vpop.permute.xlu0 %4994
        %4996 = vrot.lane.b32.xlu0 %v4695, 8
        %v4997 = vpop.permute.xlu0 %4996
        %4998 = vrot.lane.b32.xlu0 %v4696, 8
        %v4999 = vpop.permute.xlu0 %4998
        %5000 = vrot.lane.b32.xlu0 %v4697, 8
        %v5001 = vpop.permute.xlu0 %5000
        %5002 = vrot.lane.b32.xlu0 %v4698, 8
        %v5003 = vpop.permute.xlu0 %5002
        %5004 = vrot.lane.b32.xlu0 %v4699, 8
        %v5005 = vpop.permute.xlu0 %5004
        %5006 = vrot.lane.b32.xlu0 %v4700, 8
        %v5007 = vpop.permute.xlu0 %5006
        %5008 = vrot.lane.b32.xlu0 %v4701, 8
        %v5009 = vpop.permute.xlu0 %5008
        %5010 = vrot.lane.b32.xlu0 %v4702, 8
        %v5011 = vpop.permute.xlu0 %5010
        %5012 = vrot.lane.b32.xlu0 %v4703, 8
        %v5013 = vpop.permute.xlu0 %5012
        %5014 = vrot.lane.b32.xlu0 %v4704, 8
        %v5015 = vpop.permute.xlu0 %5014
        %5016 = vrot.lane.b32.xlu0 %v4705, 8
        %v5017 = vpop.permute.xlu0 %5016
        %5018 = vrot.lane.b32.xlu0 %v4706, 8
        %v5019 = vpop.permute.xlu0 %5018
        %5020 = vrot.lane.b32.xlu0 %v4707, 8
        %v5021 = vpop.permute.xlu0 %5020
        %5022 = vrot.lane.b32.xlu0 %v4708, 8
        %v5023 = vpop.permute.xlu0 %5022
        %5024 = vrot.lane.b32.xlu0 %v4709, 8
        %v5025 = vpop.permute.xlu0 %5024
        %5026 = vrot.lane.b32.xlu0 %v4710, 8
        %v5027 = vpop.permute.xlu0 %5026
        %5028 = vrot.lane.b32.xlu0 %v4711, 8
        %v5029 = vpop.permute.xlu0 %5028
        %5030 = vrot.lane.b32.xlu0 %v4712, 8
        %v5031 = vpop.permute.xlu0 %5030
        %5032 = vrot.lane.b32.xlu0 %v4713, 8
        %v5033 = vpop.permute.xlu0 %5032
        %5034 = vrot.lane.b32.xlu0 %v4714, 8
        %v5035 = vpop.permute.xlu0 %5034
        %5100 = vrot.lane.b32.xlu0 %v4715, 16
        %v5101 = vpop.permute.xlu0 %5100
        %5102 = vrot.lane.b32.xlu0 %v4716, 16
        %v5103 = vpop.permute.xlu0 %5102
        %5104 = vrot.lane.b32.xlu0 %v4717, 16
        %v5105 = vpop.permute.xlu0 %5104
        %5106 = vrot.lane.b32.xlu0 %v4718, 16
        %v5107 = vpop.permute.xlu0 %5106
        %5108 = vrot.lane.b32.xlu0 %v4719, 16
        %v5109 = vpop.permute.xlu0 %5108
        %5110 = vrot.lane.b32.xlu0 %v4720, 16
        %v5111 = vpop.permute.xlu0 %5110
        %5112 = vrot.lane.b32.xlu0 %v4721, 16
        %v5113 = vpop.permute.xlu0 %5112
        %5114 = vrot.lane.b32.xlu0 %v4722, 16
        %v5115 = vpop.permute.xlu0 %5114
        %5116 = vrot.lane.b32.xlu0 %v4723, 16
        %v5117 = vpop.permute.xlu0 %5116
        %5118 = vrot.lane.b32.xlu0 %v4724, 16
        %v5119 = vpop.permute.xlu0 %5118
        %5120 = vrot.lane.b32.xlu0 %v4725, 16
        %v5121 = vpop.permute.xlu0 %5120
        %5122 = vrot.lane.b32.xlu0 %v4726, 16
        %v5123 = vpop.permute.xlu0 %5122
        %5124 = vrot.lane.b32.xlu0 %v4727, 16
        %v5125 = vpop.permute.xlu0 %5124
        %5126 = vrot.lane.b32.xlu0 %v4728, 16
        %v5127 = vpop.permute.xlu0 %5126
        %5128 = vrot.lane.b32.xlu0 %v4729, 16
        %v5129 = vpop.permute.xlu0 %5128
        %5130 = vrot.lane.b32.xlu0 %v4730, 16
        %v5131 = vpop.permute.xlu0 %5130
        %5132 = vrot.lane.b32.xlu0 %v4731, 16
        %v5133 = vpop.permute.xlu0 %5132
        %5134 = vrot.lane.b32.xlu0 %v4732, 16
        %v5135 = vpop.permute.xlu0 %5134
        %5136 = vrot.lane.b32.xlu0 %v4733, 16
        %v5137 = vpop.permute.xlu0 %5136
        %5138 = vrot.lane.b32.xlu0 %v4734, 16
        %v5139 = vpop.permute.xlu0 %5138
        %5140 = vrot.lane.b32.xlu0 %v4735, 16
        %v5141 = vpop.permute.xlu0 %5140
        %5142 = vrot.lane.b32.xlu0 %v4736, 16
        %v5143 = vpop.permute.xlu0 %5142
        %5144 = vrot.lane.b32.xlu0 %v4737, 16
        %v5145 = vpop.permute.xlu0 %5144
        %5146 = vrot.lane.b32.xlu0 %v4738, 16
        %v5147 = vpop.permute.xlu0 %5146
        %5148 = vrot.lane.b32.xlu0 %v4739, 16
        %v5149 = vpop.permute.xlu0 %5148
        %5150 = vrot.lane.b32.xlu0 %v4740, 16
        %v5151 = vpop.permute.xlu0 %5150
        %5152 = vrot.lane.b32.xlu0 %v4741, 16
        %v5153 = vpop.permute.xlu0 %5152
        %5154 = vrot.lane.b32.xlu0 %v4742, 16
        %v5155 = vpop.permute.xlu0 %5154
        %5156 = vrot.lane.b32.xlu0 %v4743, 16
        %v5157 = vpop.permute.xlu0 %5156
        %5158 = vrot.lane.b32.xlu0 %v4744, 16
        %v5159 = vpop.permute.xlu0 %5158
        %5160 = vrot.lane.b32.xlu0 %v4745, 16
        %v5161 = vpop.permute.xlu0 %5160
        %5162 = vrot.lane.b32.xlu0 %v4746, 16
        %v5163 = vpop.permute.xlu0 %5162
        %5228 = vrot.lane.b32.xlu0 %v4747, 24
        %v5229 = vpop.permute.xlu0 %5228
        %5230 = vrot.lane.b32.xlu0 %v4748, 24
        %v5231 = vpop.permute.xlu0 %5230
        %5232 = vrot.lane.b32.xlu0 %v4749, 24
        %v5233 = vpop.permute.xlu0 %5232
        %5234 = vrot.lane.b32.xlu0 %v4750, 24
        %v5235 = vpop.permute.xlu0 %5234
        %5236 = vrot.lane.b32.xlu0 %v4751, 24
        %v5237 = vpop.permute.xlu0 %5236
        %5238 = vrot.lane.b32.xlu0 %v4752, 24
        %v5239 = vpop.permute.xlu0 %5238
        %5240 = vrot.lane.b32.xlu0 %v4753, 24
        %v5241 = vpop.permute.xlu0 %5240
        %5242 = vrot.lane.b32.xlu0 %v4754, 24
        %v5243 = vpop.permute.xlu0 %5242
        %5244 = vrot.lane.b32.xlu0 %v4755, 24
        %v5245 = vpop.permute.xlu0 %5244
        %5246 = vrot.lane.b32.xlu0 %v4756, 24
        %v5247 = vpop.permute.xlu0 %5246
        %5248 = vrot.lane.b32.xlu0 %v4757, 24
        %v5249 = vpop.permute.xlu0 %5248
        %5250 = vrot.lane.b32.xlu0 %v4758, 24
        %v5251 = vpop.permute.xlu0 %5250
        %5252 = vrot.lane.b32.xlu0 %v4759, 24
        %v5253 = vpop.permute.xlu0 %5252
        %5254 = vrot.lane.b32.xlu0 %v4760, 24
        %v5255 = vpop.permute.xlu0 %5254
        %5256 = vrot.lane.b32.xlu0 %v4761, 24
        %v5257 = vpop.permute.xlu0 %5256
        %5258 = vrot.lane.b32.xlu0 %v4762, 24
        %v5259 = vpop.permute.xlu0 %5258
        %5260 = vrot.lane.b32.xlu0 %v4763, 24
        %v5261 = vpop.permute.xlu0 %5260
        %5262 = vrot.lane.b32.xlu0 %v4764, 24
        %v5263 = vpop.permute.xlu0 %5262
        %5264 = vrot.lane.b32.xlu0 %v4765, 24
        %v5265 = vpop.permute.xlu0 %5264
        %5266 = vrot.lane.b32.xlu0 %v4766, 24
        %v5267 = vpop.permute.xlu0 %5266
        %5268 = vrot.lane.b32.xlu0 %v4767, 24
        %v5269 = vpop.permute.xlu0 %5268
        %5270 = vrot.lane.b32.xlu0 %v4768, 24
        %v5271 = vpop.permute.xlu0 %5270
        %5272 = vrot.lane.b32.xlu0 %v4769, 24
        %v5273 = vpop.permute.xlu0 %5272
        %5274 = vrot.lane.b32.xlu0 %v4770, 24
        %v5275 = vpop.permute.xlu0 %5274
        %5276 = vrot.lane.b32.xlu0 %v4771, 24
        %v5277 = vpop.permute.xlu0 %5276
        %5278 = vrot.lane.b32.xlu0 %v4772, 24
        %v5279 = vpop.permute.xlu0 %5278
        %5280 = vrot.lane.b32.xlu0 %v4773, 24
        %v5281 = vpop.permute.xlu0 %5280
        %5282 = vrot.lane.b32.xlu0 %v4774, 24
        %v5283 = vpop.permute.xlu0 %5282
        %5284 = vrot.lane.b32.xlu0 %v4775, 24
        %v5285 = vpop.permute.xlu0 %5284
        %5286 = vrot.lane.b32.xlu0 %v4776, 24
        %v5287 = vpop.permute.xlu0 %5286
        %5288 = vrot.lane.b32.xlu0 %v4777, 24
        %v5289 = vpop.permute.xlu0 %5288
        %5290 = vrot.lane.b32.xlu0 %v4778, 24
        %v5291 = vpop.permute.xlu0 %5290
        %5356 = vrot.lane.b32.xlu0 %v4779, 32
        %v5357 = vpop.permute.xlu0 %5356
        %5358 = vrot.lane.b32.xlu0 %v4780, 32
        %v5359 = vpop.permute.xlu0 %5358
        %5360 = vrot.lane.b32.xlu0 %v4781, 32
        %v5361 = vpop.permute.xlu0 %5360
        %5362 = vrot.lane.b32.xlu0 %v4782, 32
        %v5363 = vpop.permute.xlu0 %5362
        %5364 = vrot.lane.b32.xlu0 %v4783, 32
        %v5365 = vpop.permute.xlu0 %5364
        %5366 = vrot.lane.b32.xlu0 %v4784, 32
        %v5367 = vpop.permute.xlu0 %5366
        %5368 = vrot.lane.b32.xlu0 %v4785, 32
        %v5369 = vpop.permute.xlu0 %5368
        %5370 = vrot.lane.b32.xlu0 %v4786, 32
        %v5371 = vpop.permute.xlu0 %5370
        %5372 = vrot.lane.b32.xlu0 %v4787, 32
        %v5373 = vpop.permute.xlu0 %5372
        %5374 = vrot.lane.b32.xlu0 %v4788, 32
        %v5375 = vpop.permute.xlu0 %5374
        %5376 = vrot.lane.b32.xlu0 %v4789, 32
        %v5377 = vpop.permute.xlu0 %5376
        %5378 = vrot.lane.b32.xlu0 %v4790, 32
        %v5379 = vpop.permute.xlu0 %5378
        %5380 = vrot.lane.b32.xlu0 %v4791, 32
        %v5381 = vpop.permute.xlu0 %5380
        %5382 = vrot.lane.b32.xlu0 %v4792, 32
        %v5383 = vpop.permute.xlu0 %5382
        %5384 = vrot.lane.b32.xlu0 %v4793, 32
        %v5385 = vpop.permute.xlu0 %5384
        %5386 = vrot.lane.b32.xlu0 %v4794, 32
        %v5387 = vpop.permute.xlu0 %5386
        %5388 = vrot.lane.b32.xlu0 %v4795, 32
        %v5389 = vpop.permute.xlu0 %5388
        %5390 = vrot.lane.b32.xlu0 %v4796, 32
        %v5391 = vpop.permute.xlu0 %5390
        %5392 = vrot.lane.b32.xlu0 %v4797, 32
        %v5393 = vpop.permute.xlu0 %5392
        %5394 = vrot.lane.b32.xlu0 %v4798, 32
        %v5395 = vpop.permute.xlu0 %5394
        %5396 = vrot.lane.b32.xlu0 %v4799, 32
        %v5397 = vpop.permute.xlu0 %5396
        %5398 = vrot.lane.b32.xlu0 %v4800, 32
        %v5399 = vpop.permute.xlu0 %5398
        %5400 = vrot.lane.b32.xlu0 %v4801, 32
        %v5401 = vpop.permute.xlu0 %5400
        %5402 = vrot.lane.b32.xlu0 %v4802, 32
        %v5403 = vpop.permute.xlu0 %5402
        %5404 = vrot.lane.b32.xlu0 %v4803, 32
        %v5405 = vpop.permute.xlu0 %5404
        %5406 = vrot.lane.b32.xlu0 %v4804, 32
        %v5407 = vpop.permute.xlu0 %5406
        %5408 = vrot.lane.b32.xlu0 %v4805, 32
        %v5409 = vpop.permute.xlu0 %5408
        %5410 = vrot.lane.b32.xlu0 %v4806, 32
        %v5411 = vpop.permute.xlu0 %5410
        %5412 = vrot.lane.b32.xlu0 %v4807, 32
        %v5413 = vpop.permute.xlu0 %5412
        %5414 = vrot.lane.b32.xlu0 %v4808, 32
        %v5415 = vpop.permute.xlu0 %5414
        %5416 = vrot.lane.b32.xlu0 %v4809, 32
        %v5417 = vpop.permute.xlu0 %5416
        %5418 = vrot.lane.b32.xlu0 %v4810, 32
        %v5419 = vpop.permute.xlu0 %5418
        %5484 = vrot.lane.b32.xlu0 %v4811, 40
        %v5485 = vpop.permute.xlu0 %5484
        %5486 = vrot.lane.b32.xlu0 %v4812, 40
        %v5487 = vpop.permute.xlu0 %5486
        %5488 = vrot.lane.b32.xlu0 %v4813, 40
        %v5489 = vpop.permute.xlu0 %5488
        %5490 = vrot.lane.b32.xlu0 %v4814, 40
        %v5491 = vpop.permute.xlu0 %5490
        %5492 = vrot.lane.b32.xlu0 %v4815, 40
        %v5493 = vpop.permute.xlu0 %5492
        %5494 = vrot.lane.b32.xlu0 %v4816, 40
        %v5495 = vpop.permute.xlu0 %5494
        %5496 = vrot.lane.b32.xlu0 %v4817, 40
        %v5497 = vpop.permute.xlu0 %5496
        %5498 = vrot.lane.b32.xlu0 %v4818, 40
        %v5499 = vpop.permute.xlu0 %5498
        %5500 = vrot.lane.b32.xlu0 %v4819, 40
        %v5501 = vpop.permute.xlu0 %5500
        %5502 = vrot.lane.b32.xlu0 %v4820, 40
        %v5503 = vpop.permute.xlu0 %5502
        %5504 = vrot.lane.b32.xlu0 %v4821, 40
        %v5505 = vpop.permute.xlu0 %5504
        %5506 = vrot.lane.b32.xlu0 %v4822, 40
        %v5507 = vpop.permute.xlu0 %5506
        %5508 = vrot.lane.b32.xlu0 %v4823, 40
        %v5509 = vpop.permute.xlu0 %5508
        %5510 = vrot.lane.b32.xlu0 %v4824, 40
        %v5511 = vpop.permute.xlu0 %5510
        %5512 = vrot.lane.b32.xlu0 %v4825, 40
        %v5513 = vpop.permute.xlu0 %5512
        %5514 = vrot.lane.b32.xlu0 %v4826, 40
        %v5515 = vpop.permute.xlu0 %5514
        %5516 = vrot.lane.b32.xlu0 %v4827, 40
        %v5517 = vpop.permute.xlu0 %5516
        %5518 = vrot.lane.b32.xlu0 %v4828, 40
        %v5519 = vpop.permute.xlu0 %5518
        %5520 = vrot.lane.b32.xlu0 %v4829, 40
        %v5521 = vpop.permute.xlu0 %5520
        %5522 = vrot.lane.b32.xlu0 %v4830, 40
        %v5523 = vpop.permute.xlu0 %5522
        %5524 = vrot.lane.b32.xlu0 %v4831, 40
        %v5525 = vpop.permute.xlu0 %5524
        %5526 = vrot.lane.b32.xlu0 %v4832, 40
        %v5527 = vpop.permute.xlu0 %5526
        %5528 = vrot.lane.b32.xlu0 %v4833, 40
        %v5529 = vpop.permute.xlu0 %5528
        %5530 = vrot.lane.b32.xlu0 %v4834, 40
        %v5531 = vpop.permute.xlu0 %5530
        %5532 = vrot.lane.b32.xlu0 %v4835, 40
        %v5533 = vpop.permute.xlu0 %5532
        %5534 = vrot.lane.b32.xlu0 %v4836, 40
        %v5535 = vpop.permute.xlu0 %5534
        %5536 = vrot.lane.b32.xlu0 %v4837, 40
        %v5537 = vpop.permute.xlu0 %5536
        %5538 = vrot.lane.b32.xlu0 %v4838, 40
        %v5539 = vpop.permute.xlu0 %5538
        %5540 = vrot.lane.b32.xlu0 %v4839, 40
        %v5541 = vpop.permute.xlu0 %5540
        %5542 = vrot.lane.b32.xlu0 %v4840, 40
        %v5543 = vpop.permute.xlu0 %5542
        %5544 = vrot.lane.b32.xlu0 %v4841, 40
        %v5545 = vpop.permute.xlu0 %5544
        %5546 = vrot.lane.b32.xlu0 %v4842, 40
        %v5547 = vpop.permute.xlu0 %5546
        %5612 = vrot.lane.b32.xlu0 %v4844, 48
        %v5613 = vpop.permute.xlu0 %5612
        %5614 = vrot.lane.b32.xlu0 %v4845, 48
        %v5615 = vpop.permute.xlu0 %5614
        %5616 = vrot.lane.b32.xlu0 %v4846, 48
        %v5617 = vpop.permute.xlu0 %5616
        %5618 = vrot.lane.b32.xlu0 %v4847, 48
        %v5619 = vpop.permute.xlu0 %5618
        %5620 = vrot.lane.b32.xlu0 %v4848, 48
        %v5621 = vpop.permute.xlu0 %5620
        %5622 = vrot.lane.b32.xlu0 %v4849, 48
        %v5623 = vpop.permute.xlu0 %5622
        %5624 = vrot.lane.b32.xlu0 %v4850, 48
        %v5625 = vpop.permute.xlu0 %5624
        %5626 = vrot.lane.b32.xlu0 %v4851, 48
        %v5627 = vpop.permute.xlu0 %5626
        %5628 = vrot.lane.b32.xlu0 %v4852, 48
        %v5629 = vpop.permute.xlu0 %5628
        %5630 = vrot.lane.b32.xlu0 %v4853, 48
        %v5631 = vpop.permute.xlu0 %5630
        %5632 = vrot.lane.b32.xlu0 %v4854, 48
        %v5633 = vpop.permute.xlu0 %5632
        %5634 = vrot.lane.b32.xlu0 %v4855, 48
        %v5635 = vpop.permute.xlu0 %5634
        %5636 = vrot.lane.b32.xlu0 %v4856, 48
        %v5637 = vpop.permute.xlu0 %5636
        %5638 = vrot.lane.b32.xlu0 %v4857, 48
        %v5639 = vpop.permute.xlu0 %5638
        %5640 = vrot.lane.b32.xlu0 %v4858, 48
        %v5641 = vpop.permute.xlu0 %5640
        %5642 = vrot.lane.b32.xlu0 %v4859, 48
        %v5643 = vpop.permute.xlu0 %5642
        %5644 = vrot.lane.b32.xlu0 %v4860, 48
        %v5645 = vpop.permute.xlu0 %5644
        %5646 = vrot.lane.b32.xlu0 %v4861, 48
        %v5647 = vpop.permute.xlu0 %5646
        %5648 = vrot.lane.b32.xlu0 %v4862, 48
        %v5649 = vpop.permute.xlu0 %5648
        %5650 = vrot.lane.b32.xlu0 %v4863, 48
        %v5651 = vpop.permute.xlu0 %5650
        %5652 = vrot.lane.b32.xlu0 %v4864, 48
        %v5653 = vpop.permute.xlu0 %5652
        %5654 = vrot.lane.b32.xlu0 %v4865, 48
        %v5655 = vpop.permute.xlu0 %5654
        %5656 = vrot.lane.b32.xlu0 %v4866, 48
        %v5657 = vpop.permute.xlu0 %5656
        %5658 = vrot.lane.b32.xlu0 %v4867, 48
        %v5659 = vpop.permute.xlu0 %5658
        %5660 = vrot.lane.b32.xlu0 %v4868, 48
        %v5661 = vpop.permute.xlu0 %5660
        %5662 = vrot.lane.b32.xlu0 %v4869, 48
        %v5663 = vpop.permute.xlu0 %5662
        %5664 = vrot.lane.b32.xlu0 %v4870, 48
        %v5665 = vpop.permute.xlu0 %5664
        %5666 = vrot.lane.b32.xlu0 %v4871, 48
        %v5667 = vpop.permute.xlu0 %5666
        %5668 = vrot.lane.b32.xlu0 %v4872, 48
        %v5669 = vpop.permute.xlu0 %5668
        %5670 = vrot.lane.b32.xlu0 %v4873, 48
        %v5671 = vpop.permute.xlu0 %5670
        %5672 = vrot.lane.b32.xlu0 %v4874, 48
        %v5673 = vpop.permute.xlu0 %5672
        %5674 = vrot.lane.b32.xlu0 %v4875, 48
        %v5675 = vpop.permute.xlu0 %5674
        %5740 = vrot.lane.b32.xlu0 %v4876, 56
        %v5741 = vpop.permute.xlu0 %5740
        %5742 = vrot.lane.b32.xlu0 %v4877, 56
        %v5743 = vpop.permute.xlu0 %5742
        %5744 = vrot.lane.b32.xlu0 %v4878, 56
        %v5745 = vpop.permute.xlu0 %5744
        %5746 = vrot.lane.b32.xlu0 %v4879, 56
        %v5747 = vpop.permute.xlu0 %5746
        %5748 = vrot.lane.b32.xlu0 %v4880, 56
        %v5749 = vpop.permute.xlu0 %5748
        %5750 = vrot.lane.b32.xlu0 %v4881, 56
        %v5751 = vpop.permute.xlu0 %5750
        %5752 = vrot.lane.b32.xlu0 %v4882, 56
        %v5753 = vpop.permute.xlu0 %5752
        %5754 = vrot.lane.b32.xlu0 %v4883, 56
        %v5755 = vpop.permute.xlu0 %5754
        %5756 = vrot.lane.b32.xlu0 %v4884, 56
        %v5757 = vpop.permute.xlu0 %5756
        %5758 = vrot.lane.b32.xlu0 %v4885, 56
        %v5759 = vpop.permute.xlu0 %5758
        %5760 = vrot.lane.b32.xlu0 %v4886, 56
        %v5761 = vpop.permute.xlu0 %5760
        %5762 = vrot.lane.b32.xlu0 %v4887, 56
        %v5763 = vpop.permute.xlu0 %5762
        %5764 = vrot.lane.b32.xlu0 %v4888, 56
        %v5765 = vpop.permute.xlu0 %5764
        %5766 = vrot.lane.b32.xlu0 %v4889, 56
        %v5767 = vpop.permute.xlu0 %5766
        %5768 = vrot.lane.b32.xlu0 %v4890, 56
        %v5769 = vpop.permute.xlu0 %5768
        %5770 = vrot.lane.b32.xlu0 %v4891, 56
        %v5771 = vpop.permute.xlu0 %5770
        %5772 = vrot.lane.b32.xlu0 %v4892, 56
        %v5773 = vpop.permute.xlu0 %5772
        %5774 = vrot.lane.b32.xlu0 %v4893, 56
        %v5775 = vpop.permute.xlu0 %5774
        %5776 = vrot.lane.b32.xlu0 %v4894, 56
        %v5777 = vpop.permute.xlu0 %5776
        %5778 = vrot.lane.b32.xlu0 %v4895, 56
        %v5779 = vpop.permute.xlu0 %5778
        %5780 = vrot.lane.b32.xlu0 %v4896, 56
        %v5781 = vpop.permute.xlu0 %5780
        %5782 = vrot.lane.b32.xlu0 %v4897, 56
        %v5783 = vpop.permute.xlu0 %5782
        %5784 = vrot.lane.b32.xlu0 %v4898, 56
        %v5785 = vpop.permute.xlu0 %5784
        %5786 = vrot.lane.b32.xlu0 %v4899, 56
        %v5787 = vpop.permute.xlu0 %5786
        %5788 = vrot.lane.b32.xlu0 %v4900, 56
        %v5789 = vpop.permute.xlu0 %5788
        %5790 = vrot.lane.b32.xlu0 %v4901, 56
        %v5791 = vpop.permute.xlu0 %5790
        %5792 = vrot.lane.b32.xlu0 %v4902, 56
        %v5793 = vpop.permute.xlu0 %5792
        %5794 = vrot.lane.b32.xlu0 %v4903, 56
        %v5795 = vpop.permute.xlu0 %5794
        %5796 = vrot.lane.b32.xlu0 %v4904, 56
        %v5797 = vpop.permute.xlu0 %5796
        %5798 = vrot.lane.b32.xlu0 %v4905, 56
        %v5799 = vpop.permute.xlu0 %5798
        %5800 = vrot.lane.b32.xlu0 %v4906, 56
        %v5801 = vpop.permute.xlu0 %5800
        %5802 = vrot.lane.b32.xlu0 %v4907, 56
        %v5803 = vpop.permute.xlu0 %5802
        %5868 = vrot.lane.b32.xlu0 %v4908, 64
        %v5869 = vpop.permute.xlu0 %5868
        %5870 = vrot.lane.b32.xlu0 %v4909, 64
        %v5871 = vpop.permute.xlu0 %5870
        %5872 = vrot.lane.b32.xlu0 %v4910, 64
        %v5873 = vpop.permute.xlu0 %5872
        %5874 = vrot.lane.b32.xlu0 %v4911, 64
        %v5875 = vpop.permute.xlu0 %5874
        %5876 = vrot.lane.b32.xlu0 %v4912, 64
        %v5877 = vpop.permute.xlu0 %5876
        %5878 = vrot.lane.b32.xlu0 %v4913, 64
        %v5879 = vpop.permute.xlu0 %5878
        %5880 = vrot.lane.b32.xlu0 %v4914, 64
        %v5881 = vpop.permute.xlu0 %5880
        %5882 = vrot.lane.b32.xlu0 %v4915, 64
        %v5883 = vpop.permute.xlu0 %5882
        %5884 = vrot.lane.b32.xlu0 %v4916, 64
        %v5885 = vpop.permute.xlu0 %5884
        %5886 = vrot.lane.b32.xlu0 %v4917, 64
        %v5887 = vpop.permute.xlu0 %5886
        %5888 = vrot.lane.b32.xlu0 %v4918, 64
        %v5889 = vpop.permute.xlu0 %5888
        %5890 = vrot.lane.b32.xlu0 %v4919, 64
        %v5891 = vpop.permute.xlu0 %5890
        %5892 = vrot.lane.b32.xlu0 %v4920, 64
        %v5893 = vpop.permute.xlu0 %5892
        %5894 = vrot.lane.b32.xlu0 %v4921, 64
        %v5895 = vpop.permute.xlu0 %5894
        %5896 = vrot.lane.b32.xlu0 %v4922, 64
        %v5897 = vpop.permute.xlu0 %5896
        %5898 = vrot.lane.b32.xlu0 %v4923, 64
        %v5899 = vpop.permute.xlu0 %5898
        %5900 = vrot.lane.b32.xlu0 %v4924, 64
        %v5901 = vpop.permute.xlu0 %5900
        %5902 = vrot.lane.b32.xlu0 %v4925, 64
        %v5903 = vpop.permute.xlu0 %5902
        %5904 = vrot.lane.b32.xlu0 %v4926, 64
        %v5905 = vpop.permute.xlu0 %5904
        %5906 = vrot.lane.b32.xlu0 %v4927, 64
        %v5907 = vpop.permute.xlu0 %5906
        %5908 = vrot.lane.b32.xlu0 %v4928, 64
        %v5909 = vpop.permute.xlu0 %5908
        %5910 = vrot.lane.b32.xlu0 %v4929, 64
        %v5911 = vpop.permute.xlu0 %5910
        %5912 = vrot.lane.b32.xlu0 %v4930, 64
        %v5913 = vpop.permute.xlu0 %5912
        %5914 = vrot.lane.b32.xlu0 %v4931, 64
        %v5915 = vpop.permute.xlu0 %5914
        %5916 = vrot.lane.b32.xlu0 %v4932, 64
        %v5917 = vpop.permute.xlu0 %5916
        %5918 = vrot.lane.b32.xlu0 %v4933, 64
        %v5919 = vpop.permute.xlu0 %5918
        %5920 = vrot.lane.b32.xlu0 %v4934, 64
        %v5921 = vpop.permute.xlu0 %5920
        %5922 = vrot.lane.b32.xlu0 %v4935, 64
        %v5923 = vpop.permute.xlu0 %5922
        %5924 = vrot.lane.b32.xlu0 %v4936, 64
        %v5925 = vpop.permute.xlu0 %5924
        %5926 = vrot.lane.b32.xlu0 %v4937, 64
        %v5927 = vpop.permute.xlu0 %5926
        %5928 = vrot.lane.b32.xlu0 %v4938, 64
        %v5929 = vpop.permute.xlu0 %5928
        %5930 = vrot.lane.b32.xlu0 %v4939, 64
        %v5931 = vpop.permute.xlu0 %5930
        %v5964 = vsel %vm1828, %v4651, %v4973
        %v5965 = vsel %vm1828, %v4652, %v4975
        %v5966 = vsel %vm1828, %v4653, %v4977
        %v5967 = vsel %vm1828, %v4654, %v4979
        %v5968 = vsel %vm1828, %v4655, %v4981
        %v5969 = vsel %vm1828, %v4656, %v4983
        %v5970 = vsel %vm1828, %v4657, %v4985
        %v5971 = vsel %vm1828, %v4658, %v4987
        %v5972 = vsel %vm1828, %v4659, %v4989
        %v5973 = vsel %vm1828, %v4660, %v4991
        %v5974 = vsel %vm1828, %v4661, %v4993
        %v5975 = vsel %vm1828, %v4662, %v4995
        %v5976 = vsel %vm1828, %v4663, %v4997
        %v5977 = vsel %vm1828, %v4664, %v4999
        %v5978 = vsel %vm1828, %v4665, %v5001
        %v5979 = vsel %vm1828, %v4666, %v5003
        %v5980 = vsel %vm1828, %v4667, %v5005
        %v5981 = vsel %vm1828, %v4668, %v5007
        %v5982 = vsel %vm1828, %v4669, %v5009
        %v5983 = vsel %vm1828, %v4670, %v5011
        %v5984 = vsel %vm1828, %v4671, %v5013
        %v5985 = vsel %vm1828, %v4672, %v5015
        %v5986 = vsel %vm1828, %v4673, %v5017
        %v5987 = vsel %vm1828, %v4674, %v5019
        %v5988 = vsel %vm1828, %v4675, %v5021
        %v5989 = vsel %vm1828, %v4676, %v5023
        %v5990 = vsel %vm1828, %v4677, %v5025
        %v5991 = vsel %vm1828, %v4678, %v5027
        %v5992 = vsel %vm1828, %v4679, %v5029
        %v5993 = vsel %vm1828, %v4680, %v5031
        %v5994 = vsel %vm1828, %v4681, %v5033
        %v5995 = vsel %vm1828, %v4682, %v5035
        %v5996 = vsel %vm1861, %v5964, %v5101
        %v5997 = vsel %vm1861, %v5965, %v5103
        %v5998 = vsel %vm1861, %v5966, %v5105
        %v5999 = vsel %vm1861, %v5967, %v5107
        %v6000 = vsel %vm1861, %v5968, %v5109
        %v6001 = vsel %vm1861, %v5969, %v5111
        %v6002 = vsel %vm1861, %v5970, %v5113
        %v6003 = vsel %vm1861, %v5971, %v5115
        %v6004 = vsel %vm1861, %v5972, %v5117
        %v6005 = vsel %vm1861, %v5973, %v5119
        %v6006 = vsel %vm1861, %v5974, %v5121
        %v6007 = vsel %vm1861, %v5975, %v5123
        %v6008 = vsel %vm1861, %v5976, %v5125
        %v6009 = vsel %vm1861, %v5977, %v5127
        %v6010 = vsel %vm1861, %v5978, %v5129
        %v6011 = vsel %vm1861, %v5979, %v5131
        %v6012 = vsel %vm1861, %v5980, %v5133
        %v6013 = vsel %vm1861, %v5981, %v5135
        %v6014 = vsel %vm1861, %v5982, %v5137
        %v6015 = vsel %vm1861, %v5983, %v5139
        %v6016 = vsel %vm1861, %v5984, %v5141
        %v6017 = vsel %vm1861, %v5985, %v5143
        %v6018 = vsel %vm1861, %v5986, %v5145
        %v6019 = vsel %vm1861, %v5987, %v5147
        %v6020 = vsel %vm1861, %v5988, %v5149
        %v6021 = vsel %vm1861, %v5989, %v5151
        %v6022 = vsel %vm1861, %v5990, %v5153
        %v6023 = vsel %vm1861, %v5991, %v5155
        %v6024 = vsel %vm1861, %v5992, %v5157
        %v6025 = vsel %vm1861, %v5993, %v5159
        %v6026 = vsel %vm1861, %v5994, %v5161
        %v6027 = vsel %vm1861, %v5995, %v5163
        %v6028 = vsel %vm1894, %v5996, %v5229
        %v6029 = vsel %vm1894, %v5997, %v5231
        %v6030 = vsel %vm1894, %v5998, %v5233
        %v6031 = vsel %vm1894, %v5999, %v5235
        %v6032 = vsel %vm1894, %v6000, %v5237
        %v6033 = vsel %vm1894, %v6001, %v5239
        %v6034 = vsel %vm1894, %v6002, %v5241
        %v6035 = vsel %vm1894, %v6003, %v5243
        %v6036 = vsel %vm1894, %v6004, %v5245
        %v6037 = vsel %vm1894, %v6005, %v5247
        %v6038 = vsel %vm1894, %v6006, %v5249
        %v6039 = vsel %vm1894, %v6007, %v5251
        %v6040 = vsel %vm1894, %v6008, %v5253
        %v6041 = vsel %vm1894, %v6009, %v5255
        %v6042 = vsel %vm1894, %v6010, %v5257
        %v6043 = vsel %vm1894, %v6011, %v5259
        %v6044 = vsel %vm1894, %v6012, %v5261
        %v6045 = vsel %vm1894, %v6013, %v5263
        %v6046 = vsel %vm1894, %v6014, %v5265
        %v6047 = vsel %vm1894, %v6015, %v5267
        %v6048 = vsel %vm1894, %v6016, %v5269
        %v6049 = vsel %vm1894, %v6017, %v5271
        %v6050 = vsel %vm1894, %v6018, %v5273
        %v6051 = vsel %vm1894, %v6019, %v5275
        %v6052 = vsel %vm1894, %v6020, %v5277
        %v6053 = vsel %vm1894, %v6021, %v5279
        %v6054 = vsel %vm1894, %v6022, %v5281
        %v6055 = vsel %vm1894, %v6023, %v5283
        %v6056 = vsel %vm1894, %v6024, %v5285
        %v6057 = vsel %vm1894, %v6025, %v5287
        %v6058 = vsel %vm1894, %v6026, %v5289
        %v6059 = vsel %vm1894, %v6027, %v5291
        %v6060 = vsel %vm1927, %v6028, %v5357
        %v6061 = vsel %vm1927, %v6029, %v5359
        %v6062 = vsel %vm1927, %v6030, %v5361
        %v6063 = vsel %vm1927, %v6031, %v5363
        %v6064 = vsel %vm1927, %v6032, %v5365
        %v6065 = vsel %vm1927, %v6033, %v5367
        %v6066 = vsel %vm1927, %v6034, %v5369
        %v6067 = vsel %vm1927, %v6035, %v5371
        %v6068 = vsel %vm1927, %v6036, %v5373
        %v6069 = vsel %vm1927, %v6037, %v5375
        %v6070 = vsel %vm1927, %v6038, %v5377
        %v6071 = vsel %vm1927, %v6039, %v5379
        %v6072 = vsel %vm1927, %v6040, %v5381
        %v6073 = vsel %vm1927, %v6041, %v5383
        %v6074 = vsel %vm1927, %v6042, %v5385
        %v6075 = vsel %vm1927, %v6043, %v5387
        %v6076 = vsel %vm1927, %v6044, %v5389
        %v6077 = vsel %vm1927, %v6045, %v5391
        %v6078 = vsel %vm1927, %v6046, %v5393
        %v6079 = vsel %vm1927, %v6047, %v5395
        %v6080 = vsel %vm1927, %v6048, %v5397
        %v6081 = vsel %vm1927, %v6049, %v5399
        %v6082 = vsel %vm1927, %v6050, %v5401
        %v6083 = vsel %vm1927, %v6051, %v5403
        %v6084 = vsel %vm1927, %v6052, %v5405
        %v6085 = vsel %vm1927, %v6053, %v5407
        %v6086 = vsel %vm1927, %v6054, %v5409
        %v6087 = vsel %vm1927, %v6055, %v5411
        %v6088 = vsel %vm1927, %v6056, %v5413
        %v6089 = vsel %vm1927, %v6057, %v5415
        %v6090 = vsel %vm1927, %v6058, %v5417
        %v6091 = vsel %vm1927, %v6059, %v5419
        %v6092 = vsel %vm1960, %v6060, %v5485
        %v6093 = vsel %vm1960, %v6061, %v5487
        %v6094 = vsel %vm1960, %v6062, %v5489
        %v6095 = vsel %vm1960, %v6063, %v5491
        %v6096 = vsel %vm1960, %v6064, %v5493
        %v6097 = vsel %vm1960, %v6065, %v5495
        %v6098 = vsel %vm1960, %v6066, %v5497
        %v6099 = vsel %vm1960, %v6067, %v5499
        %v6100 = vsel %vm1960, %v6068, %v5501
        %v6101 = vsel %vm1960, %v6069, %v5503
        %v6102 = vsel %vm1960, %v6070, %v5505
        %v6103 = vsel %vm1960, %v6071, %v5507
        %v6104 = vsel %vm1960, %v6072, %v5509
        %v6105 = vsel %vm1960, %v6073, %v5511
        %v6106 = vsel %vm1960, %v6074, %v5513
        %v6107 = vsel %vm1960, %v6075, %v5515
        %v6108 = vsel %vm1960, %v6076, %v5517
        %v6109 = vsel %vm1960, %v6077, %v5519
        %v6110 = vsel %vm1960, %v6078, %v5521
        %v6111 = vsel %vm1960, %v6079, %v5523
        %v6112 = vsel %vm1960, %v6080, %v5525
        %v6113 = vsel %vm1960, %v6081, %v5527
        %v6114 = vsel %vm1960, %v6082, %v5529
        %v6115 = vsel %vm1960, %v6083, %v5531
        %v6116 = vsel %vm1960, %v6084, %v5533
        %v6117 = vsel %vm1960, %v6085, %v5535
        %v6118 = vsel %vm1960, %v6086, %v5537
        %v6119 = vsel %vm1960, %v6087, %v5539
        %v6120 = vsel %vm1960, %v6088, %v5541
        %v6121 = vsel %vm1960, %v6089, %v5543
        %v6122 = vsel %vm1960, %v6090, %v5545
        %v6123 = vsel %vm1960, %v6091, %v5547
        %v6124 = vsel %vm1993, %v6092, %v5613
        %v6125 = vsel %vm1993, %v6093, %v5615
        %v6126 = vsel %vm1993, %v6094, %v5617
        %v6127 = vsel %vm1993, %v6095, %v5619
        %v6128 = vsel %vm1993, %v6096, %v5621
        %v6129 = vsel %vm1993, %v6097, %v5623
        %v6130 = vsel %vm1993, %v6098, %v5625
        %v6131 = vsel %vm1993, %v6099, %v5627
        %v6132 = vsel %vm1993, %v6100, %v5629
        %v6133 = vsel %vm1993, %v6101, %v5631
        %v6134 = vsel %vm1993, %v6102, %v5633
        %v6135 = vsel %vm1993, %v6103, %v5635
        %v6136 = vsel %vm1993, %v6104, %v5637
        %v6137 = vsel %vm1993, %v6105, %v5639
        %v6138 = vsel %vm1993, %v6106, %v5641
        %v6139 = vsel %vm1993, %v6107, %v5643
        %v6140 = vsel %vm1993, %v6108, %v5645
        %v6141 = vsel %vm1993, %v6109, %v5647
        %v6142 = vsel %vm1993, %v6110, %v5649
        %v6143 = vsel %vm1993, %v6111, %v5651
        %v6144 = vsel %vm1993, %v6112, %v5653
        %v6145 = vsel %vm1993, %v6113, %v5655
        %v6146 = vsel %vm1993, %v6114, %v5657
        %v6147 = vsel %vm1993, %v6115, %v5659
        %v6148 = vsel %vm1993, %v6116, %v5661
        %v6149 = vsel %vm1993, %v6117, %v5663
        %v6150 = vsel %vm1993, %v6118, %v5665
        %v6151 = vsel %vm1993, %v6119, %v5667
        %v6152 = vsel %vm1993, %v6120, %v5669
        %v6153 = vsel %vm1993, %v6121, %v5671
        %v6154 = vsel %vm1993, %v6122, %v5673
        %v6155 = vsel %vm1993, %v6123, %v5675
        %v6156 = vsel %vm2026, %v6124, %v5741
        %v6157 = vsel %vm2026, %v6125, %v5743
        %v6158 = vsel %vm2026, %v6126, %v5745
        %v6159 = vsel %vm2026, %v6127, %v5747
        %v6160 = vsel %vm2026, %v6128, %v5749
        %v6161 = vsel %vm2026, %v6129, %v5751
        %v6162 = vsel %vm2026, %v6130, %v5753
        %v6163 = vsel %vm2026, %v6131, %v5755
        %v6164 = vsel %vm2026, %v6132, %v5757
        %v6165 = vsel %vm2026, %v6133, %v5759
        %v6166 = vsel %vm2026, %v6134, %v5761
        %v6167 = vsel %vm2026, %v6135, %v5763
        %v6168 = vsel %vm2026, %v6136, %v5765
        %v6169 = vsel %vm2026, %v6137, %v5767
        %v6170 = vsel %vm2026, %v6138, %v5769
        %v6171 = vsel %vm2026, %v6139, %v5771
        %v6172 = vsel %vm2026, %v6140, %v5773
        %v6173 = vsel %vm2026, %v6141, %v5775
        %v6174 = vsel %vm2026, %v6142, %v5777
        %v6175 = vsel %vm2026, %v6143, %v5779
        %v6176 = vsel %vm2026, %v6144, %v5781
        %v6177 = vsel %vm2026, %v6145, %v5783
        %v6178 = vsel %vm2026, %v6146, %v5785
        %v6179 = vsel %vm2026, %v6147, %v5787
        %v6180 = vsel %vm2026, %v6148, %v5789
        %v6181 = vsel %vm2026, %v6149, %v5791
        %v6182 = vsel %vm2026, %v6150, %v5793
        %v6183 = vsel %vm2026, %v6151, %v5795
        %v6184 = vsel %vm2026, %v6152, %v5797
        %v6185 = vsel %vm2026, %v6153, %v5799
        %v6186 = vsel %vm2026, %v6154, %v5801
        %v6187 = vsel %vm2026, %v6155, %v5803
        %v6188 = vsel %vm2059, %v6156, %v5869
        %v6189 = vsel %vm2059, %v6157, %v5871
        %v6190 = vsel %vm2059, %v6158, %v5873
        %v6191 = vsel %vm2059, %v6159, %v5875
        %v6192 = vsel %vm2059, %v6160, %v5877
        %v6193 = vsel %vm2059, %v6161, %v5879
        %v6194 = vsel %vm2059, %v6162, %v5881
        %v6195 = vsel %vm2059, %v6163, %v5883
        %v6196 = vsel %vm2059, %v6164, %v5885
        %v6197 = vsel %vm2059, %v6165, %v5887
        %v6198 = vsel %vm2059, %v6166, %v5889
        %v6199 = vsel %vm2059, %v6167, %v5891
        %v6200 = vsel %vm2059, %v6168, %v5893
        %v6201 = vsel %vm2059, %v6169, %v5895
        %v6202 = vsel %vm2059, %v6170, %v5897
        %v6203 = vsel %vm2059, %v6171, %v5899
        %v6204 = vsel %vm2059, %v6172, %v5901
        %v6205 = vsel %vm2059, %v6173, %v5903
        %v6206 = vsel %vm2059, %v6174, %v5905
        %v6207 = vsel %vm2059, %v6175, %v5907
        %v6208 = vsel %vm2059, %v6176, %v5909
        %v6209 = vsel %vm2059, %v6177, %v5911
        %v6210 = vsel %vm2059, %v6178, %v5913
        %v6211 = vsel %vm2059, %v6179, %v5915
        %v6212 = vsel %vm2059, %v6180, %v5917
        %v6213 = vsel %vm2059, %v6181, %v5919
        %v6214 = vsel %vm2059, %v6182, %v5921
        %v6215 = vsel %vm2059, %v6183, %v5923
        %v6216 = vsel %vm2059, %v6184, %v5925
        %v6217 = vsel %vm2059, %v6185, %v5927
        %v6218 = vsel %vm2059, %v6186, %v5929
        %v6219 = vsel %vm2059, %v6187, %v5931
        %v6220 = vld [vmem:[%s6] sm:$0xff]
        %v6221 = vld [vmem:[%s6 + $0x8] sm:$0xff]
        %v6222 = vld [vmem:[%s6 + $0x10] sm:$0xff]
        %v6223 = vld [vmem:[%s6 + $0x18] sm:$0xff]
        %v6224 = vld [vmem:[%s6 + $0x20] sm:$0xff]
        %v6225 = vld [vmem:[%s6 + $0x28] sm:$0xff]
        %v6226 = vld [vmem:[%s6 + $0x30] sm:$0xff]
        %v6227 = vld [vmem:[%s6 + $0x38] sm:$0xff]
        %v6228 = vld [vmem:[%s6 + $0x40] sm:$0xff]
        %v6229 = vld [vmem:[#allocation4] sm:$0xff]
        %v6230 = vld [vmem:[#allocation4 + $0x8] sm:$0xff]
        %v6231 = vld [vmem:[#allocation4 + $0x18] sm:$0xff]
        %v6232 = vld [vmem:[#allocation4 + $0x20] sm:$0xff]
        %v6233 = vld [vmem:[#allocation4 + $0x30] sm:$0xff]
        %v6234 = vld [vmem:[#allocation4 + $0x38] sm:$0xff]
        %v6235 = vld [vmem:[#allocation4 + $0x48] sm:$0xff]
        %v6236 = vld [vmem:[#allocation4 + $0x50] sm:$0xff]
        %v6237 = vld [vmem:[#allocation4 + $0x60] sm:$0xff]
        %v6238 = vld [vmem:[#allocation4 + $0x68] sm:$0xff]
        %v6239 = vld [vmem:[#allocation4 + $0x78] sm:$0xff]
        %v6240 = vld [vmem:[#allocation4 + $0x80] sm:$0xff]
        %v6241 = vld [vmem:[#allocation4 + $0x90] sm:$0xff]
        %v6242 = vld [vmem:[#allocation4 + $0x98] sm:$0xff]
        %v6243 = vld [vmem:[#allocation4 + $0xa8] sm:$0xff]
        %v6244 = vld [vmem:[#allocation4 + $0xb0] sm:$0xff]
        %v6245 = vld [vmem:[#allocation4 + $0xc0] sm:$0xff]
        %v6246 = vld [vmem:[#allocation4 + $0xc8] sm:$0xff]
        %v6247 = vld [vmem:[#allocation4 + $0xd8] sm:$0xff]
        %v6248 = vld [vmem:[#allocation4 + $0xe0] sm:$0xff]
        %v6249 = vld [vmem:[#allocation4 + $0xf0] sm:$0xff]
        %v6250 = vld [vmem:[#allocation4 + $0xf8] sm:$0xff]
        %v6251 = vld [vmem:[#allocation4 + $0x108] sm:$0xff]
        %v6252 = vld [vmem:[#allocation4 + $0x110] sm:$0xff]
        %v6253 = vld [vmem:[#allocation4 + $0x120] sm:$0xff]
        %v6254 = vld [vmem:[#allocation4 + $0x128] sm:$0xff]
        %v6255 = vld [vmem:[#allocation4 + $0x138] sm:$0xff]
        %v6256 = vld [vmem:[#allocation4 + $0x140] sm:$0xff]
        %v6257 = vld [vmem:[#allocation4 + $0x150] sm:$0xff]
        %v6258 = vld [vmem:[#allocation4 + $0x158] sm:$0xff]
        %v6259 = vld [vmem:[#allocation4 + $0x168] sm:$0xff]
        %v6260 = vld [vmem:[#allocation4 + $0x170] sm:$0xff]
        %v6261 = vld [vmem:[#allocation4 + $0x1] sm:$0xff]
        %v6262 = vld [vmem:[#allocation4 + $0x9] sm:$0xff]
        %v6263 = vld [vmem:[#allocation4 + $0x19] sm:$0xff]
        %v6264 = vld [vmem:[#allocation4 + $0x21] sm:$0xff]
        %v6265 = vld [vmem:[#allocation4 + $0x31] sm:$0xff]
        %v6266 = vld [vmem:[#allocation4 + $0x39] sm:$0xff]
        %v6267 = vld [vmem:[#allocation4 + $0x49] sm:$0xff]
        %v6268 = vld [vmem:[#allocation4 + $0x51] sm:$0xff]
        %v6269 = vld [vmem:[#allocation4 + $0x61] sm:$0xff]
        %v6270 = vld [vmem:[#allocation4 + $0x69] sm:$0xff]
        %v6271 = vld [vmem:[#allocation4 + $0x79] sm:$0xff]
        %v6272 = vld [vmem:[#allocation4 + $0x81] sm:$0xff]
        %v6273 = vld [vmem:[#allocation4 + $0x91] sm:$0xff]
        %v6274 = vld [vmem:[#allocation4 + $0x99] sm:$0xff]
        %v6275 = vld [vmem:[#allocation4 + $0xa9] sm:$0xff]
        %v6276 = vld [vmem:[#allocation4 + $0xb1] sm:$0xff]
        %v6277 = vld [vmem:[#allocation4 + $0xc1] sm:$0xff]
        %v6278 = vld [vmem:[#allocation4 + $0xc9] sm:$0xff]
        %v6279 = vld [vmem:[#allocation4 + $0xd9] sm:$0xff]
        %v6280 = vld [vmem:[#allocation4 + $0xe1] sm:$0xff]
        %v6281 = vld [vmem:[#allocation4 + $0xf1] sm:$0xff]
        %v6282 = vld [vmem:[#allocation4 + $0xf9] sm:$0xff]
        %v6283 = vld [vmem:[#allocation4 + $0x109] sm:$0xff]
        %v6284 = vld [vmem:[#allocation4 + $0x111] sm:$0xff]
        %v6285 = vld [vmem:[#allocation4 + $0x121] sm:$0xff]
        %v6286 = vld [vmem:[#allocation4 + $0x129] sm:$0xff]
        %v6287 = vld [vmem:[#allocation4 + $0x139] sm:$0xff]
        %v6288 = vld [vmem:[#allocation4 + $0x141] sm:$0xff]
        %v6289 = vld [vmem:[#allocation4 + $0x151] sm:$0xff]
        %v6290 = vld [vmem:[#allocation4 + $0x159] sm:$0xff]
        %v6291 = vld [vmem:[#allocation4 + $0x169] sm:$0xff]
        %v6292 = vld [vmem:[#allocation4 + $0x171] sm:$0xff]
        %v6293 = vld [vmem:[#allocation4 + $0x2] sm:$0xff]
        %v6294 = vld [vmem:[#allocation4 + $0xa] sm:$0xff]
        %v6295 = vld [vmem:[#allocation4 + $0x1a] sm:$0xff]
        %v6296 = vld [vmem:[#allocation4 + $0x22] sm:$0xff]
        %v6297 = vld [vmem:[#allocation4 + $0x32] sm:$0xff]
        %v6298 = vld [vmem:[#allocation4 + $0x3a] sm:$0xff]
        %v6299 = vld [vmem:[#allocation4 + $0x4a] sm:$0xff]
        %v6300 = vld [vmem:[#allocation4 + $0x52] sm:$0xff]
        %v6301 = vld [vmem:[#allocation4 + $0x62] sm:$0xff]
        %v6302 = vld [vmem:[#allocation4 + $0x6a] sm:$0xff]
        %v6303 = vld [vmem:[#allocation4 + $0x7a] sm:$0xff]
        %v6304 = vld [vmem:[#allocation4 + $0x82] sm:$0xff]
        %v6305 = vld [vmem:[#allocation4 + $0x92] sm:$0xff]
        %v6306 = vld [vmem:[#allocation4 + $0x9a] sm:$0xff]
        %v6307 = vld [vmem:[#allocation4 + $0xaa] sm:$0xff]
        %v6308 = vld [vmem:[#allocation4 + $0xb2] sm:$0xff]
        %v6309 = vld [vmem:[#allocation4 + $0xc2] sm:$0xff]
        %v6310 = vld [vmem:[#allocation4 + $0xca] sm:$0xff]
        %v6311 = vld [vmem:[#allocation4 + $0xda] sm:$0xff]
        %v6312 = vld [vmem:[#allocation4 + $0xe2] sm:$0xff]
        %v6313 = vld [vmem:[#allocation4 + $0xf2] sm:$0xff]
        %v6314 = vld [vmem:[#allocation4 + $0xfa] sm:$0xff]
        %v6315 = vld [vmem:[#allocation4 + $0x10a] sm:$0xff]
        %v6316 = vld [vmem:[#allocation4 + $0x112] sm:$0xff]
        %v6317 = vld [vmem:[#allocation4 + $0x122] sm:$0xff]
        %v6318 = vld [vmem:[#allocation4 + $0x12a] sm:$0xff]
        %v6319 = vld [vmem:[#allocation4 + $0x13a] sm:$0xff]
        %v6320 = vld [vmem:[#allocation4 + $0x142] sm:$0xff]
        %v6321 = vld [vmem:[#allocation4 + $0x152] sm:$0xff]
        %v6322 = vld [vmem:[#allocation4 + $0x15a] sm:$0xff]
        %v6323 = vld [vmem:[#allocation4 + $0x16a] sm:$0xff]
        %v6324 = vld [vmem:[#allocation4 + $0x172] sm:$0xff]
        %v6325 = vld [vmem:[%s4618] sm:$0xff]
        %v6326 = vld [vmem:[%s4618 + $0x8] sm:$0xff]
        %v6327 = vld [vmem:[%s4618 + $0x18] sm:$0xff]
        %v6328 = vld [vmem:[%s4618 + $0x20] sm:$0xff]
        %v6329 = vld [vmem:[%s4618 + $0x30] sm:$0xff]
        %v6330 = vld [vmem:[%s4618 + $0x38] sm:$0xff]
        %v6331 = vld [vmem:[%s4618 + $0x48] sm:$0xff]
        %v6332 = vld [vmem:[%s4618 + $0x50] sm:$0xff]
        %v6333 = vld [vmem:[%s4618 + $0x60] sm:$0xff]
        %v6334 = vld [vmem:[%s4618 + $0x68] sm:$0xff]
        %v6335 = vld [vmem:[%s4618 + $0x78] sm:$0xff]
        %v6336 = vld [vmem:[%s4618 + $0x80] sm:$0xff]
        %v6337 = vld [vmem:[%s4618 + $0x90] sm:$0xff]
        %v6338 = vld [vmem:[%s4618 + $0x98] sm:$0xff]
        %v6339 = vld [vmem:[%s4618 + $0xa8] sm:$0xff]
        %v6340 = vld [vmem:[%s4618 + $0xb0] sm:$0xff]
        %v6341 = vld [vmem:[%s4618 + $0xc0] sm:$0xff]
        %v6342 = vld [vmem:[%s4618 + $0xc8] sm:$0xff]
        %v6343 = vld [vmem:[%s4618 + $0xd8] sm:$0xff]
        %v6344 = vld [vmem:[%s4618 + $0xe0] sm:$0xff]
        %v6345 = vld [vmem:[%s4618 + $0xf0] sm:$0xff]
        %v6346 = vld [vmem:[%s4618 + $0xf8] sm:$0xff]
        %v6347 = vld [vmem:[%s4618 + $0x108] sm:$0xff]
        %v6348 = vld [vmem:[%s4618 + $0x110] sm:$0xff]
        %v6349 = vld [vmem:[%s4618 + $0x120] sm:$0xff]
        %v6350 = vld [vmem:[%s4618 + $0x128] sm:$0xff]
        %v6351 = vld [vmem:[%s4618 + $0x138] sm:$0xff]
        %v6352 = vld [vmem:[%s4618 + $0x140] sm:$0xff]
        %v6353 = vld [vmem:[%s4618 + $0x150] sm:$0xff]
        %v6354 = vld [vmem:[%s4618 + $0x158] sm:$0xff]
        %v6355 = vld [vmem:[%s4618 + $0x168] sm:$0xff]
        %v6356 = vld [vmem:[%s4618 + $0x170] sm:$0xff]
        %v6357 = vld [vmem:[%s4618 + $0x1] sm:$0xff]
        %v6358 = vld [vmem:[%s4618 + $0x9] sm:$0xff]
        %v6359 = vld [vmem:[%s4618 + $0x19] sm:$0xff]
        %v6360 = vld [vmem:[%s4618 + $0x21] sm:$0xff]
        %v6361 = vld [vmem:[%s4618 + $0x31] sm:$0xff]
        %v6362 = vld [vmem:[%s4618 + $0x39] sm:$0xff]
        %v6363 = vld [vmem:[%s4618 + $0x49] sm:$0xff]
        %v6364 = vld [vmem:[%s4618 + $0x51] sm:$0xff]
        %v6365 = vld [vmem:[%s4618 + $0x61] sm:$0xff]
        %v6366 = vld [vmem:[%s4618 + $0x69] sm:$0xff]
        %v6367 = vld [vmem:[%s4618 + $0x79] sm:$0xff]
        %v6368 = vld [vmem:[%s4618 + $0x81] sm:$0xff]
        %v6369 = vld [vmem:[%s4618 + $0x91] sm:$0xff]
        %v6370 = vld [vmem:[%s4618 + $0x99] sm:$0xff]
        %v6371 = vld [vmem:[%s4618 + $0xa9] sm:$0xff]
        %v6372 = vld [vmem:[%s4618 + $0xb1] sm:$0xff]
        %v6373 = vld [vmem:[%s4618 + $0xc1] sm:$0xff]
        %v6374 = vld [vmem:[%s4618 + $0xc9] sm:$0xff]
        %v6375 = vld [vmem:[%s4618 + $0xd9] sm:$0xff]
        %v6376 = vld [vmem:[%s4618 + $0xe1] sm:$0xff]
        %v6377 = vld [vmem:[%s4618 + $0xf1] sm:$0xff]
        %v6378 = vld [vmem:[%s4618 + $0xf9] sm:$0xff]
        %v6379 = vld [vmem:[%s4618 + $0x109] sm:$0xff]
        %v6380 = vld [vmem:[%s4618 + $0x111] sm:$0xff]
        %v6381 = vld [vmem:[%s4618 + $0x121] sm:$0xff]
        %v6382 = vld [vmem:[%s4618 + $0x129] sm:$0xff]
        %v6383 = vld [vmem:[%s4618 + $0x139] sm:$0xff]
        %v6384 = vld [vmem:[%s4618 + $0x141] sm:$0xff]
        %v6385 = vld [vmem:[%s4618 + $0x151] sm:$0xff]
        %v6386 = vld [vmem:[%s4618 + $0x159] sm:$0xff]
        %v6387 = vld [vmem:[%s4618 + $0x169] sm:$0xff]
        %v6388 = vld [vmem:[%s4618 + $0x171] sm:$0xff]
        %v6389 = vld [vmem:[%s4618 + $0x2] sm:$0xff]
        %v6390 = vld [vmem:[%s4618 + $0xa] sm:$0xff]
        %v6391 = vld [vmem:[%s4618 + $0x1a] sm:$0xff]
        %v6392 = vld [vmem:[%s4618 + $0x22] sm:$0xff]
        %v6393 = vld [vmem:[%s4618 + $0x32] sm:$0xff]
        %v6394 = vld [vmem:[%s4618 + $0x3a] sm:$0xff]
        %v6395 = vld [vmem:[%s4618 + $0x4a] sm:$0xff]
        %v6396 = vld [vmem:[%s4618 + $0x52] sm:$0xff]
        %v6397 = vld [vmem:[%s4618 + $0x62] sm:$0xff]
        %v6398 = vld [vmem:[%s4618 + $0x6a] sm:$0xff]
        %v6399 = vld [vmem:[%s4618 + $0x7a] sm:$0xff]
        %v6400 = vld [vmem:[%s4618 + $0x82] sm:$0xff]
        %v6401 = vld [vmem:[%s4618 + $0x92] sm:$0xff]
        %v6402 = vld [vmem:[%s4618 + $0x9a] sm:$0xff]
        %v6403 = vld [vmem:[%s4618 + $0xaa] sm:$0xff]
        %v6404 = vld [vmem:[%s4618 + $0xb2] sm:$0xff]
        %v6405 = vld [vmem:[%s4618 + $0xc2] sm:$0xff]
        %v6406 = vld [vmem:[%s4618 + $0xca] sm:$0xff]
        %v6407 = vld [vmem:[%s4618 + $0xda] sm:$0xff]
        %v6408 = vld [vmem:[%s4618 + $0xe2] sm:$0xff]
        %v6409 = vld [vmem:[%s4618 + $0xf2] sm:$0xff]
        %v6410 = vld [vmem:[%s4618 + $0xfa] sm:$0xff]
        %v6411 = vld [vmem:[%s4618 + $0x10a] sm:$0xff]
        %v6412 = vld [vmem:[%s4618 + $0x112] sm:$0xff]
        %v6413 = vld [vmem:[%s4618 + $0x122] sm:$0xff]
        %v6414 = vld [vmem:[%s4618 + $0x12a] sm:$0xff]
        %v6415 = vld [vmem:[%s4618 + $0x13a] sm:$0xff]
        %v6416 = vld [vmem:[%s4618 + $0x142] sm:$0xff]
        %v6417 = vld [vmem:[%s4618 + $0x152] sm:$0xff]
        %v6418 = vld [vmem:[%s4618 + $0x15a] sm:$0xff]
        %v6419 = vld [vmem:[%s4618 + $0x16a] sm:$0xff]
        %v6420 = vld [vmem:[%s4618 + $0x172] sm:$0xff]
        %s6421 = scalar_lea.vmem [#allocation4], 48
        %v6422 = vld [vmem:[%s6421] sm:$0xff]
        %v6423 = vld [vmem:[%s6421 + $0x8] sm:$0xff]
        %v6424 = vld [vmem:[%s6421 + $0x18] sm:$0xff]
        %v6425 = vld [vmem:[%s6421 + $0x20] sm:$0xff]
        %v6426 = vld [vmem:[%s6421 + $0x30] sm:$0xff]
        %v6427 = vld [vmem:[%s6421 + $0x38] sm:$0xff]
        %v6428 = vld [vmem:[%s6421 + $0x48] sm:$0xff]
        %v6429 = vld [vmem:[%s6421 + $0x50] sm:$0xff]
        %v6430 = vld [vmem:[%s6421 + $0x60] sm:$0xff]
        %v6431 = vld [vmem:[%s6421 + $0x68] sm:$0xff]
        %v6432 = vld [vmem:[%s6421 + $0x78] sm:$0xff]
        %v6433 = vld [vmem:[%s6421 + $0x80] sm:$0xff]
        %v6434 = vld [vmem:[%s6421 + $0x90] sm:$0xff]
        %v6435 = vld [vmem:[%s6421 + $0x98] sm:$0xff]
        %v6436 = vld [vmem:[%s6421 + $0xa8] sm:$0xff]
        %v6437 = vld [vmem:[%s6421 + $0xb0] sm:$0xff]
        %v6438 = vld [vmem:[%s6421 + $0xc0] sm:$0xff]
        %v6439 = vld [vmem:[%s6421 + $0xc8] sm:$0xff]
        %v6440 = vld [vmem:[%s6421 + $0xd8] sm:$0xff]
        %v6441 = vld [vmem:[%s6421 + $0xe0] sm:$0xff]
        %v6442 = vld [vmem:[%s6421 + $0xf0] sm:$0xff]
        %v6443 = vld [vmem:[%s6421 + $0xf8] sm:$0xff]
        %v6444 = vld [vmem:[%s6421 + $0x108] sm:$0xff]
        %v6445 = vld [vmem:[%s6421 + $0x110] sm:$0xff]
        %v6446 = vld [vmem:[%s6421 + $0x120] sm:$0xff]
        %v6447 = vld [vmem:[%s6421 + $0x128] sm:$0xff]
        %v6448 = vld [vmem:[%s6421 + $0x138] sm:$0xff]
        %v6449 = vld [vmem:[%s6421 + $0x140] sm:$0xff]
        %v6450 = vld [vmem:[%s6421 + $0x150] sm:$0xff]
        %v6451 = vld [vmem:[%s6421 + $0x158] sm:$0xff]
        %v6452 = vld [vmem:[%s6421 + $0x168] sm:$0xff]
        %v6453 = vld [vmem:[%s6421 + $0x170] sm:$0xff]
        %v6454 = vld [vmem:[%s6421 + $0x1] sm:$0xff]
        %v6455 = vld [vmem:[%s6421 + $0x9] sm:$0xff]
        %v6456 = vld [vmem:[%s6421 + $0x19] sm:$0xff]
        %v6457 = vld [vmem:[%s6421 + $0x21] sm:$0xff]
        %v6458 = vld [vmem:[%s6421 + $0x31] sm:$0xff]
        %v6459 = vld [vmem:[%s6421 + $0x39] sm:$0xff]
        %v6460 = vld [vmem:[%s6421 + $0x49] sm:$0xff]
        %v6461 = vld [vmem:[%s6421 + $0x51] sm:$0xff]
        %v6462 = vld [vmem:[%s6421 + $0x61] sm:$0xff]
        %v6463 = vld [vmem:[%s6421 + $0x69] sm:$0xff]
        %v6464 = vld [vmem:[%s6421 + $0x79] sm:$0xff]
        %v6465 = vld [vmem:[%s6421 + $0x81] sm:$0xff]
        %v6466 = vld [vmem:[%s6421 + $0x91] sm:$0xff]
        %v6467 = vld [vmem:[%s6421 + $0x99] sm:$0xff]
        %v6468 = vld [vmem:[%s6421 + $0xa9] sm:$0xff]
        %v6469 = vld [vmem:[%s6421 + $0xb1] sm:$0xff]
        %v6470 = vld [vmem:[%s6421 + $0xc1] sm:$0xff]
        %v6471 = vld [vmem:[%s6421 + $0xc9] sm:$0xff]
        %v6472 = vld [vmem:[%s6421 + $0xd9] sm:$0xff]
        %v6473 = vld [vmem:[%s6421 + $0xe1] sm:$0xff]
        %v6474 = vld [vmem:[%s6421 + $0xf1] sm:$0xff]
        %v6475 = vld [vmem:[%s6421 + $0xf9] sm:$0xff]
        %v6476 = vld [vmem:[%s6421 + $0x109] sm:$0xff]
        %v6477 = vld [vmem:[%s6421 + $0x111] sm:$0xff]
        %v6478 = vld [vmem:[%s6421 + $0x121] sm:$0xff]
        %v6479 = vld [vmem:[%s6421 + $0x129] sm:$0xff]
        %v6480 = vld [vmem:[%s6421 + $0x139] sm:$0xff]
        %v6481 = vld [vmem:[%s6421 + $0x141] sm:$0xff]
        %v6482 = vld [vmem:[%s6421 + $0x151] sm:$0xff]
        %v6483 = vld [vmem:[%s6421 + $0x159] sm:$0xff]
        %v6484 = vld [vmem:[%s6421 + $0x169] sm:$0xff]
        %v6485 = vld [vmem:[%s6421 + $0x171] sm:$0xff]
        %v6486 = vld [vmem:[%s6421 + $0x2] sm:$0xff]
        %v6487 = vld [vmem:[%s6421 + $0xa] sm:$0xff]
        %v6488 = vld [vmem:[%s6421 + $0x1a] sm:$0xff]
        %v6489 = vld [vmem:[%s6421 + $0x22] sm:$0xff]
        %v6490 = vld [vmem:[%s6421 + $0x32] sm:$0xff]
        %v6491 = vld [vmem:[%s6421 + $0x3a] sm:$0xff]
        %v6492 = vld [vmem:[%s6421 + $0x4a] sm:$0xff]
        %v6493 = vld [vmem:[%s6421 + $0x52] sm:$0xff]
        %v6494 = vld [vmem:[%s6421 + $0x62] sm:$0xff]
        %v6495 = vld [vmem:[%s6421 + $0x6a] sm:$0xff]
        %v6496 = vld [vmem:[%s6421 + $0x7a] sm:$0xff]
        %v6497 = vld [vmem:[%s6421 + $0x82] sm:$0xff]
        %v6498 = vld [vmem:[%s6421 + $0x92] sm:$0xff]
        %v6499 = vld [vmem:[%s6421 + $0x9a] sm:$0xff]
        %v6500 = vld [vmem:[%s6421 + $0xaa] sm:$0xff]
        %v6501 = vld [vmem:[%s6421 + $0xb2] sm:$0xff]
        %v6502 = vld [vmem:[%s6421 + $0xc2] sm:$0xff]
        %v6503 = vld [vmem:[%s6421 + $0xca] sm:$0xff]
        %v6504 = vld [vmem:[%s6421 + $0xda] sm:$0xff]
        %v6505 = vld [vmem:[%s6421 + $0xe2] sm:$0xff]
        %v6506 = vld [vmem:[%s6421 + $0xf2] sm:$0xff]
        %v6507 = vld [vmem:[%s6421 + $0xfa] sm:$0xff]
        %v6508 = vld [vmem:[%s6421 + $0x10a] sm:$0xff]
        %v6509 = vld [vmem:[%s6421 + $0x112] sm:$0xff]
        %v6510 = vld [vmem:[%s6421 + $0x122] sm:$0xff]
        %v6511 = vld [vmem:[%s6421 + $0x12a] sm:$0xff]
        %v6512 = vld [vmem:[%s6421 + $0x13a] sm:$0xff]
        %v6513 = vld [vmem:[%s6421 + $0x142] sm:$0xff]
        %v6514 = vld [vmem:[%s6421 + $0x152] sm:$0xff]
        %v6515 = vld [vmem:[%s6421 + $0x15a] sm:$0xff]
        %v6516 = vld [vmem:[%s6421 + $0x16a] sm:$0xff]
        %v6517 = vld [vmem:[%s6421 + $0x172] sm:$0xff]
        %6550 = vrot.lane.b32.xlu0 %v6261, 8
        %v6551 = vpop.permute.xlu0 %6550
        %6552 = vrot.lane.b32.xlu0 %v6262, 8
        %v6553 = vpop.permute.xlu0 %6552
        %6554 = vrot.lane.b32.xlu0 %v6263, 8
        %v6555 = vpop.permute.xlu0 %6554
        %6556 = vrot.lane.b32.xlu0 %v6264, 8
        %v6557 = vpop.permute.xlu0 %6556
        %6558 = vrot.lane.b32.xlu0 %v6265, 8
        %v6559 = vpop.permute.xlu0 %6558
        %6560 = vrot.lane.b32.xlu0 %v6266, 8
        %v6561 = vpop.permute.xlu0 %6560
        %6562 = vrot.lane.b32.xlu0 %v6267, 8
        %v6563 = vpop.permute.xlu0 %6562
        %6564 = vrot.lane.b32.xlu0 %v6268, 8
        %v6565 = vpop.permute.xlu0 %6564
        %6566 = vrot.lane.b32.xlu0 %v6269, 8
        %v6567 = vpop.permute.xlu0 %6566
        %6568 = vrot.lane.b32.xlu0 %v6270, 8
        %v6569 = vpop.permute.xlu0 %6568
        %6570 = vrot.lane.b32.xlu0 %v6271, 8
        %v6571 = vpop.permute.xlu0 %6570
        %6572 = vrot.lane.b32.xlu0 %v6272, 8
        %v6573 = vpop.permute.xlu0 %6572
        %6574 = vrot.lane.b32.xlu0 %v6273, 8
        %v6575 = vpop.permute.xlu0 %6574
        %6576 = vrot.lane.b32.xlu0 %v6274, 8
        %v6577 = vpop.permute.xlu0 %6576
        %6578 = vrot.lane.b32.xlu0 %v6275, 8
        %v6579 = vpop.permute.xlu0 %6578
        %6580 = vrot.lane.b32.xlu0 %v6276, 8
        %v6581 = vpop.permute.xlu0 %6580
        %6582 = vrot.lane.b32.xlu0 %v6277, 8
        %v6583 = vpop.permute.xlu0 %6582
        %6584 = vrot.lane.b32.xlu0 %v6278, 8
        %v6585 = vpop.permute.xlu0 %6584
        %6586 = vrot.lane.b32.xlu0 %v6279, 8
        %v6587 = vpop.permute.xlu0 %6586
        %6588 = vrot.lane.b32.xlu0 %v6280, 8
        %v6589 = vpop.permute.xlu0 %6588
        %6590 = vrot.lane.b32.xlu0 %v6281, 8
        %v6591 = vpop.permute.xlu0 %6590
        %6592 = vrot.lane.b32.xlu0 %v6282, 8
        %v6593 = vpop.permute.xlu0 %6592
        %6594 = vrot.lane.b32.xlu0 %v6283, 8
        %v6595 = vpop.permute.xlu0 %6594
        %6596 = vrot.lane.b32.xlu0 %v6284, 8
        %v6597 = vpop.permute.xlu0 %6596
        %6598 = vrot.lane.b32.xlu0 %v6285, 8
        %v6599 = vpop.permute.xlu0 %6598
        %6600 = vrot.lane.b32.xlu0 %v6286, 8
        %v6601 = vpop.permute.xlu0 %6600
        %6602 = vrot.lane.b32.xlu0 %v6287, 8
        %v6603 = vpop.permute.xlu0 %6602
        %6604 = vrot.lane.b32.xlu0 %v6288, 8
        %v6605 = vpop.permute.xlu0 %6604
        %6606 = vrot.lane.b32.xlu0 %v6289, 8
        %v6607 = vpop.permute.xlu0 %6606
        %6608 = vrot.lane.b32.xlu0 %v6290, 8
        %v6609 = vpop.permute.xlu0 %6608
        %6610 = vrot.lane.b32.xlu0 %v6291, 8
        %v6611 = vpop.permute.xlu0 %6610
        %6612 = vrot.lane.b32.xlu0 %v6292, 8
        %v6613 = vpop.permute.xlu0 %6612
        %6678 = vrot.lane.b32.xlu0 %v6293, 16
        %v6679 = vpop.permute.xlu0 %6678
        %6680 = vrot.lane.b32.xlu0 %v6294, 16
        %v6681 = vpop.permute.xlu0 %6680
        %6682 = vrot.lane.b32.xlu0 %v6295, 16
        %v6683 = vpop.permute.xlu0 %6682
        %6684 = vrot.lane.b32.xlu0 %v6296, 16
        %v6685 = vpop.permute.xlu0 %6684
        %6686 = vrot.lane.b32.xlu0 %v6297, 16
        %v6687 = vpop.permute.xlu0 %6686
        %6688 = vrot.lane.b32.xlu0 %v6298, 16
        %v6689 = vpop.permute.xlu0 %6688
        %6690 = vrot.lane.b32.xlu0 %v6299, 16
        %v6691 = vpop.permute.xlu0 %6690
        %6692 = vrot.lane.b32.xlu0 %v6300, 16
        %v6693 = vpop.permute.xlu0 %6692
        %6694 = vrot.lane.b32.xlu0 %v6301, 16
        %v6695 = vpop.permute.xlu0 %6694
        %6696 = vrot.lane.b32.xlu0 %v6302, 16
        %v6697 = vpop.permute.xlu0 %6696
        %6698 = vrot.lane.b32.xlu0 %v6303, 16
        %v6699 = vpop.permute.xlu0 %6698
        %6700 = vrot.lane.b32.xlu0 %v6304, 16
        %v6701 = vpop.permute.xlu0 %6700
        %6702 = vrot.lane.b32.xlu0 %v6305, 16
        %v6703 = vpop.permute.xlu0 %6702
        %6704 = vrot.lane.b32.xlu0 %v6306, 16
        %v6705 = vpop.permute.xlu0 %6704
        %6706 = vrot.lane.b32.xlu0 %v6307, 16
        %v6707 = vpop.permute.xlu0 %6706
        %6708 = vrot.lane.b32.xlu0 %v6308, 16
        %v6709 = vpop.permute.xlu0 %6708
        %6710 = vrot.lane.b32.xlu0 %v6309, 16
        %v6711 = vpop.permute.xlu0 %6710
        %6712 = vrot.lane.b32.xlu0 %v6310, 16
        %v6713 = vpop.permute.xlu0 %6712
        %6714 = vrot.lane.b32.xlu0 %v6311, 16
        %v6715 = vpop.permute.xlu0 %6714
        %6716 = vrot.lane.b32.xlu0 %v6312, 16
        %v6717 = vpop.permute.xlu0 %6716
        %6718 = vrot.lane.b32.xlu0 %v6313, 16
        %v6719 = vpop.permute.xlu0 %6718
        %6720 = vrot.lane.b32.xlu0 %v6314, 16
        %v6721 = vpop.permute.xlu0 %6720
        %6722 = vrot.lane.b32.xlu0 %v6315, 16
        %v6723 = vpop.permute.xlu0 %6722
        %6724 = vrot.lane.b32.xlu0 %v6316, 16
        %v6725 = vpop.permute.xlu0 %6724
        %6726 = vrot.lane.b32.xlu0 %v6317, 16
        %v6727 = vpop.permute.xlu0 %6726
        %6728 = vrot.lane.b32.xlu0 %v6318, 16
        %v6729 = vpop.permute.xlu0 %6728
        %6730 = vrot.lane.b32.xlu0 %v6319, 16
        %v6731 = vpop.permute.xlu0 %6730
        %6732 = vrot.lane.b32.xlu0 %v6320, 16
        %v6733 = vpop.permute.xlu0 %6732
        %6734 = vrot.lane.b32.xlu0 %v6321, 16
        %v6735 = vpop.permute.xlu0 %6734
        %6736 = vrot.lane.b32.xlu0 %v6322, 16
        %v6737 = vpop.permute.xlu0 %6736
        %6738 = vrot.lane.b32.xlu0 %v6323, 16
        %v6739 = vpop.permute.xlu0 %6738
        %6740 = vrot.lane.b32.xlu0 %v6324, 16
        %v6741 = vpop.permute.xlu0 %6740
        %6806 = vrot.lane.b32.xlu0 %v6325, 24
        %v6807 = vpop.permute.xlu0 %6806
        %6808 = vrot.lane.b32.xlu0 %v6326, 24
        %v6809 = vpop.permute.xlu0 %6808
        %6810 = vrot.lane.b32.xlu0 %v6327, 24
        %v6811 = vpop.permute.xlu0 %6810
        %6812 = vrot.lane.b32.xlu0 %v6328, 24
        %v6813 = vpop.permute.xlu0 %6812
        %6814 = vrot.lane.b32.xlu0 %v6329, 24
        %v6815 = vpop.permute.xlu0 %6814
        %6816 = vrot.lane.b32.xlu0 %v6330, 24
        %v6817 = vpop.permute.xlu0 %6816
        %6818 = vrot.lane.b32.xlu0 %v6331, 24
        %v6819 = vpop.permute.xlu0 %6818
        %6820 = vrot.lane.b32.xlu0 %v6332, 24
        %v6821 = vpop.permute.xlu0 %6820
        %6822 = vrot.lane.b32.xlu0 %v6333, 24
        %v6823 = vpop.permute.xlu0 %6822
        %6824 = vrot.lane.b32.xlu0 %v6334, 24
        %v6825 = vpop.permute.xlu0 %6824
        %6826 = vrot.lane.b32.xlu0 %v6335, 24
        %v6827 = vpop.permute.xlu0 %6826
        %6828 = vrot.lane.b32.xlu0 %v6336, 24
        %v6829 = vpop.permute.xlu0 %6828
        %6830 = vrot.lane.b32.xlu0 %v6337, 24
        %v6831 = vpop.permute.xlu0 %6830
        %6832 = vrot.lane.b32.xlu0 %v6338, 24
        %v6833 = vpop.permute.xlu0 %6832
        %6834 = vrot.lane.b32.xlu0 %v6339, 24
        %v6835 = vpop.permute.xlu0 %6834
        %6836 = vrot.lane.b32.xlu0 %v6340, 24
        %v6837 = vpop.permute.xlu0 %6836
        %6838 = vrot.lane.b32.xlu0 %v6341, 24
        %v6839 = vpop.permute.xlu0 %6838
        %6840 = vrot.lane.b32.xlu0 %v6342, 24
        %v6841 = vpop.permute.xlu0 %6840
        %6842 = vrot.lane.b32.xlu0 %v6343, 24
        %v6843 = vpop.permute.xlu0 %6842
        %6844 = vrot.lane.b32.xlu0 %v6344, 24
        %v6845 = vpop.permute.xlu0 %6844
        %6846 = vrot.lane.b32.xlu0 %v6345, 24
        %v6847 = vpop.permute.xlu0 %6846
        %6848 = vrot.lane.b32.xlu0 %v6346, 24
        %v6849 = vpop.permute.xlu0 %6848
        %6850 = vrot.lane.b32.xlu0 %v6347, 24
        %v6851 = vpop.permute.xlu0 %6850
        %6852 = vrot.lane.b32.xlu0 %v6348, 24
        %v6853 = vpop.permute.xlu0 %6852
        %6854 = vrot.lane.b32.xlu0 %v6349, 24
        %v6855 = vpop.permute.xlu0 %6854
        %6856 = vrot.lane.b32.xlu0 %v6350, 24
        %v6857 = vpop.permute.xlu0 %6856
        %6858 = vrot.lane.b32.xlu0 %v6351, 24
        %v6859 = vpop.permute.xlu0 %6858
        %6860 = vrot.lane.b32.xlu0 %v6352, 24
        %v6861 = vpop.permute.xlu0 %6860
        %6862 = vrot.lane.b32.xlu0 %v6353, 24
        %v6863 = vpop.permute.xlu0 %6862
        %6864 = vrot.lane.b32.xlu0 %v6354, 24
        %v6865 = vpop.permute.xlu0 %6864
        %6866 = vrot.lane.b32.xlu0 %v6355, 24
        %v6867 = vpop.permute.xlu0 %6866
        %6868 = vrot.lane.b32.xlu0 %v6356, 24
        %v6869 = vpop.permute.xlu0 %6868
        %6934 = vrot.lane.b32.xlu0 %v6357, 32
        %v6935 = vpop.permute.xlu0 %6934
        %6936 = vrot.lane.b32.xlu0 %v6358, 32
        %v6937 = vpop.permute.xlu0 %6936
        %6938 = vrot.lane.b32.xlu0 %v6359, 32
        %v6939 = vpop.permute.xlu0 %6938
        %6940 = vrot.lane.b32.xlu0 %v6360, 32
        %v6941 = vpop.permute.xlu0 %6940
        %6942 = vrot.lane.b32.xlu0 %v6361, 32
        %v6943 = vpop.permute.xlu0 %6942
        %6944 = vrot.lane.b32.xlu0 %v6362, 32
        %v6945 = vpop.permute.xlu0 %6944
        %6946 = vrot.lane.b32.xlu0 %v6363, 32
        %v6947 = vpop.permute.xlu0 %6946
        %6948 = vrot.lane.b32.xlu0 %v6364, 32
        %v6949 = vpop.permute.xlu0 %6948
        %6950 = vrot.lane.b32.xlu0 %v6365, 32
        %v6951 = vpop.permute.xlu0 %6950
        %6952 = vrot.lane.b32.xlu0 %v6366, 32
        %v6953 = vpop.permute.xlu0 %6952
        %6954 = vrot.lane.b32.xlu0 %v6367, 32
        %v6955 = vpop.permute.xlu0 %6954
        %6956 = vrot.lane.b32.xlu0 %v6368, 32
        %v6957 = vpop.permute.xlu0 %6956
        %6958 = vrot.lane.b32.xlu0 %v6369, 32
        %v6959 = vpop.permute.xlu0 %6958
        %6960 = vrot.lane.b32.xlu0 %v6370, 32
        %v6961 = vpop.permute.xlu0 %6960
        %6962 = vrot.lane.b32.xlu0 %v6371, 32
        %v6963 = vpop.permute.xlu0 %6962
        %6964 = vrot.lane.b32.xlu0 %v6372, 32
        %v6965 = vpop.permute.xlu0 %6964
        %6966 = vrot.lane.b32.xlu0 %v6373, 32
        %v6967 = vpop.permute.xlu0 %6966
        %6968 = vrot.lane.b32.xlu0 %v6374, 32
        %v6969 = vpop.permute.xlu0 %6968
        %6970 = vrot.lane.b32.xlu0 %v6375, 32
        %v6971 = vpop.permute.xlu0 %6970
        %6972 = vrot.lane.b32.xlu0 %v6376, 32
        %v6973 = vpop.permute.xlu0 %6972
        %6974 = vrot.lane.b32.xlu0 %v6377, 32
        %v6975 = vpop.permute.xlu0 %6974
        %6976 = vrot.lane.b32.xlu0 %v6378, 32
        %v6977 = vpop.permute.xlu0 %6976
        %6978 = vrot.lane.b32.xlu0 %v6379, 32
        %v6979 = vpop.permute.xlu0 %6978
        %6980 = vrot.lane.b32.xlu0 %v6380, 32
        %v6981 = vpop.permute.xlu0 %6980
        %6982 = vrot.lane.b32.xlu0 %v6381, 32
        %v6983 = vpop.permute.xlu0 %6982
        %6984 = vrot.lane.b32.xlu0 %v6382, 32
        %v6985 = vpop.permute.xlu0 %6984
        %6986 = vrot.lane.b32.xlu0 %v6383, 32
        %v6987 = vpop.permute.xlu0 %6986
        %6988 = vrot.lane.b32.xlu0 %v6384, 32
        %v6989 = vpop.permute.xlu0 %6988
        %6990 = vrot.lane.b32.xlu0 %v6385, 32
        %v6991 = vpop.permute.xlu0 %6990
        %6992 = vrot.lane.b32.xlu0 %v6386, 32
        %v6993 = vpop.permute.xlu0 %6992
        %6994 = vrot.lane.b32.xlu0 %v6387, 32
        %v6995 = vpop.permute.xlu0 %6994
        %6996 = vrot.lane.b32.xlu0 %v6388, 32
        %v6997 = vpop.permute.xlu0 %6996
        %7062 = vrot.lane.b32.xlu0 %v6389, 40
        %v7063 = vpop.permute.xlu0 %7062
        %7064 = vrot.lane.b32.xlu0 %v6390, 40
        %v7065 = vpop.permute.xlu0 %7064
        %7066 = vrot.lane.b32.xlu0 %v6391, 40
        %v7067 = vpop.permute.xlu0 %7066
        %7068 = vrot.lane.b32.xlu0 %v6392, 40
        %v7069 = vpop.permute.xlu0 %7068
        %7070 = vrot.lane.b32.xlu0 %v6393, 40
        %v7071 = vpop.permute.xlu0 %7070
        %7072 = vrot.lane.b32.xlu0 %v6394, 40
        %v7073 = vpop.permute.xlu0 %7072
        %7074 = vrot.lane.b32.xlu0 %v6395, 40
        %v7075 = vpop.permute.xlu0 %7074
        %7076 = vrot.lane.b32.xlu0 %v6396, 40
        %v7077 = vpop.permute.xlu0 %7076
        %7078 = vrot.lane.b32.xlu0 %v6397, 40
        %v7079 = vpop.permute.xlu0 %7078
        %7080 = vrot.lane.b32.xlu0 %v6398, 40
        %v7081 = vpop.permute.xlu0 %7080
        %7082 = vrot.lane.b32.xlu0 %v6399, 40
        %v7083 = vpop.permute.xlu0 %7082
        %7084 = vrot.lane.b32.xlu0 %v6400, 40
        %v7085 = vpop.permute.xlu0 %7084
        %7086 = vrot.lane.b32.xlu0 %v6401, 40
        %v7087 = vpop.permute.xlu0 %7086
        %7088 = vrot.lane.b32.xlu0 %v6402, 40
        %v7089 = vpop.permute.xlu0 %7088
        %7090 = vrot.lane.b32.xlu0 %v6403, 40
        %v7091 = vpop.permute.xlu0 %7090
        %7092 = vrot.lane.b32.xlu0 %v6404, 40
        %v7093 = vpop.permute.xlu0 %7092
        %7094 = vrot.lane.b32.xlu0 %v6405, 40
        %v7095 = vpop.permute.xlu0 %7094
        %7096 = vrot.lane.b32.xlu0 %v6406, 40
        %v7097 = vpop.permute.xlu0 %7096
        %7098 = vrot.lane.b32.xlu0 %v6407, 40
        %v7099 = vpop.permute.xlu0 %7098
        %7100 = vrot.lane.b32.xlu0 %v6408, 40
        %v7101 = vpop.permute.xlu0 %7100
        %7102 = vrot.lane.b32.xlu0 %v6409, 40
        %v7103 = vpop.permute.xlu0 %7102
        %7104 = vrot.lane.b32.xlu0 %v6410, 40
        %v7105 = vpop.permute.xlu0 %7104
        %7106 = vrot.lane.b32.xlu0 %v6411, 40
        %v7107 = vpop.permute.xlu0 %7106
        %7108 = vrot.lane.b32.xlu0 %v6412, 40
        %v7109 = vpop.permute.xlu0 %7108
        %7110 = vrot.lane.b32.xlu0 %v6413, 40
        %v7111 = vpop.permute.xlu0 %7110
        %7112 = vrot.lane.b32.xlu0 %v6414, 40
        %v7113 = vpop.permute.xlu0 %7112
        %7114 = vrot.lane.b32.xlu0 %v6415, 40
        %v7115 = vpop.permute.xlu0 %7114
        %7116 = vrot.lane.b32.xlu0 %v6416, 40
        %v7117 = vpop.permute.xlu0 %7116
        %7118 = vrot.lane.b32.xlu0 %v6417, 40
        %v7119 = vpop.permute.xlu0 %7118
        %7120 = vrot.lane.b32.xlu0 %v6418, 40
        %v7121 = vpop.permute.xlu0 %7120
        %7122 = vrot.lane.b32.xlu0 %v6419, 40
        %v7123 = vpop.permute.xlu0 %7122
        %7124 = vrot.lane.b32.xlu0 %v6420, 40
        %v7125 = vpop.permute.xlu0 %7124
        %7190 = vrot.lane.b32.xlu0 %v6422, 48
        %v7191 = vpop.permute.xlu0 %7190
        %7192 = vrot.lane.b32.xlu0 %v6423, 48
        %v7193 = vpop.permute.xlu0 %7192
        %7194 = vrot.lane.b32.xlu0 %v6424, 48
        %v7195 = vpop.permute.xlu0 %7194
        %7196 = vrot.lane.b32.xlu0 %v6425, 48
        %v7197 = vpop.permute.xlu0 %7196
        %7198 = vrot.lane.b32.xlu0 %v6426, 48
        %v7199 = vpop.permute.xlu0 %7198
        %7200 = vrot.lane.b32.xlu0 %v6427, 48
        %v7201 = vpop.permute.xlu0 %7200
        %7202 = vrot.lane.b32.xlu0 %v6428, 48
        %v7203 = vpop.permute.xlu0 %7202
        %7204 = vrot.lane.b32.xlu0 %v6429, 48
        %v7205 = vpop.permute.xlu0 %7204
        %7206 = vrot.lane.b32.xlu0 %v6430, 48
        %v7207 = vpop.permute.xlu0 %7206
        %7208 = vrot.lane.b32.xlu0 %v6431, 48
        %v7209 = vpop.permute.xlu0 %7208
        %7210 = vrot.lane.b32.xlu0 %v6432, 48
        %v7211 = vpop.permute.xlu0 %7210
        %7212 = vrot.lane.b32.xlu0 %v6433, 48
        %v7213 = vpop.permute.xlu0 %7212
        %7214 = vrot.lane.b32.xlu0 %v6434, 48
        %v7215 = vpop.permute.xlu0 %7214
        %7216 = vrot.lane.b32.xlu0 %v6435, 48
        %v7217 = vpop.permute.xlu0 %7216
        %7218 = vrot.lane.b32.xlu0 %v6436, 48
        %v7219 = vpop.permute.xlu0 %7218
        %7220 = vrot.lane.b32.xlu0 %v6437, 48
        %v7221 = vpop.permute.xlu0 %7220
        %7222 = vrot.lane.b32.xlu0 %v6438, 48
        %v7223 = vpop.permute.xlu0 %7222
        %7224 = vrot.lane.b32.xlu0 %v6439, 48
        %v7225 = vpop.permute.xlu0 %7224
        %7226 = vrot.lane.b32.xlu0 %v6440, 48
        %v7227 = vpop.permute.xlu0 %7226
        %7228 = vrot.lane.b32.xlu0 %v6441, 48
        %v7229 = vpop.permute.xlu0 %7228
        %7230 = vrot.lane.b32.xlu0 %v6442, 48
        %v7231 = vpop.permute.xlu0 %7230
        %7232 = vrot.lane.b32.xlu0 %v6443, 48
        %v7233 = vpop.permute.xlu0 %7232
        %7234 = vrot.lane.b32.xlu0 %v6444, 48
        %v7235 = vpop.permute.xlu0 %7234
        %7236 = vrot.lane.b32.xlu0 %v6445, 48
        %v7237 = vpop.permute.xlu0 %7236
        %7238 = vrot.lane.b32.xlu0 %v6446, 48
        %v7239 = vpop.permute.xlu0 %7238
        %7240 = vrot.lane.b32.xlu0 %v6447, 48
        %v7241 = vpop.permute.xlu0 %7240
        %7242 = vrot.lane.b32.xlu0 %v6448, 48
        %v7243 = vpop.permute.xlu0 %7242
        %7244 = vrot.lane.b32.xlu0 %v6449, 48
        %v7245 = vpop.permute.xlu0 %7244
        %7246 = vrot.lane.b32.xlu0 %v6450, 48
        %v7247 = vpop.permute.xlu0 %7246
        %7248 = vrot.lane.b32.xlu0 %v6451, 48
        %v7249 = vpop.permute.xlu0 %7248
        %7250 = vrot.lane.b32.xlu0 %v6452, 48
        %v7251 = vpop.permute.xlu0 %7250
        %7252 = vrot.lane.b32.xlu0 %v6453, 48
        %v7253 = vpop.permute.xlu0 %7252
        %7318 = vrot.lane.b32.xlu0 %v6454, 56
        %v7319 = vpop.permute.xlu0 %7318
        %7320 = vrot.lane.b32.xlu0 %v6455, 56
        %v7321 = vpop.permute.xlu0 %7320
        %7322 = vrot.lane.b32.xlu0 %v6456, 56
        %v7323 = vpop.permute.xlu0 %7322
        %7324 = vrot.lane.b32.xlu0 %v6457, 56
        %v7325 = vpop.permute.xlu0 %7324
        %7326 = vrot.lane.b32.xlu0 %v6458, 56
        %v7327 = vpop.permute.xlu0 %7326
        %7328 = vrot.lane.b32.xlu0 %v6459, 56
        %v7329 = vpop.permute.xlu0 %7328
        %7330 = vrot.lane.b32.xlu0 %v6460, 56
        %v7331 = vpop.permute.xlu0 %7330
        %7332 = vrot.lane.b32.xlu0 %v6461, 56
        %v7333 = vpop.permute.xlu0 %7332
        %7334 = vrot.lane.b32.xlu0 %v6462, 56
        %v7335 = vpop.permute.xlu0 %7334
        %7336 = vrot.lane.b32.xlu0 %v6463, 56
        %v7337 = vpop.permute.xlu0 %7336
        %7338 = vrot.lane.b32.xlu0 %v6464, 56
        %v7339 = vpop.permute.xlu0 %7338
        %7340 = vrot.lane.b32.xlu0 %v6465, 56
        %v7341 = vpop.permute.xlu0 %7340
        %7342 = vrot.lane.b32.xlu0 %v6466, 56
        %v7343 = vpop.permute.xlu0 %7342
        %7344 = vrot.lane.b32.xlu0 %v6467, 56
        %v7345 = vpop.permute.xlu0 %7344
        %7346 = vrot.lane.b32.xlu0 %v6468, 56
        %v7347 = vpop.permute.xlu0 %7346
        %7348 = vrot.lane.b32.xlu0 %v6469, 56
        %v7349 = vpop.permute.xlu0 %7348
        %7350 = vrot.lane.b32.xlu0 %v6470, 56
        %v7351 = vpop.permute.xlu0 %7350
        %7352 = vrot.lane.b32.xlu0 %v6471, 56
        %v7353 = vpop.permute.xlu0 %7352
        %7354 = vrot.lane.b32.xlu0 %v6472, 56
        %v7355 = vpop.permute.xlu0 %7354
        %7356 = vrot.lane.b32.xlu0 %v6473, 56
        %v7357 = vpop.permute.xlu0 %7356
        %7358 = vrot.lane.b32.xlu0 %v6474, 56
        %v7359 = vpop.permute.xlu0 %7358
        %7360 = vrot.lane.b32.xlu0 %v6475, 56
        %v7361 = vpop.permute.xlu0 %7360
        %7362 = vrot.lane.b32.xlu0 %v6476, 56
        %v7363 = vpop.permute.xlu0 %7362
        %7364 = vrot.lane.b32.xlu0 %v6477, 56
        %v7365 = vpop.permute.xlu0 %7364
        %7366 = vrot.lane.b32.xlu0 %v6478, 56
        %v7367 = vpop.permute.xlu0 %7366
        %7368 = vrot.lane.b32.xlu0 %v6479, 56
        %v7369 = vpop.permute.xlu0 %7368
        %7370 = vrot.lane.b32.xlu0 %v6480, 56
        %v7371 = vpop.permute.xlu0 %7370
        %7372 = vrot.lane.b32.xlu0 %v6481, 56
        %v7373 = vpop.permute.xlu0 %7372
        %7374 = vrot.lane.b32.xlu0 %v6482, 56
        %v7375 = vpop.permute.xlu0 %7374
        %7376 = vrot.lane.b32.xlu0 %v6483, 56
        %v7377 = vpop.permute.xlu0 %7376
        %7378 = vrot.lane.b32.xlu0 %v6484, 56
        %v7379 = vpop.permute.xlu0 %7378
        %7380 = vrot.lane.b32.xlu0 %v6485, 56
        %v7381 = vpop.permute.xlu0 %7380
        %7446 = vrot.lane.b32.xlu0 %v6486, 64
        %v7447 = vpop.permute.xlu0 %7446
        %7448 = vrot.lane.b32.xlu0 %v6487, 64
        %v7449 = vpop.permute.xlu0 %7448
        %7450 = vrot.lane.b32.xlu0 %v6488, 64
        %v7451 = vpop.permute.xlu0 %7450
        %7452 = vrot.lane.b32.xlu0 %v6489, 64
        %v7453 = vpop.permute.xlu0 %7452
        %7454 = vrot.lane.b32.xlu0 %v6490, 64
        %v7455 = vpop.permute.xlu0 %7454
        %7456 = vrot.lane.b32.xlu0 %v6491, 64
        %v7457 = vpop.permute.xlu0 %7456
        %7458 = vrot.lane.b32.xlu0 %v6492, 64
        %v7459 = vpop.permute.xlu0 %7458
        %7460 = vrot.lane.b32.xlu0 %v6493, 64
        %v7461 = vpop.permute.xlu0 %7460
        %7462 = vrot.lane.b32.xlu0 %v6494, 64
        %v7463 = vpop.permute.xlu0 %7462
        %7464 = vrot.lane.b32.xlu0 %v6495, 64
        %v7465 = vpop.permute.xlu0 %7464
        %7466 = vrot.lane.b32.xlu0 %v6496, 64
        %v7467 = vpop.permute.xlu0 %7466
        %7468 = vrot.lane.b32.xlu0 %v6497, 64
        %v7469 = vpop.permute.xlu0 %7468
        %7470 = vrot.lane.b32.xlu0 %v6498, 64
        %v7471 = vpop.permute.xlu0 %7470
        %7472 = vrot.lane.b32.xlu0 %v6499, 64
        %v7473 = vpop.permute.xlu0 %7472
        %7474 = vrot.lane.b32.xlu0 %v6500, 64
        %v7475 = vpop.permute.xlu0 %7474
        %7476 = vrot.lane.b32.xlu0 %v6501, 64
        %v7477 = vpop.permute.xlu0 %7476
        %7478 = vrot.lane.b32.xlu0 %v6502, 64
        %v7479 = vpop.permute.xlu0 %7478
        %7480 = vrot.lane.b32.xlu0 %v6503, 64
        %v7481 = vpop.permute.xlu0 %7480
        %7482 = vrot.lane.b32.xlu0 %v6504, 64
        %v7483 = vpop.permute.xlu0 %7482
        %7484 = vrot.lane.b32.xlu0 %v6505, 64
        %v7485 = vpop.permute.xlu0 %7484
        %7486 = vrot.lane.b32.xlu0 %v6506, 64
        %v7487 = vpop.permute.xlu0 %7486
        %7488 = vrot.lane.b32.xlu0 %v6507, 64
        %v7489 = vpop.permute.xlu0 %7488
        %7490 = vrot.lane.b32.xlu0 %v6508, 64
        %v7491 = vpop.permute.xlu0 %7490
        %7492 = vrot.lane.b32.xlu0 %v6509, 64
        %v7493 = vpop.permute.xlu0 %7492
        %7494 = vrot.lane.b32.xlu0 %v6510, 64
        %v7495 = vpop.permute.xlu0 %7494
        %7496 = vrot.lane.b32.xlu0 %v6511, 64
        %v7497 = vpop.permute.xlu0 %7496
        %7498 = vrot.lane.b32.xlu0 %v6512, 64
        %v7499 = vpop.permute.xlu0 %7498
        %7500 = vrot.lane.b32.xlu0 %v6513, 64
        %v7501 = vpop.permute.xlu0 %7500
        %7502 = vrot.lane.b32.xlu0 %v6514, 64
        %v7503 = vpop.permute.xlu0 %7502
        %7504 = vrot.lane.b32.xlu0 %v6515, 64
        %v7505 = vpop.permute.xlu0 %7504
        %7506 = vrot.lane.b32.xlu0 %v6516, 64
        %v7507 = vpop.permute.xlu0 %7506
        %7508 = vrot.lane.b32.xlu0 %v6517, 64
        %v7509 = vpop.permute.xlu0 %7508
        %v7542 = vsel %vm1828, %v6229, %v6551
        %v7543 = vsel %vm1828, %v6230, %v6553
        %v7544 = vsel %vm1828, %v6231, %v6555
        %v7545 = vsel %vm1828, %v6232, %v6557
        %v7546 = vsel %vm1828, %v6233, %v6559
        %v7547 = vsel %vm1828, %v6234, %v6561
        %v7548 = vsel %vm1828, %v6235, %v6563
        %v7549 = vsel %vm1828, %v6236, %v6565
        %v7550 = vsel %vm1828, %v6237, %v6567
        %v7551 = vsel %vm1828, %v6238, %v6569
        %v7552 = vsel %vm1828, %v6239, %v6571
        %v7553 = vsel %vm1828, %v6240, %v6573
        %v7554 = vsel %vm1828, %v6241, %v6575
        %v7555 = vsel %vm1828, %v6242, %v6577
        %v7556 = vsel %vm1828, %v6243, %v6579
        %v7557 = vsel %vm1828, %v6244, %v6581
        %v7558 = vsel %vm1828, %v6245, %v6583
        %v7559 = vsel %vm1828, %v6246, %v6585
        %v7560 = vsel %vm1828, %v6247, %v6587
        %v7561 = vsel %vm1828, %v6248, %v6589
        %v7562 = vsel %vm1828, %v6249, %v6591
        %v7563 = vsel %vm1828, %v6250, %v6593
        %v7564 = vsel %vm1828, %v6251, %v6595
        %v7565 = vsel %vm1828, %v6252, %v6597
        %v7566 = vsel %vm1828, %v6253, %v6599
        %v7567 = vsel %vm1828, %v6254, %v6601
        %v7568 = vsel %vm1828, %v6255, %v6603
        %v7569 = vsel %vm1828, %v6256, %v6605
        %v7570 = vsel %vm1828, %v6257, %v6607
        %v7571 = vsel %vm1828, %v6258, %v6609
        %v7572 = vsel %vm1828, %v6259, %v6611
        %v7573 = vsel %vm1828, %v6260, %v6613
        %v7574 = vsel %vm1861, %v7542, %v6679
        %v7575 = vsel %vm1861, %v7543, %v6681
        %v7576 = vsel %vm1861, %v7544, %v6683
        %v7577 = vsel %vm1861, %v7545, %v6685
        %v7578 = vsel %vm1861, %v7546, %v6687
        %v7579 = vsel %vm1861, %v7547, %v6689
        %v7580 = vsel %vm1861, %v7548, %v6691
        %v7581 = vsel %vm1861, %v7549, %v6693
        %v7582 = vsel %vm1861, %v7550, %v6695
        %v7583 = vsel %vm1861, %v7551, %v6697
        %v7584 = vsel %vm1861, %v7552, %v6699
        %v7585 = vsel %vm1861, %v7553, %v6701
        %v7586 = vsel %vm1861, %v7554, %v6703
        %v7587 = vsel %vm1861, %v7555, %v6705
        %v7588 = vsel %vm1861, %v7556, %v6707
        %v7589 = vsel %vm1861, %v7557, %v6709
        %v7590 = vsel %vm1861, %v7558, %v6711
        %v7591 = vsel %vm1861, %v7559, %v6713
        %v7592 = vsel %vm1861, %v7560, %v6715
        %v7593 = vsel %vm1861, %v7561, %v6717
        %v7594 = vsel %vm1861, %v7562, %v6719
        %v7595 = vsel %vm1861, %v7563, %v6721
        %v7596 = vsel %vm1861, %v7564, %v6723
        %v7597 = vsel %vm1861, %v7565, %v6725
        %v7598 = vsel %vm1861, %v7566, %v6727
        %v7599 = vsel %vm1861, %v7567, %v6729
        %v7600 = vsel %vm1861, %v7568, %v6731
        %v7601 = vsel %vm1861, %v7569, %v6733
        %v7602 = vsel %vm1861, %v7570, %v6735
        %v7603 = vsel %vm1861, %v7571, %v6737
        %v7604 = vsel %vm1861, %v7572, %v6739
        %v7605 = vsel %vm1861, %v7573, %v6741
        %v7606 = vsel %vm1894, %v7574, %v6807
        %v7607 = vsel %vm1894, %v7575, %v6809
        %v7608 = vsel %vm1894, %v7576, %v6811
        %v7609 = vsel %vm1894, %v7577, %v6813
        %v7610 = vsel %vm1894, %v7578, %v6815
        %v7611 = vsel %vm1894, %v7579, %v6817
        %v7612 = vsel %vm1894, %v7580, %v6819
        %v7613 = vsel %vm1894, %v7581, %v6821
        %v7614 = vsel %vm1894, %v7582, %v6823
        %v7615 = vsel %vm1894, %v7583, %v6825
        %v7616 = vsel %vm1894, %v7584, %v6827
        %v7617 = vsel %vm1894, %v7585, %v6829
        %v7618 = vsel %vm1894, %v7586, %v6831
        %v7619 = vsel %vm1894, %v7587, %v6833
        %v7620 = vsel %vm1894, %v7588, %v6835
        %v7621 = vsel %vm1894, %v7589, %v6837
        %v7622 = vsel %vm1894, %v7590, %v6839
        %v7623 = vsel %vm1894, %v7591, %v6841
        %v7624 = vsel %vm1894, %v7592, %v6843
        %v7625 = vsel %vm1894, %v7593, %v6845
        %v7626 = vsel %vm1894, %v7594, %v6847
        %v7627 = vsel %vm1894, %v7595, %v6849
        %v7628 = vsel %vm1894, %v7596, %v6851
        %v7629 = vsel %vm1894, %v7597, %v6853
        %v7630 = vsel %vm1894, %v7598, %v6855
        %v7631 = vsel %vm1894, %v7599, %v6857
        %v7632 = vsel %vm1894, %v7600, %v6859
        %v7633 = vsel %vm1894, %v7601, %v6861
        %v7634 = vsel %vm1894, %v7602, %v6863
        %v7635 = vsel %vm1894, %v7603, %v6865
        %v7636 = vsel %vm1894, %v7604, %v6867
        %v7637 = vsel %vm1894, %v7605, %v6869
        %v7638 = vsel %vm1927, %v7606, %v6935
        %v7639 = vsel %vm1927, %v7607, %v6937
        %v7640 = vsel %vm1927, %v7608, %v6939
        %v7641 = vsel %vm1927, %v7609, %v6941
        %v7642 = vsel %vm1927, %v7610, %v6943
        %v7643 = vsel %vm1927, %v7611, %v6945
        %v7644 = vsel %vm1927, %v7612, %v6947
        %v7645 = vsel %vm1927, %v7613, %v6949
        %v7646 = vsel %vm1927, %v7614, %v6951
        %v7647 = vsel %vm1927, %v7615, %v6953
        %v7648 = vsel %vm1927, %v7616, %v6955
        %v7649 = vsel %vm1927, %v7617, %v6957
        %v7650 = vsel %vm1927, %v7618, %v6959
        %v7651 = vsel %vm1927, %v7619, %v6961
        %v7652 = vsel %vm1927, %v7620, %v6963
        %v7653 = vsel %vm1927, %v7621, %v6965
        %v7654 = vsel %vm1927, %v7622, %v6967
        %v7655 = vsel %vm1927, %v7623, %v6969
        %v7656 = vsel %vm1927, %v7624, %v6971
        %v7657 = vsel %vm1927, %v7625, %v6973
        %v7658 = vsel %vm1927, %v7626, %v6975
        %v7659 = vsel %vm1927, %v7627, %v6977
        %v7660 = vsel %vm1927, %v7628, %v6979
        %v7661 = vsel %vm1927, %v7629, %v6981
        %v7662 = vsel %vm1927, %v7630, %v6983
        %v7663 = vsel %vm1927, %v7631, %v6985
        %v7664 = vsel %vm1927, %v7632, %v6987
        %v7665 = vsel %vm1927, %v7633, %v6989
        %v7666 = vsel %vm1927, %v7634, %v6991
        %v7667 = vsel %vm1927, %v7635, %v6993
        %v7668 = vsel %vm1927, %v7636, %v6995
        %v7669 = vsel %vm1927, %v7637, %v6997
        %v7670 = vsel %vm1960, %v7638, %v7063
        %v7671 = vsel %vm1960, %v7639, %v7065
        %v7672 = vsel %vm1960, %v7640, %v7067
        %v7673 = vsel %vm1960, %v7641, %v7069
        %v7674 = vsel %vm1960, %v7642, %v7071
        %v7675 = vsel %vm1960, %v7643, %v7073
        %v7676 = vsel %vm1960, %v7644, %v7075
        %v7677 = vsel %vm1960, %v7645, %v7077
        %v7678 = vsel %vm1960, %v7646, %v7079
        %v7679 = vsel %vm1960, %v7647, %v7081
        %v7680 = vsel %vm1960, %v7648, %v7083
        %v7681 = vsel %vm1960, %v7649, %v7085
        %v7682 = vsel %vm1960, %v7650, %v7087
        %v7683 = vsel %vm1960, %v7651, %v7089
        %v7684 = vsel %vm1960, %v7652, %v7091
        %v7685 = vsel %vm1960, %v7653, %v7093
        %v7686 = vsel %vm1960, %v7654, %v7095
        %v7687 = vsel %vm1960, %v7655, %v7097
        %v7688 = vsel %vm1960, %v7656, %v7099
        %v7689 = vsel %vm1960, %v7657, %v7101
        %v7690 = vsel %vm1960, %v7658, %v7103
        %v7691 = vsel %vm1960, %v7659, %v7105
        %v7692 = vsel %vm1960, %v7660, %v7107
        %v7693 = vsel %vm1960, %v7661, %v7109
        %v7694 = vsel %vm1960, %v7662, %v7111
        %v7695 = vsel %vm1960, %v7663, %v7113
        %v7696 = vsel %vm1960, %v7664, %v7115
        %v7697 = vsel %vm1960, %v7665, %v7117
        %v7698 = vsel %vm1960, %v7666, %v7119
        %v7699 = vsel %vm1960, %v7667, %v7121
        %v7700 = vsel %vm1960, %v7668, %v7123
        %v7701 = vsel %vm1960, %v7669, %v7125
        %v7702 = vsel %vm1993, %v7670, %v7191
        %v7703 = vsel %vm1993, %v7671, %v7193
        %v7704 = vsel %vm1993, %v7672, %v7195
        %v7705 = vsel %vm1993, %v7673, %v7197
        %v7706 = vsel %vm1993, %v7674, %v7199
        %v7707 = vsel %vm1993, %v7675, %v7201
        %v7708 = vsel %vm1993, %v7676, %v7203
        %v7709 = vsel %vm1993, %v7677, %v7205
        %v7710 = vsel %vm1993, %v7678, %v7207
        %v7711 = vsel %vm1993, %v7679, %v7209
        %v7712 = vsel %vm1993, %v7680, %v7211
        %v7713 = vsel %vm1993, %v7681, %v7213
        %v7714 = vsel %vm1993, %v7682, %v7215
        %v7715 = vsel %vm1993, %v7683, %v7217
        %v7716 = vsel %vm1993, %v7684, %v7219
        %v7717 = vsel %vm1993, %v7685, %v7221
        %v7718 = vsel %vm1993, %v7686, %v7223
        %v7719 = vsel %vm1993, %v7687, %v7225
        %v7720 = vsel %vm1993, %v7688, %v7227
        %v7721 = vsel %vm1993, %v7689, %v7229
        %v7722 = vsel %vm1993, %v7690, %v7231
        %v7723 = vsel %vm1993, %v7691, %v7233
        %v7724 = vsel %vm1993, %v7692, %v7235
        %v7725 = vsel %vm1993, %v7693, %v7237
        %v7726 = vsel %vm1993, %v7694, %v7239
        %v7727 = vsel %vm1993, %v7695, %v7241
        %v7728 = vsel %vm1993, %v7696, %v7243
        %v7729 = vsel %vm1993, %v7697, %v7245
        %v7730 = vsel %vm1993, %v7698, %v7247
        %v7731 = vsel %vm1993, %v7699, %v7249
        %v7732 = vsel %vm1993, %v7700, %v7251
        %v7733 = vsel %vm1993, %v7701, %v7253
        %v7734 = vsel %vm2026, %v7702, %v7319
        %v7735 = vsel %vm2026, %v7703, %v7321
        %v7736 = vsel %vm2026, %v7704, %v7323
        %v7737 = vsel %vm2026, %v7705, %v7325
        %v7738 = vsel %vm2026, %v7706, %v7327
        %v7739 = vsel %vm2026, %v7707, %v7329
        %v7740 = vsel %vm2026, %v7708, %v7331
        %v7741 = vsel %vm2026, %v7709, %v7333
        %v7742 = vsel %vm2026, %v7710, %v7335
        %v7743 = vsel %vm2026, %v7711, %v7337
        %v7744 = vsel %vm2026, %v7712, %v7339
        %v7745 = vsel %vm2026, %v7713, %v7341
        %v7746 = vsel %vm2026, %v7714, %v7343
        %v7747 = vsel %vm2026, %v7715, %v7345
        %v7748 = vsel %vm2026, %v7716, %v7347
        %v7749 = vsel %vm2026, %v7717, %v7349
        %v7750 = vsel %vm2026, %v7718, %v7351
        %v7751 = vsel %vm2026, %v7719, %v7353
        %v7752 = vsel %vm2026, %v7720, %v7355
        %v7753 = vsel %vm2026, %v7721, %v7357
        %v7754 = vsel %vm2026, %v7722, %v7359
        %v7755 = vsel %vm2026, %v7723, %v7361
        %v7756 = vsel %vm2026, %v7724, %v7363
        %v7757 = vsel %vm2026, %v7725, %v7365
        %v7758 = vsel %vm2026, %v7726, %v7367
        %v7759 = vsel %vm2026, %v7727, %v7369
        %v7760 = vsel %vm2026, %v7728, %v7371
        %v7761 = vsel %vm2026, %v7729, %v7373
        %v7762 = vsel %vm2026, %v7730, %v7375
        %v7763 = vsel %vm2026, %v7731, %v7377
        %v7764 = vsel %vm2026, %v7732, %v7379
        %v7765 = vsel %vm2026, %v7733, %v7381
        %v7766 = vsel %vm2059, %v7734, %v7447
        %v7767 = vsel %vm2059, %v7735, %v7449
        %v7768 = vsel %vm2059, %v7736, %v7451
        %v7769 = vsel %vm2059, %v7737, %v7453
        %v7770 = vsel %vm2059, %v7738, %v7455
        %v7771 = vsel %vm2059, %v7739, %v7457
        %v7772 = vsel %vm2059, %v7740, %v7459
        %v7773 = vsel %vm2059, %v7741, %v7461
        %v7774 = vsel %vm2059, %v7742, %v7463
        %v7775 = vsel %vm2059, %v7743, %v7465
        %v7776 = vsel %vm2059, %v7744, %v7467
        %v7777 = vsel %vm2059, %v7745, %v7469
        %v7778 = vsel %vm2059, %v7746, %v7471
        %v7779 = vsel %vm2059, %v7747, %v7473
        %v7780 = vsel %vm2059, %v7748, %v7475
        %v7781 = vsel %vm2059, %v7749, %v7477
        %v7782 = vsel %vm2059, %v7750, %v7479
        %v7783 = vsel %vm2059, %v7751, %v7481
        %v7784 = vsel %vm2059, %v7752, %v7483
        %v7785 = vsel %vm2059, %v7753, %v7485
        %v7786 = vsel %vm2059, %v7754, %v7487
        %v7787 = vsel %vm2059, %v7755, %v7489
        %v7788 = vsel %vm2059, %v7756, %v7491
        %v7789 = vsel %vm2059, %v7757, %v7493
        %v7790 = vsel %vm2059, %v7758, %v7495
        %v7791 = vsel %vm2059, %v7759, %v7497
        %v7792 = vsel %vm2059, %v7760, %v7499
        %v7793 = vsel %vm2059, %v7761, %v7501
        %v7794 = vsel %vm2059, %v7762, %v7503
        %v7795 = vsel %vm2059, %v7763, %v7505
        %v7796 = vsel %vm2059, %v7764, %v7507
        %v7797 = vsel %vm2059, %v7765, %v7509
        %v7798 = vld [vmem:[%s7] sm:$0xff]
        %v7799 = vld [vmem:[%s7 + $0x8] sm:$0xff]
        %v7800 = vld [vmem:[%s7 + $0x10] sm:$0xff]
        %v7801 = vld [vmem:[%s7 + $0x18] sm:$0xff]
        %v7802 = vld [vmem:[%s7 + $0x20] sm:$0xff]
        %v7803 = vld [vmem:[%s7 + $0x28] sm:$0xff]
        %v7804 = vld [vmem:[%s7 + $0x30] sm:$0xff]
        %v7805 = vld [vmem:[%s7 + $0x38] sm:$0xff]
        %v7806 = vld [vmem:[%s7 + $0x40] sm:$0xff]
        %v7808 = vsel %vm2101, %v7766, 0
        %v7811 = vsel %vm2101, %v7767, 0
        %v7814 = vsel %vm2101, %v7768, 0
        %v7817 = vsel %vm2101, %v7769, 0
        %v7820 = vsel %vm2101, %v7770, 0
        %v7823 = vsel %vm2101, %v7771, 0
        %v7826 = vsel %vm2101, %v7772, 0
        %v7829 = vsel %vm2101, %v7773, 0
        %v7832 = vsel %vm2101, %v7774, 0
        %v7835 = vsel %vm2101, %v7775, 0
        %v7838 = vsel %vm2101, %v7776, 0
        %v7841 = vsel %vm2101, %v7777, 0
        %v7844 = vsel %vm2101, %v7778, 0
        %v7847 = vsel %vm2101, %v7779, 0
        %v7850 = vsel %vm2101, %v7780, 0
        %v7853 = vsel %vm2101, %v7781, 0
        %v7856 = vsel %vm2101, %v7782, 0
        %v7859 = vsel %vm2101, %v7783, 0
        %v7862 = vsel %vm2101, %v7784, 0
        %v7865 = vsel %vm2101, %v7785, 0
        %v7868 = vsel %vm2101, %v7786, 0
        %v7871 = vsel %vm2101, %v7787, 0
        %v7874 = vsel %vm2101, %v7788, 0
        %v7877 = vsel %vm2101, %v7789, 0
        %v7880 = vsel %vm2101, %v7790, 0
        %v7883 = vsel %vm2101, %v7791, 0
        %v7886 = vsel %vm2101, %v7792, 0
        %v7889 = vsel %vm2101, %v7793, 0
        %v7892 = vsel %vm2101, %v7794, 0
        %v7895 = vsel %vm2101, %v7795, 0
        %v7898 = vsel %vm2101, %v7796, 0
        %v7901 = vsel %vm2101, %v7797, 0
        %7903 = vmatpush.msra.mxu0 0.0
        %7904 = vmatpush.msra.mxu0 0.0
        %7905 = vmatpush.msra.mxu0 0.0
        %7906 = vmatpush.msra.mxu0 0.0
        %7907 = vmatpush.msra.mxu0 0.0
        %7908 = vmatpush.msra.mxu0 0.0
        %7909 = vmatpush.msra.mxu0 0.0
        %7910 = vmatpush.msra.mxu0 %v7806
        %7911 = vmatpush.msra.mxu0 %v7805
        %7912 = vmatpush.msra.mxu0 %v7804
        %7913 = vmatpush.msra.mxu0 %v7803
        %7914 = vmatpush.msra.mxu0 %v7802
        %7915 = vmatpush.msra.mxu0 %v7801
        %7916 = vmatpush.msra.mxu0 %v7800
        %7917 = vmatpush.msra.mxu0 %v7799
        %7918 = vmatpush.msra.mxu0 %v7798
        %7919 = vmatmul.f32.gmra.mxu0 %v7808
        %v7920 = vpop.f32.mrf.mxu0
        %v7921 = vadd.f32 0.0, %v7920
        %7922 = vmatmul.f32.gmra.mxu0 %v7811
        %v7923 = vpop.f32.mrf.mxu0
        %v7924 = vadd.f32 0.0, %v7923
        %7925 = vmatmul.f32.gmra.mxu0 %v7814
        %v7926 = vpop.f32.mrf.mxu0
        %v7927 = vadd.f32 0.0, %v7926
        %7928 = vmatmul.f32.gmra.mxu0 %v7817
        %v7929 = vpop.f32.mrf.mxu0
        %v7930 = vadd.f32 0.0, %v7929
        %7931 = vmatmul.f32.gmra.mxu0 %v7820
        %v7932 = vpop.f32.mrf.mxu0
        %v7933 = vadd.f32 0.0, %v7932
        %7934 = vmatmul.f32.gmra.mxu0 %v7823
        %v7935 = vpop.f32.mrf.mxu0
        %v7936 = vadd.f32 0.0, %v7935
        %7937 = vmatmul.f32.gmra.mxu0 %v7826
        %v7938 = vpop.f32.mrf.mxu0
        %v7939 = vadd.f32 0.0, %v7938
        %7940 = vmatmul.f32.gmra.mxu0 %v7829
        %v7941 = vpop.f32.mrf.mxu0
        %v7942 = vadd.f32 0.0, %v7941
        %7943 = vmatmul.f32.gmra.mxu0 %v7832
        %v7944 = vpop.f32.mrf.mxu0
        %v7945 = vadd.f32 0.0, %v7944
        %7946 = vmatmul.f32.gmra.mxu0 %v7835
        %v7947 = vpop.f32.mrf.mxu0
        %v7948 = vadd.f32 0.0, %v7947
        %7949 = vmatmul.f32.gmra.mxu0 %v7838
        %v7950 = vpop.f32.mrf.mxu0
        %v7951 = vadd.f32 0.0, %v7950
        %7952 = vmatmul.f32.gmra.mxu0 %v7841
        %v7953 = vpop.f32.mrf.mxu0
        %v7954 = vadd.f32 0.0, %v7953
        %7955 = vmatmul.f32.gmra.mxu0 %v7844
        %v7956 = vpop.f32.mrf.mxu0
        %v7957 = vadd.f32 0.0, %v7956
        %7958 = vmatmul.f32.gmra.mxu0 %v7847
        %v7959 = vpop.f32.mrf.mxu0
        %v7960 = vadd.f32 0.0, %v7959
        %7961 = vmatmul.f32.gmra.mxu0 %v7850
        %v7962 = vpop.f32.mrf.mxu0
        %v7963 = vadd.f32 0.0, %v7962
        %7964 = vmatmul.f32.gmra.mxu0 %v7853
        %v7965 = vpop.f32.mrf.mxu0
        %v7966 = vadd.f32 0.0, %v7965
        %7967 = vmatmul.f32.gmra.mxu0 %v7856
        %v7968 = vpop.f32.mrf.mxu0
        %v7969 = vadd.f32 0.0, %v7968
        %7970 = vmatmul.f32.gmra.mxu0 %v7859
        %v7971 = vpop.f32.mrf.mxu0
        %v7972 = vadd.f32 0.0, %v7971
        %7973 = vmatmul.f32.gmra.mxu0 %v7862
        %v7974 = vpop.f32.mrf.mxu0
        %v7975 = vadd.f32 0.0, %v7974
        %7976 = vmatmul.f32.gmra.mxu0 %v7865
        %v7977 = vpop.f32.mrf.mxu0
        %v7978 = vadd.f32 0.0, %v7977
        %7979 = vmatmul.f32.gmra.mxu0 %v7868
        %v7980 = vpop.f32.mrf.mxu0
        %v7981 = vadd.f32 0.0, %v7980
        %7982 = vmatmul.f32.gmra.mxu0 %v7871
        %v7983 = vpop.f32.mrf.mxu0
        %v7984 = vadd.f32 0.0, %v7983
        %7985 = vmatmul.f32.gmra.mxu0 %v7874
        %v7986 = vpop.f32.mrf.mxu0
        %v7987 = vadd.f32 0.0, %v7986
        %7988 = vmatmul.f32.gmra.mxu0 %v7877
        %v7989 = vpop.f32.mrf.mxu0
        %v7990 = vadd.f32 0.0, %v7989
        %7991 = vmatmul.f32.gmra.mxu0 %v7880
        %v7992 = vpop.f32.mrf.mxu0
        %v7993 = vadd.f32 0.0, %v7992
        %7994 = vmatmul.f32.gmra.mxu0 %v7883
        %v7995 = vpop.f32.mrf.mxu0
        %v7996 = vadd.f32 0.0, %v7995
        %7997 = vmatmul.f32.gmra.mxu0 %v7886
        %v7998 = vpop.f32.mrf.mxu0
        %v7999 = vadd.f32 0.0, %v7998
        %8000 = vmatmul.f32.gmra.mxu0 %v7889
        %v8001 = vpop.f32.mrf.mxu0
        %v8002 = vadd.f32 0.0, %v8001
        %8003 = vmatmul.f32.gmra.mxu0 %v7892
        %v8004 = vpop.f32.mrf.mxu0
        %v8005 = vadd.f32 0.0, %v8004
        %8006 = vmatmul.f32.gmra.mxu0 %v7895
        %v8007 = vpop.f32.mrf.mxu0
        %v8008 = vadd.f32 0.0, %v8007
        %8009 = vmatmul.f32.gmra.mxu0 %v7898
        %v8010 = vpop.f32.mrf.mxu0
        %v8011 = vadd.f32 0.0, %v8010
        %8012 = vmatmul.f32.gmra.mxu0 %v7901
        %v8013 = vpop.f32.mrf.mxu0
        %v8014 = vadd.f32 0.0, %v8013
        %8015 = vdwg.mxu0
        %v8017 = vsel %vm2101, %v6188, 0
        %v8020 = vsel %vm2101, %v6189, 0
        %v8023 = vsel %vm2101, %v6190, 0
        %v8026 = vsel %vm2101, %v6191, 0
        %v8029 = vsel %vm2101, %v6192, 0
        %v8032 = vsel %vm2101, %v6193, 0
        %v8035 = vsel %vm2101, %v6194, 0
        %v8038 = vsel %vm2101, %v6195, 0
        %v8041 = vsel %vm2101, %v6196, 0
        %v8044 = vsel %vm2101, %v6197, 0
        %v8047 = vsel %vm2101, %v6198, 0
        %v8050 = vsel %vm2101, %v6199, 0
        %v8053 = vsel %vm2101, %v6200, 0
        %v8056 = vsel %vm2101, %v6201, 0
        %v8059 = vsel %vm2101, %v6202, 0
        %v8062 = vsel %vm2101, %v6203, 0
        %v8065 = vsel %vm2101, %v6204, 0
        %v8068 = vsel %vm2101, %v6205, 0
        %v8071 = vsel %vm2101, %v6206, 0
        %v8074 = vsel %vm2101, %v6207, 0
        %v8077 = vsel %vm2101, %v6208, 0
        %v8080 = vsel %vm2101, %v6209, 0
        %v8083 = vsel %vm2101, %v6210, 0
        %v8086 = vsel %vm2101, %v6211, 0
        %v8089 = vsel %vm2101, %v6212, 0
        %v8092 = vsel %vm2101, %v6213, 0
        %v8095 = vsel %vm2101, %v6214, 0
        %v8098 = vsel %vm2101, %v6215, 0
        %v8101 = vsel %vm2101, %v6216, 0
        %v8104 = vsel %vm2101, %v6217, 0
        %v8107 = vsel %vm2101, %v6218, 0
        %v8110 = vsel %vm2101, %v6219, 0
        %8112 = vmatpush.msra.mxu0 0.0
        %8113 = vmatpush.msra.mxu0 0.0
        %8114 = vmatpush.msra.mxu0 0.0
        %8115 = vmatpush.msra.mxu0 0.0
        %8116 = vmatpush.msra.mxu0 0.0
        %8117 = vmatpush.msra.mxu0 0.0
        %8118 = vmatpush.msra.mxu0 0.0
        %8119 = vmatpush.msra.mxu0 %v6228
        %8120 = vmatpush.msra.mxu0 %v6227
        %8121 = vmatpush.msra.mxu0 %v6226
        %8122 = vmatpush.msra.mxu0 %v6225
        %8123 = vmatpush.msra.mxu0 %v6224
        %8124 = vmatpush.msra.mxu0 %v6223
        %8125 = vmatpush.msra.mxu0 %v6222
        %8126 = vmatpush.msra.mxu0 %v6221
        %8127 = vmatpush.msra.mxu0 %v6220
        %8128 = vmatmul.f32.gmra.mxu0 %v8017
        %v8129 = vpop.f32.mrf.mxu0
        %v8130 = vadd.f32 %v7921, %v8129
        %8131 = vmatmul.f32.gmra.mxu0 %v8020
        %v8132 = vpop.f32.mrf.mxu0
        %v8133 = vadd.f32 %v7924, %v8132
        %8134 = vmatmul.f32.gmra.mxu0 %v8023
        %v8135 = vpop.f32.mrf.mxu0
        %v8136 = vadd.f32 %v7927, %v8135
        %8137 = vmatmul.f32.gmra.mxu0 %v8026
        %v8138 = vpop.f32.mrf.mxu0
        %v8139 = vadd.f32 %v7930, %v8138
        %8140 = vmatmul.f32.gmra.mxu0 %v8029
        %v8141 = vpop.f32.mrf.mxu0
        %v8142 = vadd.f32 %v7933, %v8141
        %8143 = vmatmul.f32.gmra.mxu0 %v8032
        %v8144 = vpop.f32.mrf.mxu0
        %v8145 = vadd.f32 %v7936, %v8144
        %8146 = vmatmul.f32.gmra.mxu0 %v8035
        %v8147 = vpop.f32.mrf.mxu0
        %v8148 = vadd.f32 %v7939, %v8147
        %8149 = vmatmul.f32.gmra.mxu0 %v8038
        %v8150 = vpop.f32.mrf.mxu0
        %v8151 = vadd.f32 %v7942, %v8150
        %8152 = vmatmul.f32.gmra.mxu0 %v8041
        %v8153 = vpop.f32.mrf.mxu0
        %v8154 = vadd.f32 %v7945, %v8153
        %8155 = vmatmul.f32.gmra.mxu0 %v8044
        %v8156 = vpop.f32.mrf.mxu0
        %v8157 = vadd.f32 %v7948, %v8156
        %8158 = vmatmul.f32.gmra.mxu0 %v8047
        %v8159 = vpop.f32.mrf.mxu0
        %v8160 = vadd.f32 %v7951, %v8159
        %8161 = vmatmul.f32.gmra.mxu0 %v8050
        %v8162 = vpop.f32.mrf.mxu0
        %v8163 = vadd.f32 %v7954, %v8162
        %8164 = vmatmul.f32.gmra.mxu0 %v8053
        %v8165 = vpop.f32.mrf.mxu0
        %v8166 = vadd.f32 %v7957, %v8165
        %8167 = vmatmul.f32.gmra.mxu0 %v8056
        %v8168 = vpop.f32.mrf.mxu0
        %v8169 = vadd.f32 %v7960, %v8168
        %8170 = vmatmul.f32.gmra.mxu0 %v8059
        %v8171 = vpop.f32.mrf.mxu0
        %v8172 = vadd.f32 %v7963, %v8171
        %8173 = vmatmul.f32.gmra.mxu0 %v8062
        %v8174 = vpop.f32.mrf.mxu0
        %v8175 = vadd.f32 %v7966, %v8174
        %8176 = vmatmul.f32.gmra.mxu0 %v8065
        %v8177 = vpop.f32.mrf.mxu0
        %v8178 = vadd.f32 %v7969, %v8177
        %8179 = vmatmul.f32.gmra.mxu0 %v8068
        %v8180 = vpop.f32.mrf.mxu0
        %v8181 = vadd.f32 %v7972, %v8180
        %8182 = vmatmul.f32.gmra.mxu0 %v8071
        %v8183 = vpop.f32.mrf.mxu0
        %v8184 = vadd.f32 %v7975, %v8183
        %8185 = vmatmul.f32.gmra.mxu0 %v8074
        %v8186 = vpop.f32.mrf.mxu0
        %v8187 = vadd.f32 %v7978, %v8186
        %8188 = vmatmul.f32.gmra.mxu0 %v8077
        %v8189 = vpop.f32.mrf.mxu0
        %v8190 = vadd.f32 %v7981, %v8189
        %8191 = vmatmul.f32.gmra.mxu0 %v8080
        %v8192 = vpop.f32.mrf.mxu0
        %v8193 = vadd.f32 %v7984, %v8192
        %8194 = vmatmul.f32.gmra.mxu0 %v8083
        %v8195 = vpop.f32.mrf.mxu0
        %v8196 = vadd.f32 %v7987, %v8195
        %8197 = vmatmul.f32.gmra.mxu0 %v8086
        %v8198 = vpop.f32.mrf.mxu0
        %v8199 = vadd.f32 %v7990, %v8198
        %8200 = vmatmul.f32.gmra.mxu0 %v8089
        %v8201 = vpop.f32.mrf.mxu0
        %v8202 = vadd.f32 %v7993, %v8201
        %8203 = vmatmul.f32.gmra.mxu0 %v8092
        %v8204 = vpop.f32.mrf.mxu0
        %v8205 = vadd.f32 %v7996, %v8204
        %8206 = vmatmul.f32.gmra.mxu0 %v8095
        %v8207 = vpop.f32.mrf.mxu0
        %v8208 = vadd.f32 %v7999, %v8207
        %8209 = vmatmul.f32.gmra.mxu0 %v8098
        %v8210 = vpop.f32.mrf.mxu0
        %v8211 = vadd.f32 %v8002, %v8210
        %8212 = vmatmul.f32.gmra.mxu0 %v8101
        %v8213 = vpop.f32.mrf.mxu0
        %v8214 = vadd.f32 %v8005, %v8213
        %8215 = vmatmul.f32.gmra.mxu0 %v8104
        %v8216 = vpop.f32.mrf.mxu0
        %v8217 = vadd.f32 %v8008, %v8216
        %8218 = vmatmul.f32.gmra.mxu0 %v8107
        %v8219 = vpop.f32.mrf.mxu0
        %v8220 = vadd.f32 %v8011, %v8219
        %8221 = vmatmul.f32.gmra.mxu0 %v8110
        %v8222 = vpop.f32.mrf.mxu0
        %v8223 = vadd.f32 %v8014, %v8222
        %8224 = vdwg.mxu0
        %v8225 = vld [vmem:[%s2] sm:$0xff]
        %v8226 = vld [vmem:[%s2 + $0x8] sm:$0xff]
        %v8227 = vld [vmem:[%s2 + $0x10] sm:$0xff]
        %v8228 = vld [vmem:[%s2 + $0x18] sm:$0xff]
        %v8229 = vld [vmem:[%s3] sm:$0xff]
        %v8230 = vld [vmem:[%s3 + $0x8] sm:$0xff]
        %v8231 = vld [vmem:[%s3 + $0x10] sm:$0xff]
        %v8232 = vld [vmem:[%s3 + $0x18] sm:$0xff]
        %v8233 = vld [vmem:[%s3 + $0x20] sm:$0xff]
        %v8234 = vld [vmem:[%s3 + $0x28] sm:$0xff]
        %v8235 = vld [vmem:[%s3 + $0x30] sm:$0xff]
        %v8236 = vld [vmem:[%s3 + $0x38] sm:$0xff]
        %v8237 = vld [vmem:[%s3 + $0x40] sm:$0xff]
        %v8238 = vld [vmem:[%s3 + $0x48] sm:$0xff]
        %v8239 = vld [vmem:[%s3 + $0x50] sm:$0xff]
        %v8240 = vld [vmem:[%s3 + $0x58] sm:$0xff]
        %v8241 = vld [vmem:[%s3 + $0x60] sm:$0xff]
        %v8242 = vld [vmem:[%s3 + $0x68] sm:$0xff]
        %v8243 = vld [vmem:[%s3 + $0x70] sm:$0xff]
        %v8244 = vld [vmem:[%s3 + $0x78] sm:$0xff]
        %v8245 = vld [vmem:[%s3 + $0x80] sm:$0xff]
        %v8246 = vld [vmem:[%s3 + $0x88] sm:$0xff]
        %v8247 = vld [vmem:[%s3 + $0x90] sm:$0xff]
        %v8248 = vld [vmem:[%s3 + $0x98] sm:$0xff]
        %v8249 = vld [vmem:[%s3 + $0xa0] sm:$0xff]
        %v8250 = vld [vmem:[%s3 + $0xa8] sm:$0xff]
        %v8251 = vld [vmem:[%s3 + $0xb0] sm:$0xff]
        %v8252 = vld [vmem:[%s3 + $0xb8] sm:$0xff]
        %v8253 = vld [vmem:[%s3 + $0xc0] sm:$0xff]
        %v8254 = vld [vmem:[%s3 + $0xc8] sm:$0xff]
        %v8255 = vld [vmem:[%s3 + $0xd0] sm:$0xff]
        %v8256 = vld [vmem:[%s3 + $0xd8] sm:$0xff]
        %v8257 = vld [vmem:[%s3 + $0xe0] sm:$0xff]
        %v8258 = vld [vmem:[%s3 + $0xe8] sm:$0xff]
        %v8259 = vld [vmem:[%s3 + $0xf0] sm:$0xff]
        %v8260 = vld [vmem:[%s3 + $0xf8] sm:$0xff]
        %8262 = vset.pattern.permute.xlu0 0
        %8263 = vperm.xlu0 %8262, %v8130
        %v8264 = vpop.permute.xlu0 %8263
        %8267 = vset.pattern.permute.xlu0 0
        %8268 = vperm.xlu0 %8267, %v8133
        %v8269 = vpop.permute.xlu0 %8268
        %8272 = vset.pattern.permute.xlu0 0
        %8273 = vperm.xlu0 %8272, %v8136
        %v8274 = vpop.permute.xlu0 %8273
        %8277 = vset.pattern.permute.xlu0 0
        %8278 = vperm.xlu0 %8277, %v8139
        %v8279 = vpop.permute.xlu0 %8278
        %8282 = vset.pattern.permute.xlu0 0
        %8283 = vperm.xlu0 %8282, %v8142
        %v8284 = vpop.permute.xlu0 %8283
        %8287 = vset.pattern.permute.xlu0 0
        %8288 = vperm.xlu0 %8287, %v8145
        %v8289 = vpop.permute.xlu0 %8288
        %8292 = vset.pattern.permute.xlu0 0
        %8293 = vperm.xlu0 %8292, %v8148
        %v8294 = vpop.permute.xlu0 %8293
        %8297 = vset.pattern.permute.xlu0 0
        %8298 = vperm.xlu0 %8297, %v8151
        %v8299 = vpop.permute.xlu0 %8298
        %8302 = vset.pattern.permute.xlu0 0
        %8303 = vperm.xlu0 %8302, %v8154
        %v8304 = vpop.permute.xlu0 %8303
        %8307 = vset.pattern.permute.xlu0 0
        %8308 = vperm.xlu0 %8307, %v8157
        %v8309 = vpop.permute.xlu0 %8308
        %8312 = vset.pattern.permute.xlu0 0
        %8313 = vperm.xlu0 %8312, %v8160
        %v8314 = vpop.permute.xlu0 %8313
        %8317 = vset.pattern.permute.xlu0 0
        %8318 = vperm.xlu0 %8317, %v8163
        %v8319 = vpop.permute.xlu0 %8318
        %8322 = vset.pattern.permute.xlu0 0
        %8323 = vperm.xlu0 %8322, %v8166
        %v8324 = vpop.permute.xlu0 %8323
        %8327 = vset.pattern.permute.xlu0 0
        %8328 = vperm.xlu0 %8327, %v8169
        %v8329 = vpop.permute.xlu0 %8328
        %8332 = vset.pattern.permute.xlu0 0
        %8333 = vperm.xlu0 %8332, %v8172
        %v8334 = vpop.permute.xlu0 %8333
        %8337 = vset.pattern.permute.xlu0 0
        %8338 = vperm.xlu0 %8337, %v8175
        %v8339 = vpop.permute.xlu0 %8338
        %8342 = vset.pattern.permute.xlu0 0
        %8343 = vperm.xlu0 %8342, %v8178
        %v8344 = vpop.permute.xlu0 %8343
        %8347 = vset.pattern.permute.xlu0 0
        %8348 = vperm.xlu0 %8347, %v8181
        %v8349 = vpop.permute.xlu0 %8348
        %8352 = vset.pattern.permute.xlu0 0
        %8353 = vperm.xlu0 %8352, %v8184
        %v8354 = vpop.permute.xlu0 %8353
        %8357 = vset.pattern.permute.xlu0 0
        %8358 = vperm.xlu0 %8357, %v8187
        %v8359 = vpop.permute.xlu0 %8358
        %8362 = vset.pattern.permute.xlu0 0
        %8363 = vperm.xlu0 %8362, %v8190
        %v8364 = vpop.permute.xlu0 %8363
        %8367 = vset.pattern.permute.xlu0 0
        %8368 = vperm.xlu0 %8367, %v8193
        %v8369 = vpop.permute.xlu0 %8368
        %8372 = vset.pattern.permute.xlu0 0
        %8373 = vperm.xlu0 %8372, %v8196
        %v8374 = vpop.permute.xlu0 %8373
        %8377 = vset.pattern.permute.xlu0 0
        %8378 = vperm.xlu0 %8377, %v8199
        %v8379 = vpop.permute.xlu0 %8378
        %8382 = vset.pattern.permute.xlu0 0
        %8383 = vperm.xlu0 %8382, %v8202
        %v8384 = vpop.permute.xlu0 %8383
        %8387 = vset.pattern.permute.xlu0 0
        %8388 = vperm.xlu0 %8387, %v8205
        %v8389 = vpop.permute.xlu0 %8388
        %8392 = vset.pattern.permute.xlu0 0
        %8393 = vperm.xlu0 %8392, %v8208
        %v8394 = vpop.permute.xlu0 %8393
        %8397 = vset.pattern.permute.xlu0 0
        %8398 = vperm.xlu0 %8397, %v8211
        %v8399 = vpop.permute.xlu0 %8398
        %8402 = vset.pattern.permute.xlu0 0
        %8403 = vperm.xlu0 %8402, %v8214
        %v8404 = vpop.permute.xlu0 %8403
        %8407 = vset.pattern.permute.xlu0 0
        %8408 = vperm.xlu0 %8407, %v8217
        %v8409 = vpop.permute.xlu0 %8408
        %8412 = vset.pattern.permute.xlu0 0
        %8413 = vperm.xlu0 %8412, %v8220
        %v8414 = vpop.permute.xlu0 %8413
        %8417 = vset.pattern.permute.xlu0 0
        %8418 = vperm.xlu0 %8417, %v8223
        %v8419 = vpop.permute.xlu0 %8418
        %v8421 = vmul.f32 %v8264, %v8229
        %v8422 = vmul.f32 %v8269, %v8230
        %v8423 = vmul.f32 %v8274, %v8231
        %v8424 = vmul.f32 %v8279, %v8232
        %v8425 = vmul.f32 %v8284, %v8233
        %v8426 = vmul.f32 %v8289, %v8234
        %v8427 = vmul.f32 %v8294, %v8235
        %v8428 = vmul.f32 %v8299, %v8236
        %v8429 = vmul.f32 %v8304, %v8237
        %v8430 = vmul.f32 %v8309, %v8238
        %v8431 = vmul.f32 %v8314, %v8239
        %v8432 = vmul.f32 %v8319, %v8240
        %v8433 = vmul.f32 %v8324, %v8241
        %v8434 = vmul.f32 %v8329, %v8242
        %v8435 = vmul.f32 %v8334, %v8243
        %v8436 = vmul.f32 %v8339, %v8244
        %v8437 = vmul.f32 %v8344, %v8245
        %v8438 = vmul.f32 %v8349, %v8246
        %v8439 = vmul.f32 %v8354, %v8247
        %v8440 = vmul.f32 %v8359, %v8248
        %v8441 = vmul.f32 %v8364, %v8249
        %v8442 = vmul.f32 %v8369, %v8250
        %v8443 = vmul.f32 %v8374, %v8251
        %v8444 = vmul.f32 %v8379, %v8252
        %v8445 = vmul.f32 %v8384, %v8253
        %v8446 = vmul.f32 %v8389, %v8254
        %v8447 = vmul.f32 %v8394, %v8255
        %v8448 = vmul.f32 %v8399, %v8256
        %v8449 = vmul.f32 %v8404, %v8257
        %v8450 = vmul.f32 %v8409, %v8258
        %v8451 = vmul.f32 %v8414, %v8259
        %v8452 = vmul.f32 %v8419, %v8260
        %s8453 = sld [smem:[#allocation5]]
        %v8454 = vstv %s8453
        %8455 = vmatpush.msra.mxu0 %v8436
        %8456 = vmatpush.msra.mxu0 %v8435
        %8457 = vmatpush.msra.mxu0 %v8434
        %8458 = vmatpush.msra.mxu0 %v8433
        %8459 = vmatpush.msra.mxu0 %v8432
        %8460 = vmatpush.msra.mxu0 %v8431
        %8461 = vmatpush.msra.mxu0 %v8430
        %8462 = vmatpush.msra.mxu0 %v8429
        %8463 = vmatpush.msra.mxu0 %v8428
        %8464 = vmatpush.msra.mxu0 %v8427
        %8465 = vmatpush.msra.mxu0 %v8426
        %8466 = vmatpush.msra.mxu0 %v8425
        %8467 = vmatpush.msra.mxu0 %v8424
        %8468 = vmatpush.msra.mxu0 %v8423
        %8469 = vmatpush.msra.mxu0 %v8422
        %8470 = vmatpush.msra.mxu0 %v8421
        %8471 = vmatmul.f32.gmra.mxu0 %v8225
        %v8472 = vpop.f32.mrf.mxu0
        %v8473 = vadd.f32 %v8454, %v8472
        %8474 = vmatmul.f32.gmra.mxu0 %v8227
        %v8475 = vpop.f32.mrf.mxu0
        %v8476 = vadd.f32 %v8454, %v8475
        %8477 = vdwg.mxu0
        %8478 = vmatpush.msra.mxu0 %v8452
        %8479 = vmatpush.msra.mxu0 %v8451
        %8480 = vmatpush.msra.mxu0 %v8450
        %8481 = vmatpush.msra.mxu0 %v8449
        %8482 = vmatpush.msra.mxu0 %v8448
        %8483 = vmatpush.msra.mxu0 %v8447
        %8484 = vmatpush.msra.mxu0 %v8446
        %8485 = vmatpush.msra.mxu0 %v8445
        %8486 = vmatpush.msra.mxu0 %v8444
        %8487 = vmatpush.msra.mxu0 %v8443
        %8488 = vmatpush.msra.mxu0 %v8442
        %8489 = vmatpush.msra.mxu0 %v8441
        %8490 = vmatpush.msra.mxu0 %v8440
        %8491 = vmatpush.msra.mxu0 %v8439
        %8492 = vmatpush.msra.mxu0 %v8438
        %8493 = vmatpush.msra.mxu0 %v8437
        %8494 = vmatmul.f32.gmra.mxu0 %v8226
        %v8495 = vpop.f32.mrf.mxu0
        %v8496 = vadd.f32 %v8473, %v8495
        %8497 = vmatmul.f32.gmra.mxu0 %v8228
        %v8498 = vpop.f32.mrf.mxu0
        %v8499 = vadd.f32 %v8476, %v8498
        %8500 = vdwg.mxu0
        %v8501 = vxor.u32 %v8496, 2147483648
        %v8502 = vxor.u32 %v8499, 2147483648
        %v8503 = vmul.f32 %v8501, 1.442695
        %v8504 = vpow.pop %v8503
        %v8505 = vmul.f32 %v8502, 1.442695
        %v8506 = vpow.pop %v8505
        %v8507 = vadd.f32 %v8504, 1.0
        %v8508 = vadd.f32 %v8506, 1.0
        %v8509 = vrcp.pop %v8507
        %v8510 = vmul.f32 %v8507, %v8509
        %v8511 = vsub.f32 1.0, %v8510
        %v8512 = vmul.f32 %v8509, %v8511
        %v8513 = vadd.f32 %v8509, %v8512
        %vm8514 = vweird.f32 %v8507
        %vm8515 = vweird.f32 %v8509
        %vm8516 = vmor %vm8514, %vm8515
        %v8517 = vsel %vm8516, %v8509, %v8513
        %v8518 = vand.u32 2147483647, %v8507
        %vm8519 = vcmp.eq.f32.partialorder %v8518, 8.507059e+37
        %v8520 = vand.u32 %v8507, 2147483648
        %v8521 = vor.u32 1.1754944e-38, %v8520
        %v8522 = vsel %vm8519, %v8521, %v8517
        %v8523 = vmul.f32 1.0, %v8522
        %v8524 = vrcp.pop %v8508
        %v8525 = vmul.f32 %v8508, %v8524
        %v8526 = vsub.f32 1.0, %v8525
        %v8527 = vmul.f32 %v8524, %v8526
        %v8528 = vadd.f32 %v8524, %v8527
        %vm8529 = vweird.f32 %v8508
        %vm8530 = vweird.f32 %v8524
        %vm8531 = vmor %vm8529, %vm8530
        %v8532 = vsel %vm8531, %v8524, %v8528
        %v8533 = vand.u32 2147483647, %v8508
        %vm8534 = vcmp.eq.f32.partialorder %v8533, 8.507059e+37
        %v8535 = vand.u32 %v8508, 2147483648
        %v8536 = vor.u32 1.1754944e-38, %v8535
        %v8537 = vsel %vm8534, %v8536, %v8532
        %v8538 = vmul.f32 1.0, %v8537
        %v8539 = vld [vmem:[%s513] sm:$0xff]
        %v8540 = vld [vmem:[%s513 + $0x8] sm:$0xff]
        %v8541 = vmul.f32 %v8539, %v8523
        %v8542 = vmul.f32 %v8540, %v8538
        %8543 = vst [vmem:[%s503] sm:$0xff] %v8541
        %8544 = vst [vmem:[%s503 + $0x8] sm:$0xff] %v8542
        %s8545 = sand.u32 %s363, 1
        %s8546 = scalar_lea.sflag [#allocation7], %s8545
        %s8547 = sand.u32 %s363, 1
        %s8548 = smul.addr %s8547, 16
        %s8549 = scalar_lea.vmem [#allocation6], %s8548
        // Predicated region
        $region81: #{tpu_custom_call.1} parent=79 // pred_check
          %p8550 = pneg %p373
        $region82: #{tpu_custom_call.1} parent=79 // pred_check_branch
          %8552 = sbr.rel (%p8550) target = $region84
        $region83: #{tpu_custom_call.1} parent=79 // pred_region
          %8554 = vsyncadd %s8546, 0
          %s8555 = smul.addr %s30, 2
          %s8556 = smul.addr %s8555, 8
          %s8557 = scalar_lea.hbm %s15, %s8556
          %s8558 = sshll.u32 %s8549, 4
          %s8559 = int_to_ptr.vmem [resolvable:$true] %s8558
          %s8560 = sshll.u32 %s8557, 4
          %s8561 = int_to_ptr.hbm [resolvable:$true] %s8560
          %8566 = dma.vmem_to_hbm [thread:$0]  %s8559, 256, %s8561, %s8546, 128, 128, 8
        $region84: #{tpu_custom_call.1} parent=79 // pred_fallthru
          _
      $region80: #{tpu_custom_call.1} parent=5 // pred_fallthru
        _
      %p8567 = scmp.le.s32.totalorder 2, %s25
      // Predicated region
      $region85: #{tpu_custom_call.1} parent=5 // pred_check
        %p8568 = pneg %p8567
      $region86: #{tpu_custom_call.1} parent=5 // pred_check_branch
        %8570 = sbr.rel (%p8568) target = $region88
      $region87: #{tpu_custom_call.1} parent=5 // pred_region
        %s8571 = ssub.s32 %s25, 2
        // Predicated region
        $region89: #{tpu_custom_call.1} parent=87 // pred_check
          %p8572 = pneg %p379
        $region90: #{tpu_custom_call.1} parent=87 // pred_check_branch
          %8574 = sbr.rel (%p8572) target = $region92
        $region91: #{tpu_custom_call.1} parent=87 // pred_region
          %s8575 = sand.u32 %s364, 1
          %s8576 = scalar_lea.sflag [#allocation7], %s8575
          %s8577 = sand.u32 %s364, 1
          %s8578 = smul.addr %s8577, 16
          %s8579 = scalar_lea.vmem [#allocation6], %s8578
          %8581 = dma.done %s8576, 256
        $region92: #{tpu_custom_call.1} parent=87 // pred_fallthru
          _
      $region88: #{tpu_custom_call.1} parent=5 // pred_fallthru
        _
    $region6: #{tpu_custom_call.1} parent=1 // loop_footer
      %s29 = sadd.s32 1, %s25
    $region7: #{tpu_custom_call.1} parent=1 // loop_footer_branch
      %24 = sbr.rel target = $region3
    $region8: #{tpu_custom_call.1} parent=1 // loop_exit
      _
    %8582 = vsyncpa [#allocation7], 1
    %s8583 = scalar_lea.sflag [#allocation7], 1
    %8584 = vsyncpa %s8583, 1

</llo_original>
